<compile_context>
chip_gen: v5e
topology: v5e:2x2
jax: 0.10.0
libtpu: 0.0.40
codegen_flags: <defaults>
</compile_context>

<pallas_src>
import functools
import math

import jax
import jax.numpy as jnp
from jax.experimental import pallas as pl
from jax.experimental.pallas import tpu as pltpu


BANDS = [(1, 4), (4, 8), (8, 13), (13, 30), (30, 45)]
SFREQ = 200.0
_INV_SQRT2 = 1.0 / math.sqrt(2.0)


# ----------------------------- small math helpers -----------------------------

def _elu(x):
  # F.elu(alpha=1): x if x > 0 else exp(x) - 1
  return jnp.where(x > 0, x, jnp.exp(x) - 1.0)


def _erf(x):
  # Abramowitz & Stegun 7.1.26 rational approximation (|err| < 1.5e-7), built
  # from ops guaranteed to lower on Mosaic (exp / mul / add / where).
  a1, a2, a3, a4, a5 = (0.254829592, -0.284496736, 1.421413741,
                        -1.453152027, 1.061405429)
  p = 0.3275911
  s = jnp.where(x >= 0, 1.0, -1.0)
  ax = jnp.abs(x)
  t = 1.0 / (1.0 + p * ax)
  poly = ((((a5 * t + a4) * t + a3) * t + a2) * t + a1) * t
  return s * (1.0 - poly * jnp.exp(-ax * ax))


# ------------------------------- fused kernel -------------------------------

def fused_forward_kernel(
    # ---- inputs (VMEM) ----
    x_ref, w1t_ref, sc1_ref, sh1_ref, sc3_ref, sh3_ref, poolt_ref,
    psd_ref, specw_ref, bfc_ref, adj_ref,
    bigw1_ref, badj_ref, bskip_ref, att1_ref, bg1_ref, scg1_ref, shg1_ref,
    wg2_ref, att2_ref, bg2_ref, scg2_ref, shg2_ref,
    poolb_ref, wc1_ref, bc1_ref, wc2_ref, bc2_ref,
    # ---- input (HBM, memory_space=pl.ANY) ----
    w2t_hbm_ref,
    # ---- output ----
    o_ref,
    # ---- scratch ----
    w2t_vmem, dma_sem,
    *, H, D):
  f32 = jnp.float32
  HD = H * D

  # Kick off the big separable-conv weight DMA immediately; conv1 and the
  # spectral branch do not depend on it and run while it is in flight.
  w2t_copy = pltpu.make_async_copy(w2t_hbm_ref, w2t_vmem, dma_sem.at[0])
  w2t_copy.start()

  # ---- EEGNet temporal branch: conv1 (1,K1) -> BN1 -> ELU, one MXU matmul ----
  x = x_ref[...]                                                   # (N, T)
  a1 = jnp.dot(x.astype(jnp.bfloat16), w1t_ref[...],
               preferred_element_type=f32)                         # (N, F*T) lane-dense
  a1 = _elu(a1 * sc1_ref[...] + sh1_ref[...])                      # eval BatchNorm2d + ELU

  # ---- spectral branch: PSD @ (band-mean @ fc) -> ELU (independent of w2t) ----
  s_feat = _elu(jnp.dot(psd_ref[...], specw_ref[...],
                        preferred_element_type=f32) + bfc_ref[...])  # (N, S)

  # ---- separable conv (1,K2) -> BN3 -> ELU, one banded MXU matmul ----
  w2t_copy.wait()
  a2 = jnp.dot(a1.astype(jnp.bfloat16), w2t_vmem[...],
               preferred_element_type=f32)                         # (N, G*P), 1024 lanes
  a2 = _elu(a2 * sc3_ref[...] + sh3_ref[...])

  # ---- AvgPool2d((1,4)) + mean over time == mean over the first P steps ----
  y_feat = jnp.dot(a2.astype(jnp.bfloat16), poolt_ref[...],
                   preferred_element_type=f32)                     # (N, G)

  # feat = concat([y_feat, s_feat]) is never materialized: the concatenated
  # [gat1-heads | skip | adj] weight is split at row G instead, so all of the
  # former per-head / per-consumer matmuls collapse into two dots.
  G = y_feat.shape[1]
  bigw1 = bigw1_ref[...]                                           # (fusion, H*D+D+1)
  big = (jnp.dot(y_feat, bigw1[:G, :], preferred_element_type=f32)
         + jnp.dot(s_feat, bigw1[G:, :], preferred_element_type=f32))
  proj1 = big[:, :HD]                                              # GAT-1 head projections
  skip_out = big[:, HD:HD + D] + bskip_ref[...]                    # skip(h0)
  gate_pre = big[:, HD + D:] + badj_ref[...]                       # adj_lin(feat), (N,1)
  gate = 1.0 / (1.0 + jnp.exp(-gate_pre))                          # sigmoid

  adj = adj_ref[...]                                               # (N, N), [dst, src]
  # TODO(synk): the reference GATConv class is not provided; the per-edge weight
  # ew = gate[src]*gate[dst] is applied multiplicatively to the *unnormalized*
  # attention coefficients (i.e. before softmax normalization).
  ew = adj * (gate * jnp.transpose(gate))                          # (N, N)
  inv_h = 1.0 / float(H)

  def gat_layer(proj, att_ref, bg_ref, sc_ref, sh_ref):
    # All heads' attention logits from ONE block-diagonal matmul, one transpose.
    al = jnp.dot(proj, att_ref[...], preferred_element_type=f32)   # (N, 2H): [src | dst]
    al_s_t = jnp.transpose(al[:, :H])                              # (H, N)
    al_d = al[:, H:]                                               # (N, H)
    acc = None
    for hh in range(H):
      logit = al_d[:, hh:hh + 1] + al_s_t[hh:hh + 1, :]            # (dst, src)
      logit = jnp.where(logit > 0, logit, 0.2 * logit)             # LeakyReLU(0.2)
      masked = jnp.where(adj > 0, logit, jnp.float32(-1e30))
      mmax = jnp.max(masked, axis=1, keepdims=True)
      e = jnp.exp(masked - mmax) * ew                              # weighted, masked
      denom = jnp.sum(e, axis=1, keepdims=True) + 1e-16
      attn = e * pl.reciprocal(denom, approx=True)                 # per-head softmax
      msg = jnp.dot(attn, proj[:, hh * D:(hh + 1) * D],
                    preferred_element_type=f32)
      acc = msg if acc is None else acc + msg
    out = acc * inv_h + bg_ref[...]                                # concat=False -> head mean
    return _elu(out * sc_ref[...] + sh_ref[...])                   # eval BatchNorm1d + ELU

  # ---- GAT layer 1 + skip connection ----
  h1 = gat_layer(proj1, att1_ref, bg1_ref, scg1_ref, shg1_ref)
  # TODO(synk): Dropout / DropBlock2D are identity at eval; not implemented.
  h = h1 + skip_out

  # ---- GAT layer 2 (all head projections from one stacked (D, H*D) weight) ----
  proj2 = jnp.dot(h, wg2_ref[...], preferred_element_type=f32)     # (N, H*D)
  h2 = gat_layer(proj2, att2_ref, bg2_ref, scg2_ref, shg2_ref)

  # ---- global mean pool + classifier (Linear -> GELU -> Linear) ----
  g = jnp.dot(poolb_ref[...], h2, preferred_element_type=f32)      # (B, D)
  z = jnp.dot(g, wc1_ref[...], preferred_element_type=f32) + bc1_ref[...]
  z = 0.5 * z * (1.0 + _erf(z * _INV_SQRT2))                       # exact-erf GELU
  o_ref[...] = jnp.dot(z, wc2_ref[...], preferred_element_type=f32) + bc2_ref[...]


# ------------------------- one-time (hoisted) preprocessing -------------------------

def _conv_toeplitz(w, t_in, t_out, pad):
  """w: (Cout, Cin, K) conv taps -> (Cin*t_in, Cout*t_out) banded matmul weight.

  out[n, g*t_out + t] = sum_{f,p} x[n, f*t_in + p] * W[f*t_in + p, g*t_out + t]
  reproduces nn.Conv2d(kernel=(1,K), padding=(0,pad), bias=False) cross-
  correlation with implicit zero padding (no padded activation materialized).
  """
  c_out, c_in, k = w.shape
  p = jnp.arange(t_in)[:, None]
  t = jnp.arange(t_out)[None, :]
  kk = p - t + pad                                   # (t_in, t_out)
  valid = (kk >= 0) & (kk < k)
  kc = jnp.clip(kk, 0, k - 1)
  wk = w[:, :, kc]                                   # (Cout, Cin, t_in, t_out)
  wk = jnp.where(valid[None, None], wk, 0.0)
  return wk.transpose(1, 2, 0, 3).reshape(c_in * t_in, c_out * t_out)


def prepare_inference(params, *, B, C, T, edge_index, batch_idx):
  """Weight-only / graph-only preprocessing, run ONCE and reused every call."""
  N = B * C
  w1 = params["w_conv1"]                 # (F, K1)
  w2 = params["w_sep"]                   # (G, F, K2)
  F_, K1 = w1.shape
  G, _, K2 = w2.shape
  H, fusion, D = params["w_gat1"].shape
  pad1, pad2 = K1 // 2, K2 // 2
  T1 = T + 2 * pad1 - K1 + 1             # conv1 output length (== T for odd K1)
  T2 = T1 + 2 * pad2 - K2 + 1            # separable conv output length
  P = (T2 // 4) * 4                      # AvgPool(1,4)+mean == mean over first P steps

  prep = {}
  # Banded (Toeplitz) conv weights.  The separable conv is built only for the P
  # kept time steps, so its output slab is G*P lanes (128-aligned).
  prep["w1t"] = _conv_toeplitz(w1[:, None, :], T, T1, pad1).astype(jnp.bfloat16)
  prep["w2t"] = _conv_toeplitz(w2, T1, P, pad2).astype(jnp.bfloat16)
  prep["sc1"] = jnp.repeat(params["sc1"], T1).reshape(1, F_ * T1)
  prep["sh1"] = jnp.repeat(params["sh1"], T1).reshape(1, F_ * T1)
  prep["sc3"] = jnp.repeat(params["sc3"], P).reshape(1, G * P)
  prep["sh3"] = jnp.repeat(params["sh3"], P).reshape(1, G * P)
  pool = (jnp.repeat(jnp.arange(G), P)[:, None] == jnp.arange(G)[None, :])
  prep["poolt"] = (pool.astype(jnp.float32) / P).astype(jnp.bfloat16)    # (G*P, G)

  # Spectral branch: fold the PSD band-mean matrix into the fc weight.
  Fr = T // 2 + 1
  freqs = jnp.arange(Fr, dtype=jnp.float32) * (SFREQ / T)                # rfftfreq
  cols = []
  for f1, f2 in BANDS:
    m = ((freqs >= f1) & (freqs < f2)).astype(jnp.float32)
    cols.append(m / jnp.sum(m))
  bw = jnp.stack(cols, axis=1)                                           # (Fr, nb)
  prep["specw"] = bw @ params["w_fc"]                                    # (Fr, S)
  prep["bfc"] = params["b_fc"]

  # Dense adjacency (rows = dst, cols = src) and per-sample mean-pool matrix.
  src, dst = edge_index[0], edge_index[1]
  prep["adj"] = jnp.zeros((N, N), jnp.float32).at[dst, src].set(1.0)
  poolb = (batch_idx[None, :] == jnp.arange(B, dtype=batch_idx.dtype)[:, None])
  poolb = poolb.astype(jnp.float32)
  prep["poolb"] = poolb / jnp.maximum(jnp.sum(poolb, axis=1, keepdims=True), 1.0)

  # GAT layer 1 heads + skip + gate fused into one (fusion, H*D + D + 1) weight.
  wg1_cols = jnp.transpose(params["w_gat1"], (1, 0, 2)).reshape(fusion, H * D)
  prep["bigw1"] = jnp.concatenate(
      [wg1_cols, params["w_skip"], params["w_adj"]], axis=1)
  prep["badj"] = params["b_adj"]
  prep["bskip"] = params["b_skip"]

  def att_blockdiag(att_src, att_dst):
    a = jnp.zeros((H * D, 2 * H), jnp.float32)
    for hh in range(H):
      a = a.at[hh * D:(hh + 1) * D, hh].set(att_src[hh, :, 0])
      a = a.at[hh * D:(hh + 1) * D, H + hh].set(att_dst[hh, :, 0])
    return a

  prep["att1"] = att_blockdiag(params["att_src1"], params["att_dst1"])
  prep["bg1"], prep["scg1"], prep["shg1"] = (params["b_gat1"], params["sc_g1"],
                                             params["sh_g1"])
  prep["wg2"] = jnp.transpose(params["w_gat2"], (1, 0, 2)).reshape(D, H * D)
  prep["att2"] = att_blockdiag(params["att_src2"], params["att_dst2"])
  prep["bg2"], prep["scg2"], prep["shg2"] = (params["b_gat2"], params["sc_g2"],
                                             params["sh_g2"])

  prep["wc1"], prep["bc1"] = params["w_c1"], params["b_c1"]
  prep["wc2"], prep["bc2"] = params["w_c2"], params["b_c2"]
  return prep


# ------------------------------------ forward ------------------------------------

@jax.jit
def eegnet_gat_forward(prep, x):
  B, C, T = x.shape
  N = B * C
  # TODO(synk): FFT has no Pallas equivalent; rfft/PSD stay in XLA glue.
  X = jnp.fft.rfft(x, axis=2)
  psd = (jnp.abs(X) ** 2 / T).astype(jnp.float32).reshape(N, -1)   # (N, Fr)

  D = prep["wc1"].shape[0]
  H = prep["att1"].shape[1] // 2
  num_classes = prep["wc2"].shape[1]

  kernel = functools.partial(fused_forward_kernel, H=H, D=D)
  n_vmem_inputs = 28
  in_specs = ([pl.BlockSpec(memory_space=pltpu.MemorySpace.VMEM)] * n_vmem_inputs
              + [pl.BlockSpec(memory_space=pl.ANY)])               # w2t stays in HBM
  return pl.pallas_call(
      kernel,
      out_shape=jax.ShapeDtypeStruct((B, num_classes), jnp.float32),
      in_specs=in_specs,
      out_specs=pl.BlockSpec(memory_space=pltpu.MemorySpace.VMEM),
      scratch_shapes=[pltpu.VMEM(prep["w2t"].shape, jnp.bfloat16),
                      pltpu.SemaphoreType.DMA((1,))],
      compiler_params=pltpu.CompilerParams(vmem_limit_bytes=32 * 1024 * 1024),
  )(
      x.reshape(N, T), prep["w1t"], prep["sc1"], prep["sh1"],
      prep["sc3"], prep["sh3"], prep["poolt"],
      psd, prep["specw"], prep["bfc"], prep["adj"],
      prep["bigw1"], prep["badj"], prep["bskip"], prep["att1"],
      prep["bg1"], prep["scg1"], prep["shg1"],
      prep["wg2"], prep["att2"], prep["bg2"], prep["scg2"], prep["shg2"],
      prep["poolb"], prep["wc1"], prep["bc1"], prep["wc2"], prep["bc2"],
      prep["w2t"],
  )


# ----------------------------------- parameters -----------------------------------

def _bn_scale_shift(gamma, beta, mean, var, eps=1e-5):
  scale = gamma / jnp.sqrt(var + eps)
  shift = beta - mean * scale
  return scale, shift


def init_params(key, *, depth_k=25, temp_filt=16, sep_filt=16, spec_dim=16,
                gcn_dim=64, heads=4, num_classes=2):
  fusion = sep_filt + spec_dim
  nb = len(BANDS)
  keys = jax.random.split(key, 16)

  def unif(k, shape, fan_in):
    lim = 1.0 / math.sqrt(fan_in)
    return jax.random.uniform(k, shape, jnp.float32, -lim, lim)

  ones = lambda n: jnp.ones((n,), jnp.float32)
  zeros = lambda n: jnp.zeros((n,), jnp.float32)

  p = {}
  p["w_conv1"] = unif(keys[0], (temp_filt, depth_k), depth_k)
  p["w_sep"] = unif(keys[1], (sep_filt, temp_filt, 16), temp_filt * 16)
  # eval BatchNorm with fresh running stats (mean 0, var 1, gamma 1, beta 0)
  p["sc1"], p["sh1"] = _bn_scale_shift(ones(temp_filt), zeros(temp_filt),
                                       zeros(temp_filt), ones(temp_filt))
  p["sc3"], p["sh3"] = _bn_scale_shift(ones(sep_filt), zeros(sep_filt),
                                       zeros(sep_filt), ones(sep_filt))

  p["w_fc"] = unif(keys[2], (nb, spec_dim), nb)
  p["b_fc"] = unif(keys[3], (1, spec_dim), nb)

  p["w_adj"] = unif(keys[4], (fusion, 1), fusion)
  p["b_adj"] = unif(keys[5], (1, 1), fusion)

  p["w_gat1"] = unif(keys[6], (heads, fusion, gcn_dim), fusion)
  p["att_src1"] = unif(keys[7], (heads, gcn_dim, 1), gcn_dim)
  p["att_dst1"] = unif(keys[8], (heads, gcn_dim, 1), gcn_dim)
  p["b_gat1"] = jnp.zeros((1, gcn_dim), jnp.float32)

  p["w_gat2"] = unif(keys[9], (heads, gcn_dim, gcn_dim), gcn_dim)
  p["att_src2"] = unif(keys[10], (heads, gcn_dim, 1), gcn_dim)
  p["att_dst2"] = unif(keys[11], (heads, gcn_dim, 1), gcn_dim)
  p["b_gat2"] = jnp.zeros((1, gcn_dim), jnp.float32)

  scg, shg = _bn_scale_shift(jnp.ones((1, gcn_dim), jnp.float32),
                             jnp.zeros((1, gcn_dim), jnp.float32),
                             jnp.zeros((1, gcn_dim), jnp.float32),
                             jnp.ones((1, gcn_dim), jnp.float32))
  p["sc_g1"], p["sh_g1"] = scg, shg
  p["sc_g2"], p["sh_g2"] = scg, shg

  p["w_skip"] = unif(keys[12], (fusion, gcn_dim), fusion)
  p["b_skip"] = unif(keys[13], (1, gcn_dim), fusion)
  p["w_c1"] = unif(keys[14], (gcn_dim, gcn_dim), gcn_dim)
  p["b_c1"] = jnp.zeros((1, gcn_dim), jnp.float32)
  p["w_c2"] = unif(keys[15], (gcn_dim, num_classes), gcn_dim)
  p["b_c2"] = jnp.zeros((1, num_classes), jnp.float32)
  return p


# -------------------------------------- main --------------------------------------

if __name__ == "__main__":
  B, C, T = 2, 8, 64          # small shapes consistent with the module's forward
  key = jax.random.PRNGKey(0)
  kx, kp = jax.random.split(key)
  x = jax.random.normal(kx, (B, C, T), jnp.float32)

  # Fully-connected graph (with self loops) within each sample's C channel-nodes.
  edges = []
  for b in range(B):
    for i in range(C):
      for j in range(C):
        edges.append((b * C + j, b * C + i))         # (src, dst)
  edge_index = jnp.array(edges, dtype=jnp.int32).T   # (2, E)
  batch_idx = jnp.repeat(jnp.arange(B, dtype=jnp.int32), C)

  params = init_params(kp)
  prep = prepare_inference(params, B=B, C=C, T=T,
                           edge_index=edge_index, batch_idx=batch_idx)

  out = jax.block_until_ready(eegnet_gat_forward(prep, x))
  assert out.shape == (B, 2)
  assert bool(jnp.all(jnp.isfinite(out)))
  print("KERNEL_OK")
</pallas_src>

<mosaic_0001>
module attributes {stable_mosaic.version = 11 : i64} {
  func.func @fused_forward_kernel(%arg0: memref<16x64xf32, #tpu.memory_space<vmem>>, %arg1: memref<64x1024xbf16, #tpu.memory_space<vmem>>, %arg2: memref<1x1024xf32, #tpu.memory_space<vmem>>, %arg3: memref<1x1024xf32, #tpu.memory_space<vmem>>, %arg4: memref<1x1024xf32, #tpu.memory_space<vmem>>, %arg5: memref<1x1024xf32, #tpu.memory_space<vmem>>, %arg6: memref<1024x16xbf16, #tpu.memory_space<vmem>>, %arg7: memref<16x33xf32, #tpu.memory_space<vmem>>, %arg8: memref<33x16xf32, #tpu.memory_space<vmem>>, %arg9: memref<1x16xf32, #tpu.memory_space<vmem>>, %arg10: memref<16x16xf32, #tpu.memory_space<vmem>>, %arg11: memref<32x321xf32, #tpu.memory_space<vmem>>, %arg12: memref<1x1xf32, #tpu.memory_space<vmem>>, %arg13: memref<1x64xf32, #tpu.memory_space<vmem>>, %arg14: memref<256x8xf32, #tpu.memory_space<vmem>>, %arg15: memref<1x64xf32, #tpu.memory_space<vmem>>, %arg16: memref<1x64xf32, #tpu.memory_space<vmem>>, %arg17: memref<1x64xf32, #tpu.memory_space<vmem>>, %arg18: memref<64x256xf32, #tpu.memory_space<vmem>>, %arg19: memref<256x8xf32, #tpu.memory_space<vmem>>, %arg20: memref<1x64xf32, #tpu.memory_space<vmem>>, %arg21: memref<1x64xf32, #tpu.memory_space<vmem>>, %arg22: memref<1x64xf32, #tpu.memory_space<vmem>>, %arg23: memref<2x16xf32, #tpu.memory_space<vmem>>, %arg24: memref<64x64xf32, #tpu.memory_space<vmem>>, %arg25: memref<1x64xf32, #tpu.memory_space<vmem>>, %arg26: memref<64x2xf32, #tpu.memory_space<vmem>>, %arg27: memref<1x2xf32, #tpu.memory_space<vmem>>, %arg28: memref<1024x1024xbf16, #tpu.memory_space<any>>, %arg29: memref<2x2xf32, #tpu.memory_space<vmem>>, %arg30: memref<1024x1024xbf16, #tpu.memory_space<vmem>>, %arg31: memref<1x!tpu.dma_semaphore, #tpu.memory_space<semaphore_mem>>) attributes {dimension_semantics = [], scalar_prefetch = 0 : i64, scratch_operands = 2 : i64, tpu.core_type = #tpu.core_type<tc>} {
    %c0_i32 = arith.constant 0 : i32
    %0 = tpu.memref_slice %arg31[%c0_i32] : memref<1x!tpu.dma_semaphore, #tpu.memory_space<semaphore_mem>> -> memref<1x!tpu.dma_semaphore, #tpu.memory_space<semaphore_mem>>
    %1 = tpu.memref_squeeze %0 : memref<1x!tpu.dma_semaphore, #tpu.memory_space<semaphore_mem>> -> memref<!tpu.dma_semaphore, #tpu.memory_space<semaphore_mem>>
    tpu.enqueue_dma source(%arg28 : memref<1024x1024xbf16, #tpu.memory_space<any>>) target(%arg30 : memref<1024x1024xbf16, #tpu.memory_space<vmem>>) target_semaphore(%1 : memref<!tpu.dma_semaphore, #tpu.memory_space<semaphore_mem>>)
    %c0 = arith.constant 0 : index
    %c0_0 = arith.constant 0 : index
    %2 = vector.load %arg0[%c0, %c0_0] : memref<16x64xf32, #tpu.memory_space<vmem>>, vector<16x64xf32>
    %3 = arith.truncf %2 : vector<16x64xf32> to vector<16x64xbf16>
    %c0_1 = arith.constant 0 : index
    %c0_2 = arith.constant 0 : index
    %4 = vector.load %arg1[%c0_1, %c0_2] : memref<64x1024xbf16, #tpu.memory_space<vmem>>, vector<64x1024xbf16>
    %cst = arith.constant dense<0.000000e+00> : vector<16x1024xf32>
    %5 = tpu.matmul %3, %4, %cst {dimension_numbers = #tpu.dot_dimension_numbers<[1], [0], [0], [1], [0, 0, 1, 1], [], []>} : vector<16x64xbf16>, vector<64x1024xbf16>, vector<16x1024xf32> -> vector<16x1024xf32>
    %c0_3 = arith.constant 0 : index
    %c0_4 = arith.constant 0 : index
    %6 = vector.load %arg2[%c0_3, %c0_4] : memref<1x1024xf32, #tpu.memory_space<vmem>>, vector<1x1024xf32>
    %7 = vector.broadcast %6 : vector<1x1024xf32> to vector<16x1024xf32>
    %8 = arith.mulf %5, %7 : vector<16x1024xf32>
    %c0_5 = arith.constant 0 : index
    %c0_6 = arith.constant 0 : index
    %9 = vector.load %arg3[%c0_5, %c0_6] : memref<1x1024xf32, #tpu.memory_space<vmem>>, vector<1x1024xf32>
    %10 = vector.broadcast %9 : vector<1x1024xf32> to vector<16x1024xf32>
    %11 = arith.addf %8, %10 : vector<16x1024xf32>
    %cst_7 = arith.constant 0.000000e+00 : f32
    %12 = vector.broadcast %cst_7 : f32 to vector<16x1024xf32>
    %13 = arith.cmpf ogt, %11, %12 : vector<16x1024xf32>
    %14 = math.exp %11 : vector<16x1024xf32>
    %cst_8 = arith.constant 1.000000e+00 : f32
    %15 = vector.broadcast %cst_8 : f32 to vector<16x1024xf32>
    %16 = arith.subf %14, %15 : vector<16x1024xf32>
    %17 = arith.select %13, %11, %16 : vector<16x1024xi1>, vector<16x1024xf32>
    %c0_9 = arith.constant 0 : index
    %c0_10 = arith.constant 0 : index
    %18 = vector.load %arg7[%c0_9, %c0_10] : memref<16x33xf32, #tpu.memory_space<vmem>>, vector<16x33xf32>
    %c0_11 = arith.constant 0 : index
    %c0_12 = arith.constant 0 : index
    %19 = vector.load %arg8[%c0_11, %c0_12] : memref<33x16xf32, #tpu.memory_space<vmem>>, vector<33x16xf32>
    %cst_13 = arith.constant dense<0.000000e+00> : vector<16x16xf32>
    %20 = tpu.matmul %18, %19, %cst_13 {dimension_numbers = #tpu.dot_dimension_numbers<[1], [0], [0], [1], [0, 0, 1, 1], [], []>} : vector<16x33xf32>, vector<33x16xf32>, vector<16x16xf32> -> vector<16x16xf32>
    %c0_14 = arith.constant 0 : index
    %c0_15 = arith.constant 0 : index
    %21 = vector.load %arg9[%c0_14, %c0_15] : memref<1x16xf32, #tpu.memory_space<vmem>>, vector<1x16xf32>
    %22 = vector.broadcast %21 : vector<1x16xf32> to vector<16x16xf32>
    %23 = arith.addf %20, %22 : vector<16x16xf32>
    %cst_16 = arith.constant 0.000000e+00 : f32
    %24 = vector.broadcast %cst_16 : f32 to vector<16x16xf32>
    %25 = arith.cmpf ogt, %23, %24 : vector<16x16xf32>
    %26 = math.exp %23 : vector<16x16xf32>
    %cst_17 = arith.constant 1.000000e+00 : f32
    %27 = vector.broadcast %cst_17 : f32 to vector<16x16xf32>
    %28 = arith.subf %26, %27 : vector<16x16xf32>
    %29 = arith.select %25, %23, %28 : vector<16x16xi1>, vector<16x16xf32>
    %c0_i32_18 = arith.constant 0 : i32
    %30 = tpu.memref_slice %arg31[%c0_i32_18] : memref<1x!tpu.dma_semaphore, #tpu.memory_space<semaphore_mem>> -> memref<1x!tpu.dma_semaphore, #tpu.memory_space<semaphore_mem>>
    %31 = tpu.memref_squeeze %30 : memref<1x!tpu.dma_semaphore, #tpu.memory_space<semaphore_mem>> -> memref<!tpu.dma_semaphore, #tpu.memory_space<semaphore_mem>>
    tpu.wait_dma2 semaphore(%31 : memref<!tpu.dma_semaphore, #tpu.memory_space<semaphore_mem>>) src(%arg28 : memref<1024x1024xbf16, #tpu.memory_space<any>>) dst(%arg30 : memref<1024x1024xbf16, #tpu.memory_space<vmem>>)
    %32 = arith.truncf %17 : vector<16x1024xf32> to vector<16x1024xbf16>
    %c0_19 = arith.constant 0 : index
    %c0_20 = arith.constant 0 : index
    %33 = vector.load %arg30[%c0_19, %c0_20] : memref<1024x1024xbf16, #tpu.memory_space<vmem>>, vector<1024x1024xbf16>
    %cst_21 = arith.constant dense<0.000000e+00> : vector<16x1024xf32>
    %34 = tpu.matmul %32, %33, %cst_21 {dimension_numbers = #tpu.dot_dimension_numbers<[1], [0], [0], [1], [0, 0, 1, 1], [], []>} : vector<16x1024xbf16>, vector<1024x1024xbf16>, vector<16x1024xf32> -> vector<16x1024xf32>
    %c0_22 = arith.constant 0 : index
    %c0_23 = arith.constant 0 : index
    %35 = vector.load %arg4[%c0_22, %c0_23] : memref<1x1024xf32, #tpu.memory_space<vmem>>, vector<1x1024xf32>
    %36 = vector.broadcast %35 : vector<1x1024xf32> to vector<16x1024xf32>
    %37 = arith.mulf %34, %36 : vector<16x1024xf32>
    %c0_24 = arith.constant 0 : index
    %c0_25 = arith.constant 0 : index
    %38 = vector.load %arg5[%c0_24, %c0_25] : memref<1x1024xf32, #tpu.memory_space<vmem>>, vector<1x1024xf32>
    %39 = vector.broadcast %38 : vector<1x1024xf32> to vector<16x1024xf32>
    %40 = arith.addf %37, %39 : vector<16x1024xf32>
    %cst_26 = arith.constant 0.000000e+00 : f32
    %41 = vector.broadcast %cst_26 : f32 to vector<16x1024xf32>
    %42 = arith.cmpf ogt, %40, %41 : vector<16x1024xf32>
    %43 = math.exp %40 : vector<16x1024xf32>
    %cst_27 = arith.constant 1.000000e+00 : f32
    %44 = vector.broadcast %cst_27 : f32 to vector<16x1024xf32>
    %45 = arith.subf %43, %44 : vector<16x1024xf32>
    %46 = arith.select %42, %40, %45 : vector<16x1024xi1>, vector<16x1024xf32>
    %47 = arith.truncf %46 : vector<16x1024xf32> to vector<16x1024xbf16>
    %c0_28 = arith.constant 0 : index
    %c0_29 = arith.constant 0 : index
    %48 = vector.load %arg6[%c0_28, %c0_29] : memref<1024x16xbf16, #tpu.memory_space<vmem>>, vector<1024x16xbf16>
    %cst_30 = arith.constant dense<0.000000e+00> : vector<16x16xf32>
    %49 = tpu.matmul %47, %48, %cst_30 {dimension_numbers = #tpu.dot_dimension_numbers<[1], [0], [0], [1], [0, 0, 1, 1], [], []>} : vector<16x1024xbf16>, vector<1024x16xbf16>, vector<16x16xf32> -> vector<16x16xf32>
    %c0_31 = arith.constant 0 : index
    %c0_32 = arith.constant 0 : index
    %50 = vector.load %arg11[%c0_31, %c0_32] : memref<32x321xf32, #tpu.memory_space<vmem>>, vector<32x321xf32>
    %51 = vector.extract_strided_slice %50 {offsets = [0, 0], sizes = [16, 321], strides = [1, 1]} : vector<32x321xf32> to vector<16x321xf32>
    %cst_33 = arith.constant dense<0.000000e+00> : vector<16x321xf32>
    %52 = tpu.matmul %49, %51, %cst_33 {dimension_numbers = #tpu.dot_dimension_numbers<[1], [0], [0], [1], [0, 0, 1, 1], [], []>} : vector<16x16xf32>, vector<16x321xf32>, vector<16x321xf32> -> vector<16x321xf32>
    %53 = vector.extract_strided_slice %50 {offsets = [16, 0], sizes = [16, 321], strides = [1, 1]} : vector<32x321xf32> to vector<16x321xf32>
    %cst_34 = arith.constant dense<0.000000e+00> : vector<16x321xf32>
    %54 = tpu.matmul %29, %53, %cst_34 {dimension_numbers = #tpu.dot_dimension_numbers<[1], [0], [0], [1], [0, 0, 1, 1], [], []>} : vector<16x16xf32>, vector<16x321xf32>, vector<16x321xf32> -> vector<16x321xf32>
    %55 = arith.addf %52, %54 : vector<16x321xf32>
    %56 = vector.extract_strided_slice %55 {offsets = [0, 0], sizes = [16, 256], strides = [1, 1]} : vector<16x321xf32> to vector<16x256xf32>
    %57 = vector.extract_strided_slice %55 {offsets = [0, 256], sizes = [16, 64], strides = [1, 1]} : vector<16x321xf32> to vector<16x64xf32>
    %c0_35 = arith.constant 0 : index
    %c0_36 = arith.constant 0 : index
    %58 = vector.load %arg13[%c0_35, %c0_36] : memref<1x64xf32, #tpu.memory_space<vmem>>, vector<1x64xf32>
    %59 = vector.broadcast %58 : vector<1x64xf32> to vector<16x64xf32>
    %60 = arith.addf %57, %59 : vector<16x64xf32>
    %61 = vector.extract_strided_slice %55 {offsets = [0, 320], sizes = [16, 1], strides = [1, 1]} : vector<16x321xf32> to vector<16x1xf32>
    %c0_37 = arith.constant 0 : index
    %c0_38 = arith.constant 0 : index
    %62 = vector.load %arg12[%c0_37, %c0_38] : memref<1x1xf32, #tpu.memory_space<vmem>>, vector<1x1xf32>
    %63 = vector.broadcast %62 : vector<1x1xf32> to vector<16x1xf32>
    %64 = arith.addf %61, %63 : vector<16x1xf32>
    %cst_39 = arith.constant 0.000000e+00 : f32
    %65 = vector.broadcast %cst_39 : f32 to vector<16x1xf32>
    %66 = arith.subf %65, %64 : vector<16x1xf32>
    %67 = math.exp %66 : vector<16x1xf32>
    %cst_40 = arith.constant 1.000000e+00 : f32
    %68 = vector.broadcast %cst_40 : f32 to vector<16x1xf32>
    %69 = arith.addf %68, %67 : vector<16x1xf32>
    %cst_41 = arith.constant 1.000000e+00 : f32
    %70 = vector.broadcast %cst_41 : f32 to vector<16x1xf32>
    %71 = arith.divf %70, %69 : vector<16x1xf32>
    %c0_42 = arith.constant 0 : index
    %c0_43 = arith.constant 0 : index
    %72 = vector.load %arg10[%c0_42, %c0_43] : memref<16x16xf32, #tpu.memory_space<vmem>>, vector<16x16xf32>
    %73 = tpu.transpose %71, [1, 0] : vector<16x1xf32> -> vector<1x16xf32>
    %74 = vector.broadcast %71 : vector<16x1xf32> to vector<16x16xf32>
    %75 = vector.broadcast %73 : vector<1x16xf32> to vector<16x16xf32>
    %76 = arith.mulf %74, %75 : vector<16x16xf32>
    %77 = arith.mulf %72, %76 : vector<16x16xf32>
    %c0_44 = arith.constant 0 : index
    %c0_45 = arith.constant 0 : index
    %78 = vector.load %arg14[%c0_44, %c0_45] : memref<256x8xf32, #tpu.memory_space<vmem>>, vector<256x8xf32>
    %cst_46 = arith.constant dense<0.000000e+00> : vector<16x8xf32>
    %79 = tpu.matmul %56, %78, %cst_46 {dimension_numbers = #tpu.dot_dimension_numbers<[1], [0], [0], [1], [0, 0, 1, 1], [], []>} : vector<16x256xf32>, vector<256x8xf32>, vector<16x8xf32> -> vector<16x8xf32>
    %80 = vector.extract_strided_slice %79 {offsets = [0, 0], sizes = [16, 4], strides = [1, 1]} : vector<16x8xf32> to vector<16x4xf32>
    %81 = tpu.transpose %80, [1, 0] : vector<16x4xf32> -> vector<4x16xf32>
    %82 = vector.extract_strided_slice %79 {offsets = [0, 4], sizes = [16, 4], strides = [1, 1]} : vector<16x8xf32> to vector<16x4xf32>
    %83 = vector.extract_strided_slice %82 {offsets = [0, 0], sizes = [16, 1], strides = [1, 1]} : vector<16x4xf32> to vector<16x1xf32>
    %84 = vector.extract_strided_slice %81 {offsets = [0, 0], sizes = [1, 16], strides = [1, 1]} : vector<4x16xf32> to vector<1x16xf32>
    %85 = vector.broadcast %83 : vector<16x1xf32> to vector<16x16xf32>
    %86 = vector.broadcast %84 : vector<1x16xf32> to vector<16x16xf32>
    %87 = arith.addf %85, %86 : vector<16x16xf32>
    %cst_47 = arith.constant 0.000000e+00 : f32
    %88 = vector.broadcast %cst_47 : f32 to vector<16x16xf32>
    %89 = arith.cmpf ogt, %87, %88 : vector<16x16xf32>
    %cst_48 = arith.constant 2.000000e-01 : f32
    %90 = vector.broadcast %cst_48 : f32 to vector<16x16xf32>
    %91 = arith.mulf %90, %87 : vector<16x16xf32>
    %92 = arith.select %89, %87, %91 : vector<16x16xi1>, vector<16x16xf32>
    %cst_49 = arith.constant 0.000000e+00 : f32
    %93 = vector.broadcast %cst_49 : f32 to vector<16x16xf32>
    %94 = arith.cmpf ogt, %72, %93 : vector<16x16xf32>
    %cst_50 = arith.constant -1.000000e+30 : f32
    %95 = vector.broadcast %cst_50 : f32 to vector<16x16xf32>
    %96 = arith.select %94, %92, %95 : vector<16x16xi1>, vector<16x16xf32>
    %cst_51 = arith.constant dense<0xFF800000> : vector<16xf32>
    %97 = vector.multi_reduction <maximumf>, %96, %cst_51 [1] : vector<16x16xf32> to vector<16xf32>
    %98 = vector.shape_cast %97 : vector<16xf32> to vector<16x1xf32>
    %99 = vector.broadcast %98 : vector<16x1xf32> to vector<16x16xf32>
    %100 = arith.subf %96, %99 : vector<16x16xf32>
    %101 = math.exp %100 : vector<16x16xf32>
    %102 = arith.mulf %101, %77 : vector<16x16xf32>
    %cst_52 = arith.constant dense<0.000000e+00> : vector<16xf32>
    %103 = vector.multi_reduction <add>, %102, %cst_52 [1] : vector<16x16xf32> to vector<16xf32>
    %104 = vector.shape_cast %103 : vector<16xf32> to vector<16x1xf32>
    %cst_53 = arith.constant 1.000000e-16 : f32
    %105 = vector.broadcast %cst_53 : f32 to vector<16x1xf32>
    %106 = arith.addf %104, %105 : vector<16x1xf32>
    %107 = tpu.reciprocal %106 {approx = true} : vector<16x1xf32> -> vector<16x1xf32>
    %108 = vector.broadcast %107 : vector<16x1xf32> to vector<16x16xf32>
    %109 = arith.mulf %102, %108 : vector<16x16xf32>
    %110 = vector.extract_strided_slice %56 {offsets = [0, 0], sizes = [16, 64], strides = [1, 1]} : vector<16x256xf32> to vector<16x64xf32>
    %cst_54 = arith.constant dense<0.000000e+00> : vector<16x64xf32>
    %111 = tpu.matmul %109, %110, %cst_54 {dimension_numbers = #tpu.dot_dimension_numbers<[1], [0], [0], [1], [0, 0, 1, 1], [], []>} : vector<16x16xf32>, vector<16x64xf32>, vector<16x64xf32> -> vector<16x64xf32>
    %112 = vector.extract_strided_slice %82 {offsets = [0, 1], sizes = [16, 1], strides = [1, 1]} : vector<16x4xf32> to vector<16x1xf32>
    %113 = vector.extract_strided_slice %81 {offsets = [1, 0], sizes = [1, 16], strides = [1, 1]} : vector<4x16xf32> to vector<1x16xf32>
    %114 = vector.broadcast %112 : vector<16x1xf32> to vector<16x16xf32>
    %115 = vector.broadcast %113 : vector<1x16xf32> to vector<16x16xf32>
    %116 = arith.addf %114, %115 : vector<16x16xf32>
    %cst_55 = arith.constant 0.000000e+00 : f32
    %117 = vector.broadcast %cst_55 : f32 to vector<16x16xf32>
    %118 = arith.cmpf ogt, %116, %117 : vector<16x16xf32>
    %cst_56 = arith.constant 2.000000e-01 : f32
    %119 = vector.broadcast %cst_56 : f32 to vector<16x16xf32>
    %120 = arith.mulf %119, %116 : vector<16x16xf32>
    %121 = arith.select %118, %116, %120 : vector<16x16xi1>, vector<16x16xf32>
    %cst_57 = arith.constant 0.000000e+00 : f32
    %122 = vector.broadcast %cst_57 : f32 to vector<16x16xf32>
    %123 = arith.cmpf ogt, %72, %122 : vector<16x16xf32>
    %cst_58 = arith.constant -1.000000e+30 : f32
    %124 = vector.broadcast %cst_58 : f32 to vector<16x16xf32>
    %125 = arith.select %123, %121, %124 : vector<16x16xi1>, vector<16x16xf32>
    %cst_59 = arith.constant dense<0xFF800000> : vector<16xf32>
    %126 = vector.multi_reduction <maximumf>, %125, %cst_59 [1] : vector<16x16xf32> to vector<16xf32>
    %127 = vector.shape_cast %126 : vector<16xf32> to vector<16x1xf32>
    %128 = vector.broadcast %127 : vector<16x1xf32> to vector<16x16xf32>
    %129 = arith.subf %125, %128 : vector<16x16xf32>
    %130 = math.exp %129 : vector<16x16xf32>
    %131 = arith.mulf %130, %77 : vector<16x16xf32>
    %cst_60 = arith.constant dense<0.000000e+00> : vector<16xf32>
    %132 = vector.multi_reduction <add>, %131, %cst_60 [1] : vector<16x16xf32> to vector<16xf32>
    %133 = vector.shape_cast %132 : vector<16xf32> to vector<16x1xf32>
    %cst_61 = arith.constant 1.000000e-16 : f32
    %134 = vector.broadcast %cst_61 : f32 to vector<16x1xf32>
    %135 = arith.addf %133, %134 : vector<16x1xf32>
    %136 = tpu.reciprocal %135 {approx = true} : vector<16x1xf32> -> vector<16x1xf32>
    %137 = vector.broadcast %136 : vector<16x1xf32> to vector<16x16xf32>
    %138 = arith.mulf %131, %137 : vector<16x16xf32>
    %139 = vector.extract_strided_slice %56 {offsets = [0, 64], sizes = [16, 64], strides = [1, 1]} : vector<16x256xf32> to vector<16x64xf32>
    %cst_62 = arith.constant dense<0.000000e+00> : vector<16x64xf32>
    %140 = tpu.matmul %138, %139, %cst_62 {dimension_numbers = #tpu.dot_dimension_numbers<[1], [0], [0], [1], [0, 0, 1, 1], [], []>} : vector<16x16xf32>, vector<16x64xf32>, vector<16x64xf32> -> vector<16x64xf32>
    %141 = arith.addf %111, %140 : vector<16x64xf32>
    %142 = vector.extract_strided_slice %82 {offsets = [0, 2], sizes = [16, 1], strides = [1, 1]} : vector<16x4xf32> to vector<16x1xf32>
    %143 = vector.extract_strided_slice %81 {offsets = [2, 0], sizes = [1, 16], strides = [1, 1]} : vector<4x16xf32> to vector<1x16xf32>
    %144 = vector.broadcast %142 : vector<16x1xf32> to vector<16x16xf32>
    %145 = vector.broadcast %143 : vector<1x16xf32> to vector<16x16xf32>
    %146 = arith.addf %144, %145 : vector<16x16xf32>
    %cst_63 = arith.constant 0.000000e+00 : f32
    %147 = vector.broadcast %cst_63 : f32 to vector<16x16xf32>
    %148 = arith.cmpf ogt, %146, %147 : vector<16x16xf32>
    %cst_64 = arith.constant 2.000000e-01 : f32
    %149 = vector.broadcast %cst_64 : f32 to vector<16x16xf32>
    %150 = arith.mulf %149, %146 : vector<16x16xf32>
    %151 = arith.select %148, %146, %150 : vector<16x16xi1>, vector<16x16xf32>
    %cst_65 = arith.constant 0.000000e+00 : f32
    %152 = vector.broadcast %cst_65 : f32 to vector<16x16xf32>
    %153 = arith.cmpf ogt, %72, %152 : vector<16x16xf32>
    %cst_66 = arith.constant -1.000000e+30 : f32
    %154 = vector.broadcast %cst_66 : f32 to vector<16x16xf32>
    %155 = arith.select %153, %151, %154 : vector<16x16xi1>, vector<16x16xf32>
    %cst_67 = arith.constant dense<0xFF800000> : vector<16xf32>
    %156 = vector.multi_reduction <maximumf>, %155, %cst_67 [1] : vector<16x16xf32> to vector<16xf32>
    %157 = vector.shape_cast %156 : vector<16xf32> to vector<16x1xf32>
    %158 = vector.broadcast %157 : vector<16x1xf32> to vector<16x16xf32>
    %159 = arith.subf %155, %158 : vector<16x16xf32>
    %160 = math.exp %159 : vector<16x16xf32>
    %161 = arith.mulf %160, %77 : vector<16x16xf32>
    %cst_68 = arith.constant dense<0.000000e+00> : vector<16xf32>
    %162 = vector.multi_reduction <add>, %161, %cst_68 [1] : vector<16x16xf32> to vector<16xf32>
    %163 = vector.shape_cast %162 : vector<16xf32> to vector<16x1xf32>
    %cst_69 = arith.constant 1.000000e-16 : f32
    %164 = vector.broadcast %cst_69 : f32 to vector<16x1xf32>
    %165 = arith.addf %163, %164 : vector<16x1xf32>
    %166 = tpu.reciprocal %165 {approx = true} : vector<16x1xf32> -> vector<16x1xf32>
    %167 = vector.broadcast %166 : vector<16x1xf32> to vector<16x16xf32>
    %168 = arith.mulf %161, %167 : vector<16x16xf32>
    %169 = vector.extract_strided_slice %56 {offsets = [0, 128], sizes = [16, 64], strides = [1, 1]} : vector<16x256xf32> to vector<16x64xf32>
    %cst_70 = arith.constant dense<0.000000e+00> : vector<16x64xf32>
    %170 = tpu.matmul %168, %169, %cst_70 {dimension_numbers = #tpu.dot_dimension_numbers<[1], [0], [0], [1], [0, 0, 1, 1], [], []>} : vector<16x16xf32>, vector<16x64xf32>, vector<16x64xf32> -> vector<16x64xf32>
    %171 = arith.addf %141, %170 : vector<16x64xf32>
    %172 = vector.extract_strided_slice %82 {offsets = [0, 3], sizes = [16, 1], strides = [1, 1]} : vector<16x4xf32> to vector<16x1xf32>
    %173 = vector.extract_strided_slice %81 {offsets = [3, 0], sizes = [1, 16], strides = [1, 1]} : vector<4x16xf32> to vector<1x16xf32>
    %174 = vector.broadcast %172 : vector<16x1xf32> to vector<16x16xf32>
    %175 = vector.broadcast %173 : vector<1x16xf32> to vector<16x16xf32>
    %176 = arith.addf %174, %175 : vector<16x16xf32>
    %cst_71 = arith.constant 0.000000e+00 : f32
    %177 = vector.broadcast %cst_71 : f32 to vector<16x16xf32>
    %178 = arith.cmpf ogt, %176, %177 : vector<16x16xf32>
    %cst_72 = arith.constant 2.000000e-01 : f32
    %179 = vector.broadcast %cst_72 : f32 to vector<16x16xf32>
    %180 = arith.mulf %179, %176 : vector<16x16xf32>
    %181 = arith.select %178, %176, %180 : vector<16x16xi1>, vector<16x16xf32>
    %cst_73 = arith.constant 0.000000e+00 : f32
    %182 = vector.broadcast %cst_73 : f32 to vector<16x16xf32>
    %183 = arith.cmpf ogt, %72, %182 : vector<16x16xf32>
    %cst_74 = arith.constant -1.000000e+30 : f32
    %184 = vector.broadcast %cst_74 : f32 to vector<16x16xf32>
    %185 = arith.select %183, %181, %184 : vector<16x16xi1>, vector<16x16xf32>
    %cst_75 = arith.constant dense<0xFF800000> : vector<16xf32>
    %186 = vector.multi_reduction <maximumf>, %185, %cst_75 [1] : vector<16x16xf32> to vector<16xf32>
    %187 = vector.shape_cast %186 : vector<16xf32> to vector<16x1xf32>
    %188 = vector.broadcast %187 : vector<16x1xf32> to vector<16x16xf32>
    %189 = arith.subf %185, %188 : vector<16x16xf32>
    %190 = math.exp %189 : vector<16x16xf32>
    %191 = arith.mulf %190, %77 : vector<16x16xf32>
    %cst_76 = arith.constant dense<0.000000e+00> : vector<16xf32>
    %192 = vector.multi_reduction <add>, %191, %cst_76 [1] : vector<16x16xf32> to vector<16xf32>
    %193 = vector.shape_cast %192 : vector<16xf32> to vector<16x1xf32>
    %cst_77 = arith.constant 1.000000e-16 : f32
    %194 = vector.broadcast %cst_77 : f32 to vector<16x1xf32>
    %195 = arith.addf %193, %194 : vector<16x1xf32>
    %196 = tpu.reciprocal %195 {approx = true} : vector<16x1xf32> -> vector<16x1xf32>
    %197 = vector.broadcast %196 : vector<16x1xf32> to vector<16x16xf32>
    %198 = arith.mulf %191, %197 : vector<16x16xf32>
    %199 = vector.extract_strided_slice %56 {offsets = [0, 192], sizes = [16, 64], strides = [1, 1]} : vector<16x256xf32> to vector<16x64xf32>
    %cst_78 = arith.constant dense<0.000000e+00> : vector<16x64xf32>
    %200 = tpu.matmul %198, %199, %cst_78 {dimension_numbers = #tpu.dot_dimension_numbers<[1], [0], [0], [1], [0, 0, 1, 1], [], []>} : vector<16x16xf32>, vector<16x64xf32>, vector<16x64xf32> -> vector<16x64xf32>
    %201 = arith.addf %171, %200 : vector<16x64xf32>
    %cst_79 = arith.constant 2.500000e-01 : f32
    %202 = vector.broadcast %cst_79 : f32 to vector<16x64xf32>
    %203 = arith.mulf %201, %202 : vector<16x64xf32>
    %c0_80 = arith.constant 0 : index
    %c0_81 = arith.constant 0 : index
    %204 = vector.load %arg15[%c0_80, %c0_81] : memref<1x64xf32, #tpu.memory_space<vmem>>, vector<1x64xf32>
    %205 = vector.broadcast %204 : vector<1x64xf32> to vector<16x64xf32>
    %206 = arith.addf %203, %205 : vector<16x64xf32>
    %c0_82 = arith.constant 0 : index
    %c0_83 = arith.constant 0 : index
    %207 = vector.load %arg16[%c0_82, %c0_83] : memref<1x64xf32, #tpu.memory_space<vmem>>, vector<1x64xf32>
    %208 = vector.broadcast %207 : vector<1x64xf32> to vector<16x64xf32>
    %209 = arith.mulf %206, %208 : vector<16x64xf32>
    %c0_84 = arith.constant 0 : index
    %c0_85 = arith.constant 0 : index
    %210 = vector.load %arg17[%c0_84, %c0_85] : memref<1x64xf32, #tpu.memory_space<vmem>>, vector<1x64xf32>
    %211 = vector.broadcast %210 : vector<1x64xf32> to vector<16x64xf32>
    %212 = arith.addf %209, %211 : vector<16x64xf32>
    %cst_86 = arith.constant 0.000000e+00 : f32
    %213 = vector.broadcast %cst_86 : f32 to vector<16x64xf32>
    %214 = arith.cmpf ogt, %212, %213 : vector<16x64xf32>
    %215 = math.exp %212 : vector<16x64xf32>
    %cst_87 = arith.constant 1.000000e+00 : f32
    %216 = vector.broadcast %cst_87 : f32 to vector<16x64xf32>
    %217 = arith.subf %215, %216 : vector<16x64xf32>
    %218 = arith.select %214, %212, %217 : vector<16x64xi1>, vector<16x64xf32>
    %219 = arith.addf %218, %60 : vector<16x64xf32>
    %c0_88 = arith.constant 0 : index
    %c0_89 = arith.constant 0 : index
    %220 = vector.load %arg18[%c0_88, %c0_89] : memref<64x256xf32, #tpu.memory_space<vmem>>, vector<64x256xf32>
    %cst_90 = arith.constant dense<0.000000e+00> : vector<16x256xf32>
    %221 = tpu.matmul %219, %220, %cst_90 {dimension_numbers = #tpu.dot_dimension_numbers<[1], [0], [0], [1], [0, 0, 1, 1], [], []>} : vector<16x64xf32>, vector<64x256xf32>, vector<16x256xf32> -> vector<16x256xf32>
    %c0_91 = arith.constant 0 : index
    %c0_92 = arith.constant 0 : index
    %222 = vector.load %arg19[%c0_91, %c0_92] : memref<256x8xf32, #tpu.memory_space<vmem>>, vector<256x8xf32>
    %cst_93 = arith.constant dense<0.000000e+00> : vector<16x8xf32>
    %223 = tpu.matmul %221, %222, %cst_93 {dimension_numbers = #tpu.dot_dimension_numbers<[1], [0], [0], [1], [0, 0, 1, 1], [], []>} : vector<16x256xf32>, vector<256x8xf32>, vector<16x8xf32> -> vector<16x8xf32>
    %224 = vector.extract_strided_slice %223 {offsets = [0, 0], sizes = [16, 4], strides = [1, 1]} : vector<16x8xf32> to vector<16x4xf32>
    %225 = tpu.transpose %224, [1, 0] : vector<16x4xf32> -> vector<4x16xf32>
    %226 = vector.extract_strided_slice %223 {offsets = [0, 4], sizes = [16, 4], strides = [1, 1]} : vector<16x8xf32> to vector<16x4xf32>
    %227 = vector.extract_strided_slice %226 {offsets = [0, 0], sizes = [16, 1], strides = [1, 1]} : vector<16x4xf32> to vector<16x1xf32>
    %228 = vector.extract_strided_slice %225 {offsets = [0, 0], sizes = [1, 16], strides = [1, 1]} : vector<4x16xf32> to vector<1x16xf32>
    %229 = vector.broadcast %227 : vector<16x1xf32> to vector<16x16xf32>
    %230 = vector.broadcast %228 : vector<1x16xf32> to vector<16x16xf32>
    %231 = arith.addf %229, %230 : vector<16x16xf32>
    %cst_94 = arith.constant 0.000000e+00 : f32
    %232 = vector.broadcast %cst_94 : f32 to vector<16x16xf32>
    %233 = arith.cmpf ogt, %231, %232 : vector<16x16xf32>
    %cst_95 = arith.constant 2.000000e-01 : f32
    %234 = vector.broadcast %cst_95 : f32 to vector<16x16xf32>
    %235 = arith.mulf %234, %231 : vector<16x16xf32>
    %236 = arith.select %233, %231, %235 : vector<16x16xi1>, vector<16x16xf32>
    %cst_96 = arith.constant 0.000000e+00 : f32
    %237 = vector.broadcast %cst_96 : f32 to vector<16x16xf32>
    %238 = arith.cmpf ogt, %72, %237 : vector<16x16xf32>
    %cst_97 = arith.constant -1.000000e+30 : f32
    %239 = vector.broadcast %cst_97 : f32 to vector<16x16xf32>
    %240 = arith.select %238, %236, %239 : vector<16x16xi1>, vector<16x16xf32>
    %cst_98 = arith.constant dense<0xFF800000> : vector<16xf32>
    %241 = vector.multi_reduction <maximumf>, %240, %cst_98 [1] : vector<16x16xf32> to vector<16xf32>
    %242 = vector.shape_cast %241 : vector<16xf32> to vector<16x1xf32>
    %243 = vector.broadcast %242 : vector<16x1xf32> to vector<16x16xf32>
    %244 = arith.subf %240, %243 : vector<16x16xf32>
    %245 = math.exp %244 : vector<16x16xf32>
    %246 = arith.mulf %245, %77 : vector<16x16xf32>
    %cst_99 = arith.constant dense<0.000000e+00> : vector<16xf32>
    %247 = vector.multi_reduction <add>, %246, %cst_99 [1] : vector<16x16xf32> to vector<16xf32>
    %248 = vector.shape_cast %247 : vector<16xf32> to vector<16x1xf32>
    %cst_100 = arith.constant 1.000000e-16 : f32
    %249 = vector.broadcast %cst_100 : f32 to vector<16x1xf32>
    %250 = arith.addf %248, %249 : vector<16x1xf32>
    %251 = tpu.reciprocal %250 {approx = true} : vector<16x1xf32> -> vector<16x1xf32>
    %252 = vector.broadcast %251 : vector<16x1xf32> to vector<16x16xf32>
    %253 = arith.mulf %246, %252 : vector<16x16xf32>
    %254 = vector.extract_strided_slice %221 {offsets = [0, 0], sizes = [16, 64], strides = [1, 1]} : vector<16x256xf32> to vector<16x64xf32>
    %cst_101 = arith.constant dense<0.000000e+00> : vector<16x64xf32>
    %255 = tpu.matmul %253, %254, %cst_101 {dimension_numbers = #tpu.dot_dimension_numbers<[1], [0], [0], [1], [0, 0, 1, 1], [], []>} : vector<16x16xf32>, vector<16x64xf32>, vector<16x64xf32> -> vector<16x64xf32>
    %256 = vector.extract_strided_slice %226 {offsets = [0, 1], sizes = [16, 1], strides = [1, 1]} : vector<16x4xf32> to vector<16x1xf32>
    %257 = vector.extract_strided_slice %225 {offsets = [1, 0], sizes = [1, 16], strides = [1, 1]} : vector<4x16xf32> to vector<1x16xf32>
    %258 = vector.broadcast %256 : vector<16x1xf32> to vector<16x16xf32>
    %259 = vector.broadcast %257 : vector<1x16xf32> to vector<16x16xf32>
    %260 = arith.addf %258, %259 : vector<16x16xf32>
    %cst_102 = arith.constant 0.000000e+00 : f32
    %261 = vector.broadcast %cst_102 : f32 to vector<16x16xf32>
    %262 = arith.cmpf ogt, %260, %261 : vector<16x16xf32>
    %cst_103 = arith.constant 2.000000e-01 : f32
    %263 = vector.broadcast %cst_103 : f32 to vector<16x16xf32>
    %264 = arith.mulf %263, %260 : vector<16x16xf32>
    %265 = arith.select %262, %260, %264 : vector<16x16xi1>, vector<16x16xf32>
    %cst_104 = arith.constant 0.000000e+00 : f32
    %266 = vector.broadcast %cst_104 : f32 to vector<16x16xf32>
    %267 = arith.cmpf ogt, %72, %266 : vector<16x16xf32>
    %cst_105 = arith.constant -1.000000e+30 : f32
    %268 = vector.broadcast %cst_105 : f32 to vector<16x16xf32>
    %269 = arith.select %267, %265, %268 : vector<16x16xi1>, vector<16x16xf32>
    %cst_106 = arith.constant dense<0xFF800000> : vector<16xf32>
    %270 = vector.multi_reduction <maximumf>, %269, %cst_106 [1] : vector<16x16xf32> to vector<16xf32>
    %271 = vector.shape_cast %270 : vector<16xf32> to vector<16x1xf32>
    %272 = vector.broadcast %271 : vector<16x1xf32> to vector<16x16xf32>
    %273 = arith.subf %269, %272 : vector<16x16xf32>
    %274 = math.exp %273 : vector<16x16xf32>
    %275 = arith.mulf %274, %77 : vector<16x16xf32>
    %cst_107 = arith.constant dense<0.000000e+00> : vector<16xf32>
    %276 = vector.multi_reduction <add>, %275, %cst_107 [1] : vector<16x16xf32> to vector<16xf32>
    %277 = vector.shape_cast %276 : vector<16xf32> to vector<16x1xf32>
    %cst_108 = arith.constant 1.000000e-16 : f32
    %278 = vector.broadcast %cst_108 : f32 to vector<16x1xf32>
    %279 = arith.addf %277, %278 : vector<16x1xf32>
    %280 = tpu.reciprocal %279 {approx = true} : vector<16x1xf32> -> vector<16x1xf32>
    %281 = vector.broadcast %280 : vector<16x1xf32> to vector<16x16xf32>
    %282 = arith.mulf %275, %281 : vector<16x16xf32>
    %283 = vector.extract_strided_slice %221 {offsets = [0, 64], sizes = [16, 64], strides = [1, 1]} : vector<16x256xf32> to vector<16x64xf32>
    %cst_109 = arith.constant dense<0.000000e+00> : vector<16x64xf32>
    %284 = tpu.matmul %282, %283, %cst_109 {dimension_numbers = #tpu.dot_dimension_numbers<[1], [0], [0], [1], [0, 0, 1, 1], [], []>} : vector<16x16xf32>, vector<16x64xf32>, vector<16x64xf32> -> vector<16x64xf32>
    %285 = arith.addf %255, %284 : vector<16x64xf32>
    %286 = vector.extract_strided_slice %226 {offsets = [0, 2], sizes = [16, 1], strides = [1, 1]} : vector<16x4xf32> to vector<16x1xf32>
    %287 = vector.extract_strided_slice %225 {offsets = [2, 0], sizes = [1, 16], strides = [1, 1]} : vector<4x16xf32> to vector<1x16xf32>
    %288 = vector.broadcast %286 : vector<16x1xf32> to vector<16x16xf32>
    %289 = vector.broadcast %287 : vector<1x16xf32> to vector<16x16xf32>
    %290 = arith.addf %288, %289 : vector<16x16xf32>
    %cst_110 = arith.constant 0.000000e+00 : f32
    %291 = vector.broadcast %cst_110 : f32 to vector<16x16xf32>
    %292 = arith.cmpf ogt, %290, %291 : vector<16x16xf32>
    %cst_111 = arith.constant 2.000000e-01 : f32
    %293 = vector.broadcast %cst_111 : f32 to vector<16x16xf32>
    %294 = arith.mulf %293, %290 : vector<16x16xf32>
    %295 = arith.select %292, %290, %294 : vector<16x16xi1>, vector<16x16xf32>
    %cst_112 = arith.constant 0.000000e+00 : f32
    %296 = vector.broadcast %cst_112 : f32 to vector<16x16xf32>
    %297 = arith.cmpf ogt, %72, %296 : vector<16x16xf32>
    %cst_113 = arith.constant -1.000000e+30 : f32
    %298 = vector.broadcast %cst_113 : f32 to vector<16x16xf32>
    %299 = arith.select %297, %295, %298 : vector<16x16xi1>, vector<16x16xf32>
    %cst_114 = arith.constant dense<0xFF800000> : vector<16xf32>
    %300 = vector.multi_reduction <maximumf>, %299, %cst_114 [1] : vector<16x16xf32> to vector<16xf32>
    %301 = vector.shape_cast %300 : vector<16xf32> to vector<16x1xf32>
    %302 = vector.broadcast %301 : vector<16x1xf32> to vector<16x16xf32>
    %303 = arith.subf %299, %302 : vector<16x16xf32>
    %304 = math.exp %303 : vector<16x16xf32>
    %305 = arith.mulf %304, %77 : vector<16x16xf32>
    %cst_115 = arith.constant dense<0.000000e+00> : vector<16xf32>
    %306 = vector.multi_reduction <add>, %305, %cst_115 [1] : vector<16x16xf32> to vector<16xf32>
    %307 = vector.shape_cast %306 : vector<16xf32> to vector<16x1xf32>
    %cst_116 = arith.constant 1.000000e-16 : f32
    %308 = vector.broadcast %cst_116 : f32 to vector<16x1xf32>
    %309 = arith.addf %307, %308 : vector<16x1xf32>
    %310 = tpu.reciprocal %309 {approx = true} : vector<16x1xf32> -> vector<16x1xf32>
    %311 = vector.broadcast %310 : vector<16x1xf32> to vector<16x16xf32>
    %312 = arith.mulf %305, %311 : vector<16x16xf32>
    %313 = vector.extract_strided_slice %221 {offsets = [0, 128], sizes = [16, 64], strides = [1, 1]} : vector<16x256xf32> to vector<16x64xf32>
    %cst_117 = arith.constant dense<0.000000e+00> : vector<16x64xf32>
    %314 = tpu.matmul %312, %313, %cst_117 {dimension_numbers = #tpu.dot_dimension_numbers<[1], [0], [0], [1], [0, 0, 1, 1], [], []>} : vector<16x16xf32>, vector<16x64xf32>, vector<16x64xf32> -> vector<16x64xf32>
    %315 = arith.addf %285, %314 : vector<16x64xf32>
    %316 = vector.extract_strided_slice %226 {offsets = [0, 3], sizes = [16, 1], strides = [1, 1]} : vector<16x4xf32> to vector<16x1xf32>
    %317 = vector.extract_strided_slice %225 {offsets = [3, 0], sizes = [1, 16], strides = [1, 1]} : vector<4x16xf32> to vector<1x16xf32>
    %318 = vector.broadcast %316 : vector<16x1xf32> to vector<16x16xf32>
    %319 = vector.broadcast %317 : vector<1x16xf32> to vector<16x16xf32>
    %320 = arith.addf %318, %319 : vector<16x16xf32>
    %cst_118 = arith.constant 0.000000e+00 : f32
    %321 = vector.broadcast %cst_118 : f32 to vector<16x16xf32>
    %322 = arith.cmpf ogt, %320, %321 : vector<16x16xf32>
    %cst_119 = arith.constant 2.000000e-01 : f32
    %323 = vector.broadcast %cst_119 : f32 to vector<16x16xf32>
    %324 = arith.mulf %323, %320 : vector<16x16xf32>
    %325 = arith.select %322, %320, %324 : vector<16x16xi1>, vector<16x16xf32>
    %cst_120 = arith.constant 0.000000e+00 : f32
    %326 = vector.broadcast %cst_120 : f32 to vector<16x16xf32>
    %327 = arith.cmpf ogt, %72, %326 : vector<16x16xf32>
    %cst_121 = arith.constant -1.000000e+30 : f32
    %328 = vector.broadcast %cst_121 : f32 to vector<16x16xf32>
    %329 = arith.select %327, %325, %328 : vector<16x16xi1>, vector<16x16xf32>
    %cst_122 = arith.constant dense<0xFF800000> : vector<16xf32>
    %330 = vector.multi_reduction <maximumf>, %329, %cst_122 [1] : vector<16x16xf32> to vector<16xf32>
    %331 = vector.shape_cast %330 : vector<16xf32> to vector<16x1xf32>
    %332 = vector.broadcast %331 : vector<16x1xf32> to vector<16x16xf32>
    %333 = arith.subf %329, %332 : vector<16x16xf32>
    %334 = math.exp %333 : vector<16x16xf32>
    %335 = arith.mulf %334, %77 : vector<16x16xf32>
    %cst_123 = arith.constant dense<0.000000e+00> : vector<16xf32>
    %336 = vector.multi_reduction <add>, %335, %cst_123 [1] : vector<16x16xf32> to vector<16xf32>
    %337 = vector.shape_cast %336 : vector<16xf32> to vector<16x1xf32>
    %cst_124 = arith.constant 1.000000e-16 : f32
    %338 = vector.broadcast %cst_124 : f32 to vector<16x1xf32>
    %339 = arith.addf %337, %338 : vector<16x1xf32>
    %340 = tpu.reciprocal %339 {approx = true} : vector<16x1xf32> -> vector<16x1xf32>
    %341 = vector.broadcast %340 : vector<16x1xf32> to vector<16x16xf32>
    %342 = arith.mulf %335, %341 : vector<16x16xf32>
    %343 = vector.extract_strided_slice %221 {offsets = [0, 192], sizes = [16, 64], strides = [1, 1]} : vector<16x256xf32> to vector<16x64xf32>
    %cst_125 = arith.constant dense<0.000000e+00> : vector<16x64xf32>
    %344 = tpu.matmul %342, %343, %cst_125 {dimension_numbers = #tpu.dot_dimension_numbers<[1], [0], [0], [1], [0, 0, 1, 1], [], []>} : vector<16x16xf32>, vector<16x64xf32>, vector<16x64xf32> -> vector<16x64xf32>
    %345 = arith.addf %315, %344 : vector<16x64xf32>
    %cst_126 = arith.constant 2.500000e-01 : f32
    %346 = vector.broadcast %cst_126 : f32 to vector<16x64xf32>
    %347 = arith.mulf %345, %346 : vector<16x64xf32>
    %c0_127 = arith.constant 0 : index
    %c0_128 = arith.constant 0 : index
    %348 = vector.load %arg20[%c0_127, %c0_128] : memref<1x64xf32, #tpu.memory_space<vmem>>, vector<1x64xf32>
    %349 = vector.broadcast %348 : vector<1x64xf32> to vector<16x64xf32>
    %350 = arith.addf %347, %349 : vector<16x64xf32>
    %c0_129 = arith.constant 0 : index
    %c0_130 = arith.constant 0 : index
    %351 = vector.load %arg21[%c0_129, %c0_130] : memref<1x64xf32, #tpu.memory_space<vmem>>, vector<1x64xf32>
    %352 = vector.broadcast %351 : vector<1x64xf32> to vector<16x64xf32>
    %353 = arith.mulf %350, %352 : vector<16x64xf32>
    %c0_131 = arith.constant 0 : index
    %c0_132 = arith.constant 0 : index
    %354 = vector.load %arg22[%c0_131, %c0_132] : memref<1x64xf32, #tpu.memory_space<vmem>>, vector<1x64xf32>
    %355 = vector.broadcast %354 : vector<1x64xf32> to vector<16x64xf32>
    %356 = arith.addf %353, %355 : vector<16x64xf32>
    %cst_133 = arith.constant 0.000000e+00 : f32
    %357 = vector.broadcast %cst_133 : f32 to vector<16x64xf32>
    %358 = arith.cmpf ogt, %356, %357 : vector<16x64xf32>
    %359 = math.exp %356 : vector<16x64xf32>
    %cst_134 = arith.constant 1.000000e+00 : f32
    %360 = vector.broadcast %cst_134 : f32 to vector<16x64xf32>
    %361 = arith.subf %359, %360 : vector<16x64xf32>
    %362 = arith.select %358, %356, %361 : vector<16x64xi1>, vector<16x64xf32>
    %c0_135 = arith.constant 0 : index
    %c0_136 = arith.constant 0 : index
    %363 = vector.load %arg23[%c0_135, %c0_136] : memref<2x16xf32, #tpu.memory_space<vmem>>, vector<2x16xf32>
    %cst_137 = arith.constant dense<0.000000e+00> : vector<2x64xf32>
    %364 = tpu.matmul %363, %362, %cst_137 {dimension_numbers = #tpu.dot_dimension_numbers<[1], [0], [0], [1], [0, 0, 1, 1], [], []>} : vector<2x16xf32>, vector<16x64xf32>, vector<2x64xf32> -> vector<2x64xf32>
    %c0_138 = arith.constant 0 : index
    %c0_139 = arith.constant 0 : index
    %365 = vector.load %arg24[%c0_138, %c0_139] : memref<64x64xf32, #tpu.memory_space<vmem>>, vector<64x64xf32>
    %cst_140 = arith.constant dense<0.000000e+00> : vector<2x64xf32>
    %366 = tpu.matmul %364, %365, %cst_140 {dimension_numbers = #tpu.dot_dimension_numbers<[1], [0], [0], [1], [0, 0, 1, 1], [], []>} : vector<2x64xf32>, vector<64x64xf32>, vector<2x64xf32> -> vector<2x64xf32>
    %c0_141 = arith.constant 0 : index
    %c0_142 = arith.constant 0 : index
    %367 = vector.load %arg25[%c0_141, %c0_142] : memref<1x64xf32, #tpu.memory_space<vmem>>, vector<1x64xf32>
    %368 = vector.broadcast %367 : vector<1x64xf32> to vector<2x64xf32>
    %369 = arith.addf %366, %368 : vector<2x64xf32>
    %cst_143 = arith.constant 5.000000e-01 : f32
    %370 = vector.broadcast %cst_143 : f32 to vector<2x64xf32>
    %371 = arith.mulf %370, %369 : vector<2x64xf32>
    %cst_144 = arith.constant 0.707106769 : f32
    %372 = vector.broadcast %cst_144 : f32 to vector<2x64xf32>
    %373 = arith.mulf %369, %372 : vector<2x64xf32>
    %cst_145 = arith.constant 0.000000e+00 : f32
    %374 = vector.broadcast %cst_145 : f32 to vector<2x64xf32>
    %375 = arith.cmpf oge, %373, %374 : vector<2x64xf32>
    %cst_146 = arith.constant 1.000000e+00 : f32
    %cst_147 = arith.constant -1.000000e+00 : f32
    %376 = vector.broadcast %cst_146 : f32 to vector<2x64xf32>
    %377 = vector.broadcast %cst_147 : f32 to vector<2x64xf32>
    %378 = arith.select %375, %376, %377 : vector<2x64xi1>, vector<2x64xf32>
    %379 = math.absf %373 : vector<2x64xf32>
    %cst_148 = arith.constant 0.327591091 : f32
    %380 = vector.broadcast %cst_148 : f32 to vector<2x64xf32>
    %381 = arith.mulf %380, %379 : vector<2x64xf32>
    %cst_149 = arith.constant 1.000000e+00 : f32
    %382 = vector.broadcast %cst_149 : f32 to vector<2x64xf32>
    %383 = arith.addf %382, %381 : vector<2x64xf32>
    %cst_150 = arith.constant 1.000000e+00 : f32
    %384 = vector.broadcast %cst_150 : f32 to vector<2x64xf32>
    %385 = arith.divf %384, %383 : vector<2x64xf32>
    %cst_151 = arith.constant 1.06140542 : f32
    %386 = vector.broadcast %cst_151 : f32 to vector<2x64xf32>
    %387 = arith.mulf %386, %385 : vector<2x64xf32>
    %cst_152 = arith.constant -1.45315206 : f32
    %388 = vector.broadcast %cst_152 : f32 to vector<2x64xf32>
    %389 = arith.addf %387, %388 : vector<2x64xf32>
    %390 = arith.mulf %389, %385 : vector<2x64xf32>
    %cst_153 = arith.constant 1.42141378 : f32
    %391 = vector.broadcast %cst_153 : f32 to vector<2x64xf32>
    %392 = arith.addf %390, %391 : vector<2x64xf32>
    %393 = arith.mulf %392, %385 : vector<2x64xf32>
    %cst_154 = arith.constant -0.284496725 : f32
    %394 = vector.broadcast %cst_154 : f32 to vector<2x64xf32>
    %395 = arith.addf %393, %394 : vector<2x64xf32>
    %396 = arith.mulf %395, %385 : vector<2x64xf32>
    %cst_155 = arith.constant 0.254829586 : f32
    %397 = vector.broadcast %cst_155 : f32 to vector<2x64xf32>
    %398 = arith.addf %396, %397 : vector<2x64xf32>
    %399 = arith.mulf %398, %385 : vector<2x64xf32>
    %cst_156 = arith.constant 0.000000e+00 : f32
    %400 = vector.broadcast %cst_156 : f32 to vector<2x64xf32>
    %401 = arith.subf %400, %379 : vector<2x64xf32>
    %402 = arith.mulf %401, %379 : vector<2x64xf32>
    %403 = math.exp %402 : vector<2x64xf32>
    %404 = arith.mulf %399, %403 : vector<2x64xf32>
    %cst_157 = arith.constant 1.000000e+00 : f32
    %405 = vector.broadcast %cst_157 : f32 to vector<2x64xf32>
    %406 = arith.subf %405, %404 : vector<2x64xf32>
    %407 = arith.mulf %378, %406 : vector<2x64xf32>
    %cst_158 = arith.constant 1.000000e+00 : f32
    %408 = vector.broadcast %cst_158 : f32 to vector<2x64xf32>
    %409 = arith.addf %408, %407 : vector<2x64xf32>
    %410 = arith.mulf %371, %409 : vector<2x64xf32>
    %c0_159 = arith.constant 0 : index
    %c0_160 = arith.constant 0 : index
    %411 = vector.load %arg26[%c0_159, %c0_160] : memref<64x2xf32, #tpu.memory_space<vmem>>, vector<64x2xf32>
    %cst_161 = arith.constant dense<0.000000e+00> : vector<2x2xf32>
    %412 = tpu.matmul %410, %411, %cst_161 {dimension_numbers = #tpu.dot_dimension_numbers<[1], [0], [0], [1], [0, 0, 1, 1], [], []>} : vector<2x64xf32>, vector<64x2xf32>, vector<2x2xf32> -> vector<2x2xf32>
    %c0_162 = arith.constant 0 : index
    %c0_163 = arith.constant 0 : index
    %413 = vector.load %arg27[%c0_162, %c0_163] : memref<1x2xf32, #tpu.memory_space<vmem>>, vector<1x2xf32>
    %414 = vector.broadcast %413 : vector<1x2xf32> to vector<2x2xf32>
    %415 = arith.addf %412, %414 : vector<2x2xf32>
    %c0_164 = arith.constant 0 : index
    %c0_165 = arith.constant 0 : index
    %416 = vector.load %arg29[%c0_164, %c0_165] : memref<2x2xf32, #tpu.memory_space<vmem>>, vector<2x2xf32>
    tpu.vector_store %arg29[%c0_164, %c0_165], %415 {strides = array<i32>} : memref<2x2xf32, #tpu.memory_space<vmem>>, vector<2x2xf32>,
    return
  }
}

</mosaic_0001>

<llo_original>
// kernel: eegnet_gat_forward.1
$region0: #{eegnet_gat_forward.1}
  #allocation0 [shape = 'u32[]', space=smem, size = 0x4, offset = 0x4, fixed_abs, tag = 'smem constant byte address 0x4 - core index']
  #allocation1 [shape = 'u32[72,128]{1,0:T(1,128)}', space=vmem, size = 0x9000, scoped, tag = 'internal scratch']
  #allocation2 [shape = 'bf16[1024,1024]{1,0:T(8,128)(2,1)}', space=vmem, size = 0x200000, scoped, tag = 'scratch operand']
  #allocation3 [shape = 's32[1]{0}', space=sflag, size = 0x4, scoped, tag = 'scratch operand']
  #allocation4 [shape = 'f32[1,1]{1,0:T(1,128)S(1)}', space=vmem, size = 0x200, scoped, tag = 'scoped memory for eegnet_gat_forward.1']
  #allocation39 [shape = 's32[]', space=sflag, size = 0x4, offset = 0, fixed_abs, tag = 'sflag constant byte address 0x0 - dummy sync flag']
  #allocation40 [shape = 's32[]', space=sflag, size = 0x4, offset = 0, fixed_abs, tag = 'sflag constant byte address 0x0 - dummy sync flag']
  #allocation41 [shape = 'u32[]', space=smem, size = 0x4, offset = 0x44, fixed_abs, tag = 'smem constant byte address 0x44 - assertion arg 0']
  #allocation42 [shape = 'u32[]', space=smem, size = 0x4, offset = 0x48, fixed_abs, tag = 'smem constant byte address 0x48 - assertion arg 1']
  %s0 = inlined_call_operand.smem [shape: u32[30], index: -1, kind: input, shape index: {}]
  %s1 = sld [smem:[%s0]]
  %s2 = scalar_lea.smem %s0, 1
  %s3 = sld [smem:[%s2]]
  %s4 = scalar_lea.smem %s0, 2
  %s5 = sld [smem:[%s4]]
  %s6 = scalar_lea.smem %s0, 3
  %s7 = sld [smem:[%s6]]
  %s8 = scalar_lea.smem %s0, 4
  %s9 = sld [smem:[%s8]]
  %s10 = scalar_lea.smem %s0, 5
  %s11 = sld [smem:[%s10]]
  %s12 = scalar_lea.smem %s0, 6
  %s13 = sld [smem:[%s12]]
  %s14 = scalar_lea.smem %s0, 7
  %s15 = sld [smem:[%s14]]
  %s16 = scalar_lea.smem %s0, 8
  %s17 = sld [smem:[%s16]]
  %s18 = scalar_lea.smem %s0, 9
  %s19 = sld [smem:[%s18]]
  %s20 = scalar_lea.smem %s0, 10
  %s21 = sld [smem:[%s20]]
  %s22 = scalar_lea.smem %s0, 11
  %s23 = sld [smem:[%s22]]
  %s24 = scalar_lea.smem %s0, 12
  %s25 = sld [smem:[%s24]]
  %s26 = scalar_lea.smem %s0, 13
  %s27 = sld [smem:[%s26]]
  %s28 = scalar_lea.smem %s0, 14
  %s29 = sld [smem:[%s28]]
  %s30 = scalar_lea.smem %s0, 15
  %s31 = sld [smem:[%s30]]
  %s32 = scalar_lea.smem %s0, 16
  %s33 = sld [smem:[%s32]]
  %s34 = scalar_lea.smem %s0, 17
  %s35 = sld [smem:[%s34]]
  %s36 = scalar_lea.smem %s0, 18
  %s37 = sld [smem:[%s36]]
  %s38 = scalar_lea.smem %s0, 19
  %s39 = sld [smem:[%s38]]
  %s40 = scalar_lea.smem %s0, 20
  %s41 = sld [smem:[%s40]]
  %s42 = scalar_lea.smem %s0, 21
  %s43 = sld [smem:[%s42]]
  %s44 = scalar_lea.smem %s0, 22
  %s45 = sld [smem:[%s44]]
  %s46 = scalar_lea.smem %s0, 23
  %s47 = sld [smem:[%s46]]
  %s48 = scalar_lea.smem %s0, 24
  %s49 = sld [smem:[%s48]]
  %s50 = scalar_lea.smem %s0, 25
  %s51 = sld [smem:[%s50]]
  %s52 = scalar_lea.smem %s0, 26
  %s53 = sld [smem:[%s52]]
  %s54 = scalar_lea.smem %s0, 27
  %s55 = sld [smem:[%s54]]
  %s56 = scalar_lea.smem %s0, 28
  %s57 = sld [smem:[%s56]]
  %s58 = scalar_lea.smem %s0, 29
  %s59 = sld [smem:[%s58]]
  %s60 = sld [smem:[#allocation0]]
  $region210: #{eegnet_gat_forward.1} parent=0
    _
  %s62 = ssub.s32 1, %s60
  %s63 = scalar_select 0, %s62, %s60
  %v64 = vstv %s25
  %65 = vst [vmem:[#allocation4] sm:$0x1] %v64
  $region1: #{eegnet_gat_forward.1} parent=0
    #allocation5 [shape = 'u8[8192]{0}', space=vmem, size = 0x2000, scoped, tag = 'input window, operand 0, single buffered']
    #allocation6 [shape = 's32[1]{0}', space=sflag, size = 0x4, scoped, tag = 'scoped memory for eegnet_gat_forward.1']
    #allocation7 [shape = 's32[1]{0}', space=sflag, size = 0x4, scoped, tag = 'scoped memory for eegnet_gat_forward.1']
    #allocation8 [shape = 'u8[131072]{0}', space=vmem, size = 0x20000, scoped, tag = 'input window, operand 1, single buffered']
    #allocation9 [shape = 's32[1]{0}', space=sflag, size = 0x4, scoped, tag = 'scoped memory for eegnet_gat_forward.1']
    #allocation10 [shape = 'u8[4096]{0}', space=vmem, size = 0x1000, scoped, tag = 'input window, operand 2, single buffered']
    #allocation11 [shape = 'u8[4096]{0}', space=vmem, size = 0x1000, scoped, tag = 'input window, operand 3, single buffered']
    #allocation12 [shape = 's32[1]{0}', space=sflag, size = 0x4, scoped, tag = 'scoped memory for eegnet_gat_forward.1']
    #allocation13 [shape = 'u8[4096]{0}', space=vmem, size = 0x1000, scoped, tag = 'input window, operand 4, single buffered']
    #allocation14 [shape = 'u8[4096]{0}', space=vmem, size = 0x1000, scoped, tag = 'input window, operand 5, single buffered']
    #allocation15 [shape = 's32[1]{0}', space=sflag, size = 0x4, scoped, tag = 'scoped memory for eegnet_gat_forward.1']
    #allocation16 [shape = 'u8[512]{0}', space=vmem, size = 0x400, scoped, tag = 'input window, operand 9, single buffered']
    #allocation17 [shape = 'u8[8192]{0}', space=vmem, size = 0x2000, scoped, tag = 'input window, operand 10, single buffered']
    #allocation18 [shape = 's32[1]{0}', space=sflag, size = 0x4, scoped, tag = 'scoped memory for eegnet_gat_forward.1']
    #allocation19 [shape = 'u8[49152]{0}', space=vmem, size = 0xc000, scoped, tag = 'input window, operand 11, single buffered']
    #allocation20 [shape = 'u8[512]{0}', space=vmem, size = 0x400, scoped, tag = 'input window, operand 13, single buffered']
    #allocation21 [shape = 's32[1]{0}', space=sflag, size = 0x4, scoped, tag = 'scoped memory for eegnet_gat_forward.1']
    #allocation22 [shape = 'u8[512]{0}', space=vmem, size = 0x400, scoped, tag = 'input window, operand 15, single buffered']
    #allocation23 [shape = 'u8[512]{0}', space=vmem, size = 0x400, scoped, tag = 'input window, operand 16, single buffered']
    #allocation24 [shape = 's32[1]{0}', space=sflag, size = 0x4, scoped, tag = 'scoped memory for eegnet_gat_forward.1']
    #allocation25 [shape = 'u8[512]{0}', space=vmem, size = 0x400, scoped, tag = 'input window, operand 17, single buffered']
    #allocation26 [shape = 'u8[65536]{0}', space=vmem, size = 0x10000, scoped, tag = 'input window, operand 18, single buffered']
    #allocation27 [shape = 's32[1]{0}', space=sflag, size = 0x4, scoped, tag = 'scoped memory for eegnet_gat_forward.1']
    #allocation28 [shape = 'u8[512]{0}', space=vmem, size = 0x400, scoped, tag = 'input window, operand 20, single buffered']
    #allocation29 [shape = 'u8[512]{0}', space=vmem, size = 0x400, scoped, tag = 'input window, operand 21, single buffered']
    #allocation30 [shape = 's32[1]{0}', space=sflag, size = 0x4, scoped, tag = 'scoped memory for eegnet_gat_forward.1']
    #allocation31 [shape = 'u8[512]{0}', space=vmem, size = 0x400, scoped, tag = 'input window, operand 22, single buffered']
    #allocation32 [shape = 'u8[1024]{0}', space=vmem, size = 0x400, scoped, tag = 'input window, operand 23, single buffered']
    #allocation33 [shape = 's32[1]{0}', space=sflag, size = 0x4, scoped, tag = 'scoped memory for eegnet_gat_forward.1']
    #allocation34 [shape = 'u8[32768]{0}', space=vmem, size = 0x8000, scoped, tag = 'input window, operand 24, single buffered']
    #allocation35 [shape = 'u8[512]{0}', space=vmem, size = 0x400, scoped, tag = 'input window, operand 25, single buffered']
    #allocation36 [shape = 's32[1]{0}', space=sflag, size = 0x4, scoped, tag = 'scoped memory for eegnet_gat_forward.1']
    #allocation37 [shape = 'u8[512]{0}', space=vmem, size = 0x400, scoped, tag = 'input window, operand 27, single buffered']
    #allocation38 [shape = 'u8[1024]{0}', space=vmem, size = 0x400, scoped, tag = 'output window, operand 0, single buffered']
    %66 = vsyncpa [#allocation6], 0
    %67 = vsyncpa [#allocation9], 0
    %68 = vsyncpa [#allocation12], 0
    %69 = vsyncpa [#allocation15], 0
    %70 = vsyncpa [#allocation18], 0
    %71 = vsyncpa [#allocation21], 0
    %72 = vsyncpa [#allocation24], 0
    %73 = vsyncpa [#allocation27], 0
    %74 = vsyncpa [#allocation30], 0
    %75 = vsyncpa [#allocation33], 0
    %76 = vsyncpa [#allocation36], 0
    %77 = vsyncpa [#allocation7], 0
    // Predicated region
    $region2: #{eegnet_gat_forward.1} parent=1 // pred_check
      _
    $region3: #{eegnet_gat_forward.1} parent=1 // pred_check_branch
      %79 = sbr.rel (0) target = $region5
    $region4: #{eegnet_gat_forward.1} parent=1 // pred_region
      %81 = vsyncadd [#allocation6], 0
      %s82 = sshll.u32 %s1, 4
      %s83 = int_to_ptr.hbm [resolvable:$true] %s82
      %s84 = sshll.u32 [#allocation5], 4
      %s85 = int_to_ptr.vmem [resolvable:$true] %s84
      %90 = dma.hbm_to_vmem [thread:$0]  %s83, 256, %s85, [#allocation6], 128, 128, 8
    $region5: #{eegnet_gat_forward.1} parent=1 // pred_fallthru
      _
    // Predicated region
    $region6: #{eegnet_gat_forward.1} parent=1 // pred_check
      _
    $region7: #{eegnet_gat_forward.1} parent=1 // pred_check_branch
      %92 = sbr.rel (0) target = $region9
    $region8: #{eegnet_gat_forward.1} parent=1 // pred_region
      %94 = vsyncadd [#allocation9], 0
      %s95 = sshll.u32 %s3, 4
      %s96 = int_to_ptr.hbm [resolvable:$true] %s95
      %s97 = sshll.u32 [#allocation8], 4
      %s98 = int_to_ptr.vmem [resolvable:$true] %s97
      %103 = dma.hbm_to_vmem [thread:$0]  %s96, 4096, %s98, [#allocation9], 512, 512, 32
    $region9: #{eegnet_gat_forward.1} parent=1 // pred_fallthru
      _
    // Predicated region
    $region10: #{eegnet_gat_forward.1} parent=1 // pred_check
      _
    $region11: #{eegnet_gat_forward.1} parent=1 // pred_check_branch
      %105 = sbr.rel (0) target = $region13
    $region12: #{eegnet_gat_forward.1} parent=1 // pred_region
      %107 = vsyncadd [#allocation9], 0
      %s109 = sshll.u32 %s5, 4
      %s110 = int_to_ptr.hbm [resolvable:$true] %s109
      %s111 = sshll.u32 [#allocation10], 4
      %s112 = int_to_ptr.vmem [resolvable:$true] %s111
      %114 = dma.hbm_to_vmem [thread:$0]  %s110, 128, %s112, [#allocation9]
    $region13: #{eegnet_gat_forward.1} parent=1 // pred_fallthru
      _
    // Predicated region
    $region14: #{eegnet_gat_forward.1} parent=1 // pred_check
      _
    $region15: #{eegnet_gat_forward.1} parent=1 // pred_check_branch
      %116 = sbr.rel (0) target = $region17
    $region16: #{eegnet_gat_forward.1} parent=1 // pred_region
      %118 = vsyncadd [#allocation12], 0
      %s120 = sshll.u32 %s7, 4
      %s121 = int_to_ptr.hbm [resolvable:$true] %s120
      %s122 = sshll.u32 [#allocation11], 4
      %s123 = int_to_ptr.vmem [resolvable:$true] %s122
      %125 = dma.hbm_to_vmem [thread:$0]  %s121, 128, %s123, [#allocation12]
    $region17: #{eegnet_gat_forward.1} parent=1 // pred_fallthru
      _
    // Predicated region
    $region18: #{eegnet_gat_forward.1} parent=1 // pred_check
      _
    $region19: #{eegnet_gat_forward.1} parent=1 // pred_check_branch
      %127 = sbr.rel (0) target = $region21
    $region20: #{eegnet_gat_forward.1} parent=1 // pred_region
      %129 = vsyncadd [#allocation12], 0
      %s131 = sshll.u32 %s9, 4
      %s132 = int_to_ptr.hbm [resolvable:$true] %s131
      %s133 = sshll.u32 [#allocation13], 4
      %s134 = int_to_ptr.vmem [resolvable:$true] %s133
      %136 = dma.hbm_to_vmem [thread:$0]  %s132, 128, %s134, [#allocation12]
    $region21: #{eegnet_gat_forward.1} parent=1 // pred_fallthru
      _
    // Predicated region
    $region22: #{eegnet_gat_forward.1} parent=1 // pred_check
      _
    $region23: #{eegnet_gat_forward.1} parent=1 // pred_check_branch
      %138 = sbr.rel (0) target = $region25
    $region24: #{eegnet_gat_forward.1} parent=1 // pred_region
      %140 = vsyncadd [#allocation15], 0
      %s142 = sshll.u32 %s11, 4
      %s143 = int_to_ptr.hbm [resolvable:$true] %s142
      %s144 = sshll.u32 [#allocation14], 4
      %s145 = int_to_ptr.vmem [resolvable:$true] %s144
      %147 = dma.hbm_to_vmem [thread:$0]  %s143, 128, %s145, [#allocation15]
    $region25: #{eegnet_gat_forward.1} parent=1 // pred_fallthru
      _
    // Predicated region
    $region26: #{eegnet_gat_forward.1} parent=1 // pred_check
      _
    $region27: #{eegnet_gat_forward.1} parent=1 // pred_check_branch
      %149 = sbr.rel (0) target = $region29
    $region28: #{eegnet_gat_forward.1} parent=1 // pred_region
      _
    $region29: #{eegnet_gat_forward.1} parent=1 // pred_fallthru
      _
    // Predicated region
    $region30: #{eegnet_gat_forward.1} parent=1 // pred_check
      _
    $region31: #{eegnet_gat_forward.1} parent=1 // pred_check_branch
      %151 = sbr.rel (0) target = $region33
    $region32: #{eegnet_gat_forward.1} parent=1 // pred_region
      _
    $region33: #{eegnet_gat_forward.1} parent=1 // pred_fallthru
      _
    // Predicated region
    $region34: #{eegnet_gat_forward.1} parent=1 // pred_check
      _
    $region35: #{eegnet_gat_forward.1} parent=1 // pred_check_branch
      %153 = sbr.rel (0) target = $region37
    $region36: #{eegnet_gat_forward.1} parent=1 // pred_region
      _
    $region37: #{eegnet_gat_forward.1} parent=1 // pred_fallthru
      _
    // Predicated region
    $region38: #{eegnet_gat_forward.1} parent=1 // pred_check
      _
    $region39: #{eegnet_gat_forward.1} parent=1 // pred_check_branch
      %155 = sbr.rel (0) target = $region41
    $region40: #{eegnet_gat_forward.1} parent=1 // pred_region
      %157 = vsyncadd [#allocation15], 0
      %s159 = sshll.u32 %s19, 4
      %s160 = int_to_ptr.hbm [resolvable:$true] %s159
      %s161 = sshll.u32 [#allocation16], 4
      %s162 = int_to_ptr.vmem [resolvable:$true] %s161
      %164 = dma.hbm_to_vmem [thread:$0]  %s160, 16, %s162, [#allocation15]
    $region41: #{eegnet_gat_forward.1} parent=1 // pred_fallthru
      _
    // Predicated region
    $region42: #{eegnet_gat_forward.1} parent=1 // pred_check
      _
    $region43: #{eegnet_gat_forward.1} parent=1 // pred_check_branch
      %166 = sbr.rel (0) target = $region45
    $region44: #{eegnet_gat_forward.1} parent=1 // pred_region
      %168 = vsyncadd [#allocation18], 0
      %s169 = sshll.u32 %s21, 4
      %s170 = int_to_ptr.hbm [resolvable:$true] %s169
      %s171 = sshll.u32 [#allocation17], 4
      %s172 = int_to_ptr.vmem [resolvable:$true] %s171
      %177 = dma.hbm_to_vmem [thread:$0]  %s170, 256, %s172, [#allocation18], 128, 128, 8
    $region45: #{eegnet_gat_forward.1} parent=1 // pred_fallthru
      _
    // Predicated region
    $region46: #{eegnet_gat_forward.1} parent=1 // pred_check
      _
    $region47: #{eegnet_gat_forward.1} parent=1 // pred_check_branch
      %179 = sbr.rel (0) target = $region49
    $region48: #{eegnet_gat_forward.1} parent=1 // pred_region
      %181 = vsyncadd [#allocation18], 0
      %s182 = sshll.u32 %s23, 4
      %s183 = int_to_ptr.hbm [resolvable:$true] %s182
      %s184 = sshll.u32 [#allocation19], 4
      %s185 = int_to_ptr.vmem [resolvable:$true] %s184
      %190 = dma.hbm_to_vmem [thread:$0]  %s183, 1536, %s185, [#allocation18], 384, 384, 24
    $region49: #{eegnet_gat_forward.1} parent=1 // pred_fallthru
      _
    // Predicated region
    $region50: #{eegnet_gat_forward.1} parent=1 // pred_check
      _
    $region51: #{eegnet_gat_forward.1} parent=1 // pred_check_branch
      %192 = sbr.rel (0) target = $region53
    $region52: #{eegnet_gat_forward.1} parent=1 // pred_region
      _
    $region53: #{eegnet_gat_forward.1} parent=1 // pred_fallthru
      _
    // Predicated region
    $region54: #{eegnet_gat_forward.1} parent=1 // pred_check
      _
    $region55: #{eegnet_gat_forward.1} parent=1 // pred_check_branch
      %194 = sbr.rel (0) target = $region57
    $region56: #{eegnet_gat_forward.1} parent=1 // pred_region
      %196 = vsyncadd [#allocation21], 0
      %s198 = sshll.u32 %s27, 4
      %s199 = int_to_ptr.hbm [resolvable:$true] %s198
      %s200 = sshll.u32 [#allocation20], 4
      %s201 = int_to_ptr.vmem [resolvable:$true] %s200
      %203 = dma.hbm_to_vmem [thread:$0]  %s199, 16, %s201, [#allocation21]
    $region57: #{eegnet_gat_forward.1} parent=1 // pred_fallthru
      _
    // Predicated region
    $region58: #{eegnet_gat_forward.1} parent=1 // pred_check
      _
    $region59: #{eegnet_gat_forward.1} parent=1 // pred_check_branch
      %205 = sbr.rel (0) target = $region61
    $region60: #{eegnet_gat_forward.1} parent=1 // pred_region
      _
    $region61: #{eegnet_gat_forward.1} parent=1 // pred_fallthru
      _
    // Predicated region
    $region62: #{eegnet_gat_forward.1} parent=1 // pred_check
      _
    $region63: #{eegnet_gat_forward.1} parent=1 // pred_check_branch
      %207 = sbr.rel (0) target = $region65
    $region64: #{eegnet_gat_forward.1} parent=1 // pred_region
      %209 = vsyncadd [#allocation21], 0
      %s211 = sshll.u32 %s31, 4
      %s212 = int_to_ptr.hbm [resolvable:$true] %s211
      %s213 = sshll.u32 [#allocation22], 4
      %s214 = int_to_ptr.vmem [resolvable:$true] %s213
      %216 = dma.hbm_to_vmem [thread:$0]  %s212, 16, %s214, [#allocation21]
    $region65: #{eegnet_gat_forward.1} parent=1 // pred_fallthru
      _
    // Predicated region
    $region66: #{eegnet_gat_forward.1} parent=1 // pred_check
      _
    $region67: #{eegnet_gat_forward.1} parent=1 // pred_check_branch
      %218 = sbr.rel (0) target = $region69
    $region68: #{eegnet_gat_forward.1} parent=1 // pred_region
      %220 = vsyncadd [#allocation24], 0
      %s222 = sshll.u32 %s33, 4
      %s223 = int_to_ptr.hbm [resolvable:$true] %s222
      %s224 = sshll.u32 [#allocation23], 4
      %s225 = int_to_ptr.vmem [resolvable:$true] %s224
      %227 = dma.hbm_to_vmem [thread:$0]  %s223, 16, %s225, [#allocation24]
    $region69: #{eegnet_gat_forward.1} parent=1 // pred_fallthru
      _
    // Predicated region
    $region70: #{eegnet_gat_forward.1} parent=1 // pred_check
      _
    $region71: #{eegnet_gat_forward.1} parent=1 // pred_check_branch
      %229 = sbr.rel (0) target = $region73
    $region72: #{eegnet_gat_forward.1} parent=1 // pred_region
      %231 = vsyncadd [#allocation24], 0
      %s233 = sshll.u32 %s35, 4
      %s234 = int_to_ptr.hbm [resolvable:$true] %s233
      %s235 = sshll.u32 [#allocation25], 4
      %s236 = int_to_ptr.vmem [resolvable:$true] %s235
      %238 = dma.hbm_to_vmem [thread:$0]  %s234, 16, %s236, [#allocation24]
    $region73: #{eegnet_gat_forward.1} parent=1 // pred_fallthru
      _
    // Predicated region
    $region74: #{eegnet_gat_forward.1} parent=1 // pred_check
      _
    $region75: #{eegnet_gat_forward.1} parent=1 // pred_check_branch
      %240 = sbr.rel (0) target = $region77
    $region76: #{eegnet_gat_forward.1} parent=1 // pred_region
      %242 = vsyncadd [#allocation27], 0
      %s243 = sshll.u32 %s37, 4
      %s244 = int_to_ptr.hbm [resolvable:$true] %s243
      %s245 = sshll.u32 [#allocation26], 4
      %s246 = int_to_ptr.vmem [resolvable:$true] %s245
      %251 = dma.hbm_to_vmem [thread:$0]  %s244, 2048, %s246, [#allocation27], 256, 256, 16
    $region77: #{eegnet_gat_forward.1} parent=1 // pred_fallthru
      _
    // Predicated region
    $region78: #{eegnet_gat_forward.1} parent=1 // pred_check
      _
    $region79: #{eegnet_gat_forward.1} parent=1 // pred_check_branch
      %253 = sbr.rel (0) target = $region81
    $region80: #{eegnet_gat_forward.1} parent=1 // pred_region
      _
    $region81: #{eegnet_gat_forward.1} parent=1 // pred_fallthru
      _
    // Predicated region
    $region82: #{eegnet_gat_forward.1} parent=1 // pred_check
      _
    $region83: #{eegnet_gat_forward.1} parent=1 // pred_check_branch
      %255 = sbr.rel (0) target = $region85
    $region84: #{eegnet_gat_forward.1} parent=1 // pred_region
      %257 = vsyncadd [#allocation27], 0
      %s259 = sshll.u32 %s41, 4
      %s260 = int_to_ptr.hbm [resolvable:$true] %s259
      %s261 = sshll.u32 [#allocation28], 4
      %s262 = int_to_ptr.vmem [resolvable:$true] %s261
      %264 = dma.hbm_to_vmem [thread:$0]  %s260, 16, %s262, [#allocation27]
    $region85: #{eegnet_gat_forward.1} parent=1 // pred_fallthru
      _
    // Predicated region
    $region86: #{eegnet_gat_forward.1} parent=1 // pred_check
      _
    $region87: #{eegnet_gat_forward.1} parent=1 // pred_check_branch
      %266 = sbr.rel (0) target = $region89
    $region88: #{eegnet_gat_forward.1} parent=1 // pred_region
      %268 = vsyncadd [#allocation30], 0
      %s270 = sshll.u32 %s43, 4
      %s271 = int_to_ptr.hbm [resolvable:$true] %s270
      %s272 = sshll.u32 [#allocation29], 4
      %s273 = int_to_ptr.vmem [resolvable:$true] %s272
      %275 = dma.hbm_to_vmem [thread:$0]  %s271, 16, %s273, [#allocation30]
    $region89: #{eegnet_gat_forward.1} parent=1 // pred_fallthru
      _
    // Predicated region
    $region90: #{eegnet_gat_forward.1} parent=1 // pred_check
      _
    $region91: #{eegnet_gat_forward.1} parent=1 // pred_check_branch
      %277 = sbr.rel (0) target = $region93
    $region92: #{eegnet_gat_forward.1} parent=1 // pred_region
      %279 = vsyncadd [#allocation30], 0
      %s281 = sshll.u32 %s45, 4
      %s282 = int_to_ptr.hbm [resolvable:$true] %s281
      %s283 = sshll.u32 [#allocation31], 4
      %s284 = int_to_ptr.vmem [resolvable:$true] %s283
      %286 = dma.hbm_to_vmem [thread:$0]  %s282, 16, %s284, [#allocation30]
    $region93: #{eegnet_gat_forward.1} parent=1 // pred_fallthru
      _
    // Predicated region
    $region94: #{eegnet_gat_forward.1} parent=1 // pred_check
      _
    $region95: #{eegnet_gat_forward.1} parent=1 // pred_check_branch
      %288 = sbr.rel (0) target = $region97
    $region96: #{eegnet_gat_forward.1} parent=1 // pred_region
      %290 = vsyncadd [#allocation33], 0
      %s292 = sshll.u32 %s47, 4
      %s293 = int_to_ptr.hbm [resolvable:$true] %s292
      %s294 = sshll.u32 [#allocation32], 4
      %s295 = int_to_ptr.vmem [resolvable:$true] %s294
      %297 = dma.hbm_to_vmem [thread:$0]  %s293, 32, %s295, [#allocation33]
    $region97: #{eegnet_gat_forward.1} parent=1 // pred_fallthru
      _
    // Predicated region
    $region98: #{eegnet_gat_forward.1} parent=1 // pred_check
      _
    $region99: #{eegnet_gat_forward.1} parent=1 // pred_check_branch
      %299 = sbr.rel (0) target = $region101
    $region100: #{eegnet_gat_forward.1} parent=1 // pred_region
      %301 = vsyncadd [#allocation33], 0
      %s302 = sshll.u32 %s49, 4
      %s303 = int_to_ptr.hbm [resolvable:$true] %s302
      %s304 = sshll.u32 [#allocation34], 4
      %s305 = int_to_ptr.vmem [resolvable:$true] %s304
      %310 = dma.hbm_to_vmem [thread:$0]  %s303, 1024, %s305, [#allocation33], 128, 128, 8
    $region101: #{eegnet_gat_forward.1} parent=1 // pred_fallthru
      _
    // Predicated region
    $region102: #{eegnet_gat_forward.1} parent=1 // pred_check
      _
    $region103: #{eegnet_gat_forward.1} parent=1 // pred_check_branch
      %312 = sbr.rel (0) target = $region105
    $region104: #{eegnet_gat_forward.1} parent=1 // pred_region
      %314 = vsyncadd [#allocation36], 0
      %s316 = sshll.u32 %s51, 4
      %s317 = int_to_ptr.hbm [resolvable:$true] %s316
      %s318 = sshll.u32 [#allocation35], 4
      %s319 = int_to_ptr.vmem [resolvable:$true] %s318
      %321 = dma.hbm_to_vmem [thread:$0]  %s317, 16, %s319, [#allocation36]
    $region105: #{eegnet_gat_forward.1} parent=1 // pred_fallthru
      _
    // Predicated region
    $region106: #{eegnet_gat_forward.1} parent=1 // pred_check
      _
    $region107: #{eegnet_gat_forward.1} parent=1 // pred_check_branch
      %323 = sbr.rel (0) target = $region109
    $region108: #{eegnet_gat_forward.1} parent=1 // pred_region
      _
    $region109: #{eegnet_gat_forward.1} parent=1 // pred_fallthru
      _
    // Predicated region
    $region110: #{eegnet_gat_forward.1} parent=1 // pred_check
      _
    $region111: #{eegnet_gat_forward.1} parent=1 // pred_check_branch
      %325 = sbr.rel (0) target = $region113
    $region112: #{eegnet_gat_forward.1} parent=1 // pred_region
      %327 = vsyncadd [#allocation36], 0
      %s329 = sshll.u32 %s55, 4
      %s330 = int_to_ptr.hbm [resolvable:$true] %s329
      %s331 = sshll.u32 [#allocation37], 4
      %s332 = int_to_ptr.vmem [resolvable:$true] %s331
      %334 = dma.hbm_to_vmem [thread:$0]  %s330, 16, %s332, [#allocation36]
    $region113: #{eegnet_gat_forward.1} parent=1 // pred_fallthru
      _
    // Predicated region
    $region114: #{eegnet_gat_forward.1} parent=1 // pred_check
      _
    $region115: #{eegnet_gat_forward.1} parent=1 // pred_check_branch
      %336 = sbr.rel (0) target = $region117
    $region116: #{eegnet_gat_forward.1} parent=1 // pred_region
      %338 = dma.done [#allocation6], 256
    $region117: #{eegnet_gat_forward.1} parent=1 // pred_fallthru
      _
    // Predicated region
    $region118: #{eegnet_gat_forward.1} parent=1 // pred_check
      _
    $region119: #{eegnet_gat_forward.1} parent=1 // pred_check_branch
      %340 = sbr.rel (0) target = $region121
    $region120: #{eegnet_gat_forward.1} parent=1 // pred_region
      %342 = dma.done [#allocation9], 4096
    $region121: #{eegnet_gat_forward.1} parent=1 // pred_fallthru
      _
    // Predicated region
    $region122: #{eegnet_gat_forward.1} parent=1 // pred_check
      _
    $region123: #{eegnet_gat_forward.1} parent=1 // pred_check_branch
      %344 = sbr.rel (0) target = $region125
    $region124: #{eegnet_gat_forward.1} parent=1 // pred_region
      %346 = dma.done [#allocation9], 128
    $region125: #{eegnet_gat_forward.1} parent=1 // pred_fallthru
      _
    // Predicated region
    $region126: #{eegnet_gat_forward.1} parent=1 // pred_check
      _
    $region127: #{eegnet_gat_forward.1} parent=1 // pred_check_branch
      %348 = sbr.rel (0) target = $region129
    $region128: #{eegnet_gat_forward.1} parent=1 // pred_region
      %350 = dma.done [#allocation12], 128
    $region129: #{eegnet_gat_forward.1} parent=1 // pred_fallthru
      _
    // Predicated region
    $region130: #{eegnet_gat_forward.1} parent=1 // pred_check
      _
    $region131: #{eegnet_gat_forward.1} parent=1 // pred_check_branch
      %352 = sbr.rel (0) target = $region133
    $region132: #{eegnet_gat_forward.1} parent=1 // pred_region
      %354 = dma.done [#allocation12], 128
    $region133: #{eegnet_gat_forward.1} parent=1 // pred_fallthru
      _
    // Predicated region
    $region134: #{eegnet_gat_forward.1} parent=1 // pred_check
      _
    $region135: #{eegnet_gat_forward.1} parent=1 // pred_check_branch
      %356 = sbr.rel (0) target = $region137
    $region136: #{eegnet_gat_forward.1} parent=1 // pred_region
      %358 = dma.done [#allocation15], 128
    $region137: #{eegnet_gat_forward.1} parent=1 // pred_fallthru
      _
    // Predicated region
    $region138: #{eegnet_gat_forward.1} parent=1 // pred_check
      _
    $region139: #{eegnet_gat_forward.1} parent=1 // pred_check_branch
      %360 = sbr.rel (0) target = $region141
    $region140: #{eegnet_gat_forward.1} parent=1 // pred_region
      %362 = dma.done [#allocation15], 16
    $region141: #{eegnet_gat_forward.1} parent=1 // pred_fallthru
      _
    // Predicated region
    $region142: #{eegnet_gat_forward.1} parent=1 // pred_check
      _
    $region143: #{eegnet_gat_forward.1} parent=1 // pred_check_branch
      %364 = sbr.rel (0) target = $region145
    $region144: #{eegnet_gat_forward.1} parent=1 // pred_region
      %366 = dma.done [#allocation18], 256
    $region145: #{eegnet_gat_forward.1} parent=1 // pred_fallthru
      _
    // Predicated region
    $region146: #{eegnet_gat_forward.1} parent=1 // pred_check
      _
    $region147: #{eegnet_gat_forward.1} parent=1 // pred_check_branch
      %368 = sbr.rel (0) target = $region149
    $region148: #{eegnet_gat_forward.1} parent=1 // pred_region
      %370 = dma.done [#allocation18], 1536
    $region149: #{eegnet_gat_forward.1} parent=1 // pred_fallthru
      _
    // Predicated region
    $region150: #{eegnet_gat_forward.1} parent=1 // pred_check
      _
    $region151: #{eegnet_gat_forward.1} parent=1 // pred_check_branch
      %372 = sbr.rel (0) target = $region153
    $region152: #{eegnet_gat_forward.1} parent=1 // pred_region
      %374 = dma.done [#allocation21], 16
    $region153: #{eegnet_gat_forward.1} parent=1 // pred_fallthru
      _
    // Predicated region
    $region154: #{eegnet_gat_forward.1} parent=1 // pred_check
      _
    $region155: #{eegnet_gat_forward.1} parent=1 // pred_check_branch
      %376 = sbr.rel (0) target = $region157
    $region156: #{eegnet_gat_forward.1} parent=1 // pred_region
      %378 = dma.done [#allocation21], 16
    $region157: #{eegnet_gat_forward.1} parent=1 // pred_fallthru
      _
    // Predicated region
    $region158: #{eegnet_gat_forward.1} parent=1 // pred_check
      _
    $region159: #{eegnet_gat_forward.1} parent=1 // pred_check_branch
      %380 = sbr.rel (0) target = $region161
    $region160: #{eegnet_gat_forward.1} parent=1 // pred_region
      %382 = dma.done [#allocation24], 16
    $region161: #{eegnet_gat_forward.1} parent=1 // pred_fallthru
      _
    // Predicated region
    $region162: #{eegnet_gat_forward.1} parent=1 // pred_check
      _
    $region163: #{eegnet_gat_forward.1} parent=1 // pred_check_branch
      %384 = sbr.rel (0) target = $region165
    $region164: #{eegnet_gat_forward.1} parent=1 // pred_region
      %386 = dma.done [#allocation24], 16
    $region165: #{eegnet_gat_forward.1} parent=1 // pred_fallthru
      _
    // Predicated region
    $region166: #{eegnet_gat_forward.1} parent=1 // pred_check
      _
    $region167: #{eegnet_gat_forward.1} parent=1 // pred_check_branch
      %388 = sbr.rel (0) target = $region169
    $region168: #{eegnet_gat_forward.1} parent=1 // pred_region
      %390 = dma.done [#allocation27], 2048
    $region169: #{eegnet_gat_forward.1} parent=1 // pred_fallthru
      _
    // Predicated region
    $region170: #{eegnet_gat_forward.1} parent=1 // pred_check
      _
    $region171: #{eegnet_gat_forward.1} parent=1 // pred_check_branch
      %392 = sbr.rel (0) target = $region173
    $region172: #{eegnet_gat_forward.1} parent=1 // pred_region
      %394 = dma.done [#allocation27], 16
    $region173: #{eegnet_gat_forward.1} parent=1 // pred_fallthru
      _
    // Predicated region
    $region174: #{eegnet_gat_forward.1} parent=1 // pred_check
      _
    $region175: #{eegnet_gat_forward.1} parent=1 // pred_check_branch
      %396 = sbr.rel (0) target = $region177
    $region176: #{eegnet_gat_forward.1} parent=1 // pred_region
      %398 = dma.done [#allocation30], 16
    $region177: #{eegnet_gat_forward.1} parent=1 // pred_fallthru
      _
    // Predicated region
    $region178: #{eegnet_gat_forward.1} parent=1 // pred_check
      _
    $region179: #{eegnet_gat_forward.1} parent=1 // pred_check_branch
      %400 = sbr.rel (0) target = $region181
    $region180: #{eegnet_gat_forward.1} parent=1 // pred_region
      %402 = dma.done [#allocation30], 16
    $region181: #{eegnet_gat_forward.1} parent=1 // pred_fallthru
      _
    // Predicated region
    $region182: #{eegnet_gat_forward.1} parent=1 // pred_check
      _
    $region183: #{eegnet_gat_forward.1} parent=1 // pred_check_branch
      %404 = sbr.rel (0) target = $region185
    $region184: #{eegnet_gat_forward.1} parent=1 // pred_region
      %406 = dma.done [#allocation33], 32
    $region185: #{eegnet_gat_forward.1} parent=1 // pred_fallthru
      _
    // Predicated region
    $region186: #{eegnet_gat_forward.1} parent=1 // pred_check
      _
    $region187: #{eegnet_gat_forward.1} parent=1 // pred_check_branch
      %408 = sbr.rel (0) target = $region189
    $region188: #{eegnet_gat_forward.1} parent=1 // pred_region
      %410 = dma.done [#allocation33], 1024
    $region189: #{eegnet_gat_forward.1} parent=1 // pred_fallthru
      _
    // Predicated region
    $region190: #{eegnet_gat_forward.1} parent=1 // pred_check
      _
    $region191: #{eegnet_gat_forward.1} parent=1 // pred_check_branch
      %412 = sbr.rel (0) target = $region193
    $region192: #{eegnet_gat_forward.1} parent=1 // pred_region
      %414 = dma.done [#allocation36], 16
    $region193: #{eegnet_gat_forward.1} parent=1 // pred_fallthru
      _
    // Predicated region
    $region194: #{eegnet_gat_forward.1} parent=1 // pred_check
      _
    $region195: #{eegnet_gat_forward.1} parent=1 // pred_check_branch
      %416 = sbr.rel (0) target = $region197
    $region196: #{eegnet_gat_forward.1} parent=1 // pred_region
      %418 = dma.done [#allocation36], 16
    $region197: #{eegnet_gat_forward.1} parent=1 // pred_fallthru
      _
    // Predicated region
    $region198: #{eegnet_gat_forward.1} parent=1 // pred_check
      _
    $region199: #{eegnet_gat_forward.1} parent=1 // pred_check_branch
      %421 = sbr.rel target = $region201
    $region200: #{eegnet_gat_forward.1} parent=1 // pred_region
      %422 = sst [smem:[#allocation41]] [#allocation40]
      %423 = sst [smem:[#allocation42]] [#allocation39]
    $region201: #{eegnet_gat_forward.1} parent=1 // pred_fallthru
      _
    %425 = shalt.err (0)
    %s427 = sshll.u32 %s57, 4
    %s428 = int_to_ptr.hbm [resolvable:$true] %s427
    %s429 = sshll.u32 [#allocation2], 4
    %s430 = int_to_ptr.vmem [resolvable:$true] %s429
    %432 = dma.hbm_to_vmem [thread:$0]  %s428, 65536, %s430, [#allocation3]
    %v433 = vld [vmem:[#allocation5] sm:$0xff]
    %v434 = vld [vmem:[#allocation5 + $0x8] sm:$0xff]
    %v435 = vpack.c.bf16 %v434, %v433
    %v436 = vld [vmem:[#allocation8] sm:$0xff]
    %v437 = vld [vmem:[#allocation8 + $0x8] sm:$0xff]
    %v438 = vld [vmem:[#allocation8 + $0x10] sm:$0xff]
    %v439 = vld [vmem:[#allocation8 + $0x18] sm:$0xff]
    %v440 = vld [vmem:[#allocation8 + $0x20] sm:$0xff]
    %v441 = vld [vmem:[#allocation8 + $0x28] sm:$0xff]
    %v442 = vld [vmem:[#allocation8 + $0x30] sm:$0xff]
    %v443 = vld [vmem:[#allocation8 + $0x38] sm:$0xff]
    %v444 = vld [vmem:[#allocation8 + $0x40] sm:$0xff]
    %v445 = vld [vmem:[#allocation8 + $0x48] sm:$0xff]
    %v446 = vld [vmem:[#allocation8 + $0x50] sm:$0xff]
    %v447 = vld [vmem:[#allocation8 + $0x58] sm:$0xff]
    %v448 = vld [vmem:[#allocation8 + $0x60] sm:$0xff]
    %v449 = vld [vmem:[#allocation8 + $0x68] sm:$0xff]
    %v450 = vld [vmem:[#allocation8 + $0x70] sm:$0xff]
    %v451 = vld [vmem:[#allocation8 + $0x78] sm:$0xff]
    %v452 = vld [vmem:[#allocation8 + $0x80] sm:$0xff]
    %v453 = vld [vmem:[#allocation8 + $0x88] sm:$0xff]
    %v454 = vld [vmem:[#allocation8 + $0x90] sm:$0xff]
    %v455 = vld [vmem:[#allocation8 + $0x98] sm:$0xff]
    %v456 = vld [vmem:[#allocation8 + $0xa0] sm:$0xff]
    %v457 = vld [vmem:[#allocation8 + $0xa8] sm:$0xff]
    %v458 = vld [vmem:[#allocation8 + $0xb0] sm:$0xff]
    %v459 = vld [vmem:[#allocation8 + $0xb8] sm:$0xff]
    %v460 = vld [vmem:[#allocation8 + $0xc0] sm:$0xff]
    %v461 = vld [vmem:[#allocation8 + $0xc8] sm:$0xff]
    %v462 = vld [vmem:[#allocation8 + $0xd0] sm:$0xff]
    %v463 = vld [vmem:[#allocation8 + $0xd8] sm:$0xff]
    %v464 = vld [vmem:[#allocation8 + $0xe0] sm:$0xff]
    %v465 = vld [vmem:[#allocation8 + $0xe8] sm:$0xff]
    %v466 = vld [vmem:[#allocation8 + $0xf0] sm:$0xff]
    %v467 = vld [vmem:[#allocation8 + $0xf8] sm:$0xff]
    %v500 = vunpack.c.l.b16 %v436
    %v501 = vunpack.c.h.b16 %v436
    %v502 = vunpack.c.l.b16 %v437
    %v503 = vunpack.c.h.b16 %v437
    %v504 = vunpack.c.l.b16 %v438
    %v505 = vunpack.c.h.b16 %v438
    %v506 = vunpack.c.l.b16 %v439
    %v507 = vunpack.c.h.b16 %v439
    %v508 = vunpack.c.l.b16 %v440
    %v509 = vunpack.c.h.b16 %v440
    %v510 = vunpack.c.l.b16 %v441
    %v511 = vunpack.c.h.b16 %v441
    %v512 = vunpack.c.l.b16 %v442
    %v513 = vunpack.c.h.b16 %v442
    %v514 = vunpack.c.l.b16 %v443
    %v515 = vunpack.c.h.b16 %v443
    %v516 = vunpack.c.l.b16 %v444
    %v517 = vunpack.c.h.b16 %v444
    %v518 = vunpack.c.l.b16 %v445
    %v519 = vunpack.c.h.b16 %v445
    %v520 = vunpack.c.l.b16 %v446
    %v521 = vunpack.c.h.b16 %v446
    %v522 = vunpack.c.l.b16 %v447
    %v523 = vunpack.c.h.b16 %v447
    %v524 = vunpack.c.l.b16 %v448
    %v525 = vunpack.c.h.b16 %v448
    %v526 = vunpack.c.l.b16 %v449
    %v527 = vunpack.c.h.b16 %v449
    %v528 = vunpack.c.l.b16 %v450
    %v529 = vunpack.c.h.b16 %v450
    %v530 = vunpack.c.l.b16 %v451
    %v531 = vunpack.c.h.b16 %v451
    %v532 = vunpack.c.l.b16 %v452
    %v533 = vunpack.c.h.b16 %v452
    %v534 = vunpack.c.l.b16 %v453
    %v535 = vunpack.c.h.b16 %v453
    %v536 = vunpack.c.l.b16 %v454
    %v537 = vunpack.c.h.b16 %v454
    %v538 = vunpack.c.l.b16 %v455
    %v539 = vunpack.c.h.b16 %v455
    %v540 = vunpack.c.l.b16 %v456
    %v541 = vunpack.c.h.b16 %v456
    %v542 = vunpack.c.l.b16 %v457
    %v543 = vunpack.c.h.b16 %v457
    %v544 = vunpack.c.l.b16 %v458
    %v545 = vunpack.c.h.b16 %v458
    %v546 = vunpack.c.l.b16 %v459
    %v547 = vunpack.c.h.b16 %v459
    %v548 = vunpack.c.l.b16 %v460
    %v549 = vunpack.c.h.b16 %v460
    %v550 = vunpack.c.l.b16 %v461
    %v551 = vunpack.c.h.b16 %v461
    %v552 = vunpack.c.l.b16 %v462
    %v553 = vunpack.c.h.b16 %v462
    %v554 = vunpack.c.l.b16 %v463
    %v555 = vunpack.c.h.b16 %v463
    %v556 = vunpack.c.l.b16 %v464
    %v557 = vunpack.c.h.b16 %v464
    %v558 = vunpack.c.l.b16 %v465
    %v559 = vunpack.c.h.b16 %v465
    %v560 = vunpack.c.l.b16 %v466
    %v561 = vunpack.c.h.b16 %v466
    %v562 = vunpack.c.l.b16 %v467
    %v563 = vunpack.c.h.b16 %v467
    %v564 = vpack.c.b16 %v508, %v500
    %v565 = vpack.c.b16 %v509, %v501
    %v566 = vpack.c.b16 %v510, %v502
    %v567 = vpack.c.b16 %v511, %v503
    %v568 = vpack.c.b16 %v512, %v504
    %v569 = vpack.c.b16 %v513, %v505
    %v570 = vpack.c.b16 %v514, %v506
    %v571 = vpack.c.b16 %v515, %v507
    %v572 = vpack.c.b16 %v524, %v516
    %v573 = vpack.c.b16 %v525, %v517
    %v574 = vpack.c.b16 %v526, %v518
    %v575 = vpack.c.b16 %v527, %v519
    %v576 = vpack.c.b16 %v528, %v520
    %v577 = vpack.c.b16 %v529, %v521
    %v578 = vpack.c.b16 %v530, %v522
    %v579 = vpack.c.b16 %v531, %v523
    %v580 = vpack.c.b16 %v540, %v532
    %v581 = vpack.c.b16 %v541, %v533
    %v582 = vpack.c.b16 %v542, %v534
    %v583 = vpack.c.b16 %v543, %v535
    %v584 = vpack.c.b16 %v544, %v536
    %v585 = vpack.c.b16 %v545, %v537
    %v586 = vpack.c.b16 %v546, %v538
    %v587 = vpack.c.b16 %v547, %v539
    %v588 = vpack.c.b16 %v556, %v548
    %v589 = vpack.c.b16 %v557, %v549
    %v590 = vpack.c.b16 %v558, %v550
    %v591 = vpack.c.b16 %v559, %v551
    %v592 = vpack.c.b16 %v560, %v552
    %v593 = vpack.c.b16 %v561, %v553
    %v594 = vpack.c.b16 %v562, %v554
    %v595 = vpack.c.b16 %v563, %v555
    %vm628 = vcmask 523264
    %v630 = vsel %vm628, %v435, 0
    %632 = vmatpush.bf16.msra.mxu0 0
    %633 = vmatpush.bf16.msra.mxu0 0
    %634 = vmatpush.bf16.msra.mxu0 0
    %635 = vmatpush.bf16.msra.mxu0 0
    %636 = vmatpush.bf16.msra.mxu0 %v588
    %637 = vmatpush.bf16.msra.mxu0 %v580
    %638 = vmatpush.bf16.msra.mxu0 %v572
    %639 = vmatpush.bf16.msra.mxu0 %v564
    %640 = vmatmul.bf16.gmra.mxu0 %v630
    %v641 = vpop.f32.mrf.mxu0
    %v642 = vadd.f32 0.0, %v641
    %v643 = vpop.f32.mrf.mxu0
    %v644 = vadd.f32 0.0, %v643
    %645 = vdwg.mxu0
    %646 = vmatpush.bf16.msra.mxu0 0
    %647 = vmatpush.bf16.msra.mxu0 0
    %648 = vmatpush.bf16.msra.mxu0 0
    %649 = vmatpush.bf16.msra.mxu0 0
    %650 = vmatpush.bf16.msra.mxu0 %v589
    %651 = vmatpush.bf16.msra.mxu0 %v581
    %652 = vmatpush.bf16.msra.mxu0 %v573
    %653 = vmatpush.bf16.msra.mxu0 %v565
    %654 = vmatmul.bf16.gmra.mxu0 %v630
    %v655 = vpop.f32.mrf.mxu0
    %v656 = vadd.f32 0.0, %v655
    %v657 = vpop.f32.mrf.mxu0
    %v658 = vadd.f32 0.0, %v657
    %659 = vdwg.mxu0
    %660 = vmatpush.bf16.msra.mxu0 0
    %661 = vmatpush.bf16.msra.mxu0 0
    %662 = vmatpush.bf16.msra.mxu0 0
    %663 = vmatpush.bf16.msra.mxu0 0
    %664 = vmatpush.bf16.msra.mxu0 %v590
    %665 = vmatpush.bf16.msra.mxu0 %v582
    %666 = vmatpush.bf16.msra.mxu0 %v574
    %667 = vmatpush.bf16.msra.mxu0 %v566
    %668 = vmatmul.bf16.gmra.mxu0 %v630
    %v669 = vpop.f32.mrf.mxu0
    %v670 = vadd.f32 0.0, %v669
    %v671 = vpop.f32.mrf.mxu0
    %v672 = vadd.f32 0.0, %v671
    %673 = vdwg.mxu0
    %674 = vmatpush.bf16.msra.mxu0 0
    %675 = vmatpush.bf16.msra.mxu0 0
    %676 = vmatpush.bf16.msra.mxu0 0
    %677 = vmatpush.bf16.msra.mxu0 0
    %678 = vmatpush.bf16.msra.mxu0 %v591
    %679 = vmatpush.bf16.msra.mxu0 %v583
    %680 = vmatpush.bf16.msra.mxu0 %v575
    %681 = vmatpush.bf16.msra.mxu0 %v567
    %682 = vmatmul.bf16.gmra.mxu0 %v630
    %v683 = vpop.f32.mrf.mxu0
    %v684 = vadd.f32 0.0, %v683
    %v685 = vpop.f32.mrf.mxu0
    %v686 = vadd.f32 0.0, %v685
    %687 = vdwg.mxu0
    %688 = vmatpush.bf16.msra.mxu0 0
    %689 = vmatpush.bf16.msra.mxu0 0
    %690 = vmatpush.bf16.msra.mxu0 0
    %691 = vmatpush.bf16.msra.mxu0 0
    %692 = vmatpush.bf16.msra.mxu0 %v592
    %693 = vmatpush.bf16.msra.mxu0 %v584
    %694 = vmatpush.bf16.msra.mxu0 %v576
    %695 = vmatpush.bf16.msra.mxu0 %v568
    %696 = vmatmul.bf16.gmra.mxu0 %v630
    %v697 = vpop.f32.mrf.mxu0
    %v698 = vadd.f32 0.0, %v697
    %v699 = vpop.f32.mrf.mxu0
    %v700 = vadd.f32 0.0, %v699
    %701 = vdwg.mxu0
    %702 = vmatpush.bf16.msra.mxu0 0
    %703 = vmatpush.bf16.msra.mxu0 0
    %704 = vmatpush.bf16.msra.mxu0 0
    %705 = vmatpush.bf16.msra.mxu0 0
    %706 = vmatpush.bf16.msra.mxu0 %v593
    %707 = vmatpush.bf16.msra.mxu0 %v585
    %708 = vmatpush.bf16.msra.mxu0 %v577
    %709 = vmatpush.bf16.msra.mxu0 %v569
    %710 = vmatmul.bf16.gmra.mxu0 %v630
    %v711 = vpop.f32.mrf.mxu0
    %v712 = vadd.f32 0.0, %v711
    %v713 = vpop.f32.mrf.mxu0
    %v714 = vadd.f32 0.0, %v713
    %715 = vdwg.mxu0
    %716 = vmatpush.bf16.msra.mxu0 0
    %717 = vmatpush.bf16.msra.mxu0 0
    %718 = vmatpush.bf16.msra.mxu0 0
    %719 = vmatpush.bf16.msra.mxu0 0
    %720 = vmatpush.bf16.msra.mxu0 %v594
    %721 = vmatpush.bf16.msra.mxu0 %v586
    %722 = vmatpush.bf16.msra.mxu0 %v578
    %723 = vmatpush.bf16.msra.mxu0 %v570
    %724 = vmatmul.bf16.gmra.mxu0 %v630
    %v725 = vpop.f32.mrf.mxu0
    %v726 = vadd.f32 0.0, %v725
    %v727 = vpop.f32.mrf.mxu0
    %v728 = vadd.f32 0.0, %v727
    %729 = vdwg.mxu0
    %730 = vmatpush.bf16.msra.mxu0 0
    %731 = vmatpush.bf16.msra.mxu0 0
    %732 = vmatpush.bf16.msra.mxu0 0
    %733 = vmatpush.bf16.msra.mxu0 0
    %734 = vmatpush.bf16.msra.mxu0 %v595
    %735 = vmatpush.bf16.msra.mxu0 %v587
    %736 = vmatpush.bf16.msra.mxu0 %v579
    %737 = vmatpush.bf16.msra.mxu0 %v571
    %738 = vmatmul.bf16.gmra.mxu0 %v630
    %v739 = vpop.f32.mrf.mxu0
    %v740 = vadd.f32 0.0, %v739
    %v741 = vpop.f32.mrf.mxu0
    %v742 = vadd.f32 0.0, %v741
    %743 = vdwg.mxu0
    %v744 = vld [vmem:[#allocation10] sm:$0xff]
    %v746 = vperm.slane %v744, 0
    %v747 = vperm.slane %v744, 1
    %v748 = vperm.slane %v744, 2
    %v749 = vperm.slane %v744, 3
    %v750 = vperm.slane %v744, 4
    %v751 = vperm.slane %v744, 5
    %v752 = vperm.slane %v744, 6
    %v753 = vperm.slane %v744, 7
    %v762 = vmul.f32 %v642, %v746
    %v763 = vmul.f32 %v656, %v747
    %v764 = vmul.f32 %v670, %v748
    %v765 = vmul.f32 %v684, %v749
    %v766 = vmul.f32 %v698, %v750
    %v767 = vmul.f32 %v712, %v751
    %v768 = vmul.f32 %v726, %v752
    %v769 = vmul.f32 %v740, %v753
    %v770 = vmul.f32 %v644, %v746
    %v771 = vmul.f32 %v658, %v747
    %v772 = vmul.f32 %v672, %v748
    %v773 = vmul.f32 %v686, %v749
    %v774 = vmul.f32 %v700, %v750
    %v775 = vmul.f32 %v714, %v751
    %v776 = vmul.f32 %v728, %v752
    %v777 = vmul.f32 %v742, %v753
    %v778 = vld [vmem:[#allocation11] sm:$0xff]
    %v780 = vperm.slane %v778, 0
    %v781 = vperm.slane %v778, 1
    %v782 = vperm.slane %v778, 2
    %v783 = vperm.slane %v778, 3
    %v784 = vperm.slane %v778, 4
    %v785 = vperm.slane %v778, 5
    %v786 = vperm.slane %v778, 6
    %v787 = vperm.slane %v778, 7
    %v796 = vadd.f32 %v762, %v780
    %v797 = vadd.f32 %v763, %v781
    %v798 = vadd.f32 %v764, %v782
    %v799 = vadd.f32 %v765, %v783
    %v800 = vadd.f32 %v766, %v784
    %v801 = vadd.f32 %v767, %v785
    %v802 = vadd.f32 %v768, %v786
    %v803 = vadd.f32 %v769, %v787
    %v804 = vadd.f32 %v770, %v780
    %v805 = vadd.f32 %v771, %v781
    %v806 = vadd.f32 %v772, %v782
    %v807 = vadd.f32 %v773, %v783
    %v808 = vadd.f32 %v774, %v784
    %v809 = vadd.f32 %v775, %v785
    %v810 = vadd.f32 %v776, %v786
    %v811 = vadd.f32 %v777, %v787
    %vm812 = vcmp.gt.f32.partialorder %v796, 0.0
    %vm813 = vcmp.gt.f32.partialorder %v797, 0.0
    %vm814 = vcmp.gt.f32.partialorder %v798, 0.0
    %vm815 = vcmp.gt.f32.partialorder %v799, 0.0
    %vm816 = vcmp.gt.f32.partialorder %v800, 0.0
    %vm817 = vcmp.gt.f32.partialorder %v801, 0.0
    %vm818 = vcmp.gt.f32.partialorder %v802, 0.0
    %vm819 = vcmp.gt.f32.partialorder %v803, 0.0
    %vm820 = vcmp.gt.f32.partialorder %v804, 0.0
    %vm821 = vcmp.gt.f32.partialorder %v805, 0.0
    %vm822 = vcmp.gt.f32.partialorder %v806, 0.0
    %vm823 = vcmp.gt.f32.partialorder %v807, 0.0
    %vm824 = vcmp.gt.f32.partialorder %v808, 0.0
    %vm825 = vcmp.gt.f32.partialorder %v809, 0.0
    %vm826 = vcmp.gt.f32.partialorder %v810, 0.0
    %vm827 = vcmp.gt.f32.partialorder %v811, 0.0
    %v828 = vmul.f32 %v796, 1.442695
    %v829 = vpow.pop %v828
    %v830 = vmul.f32 %v797, 1.442695
    %v831 = vpow.pop %v830
    %v832 = vmul.f32 %v798, 1.442695
    %v833 = vpow.pop %v832
    %v834 = vmul.f32 %v799, 1.442695
    %v835 = vpow.pop %v834
    %v836 = vmul.f32 %v800, 1.442695
    %v837 = vpow.pop %v836
    %v838 = vmul.f32 %v801, 1.442695
    %v839 = vpow.pop %v838
    %v840 = vmul.f32 %v802, 1.442695
    %v841 = vpow.pop %v840
    %v842 = vmul.f32 %v803, 1.442695
    %v843 = vpow.pop %v842
    %v844 = vmul.f32 %v804, 1.442695
    %v845 = vpow.pop %v844
    %v846 = vmul.f32 %v805, 1.442695
    %v847 = vpow.pop %v846
    %v848 = vmul.f32 %v806, 1.442695
    %v849 = vpow.pop %v848
    %v850 = vmul.f32 %v807, 1.442695
    %v851 = vpow.pop %v850
    %v852 = vmul.f32 %v808, 1.442695
    %v853 = vpow.pop %v852
    %v854 = vmul.f32 %v809, 1.442695
    %v855 = vpow.pop %v854
    %v856 = vmul.f32 %v810, 1.442695
    %v857 = vpow.pop %v856
    %v858 = vmul.f32 %v811, 1.442695
    %v859 = vpow.pop %v858
    %v860 = vsub.f32 %v829, 1.0
    %v861 = vsub.f32 %v831, 1.0
    %v862 = vsub.f32 %v833, 1.0
    %v863 = vsub.f32 %v835, 1.0
    %v864 = vsub.f32 %v837, 1.0
    %v865 = vsub.f32 %v839, 1.0
    %v866 = vsub.f32 %v841, 1.0
    %v867 = vsub.f32 %v843, 1.0
    %v868 = vsub.f32 %v845, 1.0
    %v869 = vsub.f32 %v847, 1.0
    %v870 = vsub.f32 %v849, 1.0
    %v871 = vsub.f32 %v851, 1.0
    %v872 = vsub.f32 %v853, 1.0
    %v873 = vsub.f32 %v855, 1.0
    %v874 = vsub.f32 %v857, 1.0
    %v875 = vsub.f32 %v859, 1.0
    %v876 = vsel %vm812, %v796, %v860
    %v877 = vsel %vm813, %v797, %v861
    %v878 = vsel %vm814, %v798, %v862
    %v879 = vsel %vm815, %v799, %v863
    %v880 = vsel %vm816, %v800, %v864
    %v881 = vsel %vm817, %v801, %v865
    %v882 = vsel %vm818, %v802, %v866
    %v883 = vsel %vm819, %v803, %v867
    %v884 = vsel %vm820, %v804, %v868
    %v885 = vsel %vm821, %v805, %v869
    %v886 = vsel %vm822, %v806, %v870
    %v887 = vsel %vm823, %v807, %v871
    %v888 = vsel %vm824, %v808, %v872
    %v889 = vsel %vm825, %v809, %v873
    %v890 = vsel %vm826, %v810, %v874
    %v891 = vsel %vm827, %v811, %v875
    %v892 = vld [vmem:[%s15] sm:$0xff]
    %v893 = vld [vmem:[%s15 + $0x8] sm:$0xff]
    %v894 = vld [vmem:[%s17] sm:$0xff]
    %v895 = vld [vmem:[%s17 + $0x8] sm:$0xff]
    %v896 = vld [vmem:[%s17 + $0x10] sm:$0xff]
    %v897 = vld [vmem:[%s17 + $0x18] sm:$0xff]
    %v898 = vld [vmem:[%s17 + $0x20] sm:$0x1]
    %v899 = vld [vmem:[#allocation16] sm:$0x1]
    %v901 = vperm.slane %v899, 0
    %vm903 = vcmask 269312
    %v905 = vsel %vm903, %v892, 0
    %v908 = vsel %vm903, %v893, 0
    %vm910 = vcmask 1040384
    %v912 = vsel %vm910, %v898, 0
    %914 = vmatpush.msra.mxu0 0.0
    %915 = vmatpush.msra.mxu0 0.0
    %916 = vmatpush.msra.mxu0 0.0
    %917 = vmatpush.msra.mxu0 0.0
    %918 = vmatpush.msra.mxu0 0.0
    %919 = vmatpush.msra.mxu0 0.0
    %920 = vmatpush.msra.mxu0 0.0
    %921 = vmatpush.msra.mxu0 0.0
    %922 = vmatpush.msra.mxu0 0.0
    %923 = vmatpush.msra.mxu0 0.0
    %924 = vmatpush.msra.mxu0 0.0
    %925 = vmatpush.msra.mxu0 %v912
    %926 = vmatpush.msra.mxu0 %v897
    %927 = vmatpush.msra.mxu0 %v896
    %928 = vmatpush.msra.mxu0 %v895
    %929 = vmatpush.msra.mxu0 %v894
    %930 = vmatmul.f32.gmra.mxu0 %v905
    %v931 = vpop.f32.mrf.mxu0
    %v932 = vadd.f32 %v901, %v931
    %933 = vmatmul.f32.gmra.mxu0 %v908
    %v934 = vpop.f32.mrf.mxu0
    %v935 = vadd.f32 %v901, %v934
    %936 = vdwg.mxu0
    %vm937 = vcmp.gt.f32.partialorder %v932, 0.0
    %vm938 = vcmp.gt.f32.partialorder %v935, 0.0
    %v939 = vmul.f32 %v932, 1.442695
    %v940 = vpow.pop %v939
    %v941 = vmul.f32 %v935, 1.442695
    %v942 = vpow.pop %v941
    %v943 = vsub.f32 %v940, 1.0
    %v944 = vsub.f32 %v942, 1.0
    %v945 = vsel %vm937, %v932, %v943
    %v946 = vsel %vm938, %v935, %v944
    %s947 = smul.u32 4, 128
    %s948 = smul.u32 %s947, 8
    %s949 = sshll.u32 %s948, 4
    %950 = dma.done [#allocation3], %s949
    %v951 = vpack.c.bf16 %v884, %v876
    %v952 = vpack.c.bf16 %v885, %v877
    %v953 = vpack.c.bf16 %v886, %v878
    %v954 = vpack.c.bf16 %v887, %v879
    %v955 = vpack.c.bf16 %v888, %v880
    %v956 = vpack.c.bf16 %v889, %v881
    %v957 = vpack.c.bf16 %v890, %v882
    %v958 = vpack.c.bf16 %v891, %v883
    %v959 = vld [vmem:[#allocation2] sm:$0xff]
    %v960 = vld [vmem:[#allocation2 + $0x8] sm:$0xff]
    %v961 = vld [vmem:[#allocation2 + $0x10] sm:$0xff]
    %v962 = vld [vmem:[#allocation2 + $0x18] sm:$0xff]
    %v963 = vld [vmem:[#allocation2 + $0x20] sm:$0xff]
    %v964 = vld [vmem:[#allocation2 + $0x28] sm:$0xff]
    %v965 = vld [vmem:[#allocation2 + $0x30] sm:$0xff]
    %v966 = vld [vmem:[#allocation2 + $0x38] sm:$0xff]
    %v967 = vld [vmem:[#allocation2 + $0x40] sm:$0xff]
    %v968 = vld [vmem:[#allocation2 + $0x48] sm:$0xff]
    %v969 = vld [vmem:[#allocation2 + $0x50] sm:$0xff]
    %v970 = vld [vmem:[#allocation2 + $0x58] sm:$0xff]
    %v971 = vld [vmem:[#allocation2 + $0x60] sm:$0xff]
    %v972 = vld [vmem:[#allocation2 + $0x68] sm:$0xff]
    %v973 = vld [vmem:[#allocation2 + $0x70] sm:$0xff]
    %v974 = vld [vmem:[#allocation2 + $0x78] sm:$0xff]
    %v975 = vld [vmem:[#allocation2 + $0x80] sm:$0xff]
    %v976 = vld [vmem:[#allocation2 + $0x88] sm:$0xff]
    %v977 = vld [vmem:[#allocation2 + $0x90] sm:$0xff]
    %v978 = vld [vmem:[#allocation2 + $0x98] sm:$0xff]
    %v979 = vld [vmem:[#allocation2 + $0xa0] sm:$0xff]
    %v980 = vld [vmem:[#allocation2 + $0xa8] sm:$0xff]
    %v981 = vld [vmem:[#allocation2 + $0xb0] sm:$0xff]
    %v982 = vld [vmem:[#allocation2 + $0xb8] sm:$0xff]
    %v983 = vld [vmem:[#allocation2 + $0xc0] sm:$0xff]
    %v984 = vld [vmem:[#allocation2 + $0xc8] sm:$0xff]
    %v985 = vld [vmem:[#allocation2 + $0xd0] sm:$0xff]
    %v986 = vld [vmem:[#allocation2 + $0xd8] sm:$0xff]
    %v987 = vld [vmem:[#allocation2 + $0xe0] sm:$0xff]
    %v988 = vld [vmem:[#allocation2 + $0xe8] sm:$0xff]
    %v989 = vld [vmem:[#allocation2 + $0xf0] sm:$0xff]
    %v990 = vld [vmem:[#allocation2 + $0xf8] sm:$0xff]
    %v991 = vld [vmem:[#allocation2 + $0x100] sm:$0xff]
    %v992 = vld [vmem:[#allocation2 + $0x108] sm:$0xff]
    %v993 = vld [vmem:[#allocation2 + $0x110] sm:$0xff]
    %v994 = vld [vmem:[#allocation2 + $0x118] sm:$0xff]
    %v995 = vld [vmem:[#allocation2 + $0x120] sm:$0xff]
    %v996 = vld [vmem:[#allocation2 + $0x128] sm:$0xff]
    %v997 = vld [vmem:[#allocation2 + $0x130] sm:$0xff]
    %v998 = vld [vmem:[#allocation2 + $0x138] sm:$0xff]
    %v999 = vld [vmem:[#allocation2 + $0x140] sm:$0xff]
    %v1000 = vld [vmem:[#allocation2 + $0x148] sm:$0xff]
    %v1001 = vld [vmem:[#allocation2 + $0x150] sm:$0xff]
    %v1002 = vld [vmem:[#allocation2 + $0x158] sm:$0xff]
    %v1003 = vld [vmem:[#allocation2 + $0x160] sm:$0xff]
    %v1004 = vld [vmem:[#allocation2 + $0x168] sm:$0xff]
    %v1005 = vld [vmem:[#allocation2 + $0x170] sm:$0xff]
    %v1006 = vld [vmem:[#allocation2 + $0x178] sm:$0xff]
    %v1007 = vld [vmem:[#allocation2 + $0x180] sm:$0xff]
    %v1008 = vld [vmem:[#allocation2 + $0x188] sm:$0xff]
    %v1009 = vld [vmem:[#allocation2 + $0x190] sm:$0xff]
    %v1010 = vld [vmem:[#allocation2 + $0x198] sm:$0xff]
    %v1011 = vld [vmem:[#allocation2 + $0x1a0] sm:$0xff]
    %v1012 = vld [vmem:[#allocation2 + $0x1a8] sm:$0xff]
    %v1013 = vld [vmem:[#allocation2 + $0x1b0] sm:$0xff]
    %v1014 = vld [vmem:[#allocation2 + $0x1b8] sm:$0xff]
    %v1015 = vld [vmem:[#allocation2 + $0x1c0] sm:$0xff]
    %v1016 = vld [vmem:[#allocation2 + $0x1c8] sm:$0xff]
    %v1017 = vld [vmem:[#allocation2 + $0x1d0] sm:$0xff]
    %v1018 = vld [vmem:[#allocation2 + $0x1d8] sm:$0xff]
    %v1019 = vld [vmem:[#allocation2 + $0x1e0] sm:$0xff]
    %v1020 = vld [vmem:[#allocation2 + $0x1e8] sm:$0xff]
    %v1021 = vld [vmem:[#allocation2 + $0x1f0] sm:$0xff]
    %v1022 = vld [vmem:[#allocation2 + $0x1f8] sm:$0xff]
    %v1023 = vld [vmem:[#allocation2 + $0x200] sm:$0xff]
    %v1024 = vld [vmem:[#allocation2 + $0x208] sm:$0xff]
    %v1025 = vld [vmem:[#allocation2 + $0x210] sm:$0xff]
    %v1026 = vld [vmem:[#allocation2 + $0x218] sm:$0xff]
    %v1027 = vld [vmem:[#allocation2 + $0x220] sm:$0xff]
    %v1028 = vld [vmem:[#allocation2 + $0x228] sm:$0xff]
    %v1029 = vld [vmem:[#allocation2 + $0x230] sm:$0xff]
    %v1030 = vld [vmem:[#allocation2 + $0x238] sm:$0xff]
    %v1031 = vld [vmem:[#allocation2 + $0x240] sm:$0xff]
    %v1032 = vld [vmem:[#allocation2 + $0x248] sm:$0xff]
    %v1033 = vld [vmem:[#allocation2 + $0x250] sm:$0xff]
    %v1034 = vld [vmem:[#allocation2 + $0x258] sm:$0xff]
    %v1035 = vld [vmem:[#allocation2 + $0x260] sm:$0xff]
    %v1036 = vld [vmem:[#allocation2 + $0x268] sm:$0xff]
    %v1037 = vld [vmem:[#allocation2 + $0x270] sm:$0xff]
    %v1038 = vld [vmem:[#allocation2 + $0x278] sm:$0xff]
    %v1039 = vld [vmem:[#allocation2 + $0x280] sm:$0xff]
    %v1040 = vld [vmem:[#allocation2 + $0x288] sm:$0xff]
    %v1041 = vld [vmem:[#allocation2 + $0x290] sm:$0xff]
    %v1042 = vld [vmem:[#allocation2 + $0x298] sm:$0xff]
    %v1043 = vld [vmem:[#allocation2 + $0x2a0] sm:$0xff]
    %v1044 = vld [vmem:[#allocation2 + $0x2a8] sm:$0xff]
    %v1045 = vld [vmem:[#allocation2 + $0x2b0] sm:$0xff]
    %v1046 = vld [vmem:[#allocation2 + $0x2b8] sm:$0xff]
    %v1047 = vld [vmem:[#allocation2 + $0x2c0] sm:$0xff]
    %v1048 = vld [vmem:[#allocation2 + $0x2c8] sm:$0xff]
    %v1049 = vld [vmem:[#allocation2 + $0x2d0] sm:$0xff]
    %v1050 = vld [vmem:[#allocation2 + $0x2d8] sm:$0xff]
    %v1051 = vld [vmem:[#allocation2 + $0x2e0] sm:$0xff]
    %v1052 = vld [vmem:[#allocation2 + $0x2e8] sm:$0xff]
    %v1053 = vld [vmem:[#allocation2 + $0x2f0] sm:$0xff]
    %v1054 = vld [vmem:[#allocation2 + $0x2f8] sm:$0xff]
    %v1055 = vld [vmem:[#allocation2 + $0x300] sm:$0xff]
    %v1056 = vld [vmem:[#allocation2 + $0x308] sm:$0xff]
    %v1057 = vld [vmem:[#allocation2 + $0x310] sm:$0xff]
    %v1058 = vld [vmem:[#allocation2 + $0x318] sm:$0xff]
    %v1059 = vld [vmem:[#allocation2 + $0x320] sm:$0xff]
    %v1060 = vld [vmem:[#allocation2 + $0x328] sm:$0xff]
    %v1061 = vld [vmem:[#allocation2 + $0x330] sm:$0xff]
    %v1062 = vld [vmem:[#allocation2 + $0x338] sm:$0xff]
    %v1063 = vld [vmem:[#allocation2 + $0x340] sm:$0xff]
    %v1064 = vld [vmem:[#allocation2 + $0x348] sm:$0xff]
    %v1065 = vld [vmem:[#allocation2 + $0x350] sm:$0xff]
    %v1066 = vld [vmem:[#allocation2 + $0x358] sm:$0xff]
    %v1067 = vld [vmem:[#allocation2 + $0x360] sm:$0xff]
    %v1068 = vld [vmem:[#allocation2 + $0x368] sm:$0xff]
    %v1069 = vld [vmem:[#allocation2 + $0x370] sm:$0xff]
    %v1070 = vld [vmem:[#allocation2 + $0x378] sm:$0xff]
    %v1071 = vld [vmem:[#allocation2 + $0x380] sm:$0xff]
    %v1072 = vld [vmem:[#allocation2 + $0x388] sm:$0xff]
    %v1073 = vld [vmem:[#allocation2 + $0x390] sm:$0xff]
    %v1074 = vld [vmem:[#allocation2 + $0x398] sm:$0xff]
    %v1075 = vld [vmem:[#allocation2 + $0x3a0] sm:$0xff]
    %v1076 = vld [vmem:[#allocation2 + $0x3a8] sm:$0xff]
    %v1077 = vld [vmem:[#allocation2 + $0x3b0] sm:$0xff]
    %v1078 = vld [vmem:[#allocation2 + $0x3b8] sm:$0xff]
    %v1079 = vld [vmem:[#allocation2 + $0x3c0] sm:$0xff]
    %v1080 = vld [vmem:[#allocation2 + $0x3c8] sm:$0xff]
    %v1081 = vld [vmem:[#allocation2 + $0x3d0] sm:$0xff]
    %v1082 = vld [vmem:[#allocation2 + $0x3d8] sm:$0xff]
    %v1083 = vld [vmem:[#allocation2 + $0x3e0] sm:$0xff]
    %v1084 = vld [vmem:[#allocation2 + $0x3e8] sm:$0xff]
    %v1085 = vld [vmem:[#allocation2 + $0x3f0] sm:$0xff]
    %v1086 = vld [vmem:[#allocation2 + $0x3f8] sm:$0xff]
    %v1087 = vld [vmem:[#allocation2 + $0x400] sm:$0xff]
    %v1088 = vld [vmem:[#allocation2 + $0x408] sm:$0xff]
    %v1089 = vld [vmem:[#allocation2 + $0x410] sm:$0xff]
    %v1090 = vld [vmem:[#allocation2 + $0x418] sm:$0xff]
    %v1091 = vld [vmem:[#allocation2 + $0x420] sm:$0xff]
    %v1092 = vld [vmem:[#allocation2 + $0x428] sm:$0xff]
    %v1093 = vld [vmem:[#allocation2 + $0x430] sm:$0xff]
    %v1094 = vld [vmem:[#allocation2 + $0x438] sm:$0xff]
    %v1095 = vld [vmem:[#allocation2 + $0x440] sm:$0xff]
    %v1096 = vld [vmem:[#allocation2 + $0x448] sm:$0xff]
    %v1097 = vld [vmem:[#allocation2 + $0x450] sm:$0xff]
    %v1098 = vld [vmem:[#allocation2 + $0x458] sm:$0xff]
    %v1099 = vld [vmem:[#allocation2 + $0x460] sm:$0xff]
    %v1100 = vld [vmem:[#allocation2 + $0x468] sm:$0xff]
    %v1101 = vld [vmem:[#allocation2 + $0x470] sm:$0xff]
    %v1102 = vld [vmem:[#allocation2 + $0x478] sm:$0xff]
    %v1103 = vld [vmem:[#allocation2 + $0x480] sm:$0xff]
    %v1104 = vld [vmem:[#allocation2 + $0x488] sm:$0xff]
    %v1105 = vld [vmem:[#allocation2 + $0x490] sm:$0xff]
    %v1106 = vld [vmem:[#allocation2 + $0x498] sm:$0xff]
    %v1107 = vld [vmem:[#allocation2 + $0x4a0] sm:$0xff]
    %v1108 = vld [vmem:[#allocation2 + $0x4a8] sm:$0xff]
    %v1109 = vld [vmem:[#allocation2 + $0x4b0] sm:$0xff]
    %v1110 = vld [vmem:[#allocation2 + $0x4b8] sm:$0xff]
    %v1111 = vld [vmem:[#allocation2 + $0x4c0] sm:$0xff]
    %v1112 = vld [vmem:[#allocation2 + $0x4c8] sm:$0xff]
    %v1113 = vld [vmem:[#allocation2 + $0x4d0] sm:$0xff]
    %v1114 = vld [vmem:[#allocation2 + $0x4d8] sm:$0xff]
    %v1115 = vld [vmem:[#allocation2 + $0x4e0] sm:$0xff]
    %v1116 = vld [vmem:[#allocation2 + $0x4e8] sm:$0xff]
    %v1117 = vld [vmem:[#allocation2 + $0x4f0] sm:$0xff]
    %v1118 = vld [vmem:[#allocation2 + $0x4f8] sm:$0xff]
    %v1119 = vld [vmem:[#allocation2 + $0x500] sm:$0xff]
    %v1120 = vld [vmem:[#allocation2 + $0x508] sm:$0xff]
    %v1121 = vld [vmem:[#allocation2 + $0x510] sm:$0xff]
    %v1122 = vld [vmem:[#allocation2 + $0x518] sm:$0xff]
    %v1123 = vld [vmem:[#allocation2 + $0x520] sm:$0xff]
    %v1124 = vld [vmem:[#allocation2 + $0x528] sm:$0xff]
    %v1125 = vld [vmem:[#allocation2 + $0x530] sm:$0xff]
    %v1126 = vld [vmem:[#allocation2 + $0x538] sm:$0xff]
    %v1127 = vld [vmem:[#allocation2 + $0x540] sm:$0xff]
    %v1128 = vld [vmem:[#allocation2 + $0x548] sm:$0xff]
    %v1129 = vld [vmem:[#allocation2 + $0x550] sm:$0xff]
    %v1130 = vld [vmem:[#allocation2 + $0x558] sm:$0xff]
    %v1131 = vld [vmem:[#allocation2 + $0x560] sm:$0xff]
    %v1132 = vld [vmem:[#allocation2 + $0x568] sm:$0xff]
    %v1133 = vld [vmem:[#allocation2 + $0x570] sm:$0xff]
    %v1134 = vld [vmem:[#allocation2 + $0x578] sm:$0xff]
    %v1135 = vld [vmem:[#allocation2 + $0x580] sm:$0xff]
    %v1136 = vld [vmem:[#allocation2 + $0x588] sm:$0xff]
    %v1137 = vld [vmem:[#allocation2 + $0x590] sm:$0xff]
    %v1138 = vld [vmem:[#allocation2 + $0x598] sm:$0xff]
    %v1139 = vld [vmem:[#allocation2 + $0x5a0] sm:$0xff]
    %v1140 = vld [vmem:[#allocation2 + $0x5a8] sm:$0xff]
    %v1141 = vld [vmem:[#allocation2 + $0x5b0] sm:$0xff]
    %v1142 = vld [vmem:[#allocation2 + $0x5b8] sm:$0xff]
    %v1143 = vld [vmem:[#allocation2 + $0x5c0] sm:$0xff]
    %v1144 = vld [vmem:[#allocation2 + $0x5c8] sm:$0xff]
    %v1145 = vld [vmem:[#allocation2 + $0x5d0] sm:$0xff]
    %v1146 = vld [vmem:[#allocation2 + $0x5d8] sm:$0xff]
    %v1147 = vld [vmem:[#allocation2 + $0x5e0] sm:$0xff]
    %v1148 = vld [vmem:[#allocation2 + $0x5e8] sm:$0xff]
    %v1149 = vld [vmem:[#allocation2 + $0x5f0] sm:$0xff]
    %v1150 = vld [vmem:[#allocation2 + $0x5f8] sm:$0xff]
    %v1151 = vld [vmem:[#allocation2 + $0x600] sm:$0xff]
    %v1152 = vld [vmem:[#allocation2 + $0x608] sm:$0xff]
    %v1153 = vld [vmem:[#allocation2 + $0x610] sm:$0xff]
    %v1154 = vld [vmem:[#allocation2 + $0x618] sm:$0xff]
    %v1155 = vld [vmem:[#allocation2 + $0x620] sm:$0xff]
    %v1156 = vld [vmem:[#allocation2 + $0x628] sm:$0xff]
    %v1157 = vld [vmem:[#allocation2 + $0x630] sm:$0xff]
    %v1158 = vld [vmem:[#allocation2 + $0x638] sm:$0xff]
    %v1159 = vld [vmem:[#allocation2 + $0x640] sm:$0xff]
    %v1160 = vld [vmem:[#allocation2 + $0x648] sm:$0xff]
    %v1161 = vld [vmem:[#allocation2 + $0x650] sm:$0xff]
    %v1162 = vld [vmem:[#allocation2 + $0x658] sm:$0xff]
    %v1163 = vld [vmem:[#allocation2 + $0x660] sm:$0xff]
    %v1164 = vld [vmem:[#allocation2 + $0x668] sm:$0xff]
    %v1165 = vld [vmem:[#allocation2 + $0x670] sm:$0xff]
    %v1166 = vld [vmem:[#allocation2 + $0x678] sm:$0xff]
    %v1167 = vld [vmem:[#allocation2 + $0x680] sm:$0xff]
    %v1168 = vld [vmem:[#allocation2 + $0x688] sm:$0xff]
    %v1169 = vld [vmem:[#allocation2 + $0x690] sm:$0xff]
    %v1170 = vld [vmem:[#allocation2 + $0x698] sm:$0xff]
    %v1171 = vld [vmem:[#allocation2 + $0x6a0] sm:$0xff]
    %v1172 = vld [vmem:[#allocation2 + $0x6a8] sm:$0xff]
    %v1173 = vld [vmem:[#allocation2 + $0x6b0] sm:$0xff]
    %v1174 = vld [vmem:[#allocation2 + $0x6b8] sm:$0xff]
    %v1175 = vld [vmem:[#allocation2 + $0x6c0] sm:$0xff]
    %v1176 = vld [vmem:[#allocation2 + $0x6c8] sm:$0xff]
    %v1177 = vld [vmem:[#allocation2 + $0x6d0] sm:$0xff]
    %v1178 = vld [vmem:[#allocation2 + $0x6d8] sm:$0xff]
    %v1179 = vld [vmem:[#allocation2 + $0x6e0] sm:$0xff]
    %v1180 = vld [vmem:[#allocation2 + $0x6e8] sm:$0xff]
    %v1181 = vld [vmem:[#allocation2 + $0x6f0] sm:$0xff]
    %v1182 = vld [vmem:[#allocation2 + $0x6f8] sm:$0xff]
    %v1183 = vld [vmem:[#allocation2 + $0x700] sm:$0xff]
    %v1184 = vld [vmem:[#allocation2 + $0x708] sm:$0xff]
    %v1185 = vld [vmem:[#allocation2 + $0x710] sm:$0xff]
    %v1186 = vld [vmem:[#allocation2 + $0x718] sm:$0xff]
    %v1187 = vld [vmem:[#allocation2 + $0x720] sm:$0xff]
    %v1188 = vld [vmem:[#allocation2 + $0x728] sm:$0xff]
    %v1189 = vld [vmem:[#allocation2 + $0x730] sm:$0xff]
    %v1190 = vld [vmem:[#allocation2 + $0x738] sm:$0xff]
    %v1191 = vld [vmem:[#allocation2 + $0x740] sm:$0xff]
    %v1192 = vld [vmem:[#allocation2 + $0x748] sm:$0xff]
    %v1193 = vld [vmem:[#allocation2 + $0x750] sm:$0xff]
    %v1194 = vld [vmem:[#allocation2 + $0x758] sm:$0xff]
    %v1195 = vld [vmem:[#allocation2 + $0x760] sm:$0xff]
    %v1196 = vld [vmem:[#allocation2 + $0x768] sm:$0xff]
    %v1197 = vld [vmem:[#allocation2 + $0x770] sm:$0xff]
    %v1198 = vld [vmem:[#allocation2 + $0x778] sm:$0xff]
    %v1199 = vld [vmem:[#allocation2 + $0x780] sm:$0xff]
    %v1200 = vld [vmem:[#allocation2 + $0x788] sm:$0xff]
    %v1201 = vld [vmem:[#allocation2 + $0x790] sm:$0xff]
    %v1202 = vld [vmem:[#allocation2 + $0x798] sm:$0xff]
    %v1203 = vld [vmem:[#allocation2 + $0x7a0] sm:$0xff]
    %v1204 = vld [vmem:[#allocation2 + $0x7a8] sm:$0xff]
    %v1205 = vld [vmem:[#allocation2 + $0x7b0] sm:$0xff]
    %v1206 = vld [vmem:[#allocation2 + $0x7b8] sm:$0xff]
    %v1207 = vld [vmem:[#allocation2 + $0x7c0] sm:$0xff]
    %v1208 = vld [vmem:[#allocation2 + $0x7c8] sm:$0xff]
    %v1209 = vld [vmem:[#allocation2 + $0x7d0] sm:$0xff]
    %v1210 = vld [vmem:[#allocation2 + $0x7d8] sm:$0xff]
    %v1211 = vld [vmem:[#allocation2 + $0x7e0] sm:$0xff]
    %v1212 = vld [vmem:[#allocation2 + $0x7e8] sm:$0xff]
    %v1213 = vld [vmem:[#allocation2 + $0x7f0] sm:$0xff]
    %v1214 = vld [vmem:[#allocation2 + $0x7f8] sm:$0xff]
    %v1215 = vld [vmem:[#allocation2 + $0x800] sm:$0xff]
    %v1216 = vld [vmem:[#allocation2 + $0x808] sm:$0xff]
    %v1217 = vld [vmem:[#allocation2 + $0x810] sm:$0xff]
    %v1218 = vld [vmem:[#allocation2 + $0x818] sm:$0xff]
    %v1219 = vld [vmem:[#allocation2 + $0x820] sm:$0xff]
    %v1220 = vld [vmem:[#allocation2 + $0x828] sm:$0xff]
    %v1221 = vld [vmem:[#allocation2 + $0x830] sm:$0xff]
    %v1222 = vld [vmem:[#allocation2 + $0x838] sm:$0xff]
    %v1223 = vld [vmem:[#allocation2 + $0x840] sm:$0xff]
    %v1224 = vld [vmem:[#allocation2 + $0x848] sm:$0xff]
    %v1225 = vld [vmem:[#allocation2 + $0x850] sm:$0xff]
    %v1226 = vld [vmem:[#allocation2 + $0x858] sm:$0xff]
    %v1227 = vld [vmem:[#allocation2 + $0x860] sm:$0xff]
    %v1228 = vld [vmem:[#allocation2 + $0x868] sm:$0xff]
    %v1229 = vld [vmem:[#allocation2 + $0x870] sm:$0xff]
    %v1230 = vld [vmem:[#allocation2 + $0x878] sm:$0xff]
    %v1231 = vld [vmem:[#allocation2 + $0x880] sm:$0xff]
    %v1232 = vld [vmem:[#allocation2 + $0x888] sm:$0xff]
    %v1233 = vld [vmem:[#allocation2 + $0x890] sm:$0xff]
    %v1234 = vld [vmem:[#allocation2 + $0x898] sm:$0xff]
    %v1235 = vld [vmem:[#allocation2 + $0x8a0] sm:$0xff]
    %v1236 = vld [vmem:[#allocation2 + $0x8a8] sm:$0xff]
    %v1237 = vld [vmem:[#allocation2 + $0x8b0] sm:$0xff]
    %v1238 = vld [vmem:[#allocation2 + $0x8b8] sm:$0xff]
    %v1239 = vld [vmem:[#allocation2 + $0x8c0] sm:$0xff]
    %v1240 = vld [vmem:[#allocation2 + $0x8c8] sm:$0xff]
    %v1241 = vld [vmem:[#allocation2 + $0x8d0] sm:$0xff]
    %v1242 = vld [vmem:[#allocation2 + $0x8d8] sm:$0xff]
    %v1243 = vld [vmem:[#allocation2 + $0x8e0] sm:$0xff]
    %v1244 = vld [vmem:[#allocation2 + $0x8e8] sm:$0xff]
    %v1245 = vld [vmem:[#allocation2 + $0x8f0] sm:$0xff]
    %v1246 = vld [vmem:[#allocation2 + $0x8f8] sm:$0xff]
    %v1247 = vld [vmem:[#allocation2 + $0x900] sm:$0xff]
    %v1248 = vld [vmem:[#allocation2 + $0x908] sm:$0xff]
    %v1249 = vld [vmem:[#allocation2 + $0x910] sm:$0xff]
    %v1250 = vld [vmem:[#allocation2 + $0x918] sm:$0xff]
    %v1251 = vld [vmem:[#allocation2 + $0x920] sm:$0xff]
    %v1252 = vld [vmem:[#allocation2 + $0x928] sm:$0xff]
    %v1253 = vld [vmem:[#allocation2 + $0x930] sm:$0xff]
    %v1254 = vld [vmem:[#allocation2 + $0x938] sm:$0xff]
    %v1255 = vld [vmem:[#allocation2 + $0x940] sm:$0xff]
    %v1256 = vld [vmem:[#allocation2 + $0x948] sm:$0xff]
    %v1257 = vld [vmem:[#allocation2 + $0x950] sm:$0xff]
    %v1258 = vld [vmem:[#allocation2 + $0x958] sm:$0xff]
    %v1259 = vld [vmem:[#allocation2 + $0x960] sm:$0xff]
    %v1260 = vld [vmem:[#allocation2 + $0x968] sm:$0xff]
    %v1261 = vld [vmem:[#allocation2 + $0x970] sm:$0xff]
    %v1262 = vld [vmem:[#allocation2 + $0x978] sm:$0xff]
    %v1263 = vld [vmem:[#allocation2 + $0x980] sm:$0xff]
    %v1264 = vld [vmem:[#allocation2 + $0x988] sm:$0xff]
    %v1265 = vld [vmem:[#allocation2 + $0x990] sm:$0xff]
    %v1266 = vld [vmem:[#allocation2 + $0x998] sm:$0xff]
    %v1267 = vld [vmem:[#allocation2 + $0x9a0] sm:$0xff]
    %v1268 = vld [vmem:[#allocation2 + $0x9a8] sm:$0xff]
    %v1269 = vld [vmem:[#allocation2 + $0x9b0] sm:$0xff]
    %v1270 = vld [vmem:[#allocation2 + $0x9b8] sm:$0xff]
    %v1271 = vld [vmem:[#allocation2 + $0x9c0] sm:$0xff]
    %v1272 = vld [vmem:[#allocation2 + $0x9c8] sm:$0xff]
    %v1273 = vld [vmem:[#allocation2 + $0x9d0] sm:$0xff]
    %v1274 = vld [vmem:[#allocation2 + $0x9d8] sm:$0xff]
    %v1275 = vld [vmem:[#allocation2 + $0x9e0] sm:$0xff]
    %v1276 = vld [vmem:[#allocation2 + $0x9e8] sm:$0xff]
    %v1277 = vld [vmem:[#allocation2 + $0x9f0] sm:$0xff]
    %v1278 = vld [vmem:[#allocation2 + $0x9f8] sm:$0xff]
    %v1279 = vld [vmem:[#allocation2 + $0xa00] sm:$0xff]
    %v1280 = vld [vmem:[#allocation2 + $0xa08] sm:$0xff]
    %v1281 = vld [vmem:[#allocation2 + $0xa10] sm:$0xff]
    %v1282 = vld [vmem:[#allocation2 + $0xa18] sm:$0xff]
    %v1283 = vld [vmem:[#allocation2 + $0xa20] sm:$0xff]
    %v1284 = vld [vmem:[#allocation2 + $0xa28] sm:$0xff]
    %v1285 = vld [vmem:[#allocation2 + $0xa30] sm:$0xff]
    %v1286 = vld [vmem:[#allocation2 + $0xa38] sm:$0xff]
    %v1287 = vld [vmem:[#allocation2 + $0xa40] sm:$0xff]
    %v1288 = vld [vmem:[#allocation2 + $0xa48] sm:$0xff]
    %v1289 = vld [vmem:[#allocation2 + $0xa50] sm:$0xff]
    %v1290 = vld [vmem:[#allocation2 + $0xa58] sm:$0xff]
    %v1291 = vld [vmem:[#allocation2 + $0xa60] sm:$0xff]
    %v1292 = vld [vmem:[#allocation2 + $0xa68] sm:$0xff]
    %v1293 = vld [vmem:[#allocation2 + $0xa70] sm:$0xff]
    %v1294 = vld [vmem:[#allocation2 + $0xa78] sm:$0xff]
    %v1295 = vld [vmem:[#allocation2 + $0xa80] sm:$0xff]
    %v1296 = vld [vmem:[#allocation2 + $0xa88] sm:$0xff]
    %v1297 = vld [vmem:[#allocation2 + $0xa90] sm:$0xff]
    %v1298 = vld [vmem:[#allocation2 + $0xa98] sm:$0xff]
    %v1299 = vld [vmem:[#allocation2 + $0xaa0] sm:$0xff]
    %v1300 = vld [vmem:[#allocation2 + $0xaa8] sm:$0xff]
    %v1301 = vld [vmem:[#allocation2 + $0xab0] sm:$0xff]
    %v1302 = vld [vmem:[#allocation2 + $0xab8] sm:$0xff]
    %v1303 = vld [vmem:[#allocation2 + $0xac0] sm:$0xff]
    %v1304 = vld [vmem:[#allocation2 + $0xac8] sm:$0xff]
    %v1305 = vld [vmem:[#allocation2 + $0xad0] sm:$0xff]
    %v1306 = vld [vmem:[#allocation2 + $0xad8] sm:$0xff]
    %v1307 = vld [vmem:[#allocation2 + $0xae0] sm:$0xff]
    %v1308 = vld [vmem:[#allocation2 + $0xae8] sm:$0xff]
    %v1309 = vld [vmem:[#allocation2 + $0xaf0] sm:$0xff]
    %v1310 = vld [vmem:[#allocation2 + $0xaf8] sm:$0xff]
    %v1311 = vld [vmem:[#allocation2 + $0xb00] sm:$0xff]
    %v1312 = vld [vmem:[#allocation2 + $0xb08] sm:$0xff]
    %v1313 = vld [vmem:[#allocation2 + $0xb10] sm:$0xff]
    %v1314 = vld [vmem:[#allocation2 + $0xb18] sm:$0xff]
    %v1315 = vld [vmem:[#allocation2 + $0xb20] sm:$0xff]
    %v1316 = vld [vmem:[#allocation2 + $0xb28] sm:$0xff]
    %v1317 = vld [vmem:[#allocation2 + $0xb30] sm:$0xff]
    %v1318 = vld [vmem:[#allocation2 + $0xb38] sm:$0xff]
    %v1319 = vld [vmem:[#allocation2 + $0xb40] sm:$0xff]
    %v1320 = vld [vmem:[#allocation2 + $0xb48] sm:$0xff]
    %v1321 = vld [vmem:[#allocation2 + $0xb50] sm:$0xff]
    %v1322 = vld [vmem:[#allocation2 + $0xb58] sm:$0xff]
    %v1323 = vld [vmem:[#allocation2 + $0xb60] sm:$0xff]
    %v1324 = vld [vmem:[#allocation2 + $0xb68] sm:$0xff]
    %v1325 = vld [vmem:[#allocation2 + $0xb70] sm:$0xff]
    %v1326 = vld [vmem:[#allocation2 + $0xb78] sm:$0xff]
    %v1327 = vld [vmem:[#allocation2 + $0xb80] sm:$0xff]
    %v1328 = vld [vmem:[#allocation2 + $0xb88] sm:$0xff]
    %v1329 = vld [vmem:[#allocation2 + $0xb90] sm:$0xff]
    %v1330 = vld [vmem:[#allocation2 + $0xb98] sm:$0xff]
    %v1331 = vld [vmem:[#allocation2 + $0xba0] sm:$0xff]
    %v1332 = vld [vmem:[#allocation2 + $0xba8] sm:$0xff]
    %v1333 = vld [vmem:[#allocation2 + $0xbb0] sm:$0xff]
    %v1334 = vld [vmem:[#allocation2 + $0xbb8] sm:$0xff]
    %v1335 = vld [vmem:[#allocation2 + $0xbc0] sm:$0xff]
    %v1336 = vld [vmem:[#allocation2 + $0xbc8] sm:$0xff]
    %v1337 = vld [vmem:[#allocation2 + $0xbd0] sm:$0xff]
    %v1338 = vld [vmem:[#allocation2 + $0xbd8] sm:$0xff]
    %v1339 = vld [vmem:[#allocation2 + $0xbe0] sm:$0xff]
    %v1340 = vld [vmem:[#allocation2 + $0xbe8] sm:$0xff]
    %v1341 = vld [vmem:[#allocation2 + $0xbf0] sm:$0xff]
    %v1342 = vld [vmem:[#allocation2 + $0xbf8] sm:$0xff]
    %v1343 = vld [vmem:[#allocation2 + $0xc00] sm:$0xff]
    %v1344 = vld [vmem:[#allocation2 + $0xc08] sm:$0xff]
    %v1345 = vld [vmem:[#allocation2 + $0xc10] sm:$0xff]
    %v1346 = vld [vmem:[#allocation2 + $0xc18] sm:$0xff]
    %v1347 = vld [vmem:[#allocation2 + $0xc20] sm:$0xff]
    %v1348 = vld [vmem:[#allocation2 + $0xc28] sm:$0xff]
    %v1349 = vld [vmem:[#allocation2 + $0xc30] sm:$0xff]
    %v1350 = vld [vmem:[#allocation2 + $0xc38] sm:$0xff]
    %v1351 = vld [vmem:[#allocation2 + $0xc40] sm:$0xff]
    %v1352 = vld [vmem:[#allocation2 + $0xc48] sm:$0xff]
    %v1353 = vld [vmem:[#allocation2 + $0xc50] sm:$0xff]
    %v1354 = vld [vmem:[#allocation2 + $0xc58] sm:$0xff]
    %v1355 = vld [vmem:[#allocation2 + $0xc60] sm:$0xff]
    %v1356 = vld [vmem:[#allocation2 + $0xc68] sm:$0xff]
    %v1357 = vld [vmem:[#allocation2 + $0xc70] sm:$0xff]
    %v1358 = vld [vmem:[#allocation2 + $0xc78] sm:$0xff]
    %v1359 = vld [vmem:[#allocation2 + $0xc80] sm:$0xff]
    %v1360 = vld [vmem:[#allocation2 + $0xc88] sm:$0xff]
    %v1361 = vld [vmem:[#allocation2 + $0xc90] sm:$0xff]
    %v1362 = vld [vmem:[#allocation2 + $0xc98] sm:$0xff]
    %v1363 = vld [vmem:[#allocation2 + $0xca0] sm:$0xff]
    %v1364 = vld [vmem:[#allocation2 + $0xca8] sm:$0xff]
    %v1365 = vld [vmem:[#allocation2 + $0xcb0] sm:$0xff]
    %v1366 = vld [vmem:[#allocation2 + $0xcb8] sm:$0xff]
    %v1367 = vld [vmem:[#allocation2 + $0xcc0] sm:$0xff]
    %v1368 = vld [vmem:[#allocation2 + $0xcc8] sm:$0xff]
    %v1369 = vld [vmem:[#allocation2 + $0xcd0] sm:$0xff]
    %v1370 = vld [vmem:[#allocation2 + $0xcd8] sm:$0xff]
    %v1371 = vld [vmem:[#allocation2 + $0xce0] sm:$0xff]
    %v1372 = vld [vmem:[#allocation2 + $0xce8] sm:$0xff]
    %v1373 = vld [vmem:[#allocation2 + $0xcf0] sm:$0xff]
    %v1374 = vld [vmem:[#allocation2 + $0xcf8] sm:$0xff]
    %v1375 = vld [vmem:[#allocation2 + $0xd00] sm:$0xff]
    %v1376 = vld [vmem:[#allocation2 + $0xd08] sm:$0xff]
    %v1377 = vld [vmem:[#allocation2 + $0xd10] sm:$0xff]
    %v1378 = vld [vmem:[#allocation2 + $0xd18] sm:$0xff]
    %v1379 = vld [vmem:[#allocation2 + $0xd20] sm:$0xff]
    %v1380 = vld [vmem:[#allocation2 + $0xd28] sm:$0xff]
    %v1381 = vld [vmem:[#allocation2 + $0xd30] sm:$0xff]
    %v1382 = vld [vmem:[#allocation2 + $0xd38] sm:$0xff]
    %v1383 = vld [vmem:[#allocation2 + $0xd40] sm:$0xff]
    %v1384 = vld [vmem:[#allocation2 + $0xd48] sm:$0xff]
    %v1385 = vld [vmem:[#allocation2 + $0xd50] sm:$0xff]
    %v1386 = vld [vmem:[#allocation2 + $0xd58] sm:$0xff]
    %v1387 = vld [vmem:[#allocation2 + $0xd60] sm:$0xff]
    %v1388 = vld [vmem:[#allocation2 + $0xd68] sm:$0xff]
    %v1389 = vld [vmem:[#allocation2 + $0xd70] sm:$0xff]
    %v1390 = vld [vmem:[#allocation2 + $0xd78] sm:$0xff]
    %v1391 = vld [vmem:[#allocation2 + $0xd80] sm:$0xff]
    %v1392 = vld [vmem:[#allocation2 + $0xd88] sm:$0xff]
    %v1393 = vld [vmem:[#allocation2 + $0xd90] sm:$0xff]
    %v1394 = vld [vmem:[#allocation2 + $0xd98] sm:$0xff]
    %v1395 = vld [vmem:[#allocation2 + $0xda0] sm:$0xff]
    %v1396 = vld [vmem:[#allocation2 + $0xda8] sm:$0xff]
    %v1397 = vld [vmem:[#allocation2 + $0xdb0] sm:$0xff]
    %v1398 = vld [vmem:[#allocation2 + $0xdb8] sm:$0xff]
    %v1399 = vld [vmem:[#allocation2 + $0xdc0] sm:$0xff]
    %v1400 = vld [vmem:[#allocation2 + $0xdc8] sm:$0xff]
    %v1401 = vld [vmem:[#allocation2 + $0xdd0] sm:$0xff]
    %v1402 = vld [vmem:[#allocation2 + $0xdd8] sm:$0xff]
    %v1403 = vld [vmem:[#allocation2 + $0xde0] sm:$0xff]
    %v1404 = vld [vmem:[#allocation2 + $0xde8] sm:$0xff]
    %v1405 = vld [vmem:[#allocation2 + $0xdf0] sm:$0xff]
    %v1406 = vld [vmem:[#allocation2 + $0xdf8] sm:$0xff]
    %v1407 = vld [vmem:[#allocation2 + $0xe00] sm:$0xff]
    %v1408 = vld [vmem:[#allocation2 + $0xe08] sm:$0xff]
    %v1409 = vld [vmem:[#allocation2 + $0xe10] sm:$0xff]
    %v1410 = vld [vmem:[#allocation2 + $0xe18] sm:$0xff]
    %v1411 = vld [vmem:[#allocation2 + $0xe20] sm:$0xff]
    %v1412 = vld [vmem:[#allocation2 + $0xe28] sm:$0xff]
    %v1413 = vld [vmem:[#allocation2 + $0xe30] sm:$0xff]
    %v1414 = vld [vmem:[#allocation2 + $0xe38] sm:$0xff]
    %v1415 = vld [vmem:[#allocation2 + $0xe40] sm:$0xff]
    %v1416 = vld [vmem:[#allocation2 + $0xe48] sm:$0xff]
    %v1417 = vld [vmem:[#allocation2 + $0xe50] sm:$0xff]
    %v1418 = vld [vmem:[#allocation2 + $0xe58] sm:$0xff]
    %v1419 = vld [vmem:[#allocation2 + $0xe60] sm:$0xff]
    %v1420 = vld [vmem:[#allocation2 + $0xe68] sm:$0xff]
    %v1421 = vld [vmem:[#allocation2 + $0xe70] sm:$0xff]
    %v1422 = vld [vmem:[#allocation2 + $0xe78] sm:$0xff]
    %v1423 = vld [vmem:[#allocation2 + $0xe80] sm:$0xff]
    %v1424 = vld [vmem:[#allocation2 + $0xe88] sm:$0xff]
    %v1425 = vld [vmem:[#allocation2 + $0xe90] sm:$0xff]
    %v1426 = vld [vmem:[#allocation2 + $0xe98] sm:$0xff]
    %v1427 = vld [vmem:[#allocation2 + $0xea0] sm:$0xff]
    %v1428 = vld [vmem:[#allocation2 + $0xea8] sm:$0xff]
    %v1429 = vld [vmem:[#allocation2 + $0xeb0] sm:$0xff]
    %v1430 = vld [vmem:[#allocation2 + $0xeb8] sm:$0xff]
    %v1431 = vld [vmem:[#allocation2 + $0xec0] sm:$0xff]
    %v1432 = vld [vmem:[#allocation2 + $0xec8] sm:$0xff]
    %v1433 = vld [vmem:[#allocation2 + $0xed0] sm:$0xff]
    %v1434 = vld [vmem:[#allocation2 + $0xed8] sm:$0xff]
    %v1435 = vld [vmem:[#allocation2 + $0xee0] sm:$0xff]
    %v1436 = vld [vmem:[#allocation2 + $0xee8] sm:$0xff]
    %v1437 = vld [vmem:[#allocation2 + $0xef0] sm:$0xff]
    %v1438 = vld [vmem:[#allocation2 + $0xef8] sm:$0xff]
    %v1439 = vld [vmem:[#allocation2 + $0xf00] sm:$0xff]
    %v1440 = vld [vmem:[#allocation2 + $0xf08] sm:$0xff]
    %v1441 = vld [vmem:[#allocation2 + $0xf10] sm:$0xff]
    %v1442 = vld [vmem:[#allocation2 + $0xf18] sm:$0xff]
    %v1443 = vld [vmem:[#allocation2 + $0xf20] sm:$0xff]
    %v1444 = vld [vmem:[#allocation2 + $0xf28] sm:$0xff]
    %v1445 = vld [vmem:[#allocation2 + $0xf30] sm:$0xff]
    %v1446 = vld [vmem:[#allocation2 + $0xf38] sm:$0xff]
    %v1447 = vld [vmem:[#allocation2 + $0xf40] sm:$0xff]
    %v1448 = vld [vmem:[#allocation2 + $0xf48] sm:$0xff]
    %v1449 = vld [vmem:[#allocation2 + $0xf50] sm:$0xff]
    %v1450 = vld [vmem:[#allocation2 + $0xf58] sm:$0xff]
    %v1451 = vld [vmem:[#allocation2 + $0xf60] sm:$0xff]
    %v1452 = vld [vmem:[#allocation2 + $0xf68] sm:$0xff]
    %v1453 = vld [vmem:[#allocation2 + $0xf70] sm:$0xff]
    %v1454 = vld [vmem:[#allocation2 + $0xf78] sm:$0xff]
    %v1455 = vld [vmem:[#allocation2 + $0xf80] sm:$0xff]
    %v1456 = vld [vmem:[#allocation2 + $0xf88] sm:$0xff]
    %v1457 = vld [vmem:[#allocation2 + $0xf90] sm:$0xff]
    %v1458 = vld [vmem:[#allocation2 + $0xf98] sm:$0xff]
    %v1459 = vld [vmem:[#allocation2 + $0xfa0] sm:$0xff]
    %v1460 = vld [vmem:[#allocation2 + $0xfa8] sm:$0xff]
    %v1461 = vld [vmem:[#allocation2 + $0xfb0] sm:$0xff]
    %v1462 = vld [vmem:[#allocation2 + $0xfb8] sm:$0xff]
    %v1463 = vld [vmem:[#allocation2 + $0xfc0] sm:$0xff]
    %v1464 = vld [vmem:[#allocation2 + $0xfc8] sm:$0xff]
    %v1465 = vld [vmem:[#allocation2 + $0xfd0] sm:$0xff]
    %v1466 = vld [vmem:[#allocation2 + $0xfd8] sm:$0xff]
    %v1467 = vld [vmem:[#allocation2 + $0xfe0] sm:$0xff]
    %v1468 = vld [vmem:[#allocation2 + $0xfe8] sm:$0xff]
    %v1469 = vld [vmem:[#allocation2 + $0xff0] sm:$0xff]
    %v1470 = vld [vmem:[#allocation2 + $0xff8] sm:$0xff]
    %v1983 = vunpack.c.l.b16 %v959
    %v1984 = vunpack.c.h.b16 %v959
    %v1985 = vunpack.c.l.b16 %v960
    %v1986 = vunpack.c.h.b16 %v960
    %v1987 = vunpack.c.l.b16 %v961
    %v1988 = vunpack.c.h.b16 %v961
    %v1989 = vunpack.c.l.b16 %v962
    %v1990 = vunpack.c.h.b16 %v962
    %v1991 = vunpack.c.l.b16 %v963
    %v1992 = vunpack.c.h.b16 %v963
    %v1993 = vunpack.c.l.b16 %v964
    %v1994 = vunpack.c.h.b16 %v964
    %v1995 = vunpack.c.l.b16 %v965
    %v1996 = vunpack.c.h.b16 %v965
    %v1997 = vunpack.c.l.b16 %v966
    %v1998 = vunpack.c.h.b16 %v966
    %v1999 = vunpack.c.l.b16 %v967
    %v2000 = vunpack.c.h.b16 %v967
    %v2001 = vunpack.c.l.b16 %v968
    %v2002 = vunpack.c.h.b16 %v968
    %v2003 = vunpack.c.l.b16 %v969
    %v2004 = vunpack.c.h.b16 %v969
    %v2005 = vunpack.c.l.b16 %v970
    %v2006 = vunpack.c.h.b16 %v970
    %v2007 = vunpack.c.l.b16 %v971
    %v2008 = vunpack.c.h.b16 %v971
    %v2009 = vunpack.c.l.b16 %v972
    %v2010 = vunpack.c.h.b16 %v972
    %v2011 = vunpack.c.l.b16 %v973
    %v2012 = vunpack.c.h.b16 %v973
    %v2013 = vunpack.c.l.b16 %v974
    %v2014 = vunpack.c.h.b16 %v974
    %v2015 = vunpack.c.l.b16 %v975
    %v2016 = vunpack.c.h.b16 %v975
    %v2017 = vunpack.c.l.b16 %v976
    %v2018 = vunpack.c.h.b16 %v976
    %v2019 = vunpack.c.l.b16 %v977
    %v2020 = vunpack.c.h.b16 %v977
    %v2021 = vunpack.c.l.b16 %v978
    %v2022 = vunpack.c.h.b16 %v978
    %v2023 = vunpack.c.l.b16 %v979
    %v2024 = vunpack.c.h.b16 %v979
    %v2025 = vunpack.c.l.b16 %v980
    %v2026 = vunpack.c.h.b16 %v980
    %v2027 = vunpack.c.l.b16 %v981
    %v2028 = vunpack.c.h.b16 %v981
    %v2029 = vunpack.c.l.b16 %v982
    %v2030 = vunpack.c.h.b16 %v982
    %v2031 = vunpack.c.l.b16 %v983
    %v2032 = vunpack.c.h.b16 %v983
    %v2033 = vunpack.c.l.b16 %v984
    %v2034 = vunpack.c.h.b16 %v984
    %v2035 = vunpack.c.l.b16 %v985
    %v2036 = vunpack.c.h.b16 %v985
    %v2037 = vunpack.c.l.b16 %v986
    %v2038 = vunpack.c.h.b16 %v986
    %v2039 = vunpack.c.l.b16 %v987
    %v2040 = vunpack.c.h.b16 %v987
    %v2041 = vunpack.c.l.b16 %v988
    %v2042 = vunpack.c.h.b16 %v988
    %v2043 = vunpack.c.l.b16 %v989
    %v2044 = vunpack.c.h.b16 %v989
    %v2045 = vunpack.c.l.b16 %v990
    %v2046 = vunpack.c.h.b16 %v990
    %v2047 = vunpack.c.l.b16 %v991
    %v2048 = vunpack.c.h.b16 %v991
    %v2049 = vunpack.c.l.b16 %v992
    %v2050 = vunpack.c.h.b16 %v992
    %v2051 = vunpack.c.l.b16 %v993
    %v2052 = vunpack.c.h.b16 %v993
    %v2053 = vunpack.c.l.b16 %v994
    %v2054 = vunpack.c.h.b16 %v994
    %v2055 = vunpack.c.l.b16 %v995
    %v2056 = vunpack.c.h.b16 %v995
    %v2057 = vunpack.c.l.b16 %v996
    %v2058 = vunpack.c.h.b16 %v996
    %v2059 = vunpack.c.l.b16 %v997
    %v2060 = vunpack.c.h.b16 %v997
    %v2061 = vunpack.c.l.b16 %v998
    %v2062 = vunpack.c.h.b16 %v998
    %v2063 = vunpack.c.l.b16 %v999
    %v2064 = vunpack.c.h.b16 %v999
    %v2065 = vunpack.c.l.b16 %v1000
    %v2066 = vunpack.c.h.b16 %v1000
    %v2067 = vunpack.c.l.b16 %v1001
    %v2068 = vunpack.c.h.b16 %v1001
    %v2069 = vunpack.c.l.b16 %v1002
    %v2070 = vunpack.c.h.b16 %v1002
    %v2071 = vunpack.c.l.b16 %v1003
    %v2072 = vunpack.c.h.b16 %v1003
    %v2073 = vunpack.c.l.b16 %v1004
    %v2074 = vunpack.c.h.b16 %v1004
    %v2075 = vunpack.c.l.b16 %v1005
    %v2076 = vunpack.c.h.b16 %v1005
    %v2077 = vunpack.c.l.b16 %v1006
    %v2078 = vunpack.c.h.b16 %v1006
    %v2079 = vunpack.c.l.b16 %v1007
    %v2080 = vunpack.c.h.b16 %v1007
    %v2081 = vunpack.c.l.b16 %v1008
    %v2082 = vunpack.c.h.b16 %v1008
    %v2083 = vunpack.c.l.b16 %v1009
    %v2084 = vunpack.c.h.b16 %v1009
    %v2085 = vunpack.c.l.b16 %v1010
    %v2086 = vunpack.c.h.b16 %v1010
    %v2087 = vunpack.c.l.b16 %v1011
    %v2088 = vunpack.c.h.b16 %v1011
    %v2089 = vunpack.c.l.b16 %v1012
    %v2090 = vunpack.c.h.b16 %v1012
    %v2091 = vunpack.c.l.b16 %v1013
    %v2092 = vunpack.c.h.b16 %v1013
    %v2093 = vunpack.c.l.b16 %v1014
    %v2094 = vunpack.c.h.b16 %v1014
    %v2095 = vunpack.c.l.b16 %v1015
    %v2096 = vunpack.c.h.b16 %v1015
    %v2097 = vunpack.c.l.b16 %v1016
    %v2098 = vunpack.c.h.b16 %v1016
    %v2099 = vunpack.c.l.b16 %v1017
    %v2100 = vunpack.c.h.b16 %v1017
    %v2101 = vunpack.c.l.b16 %v1018
    %v2102 = vunpack.c.h.b16 %v1018
    %v2103 = vunpack.c.l.b16 %v1019
    %v2104 = vunpack.c.h.b16 %v1019
    %v2105 = vunpack.c.l.b16 %v1020
    %v2106 = vunpack.c.h.b16 %v1020
    %v2107 = vunpack.c.l.b16 %v1021
    %v2108 = vunpack.c.h.b16 %v1021
    %v2109 = vunpack.c.l.b16 %v1022
    %v2110 = vunpack.c.h.b16 %v1022
    %v2111 = vunpack.c.l.b16 %v1023
    %v2112 = vunpack.c.h.b16 %v1023
    %v2113 = vunpack.c.l.b16 %v1024
    %v2114 = vunpack.c.h.b16 %v1024
    %v2115 = vunpack.c.l.b16 %v1025
    %v2116 = vunpack.c.h.b16 %v1025
    %v2117 = vunpack.c.l.b16 %v1026
    %v2118 = vunpack.c.h.b16 %v1026
    %v2119 = vunpack.c.l.b16 %v1027
    %v2120 = vunpack.c.h.b16 %v1027
    %v2121 = vunpack.c.l.b16 %v1028
    %v2122 = vunpack.c.h.b16 %v1028
    %v2123 = vunpack.c.l.b16 %v1029
    %v2124 = vunpack.c.h.b16 %v1029
    %v2125 = vunpack.c.l.b16 %v1030
    %v2126 = vunpack.c.h.b16 %v1030
    %v2127 = vunpack.c.l.b16 %v1031
    %v2128 = vunpack.c.h.b16 %v1031
    %v2129 = vunpack.c.l.b16 %v1032
    %v2130 = vunpack.c.h.b16 %v1032
    %v2131 = vunpack.c.l.b16 %v1033
    %v2132 = vunpack.c.h.b16 %v1033
    %v2133 = vunpack.c.l.b16 %v1034
    %v2134 = vunpack.c.h.b16 %v1034
    %v2135 = vunpack.c.l.b16 %v1035
    %v2136 = vunpack.c.h.b16 %v1035
    %v2137 = vunpack.c.l.b16 %v1036
    %v2138 = vunpack.c.h.b16 %v1036
    %v2139 = vunpack.c.l.b16 %v1037
    %v2140 = vunpack.c.h.b16 %v1037
    %v2141 = vunpack.c.l.b16 %v1038
    %v2142 = vunpack.c.h.b16 %v1038
    %v2143 = vunpack.c.l.b16 %v1039
    %v2144 = vunpack.c.h.b16 %v1039
    %v2145 = vunpack.c.l.b16 %v1040
    %v2146 = vunpack.c.h.b16 %v1040
    %v2147 = vunpack.c.l.b16 %v1041
    %v2148 = vunpack.c.h.b16 %v1041
    %v2149 = vunpack.c.l.b16 %v1042
    %v2150 = vunpack.c.h.b16 %v1042
    %v2151 = vunpack.c.l.b16 %v1043
    %v2152 = vunpack.c.h.b16 %v1043
    %v2153 = vunpack.c.l.b16 %v1044
    %v2154 = vunpack.c.h.b16 %v1044
    %v2155 = vunpack.c.l.b16 %v1045
    %v2156 = vunpack.c.h.b16 %v1045
    %v2157 = vunpack.c.l.b16 %v1046
    %v2158 = vunpack.c.h.b16 %v1046
    %v2159 = vunpack.c.l.b16 %v1047
    %v2160 = vunpack.c.h.b16 %v1047
    %v2161 = vunpack.c.l.b16 %v1048
    %v2162 = vunpack.c.h.b16 %v1048
    %v2163 = vunpack.c.l.b16 %v1049
    %v2164 = vunpack.c.h.b16 %v1049
    %v2165 = vunpack.c.l.b16 %v1050
    %v2166 = vunpack.c.h.b16 %v1050
    %v2167 = vunpack.c.l.b16 %v1051
    %v2168 = vunpack.c.h.b16 %v1051
    %v2169 = vunpack.c.l.b16 %v1052
    %v2170 = vunpack.c.h.b16 %v1052
    %v2171 = vunpack.c.l.b16 %v1053
    %v2172 = vunpack.c.h.b16 %v1053
    %v2173 = vunpack.c.l.b16 %v1054
    %v2174 = vunpack.c.h.b16 %v1054
    %v2175 = vunpack.c.l.b16 %v1055
    %v2176 = vunpack.c.h.b16 %v1055
    %v2177 = vunpack.c.l.b16 %v1056
    %v2178 = vunpack.c.h.b16 %v1056
    %v2179 = vunpack.c.l.b16 %v1057
    %v2180 = vunpack.c.h.b16 %v1057
    %v2181 = vunpack.c.l.b16 %v1058
    %v2182 = vunpack.c.h.b16 %v1058
    %v2183 = vunpack.c.l.b16 %v1059
    %v2184 = vunpack.c.h.b16 %v1059
    %v2185 = vunpack.c.l.b16 %v1060
    %v2186 = vunpack.c.h.b16 %v1060
    %v2187 = vunpack.c.l.b16 %v1061
    %v2188 = vunpack.c.h.b16 %v1061
    %v2189 = vunpack.c.l.b16 %v1062
    %v2190 = vunpack.c.h.b16 %v1062
    %v2191 = vunpack.c.l.b16 %v1063
    %v2192 = vunpack.c.h.b16 %v1063
    %v2193 = vunpack.c.l.b16 %v1064
    %v2194 = vunpack.c.h.b16 %v1064
    %v2195 = vunpack.c.l.b16 %v1065
    %v2196 = vunpack.c.h.b16 %v1065
    %v2197 = vunpack.c.l.b16 %v1066
    %v2198 = vunpack.c.h.b16 %v1066
    %v2199 = vunpack.c.l.b16 %v1067
    %v2200 = vunpack.c.h.b16 %v1067
    %v2201 = vunpack.c.l.b16 %v1068
    %v2202 = vunpack.c.h.b16 %v1068
    %v2203 = vunpack.c.l.b16 %v1069
    %v2204 = vunpack.c.h.b16 %v1069
    %v2205 = vunpack.c.l.b16 %v1070
    %v2206 = vunpack.c.h.b16 %v1070
    %v2207 = vunpack.c.l.b16 %v1071
    %v2208 = vunpack.c.h.b16 %v1071
    %v2209 = vunpack.c.l.b16 %v1072
    %v2210 = vunpack.c.h.b16 %v1072
    %v2211 = vunpack.c.l.b16 %v1073
    %v2212 = vunpack.c.h.b16 %v1073
    %v2213 = vunpack.c.l.b16 %v1074
    %v2214 = vunpack.c.h.b16 %v1074
    %v2215 = vunpack.c.l.b16 %v1075
    %v2216 = vunpack.c.h.b16 %v1075
    %v2217 = vunpack.c.l.b16 %v1076
    %v2218 = vunpack.c.h.b16 %v1076
    %v2219 = vunpack.c.l.b16 %v1077
    %v2220 = vunpack.c.h.b16 %v1077
    %v2221 = vunpack.c.l.b16 %v1078
    %v2222 = vunpack.c.h.b16 %v1078
    %v2223 = vunpack.c.l.b16 %v1079
    %v2224 = vunpack.c.h.b16 %v1079
    %v2225 = vunpack.c.l.b16 %v1080
    %v2226 = vunpack.c.h.b16 %v1080
    %v2227 = vunpack.c.l.b16 %v1081
    %v2228 = vunpack.c.h.b16 %v1081
    %v2229 = vunpack.c.l.b16 %v1082
    %v2230 = vunpack.c.h.b16 %v1082
    %v2231 = vunpack.c.l.b16 %v1083
    %v2232 = vunpack.c.h.b16 %v1083
    %v2233 = vunpack.c.l.b16 %v1084
    %v2234 = vunpack.c.h.b16 %v1084
    %v2235 = vunpack.c.l.b16 %v1085
    %v2236 = vunpack.c.h.b16 %v1085
    %v2237 = vunpack.c.l.b16 %v1086
    %v2238 = vunpack.c.h.b16 %v1086
    %v2239 = vunpack.c.l.b16 %v1087
    %v2240 = vunpack.c.h.b16 %v1087
    %v2241 = vunpack.c.l.b16 %v1088
    %v2242 = vunpack.c.h.b16 %v1088
    %v2243 = vunpack.c.l.b16 %v1089
    %v2244 = vunpack.c.h.b16 %v1089
    %v2245 = vunpack.c.l.b16 %v1090
    %v2246 = vunpack.c.h.b16 %v1090
    %v2247 = vunpack.c.l.b16 %v1091
    %v2248 = vunpack.c.h.b16 %v1091
    %v2249 = vunpack.c.l.b16 %v1092
    %v2250 = vunpack.c.h.b16 %v1092
    %v2251 = vunpack.c.l.b16 %v1093
    %v2252 = vunpack.c.h.b16 %v1093
    %v2253 = vunpack.c.l.b16 %v1094
    %v2254 = vunpack.c.h.b16 %v1094
    %v2255 = vunpack.c.l.b16 %v1095
    %v2256 = vunpack.c.h.b16 %v1095
    %v2257 = vunpack.c.l.b16 %v1096
    %v2258 = vunpack.c.h.b16 %v1096
    %v2259 = vunpack.c.l.b16 %v1097
    %v2260 = vunpack.c.h.b16 %v1097
    %v2261 = vunpack.c.l.b16 %v1098
    %v2262 = vunpack.c.h.b16 %v1098
    %v2263 = vunpack.c.l.b16 %v1099
    %v2264 = vunpack.c.h.b16 %v1099
    %v2265 = vunpack.c.l.b16 %v1100
    %v2266 = vunpack.c.h.b16 %v1100
    %v2267 = vunpack.c.l.b16 %v1101
    %v2268 = vunpack.c.h.b16 %v1101
    %v2269 = vunpack.c.l.b16 %v1102
    %v2270 = vunpack.c.h.b16 %v1102
    %v2271 = vunpack.c.l.b16 %v1103
    %v2272 = vunpack.c.h.b16 %v1103
    %v2273 = vunpack.c.l.b16 %v1104
    %v2274 = vunpack.c.h.b16 %v1104
    %v2275 = vunpack.c.l.b16 %v1105
    %v2276 = vunpack.c.h.b16 %v1105
    %v2277 = vunpack.c.l.b16 %v1106
    %v2278 = vunpack.c.h.b16 %v1106
    %v2279 = vunpack.c.l.b16 %v1107
    %v2280 = vunpack.c.h.b16 %v1107
    %v2281 = vunpack.c.l.b16 %v1108
    %v2282 = vunpack.c.h.b16 %v1108
    %v2283 = vunpack.c.l.b16 %v1109
    %v2284 = vunpack.c.h.b16 %v1109
    %v2285 = vunpack.c.l.b16 %v1110
    %v2286 = vunpack.c.h.b16 %v1110
    %v2287 = vunpack.c.l.b16 %v1111
    %v2288 = vunpack.c.h.b16 %v1111
    %v2289 = vunpack.c.l.b16 %v1112
    %v2290 = vunpack.c.h.b16 %v1112
    %v2291 = vunpack.c.l.b16 %v1113
    %v2292 = vunpack.c.h.b16 %v1113
    %v2293 = vunpack.c.l.b16 %v1114
    %v2294 = vunpack.c.h.b16 %v1114
    %v2295 = vunpack.c.l.b16 %v1115
    %v2296 = vunpack.c.h.b16 %v1115
    %v2297 = vunpack.c.l.b16 %v1116
    %v2298 = vunpack.c.h.b16 %v1116
    %v2299 = vunpack.c.l.b16 %v1117
    %v2300 = vunpack.c.h.b16 %v1117
    %v2301 = vunpack.c.l.b16 %v1118
    %v2302 = vunpack.c.h.b16 %v1118
    %v2303 = vunpack.c.l.b16 %v1119
    %v2304 = vunpack.c.h.b16 %v1119
    %v2305 = vunpack.c.l.b16 %v1120
    %v2306 = vunpack.c.h.b16 %v1120
    %v2307 = vunpack.c.l.b16 %v1121
    %v2308 = vunpack.c.h.b16 %v1121
    %v2309 = vunpack.c.l.b16 %v1122
    %v2310 = vunpack.c.h.b16 %v1122
    %v2311 = vunpack.c.l.b16 %v1123
    %v2312 = vunpack.c.h.b16 %v1123
    %v2313 = vunpack.c.l.b16 %v1124
    %v2314 = vunpack.c.h.b16 %v1124
    %v2315 = vunpack.c.l.b16 %v1125
    %v2316 = vunpack.c.h.b16 %v1125
    %v2317 = vunpack.c.l.b16 %v1126
    %v2318 = vunpack.c.h.b16 %v1126
    %v2319 = vunpack.c.l.b16 %v1127
    %v2320 = vunpack.c.h.b16 %v1127
    %v2321 = vunpack.c.l.b16 %v1128
    %v2322 = vunpack.c.h.b16 %v1128
    %v2323 = vunpack.c.l.b16 %v1129
    %v2324 = vunpack.c.h.b16 %v1129
    %v2325 = vunpack.c.l.b16 %v1130
    %v2326 = vunpack.c.h.b16 %v1130
    %v2327 = vunpack.c.l.b16 %v1131
    %v2328 = vunpack.c.h.b16 %v1131
    %v2329 = vunpack.c.l.b16 %v1132
    %v2330 = vunpack.c.h.b16 %v1132
    %v2331 = vunpack.c.l.b16 %v1133
    %v2332 = vunpack.c.h.b16 %v1133
    %v2333 = vunpack.c.l.b16 %v1134
    %v2334 = vunpack.c.h.b16 %v1134
    %v2335 = vunpack.c.l.b16 %v1135
    %v2336 = vunpack.c.h.b16 %v1135
    %v2337 = vunpack.c.l.b16 %v1136
    %v2338 = vunpack.c.h.b16 %v1136
    %v2339 = vunpack.c.l.b16 %v1137
    %v2340 = vunpack.c.h.b16 %v1137
    %v2341 = vunpack.c.l.b16 %v1138
    %v2342 = vunpack.c.h.b16 %v1138
    %v2343 = vunpack.c.l.b16 %v1139
    %v2344 = vunpack.c.h.b16 %v1139
    %v2345 = vunpack.c.l.b16 %v1140
    %v2346 = vunpack.c.h.b16 %v1140
    %v2347 = vunpack.c.l.b16 %v1141
    %v2348 = vunpack.c.h.b16 %v1141
    %v2349 = vunpack.c.l.b16 %v1142
    %v2350 = vunpack.c.h.b16 %v1142
    %v2351 = vunpack.c.l.b16 %v1143
    %v2352 = vunpack.c.h.b16 %v1143
    %v2353 = vunpack.c.l.b16 %v1144
    %v2354 = vunpack.c.h.b16 %v1144
    %v2355 = vunpack.c.l.b16 %v1145
    %v2356 = vunpack.c.h.b16 %v1145
    %v2357 = vunpack.c.l.b16 %v1146
    %v2358 = vunpack.c.h.b16 %v1146
    %v2359 = vunpack.c.l.b16 %v1147
    %v2360 = vunpack.c.h.b16 %v1147
    %v2361 = vunpack.c.l.b16 %v1148
    %v2362 = vunpack.c.h.b16 %v1148
    %v2363 = vunpack.c.l.b16 %v1149
    %v2364 = vunpack.c.h.b16 %v1149
    %v2365 = vunpack.c.l.b16 %v1150
    %v2366 = vunpack.c.h.b16 %v1150
    %v2367 = vunpack.c.l.b16 %v1151
    %v2368 = vunpack.c.h.b16 %v1151
    %v2369 = vunpack.c.l.b16 %v1152
    %v2370 = vunpack.c.h.b16 %v1152
    %v2371 = vunpack.c.l.b16 %v1153
    %v2372 = vunpack.c.h.b16 %v1153
    %v2373 = vunpack.c.l.b16 %v1154
    %v2374 = vunpack.c.h.b16 %v1154
    %v2375 = vunpack.c.l.b16 %v1155
    %v2376 = vunpack.c.h.b16 %v1155
    %v2377 = vunpack.c.l.b16 %v1156
    %v2378 = vunpack.c.h.b16 %v1156
    %v2379 = vunpack.c.l.b16 %v1157
    %v2380 = vunpack.c.h.b16 %v1157
    %v2381 = vunpack.c.l.b16 %v1158
    %v2382 = vunpack.c.h.b16 %v1158
    %v2383 = vunpack.c.l.b16 %v1159
    %v2384 = vunpack.c.h.b16 %v1159
    %v2385 = vunpack.c.l.b16 %v1160
    %v2386 = vunpack.c.h.b16 %v1160
    %v2387 = vunpack.c.l.b16 %v1161
    %v2388 = vunpack.c.h.b16 %v1161
    %v2389 = vunpack.c.l.b16 %v1162
    %v2390 = vunpack.c.h.b16 %v1162
    %v2391 = vunpack.c.l.b16 %v1163
    %v2392 = vunpack.c.h.b16 %v1163
    %v2393 = vunpack.c.l.b16 %v1164
    %v2394 = vunpack.c.h.b16 %v1164
    %v2395 = vunpack.c.l.b16 %v1165
    %v2396 = vunpack.c.h.b16 %v1165
    %v2397 = vunpack.c.l.b16 %v1166
    %v2398 = vunpack.c.h.b16 %v1166
    %v2399 = vunpack.c.l.b16 %v1167
    %v2400 = vunpack.c.h.b16 %v1167
    %v2401 = vunpack.c.l.b16 %v1168
    %v2402 = vunpack.c.h.b16 %v1168
    %v2403 = vunpack.c.l.b16 %v1169
    %v2404 = vunpack.c.h.b16 %v1169
    %v2405 = vunpack.c.l.b16 %v1170
    %v2406 = vunpack.c.h.b16 %v1170
    %v2407 = vunpack.c.l.b16 %v1171
    %v2408 = vunpack.c.h.b16 %v1171
    %v2409 = vunpack.c.l.b16 %v1172
    %v2410 = vunpack.c.h.b16 %v1172
    %v2411 = vunpack.c.l.b16 %v1173
    %v2412 = vunpack.c.h.b16 %v1173
    %v2413 = vunpack.c.l.b16 %v1174
    %v2414 = vunpack.c.h.b16 %v1174
    %v2415 = vunpack.c.l.b16 %v1175
    %v2416 = vunpack.c.h.b16 %v1175
    %v2417 = vunpack.c.l.b16 %v1176
    %v2418 = vunpack.c.h.b16 %v1176
    %v2419 = vunpack.c.l.b16 %v1177
    %v2420 = vunpack.c.h.b16 %v1177
    %v2421 = vunpack.c.l.b16 %v1178
    %v2422 = vunpack.c.h.b16 %v1178
    %v2423 = vunpack.c.l.b16 %v1179
    %v2424 = vunpack.c.h.b16 %v1179
    %v2425 = vunpack.c.l.b16 %v1180
    %v2426 = vunpack.c.h.b16 %v1180
    %v2427 = vunpack.c.l.b16 %v1181
    %v2428 = vunpack.c.h.b16 %v1181
    %v2429 = vunpack.c.l.b16 %v1182
    %v2430 = vunpack.c.h.b16 %v1182
    %v2431 = vunpack.c.l.b16 %v1183
    %v2432 = vunpack.c.h.b16 %v1183
    %v2433 = vunpack.c.l.b16 %v1184
    %v2434 = vunpack.c.h.b16 %v1184
    %v2435 = vunpack.c.l.b16 %v1185
    %v2436 = vunpack.c.h.b16 %v1185
    %v2437 = vunpack.c.l.b16 %v1186
    %v2438 = vunpack.c.h.b16 %v1186
    %v2439 = vunpack.c.l.b16 %v1187
    %v2440 = vunpack.c.h.b16 %v1187
    %v2441 = vunpack.c.l.b16 %v1188
    %v2442 = vunpack.c.h.b16 %v1188
    %v2443 = vunpack.c.l.b16 %v1189
    %v2444 = vunpack.c.h.b16 %v1189
    %v2445 = vunpack.c.l.b16 %v1190
    %v2446 = vunpack.c.h.b16 %v1190
    %v2447 = vunpack.c.l.b16 %v1191
    %v2448 = vunpack.c.h.b16 %v1191
    %v2449 = vunpack.c.l.b16 %v1192
    %v2450 = vunpack.c.h.b16 %v1192
    %v2451 = vunpack.c.l.b16 %v1193
    %v2452 = vunpack.c.h.b16 %v1193
    %v2453 = vunpack.c.l.b16 %v1194
    %v2454 = vunpack.c.h.b16 %v1194
    %v2455 = vunpack.c.l.b16 %v1195
    %v2456 = vunpack.c.h.b16 %v1195
    %v2457 = vunpack.c.l.b16 %v1196
    %v2458 = vunpack.c.h.b16 %v1196
    %v2459 = vunpack.c.l.b16 %v1197
    %v2460 = vunpack.c.h.b16 %v1197
    %v2461 = vunpack.c.l.b16 %v1198
    %v2462 = vunpack.c.h.b16 %v1198
    %v2463 = vunpack.c.l.b16 %v1199
    %v2464 = vunpack.c.h.b16 %v1199
    %v2465 = vunpack.c.l.b16 %v1200
    %v2466 = vunpack.c.h.b16 %v1200
    %v2467 = vunpack.c.l.b16 %v1201
    %v2468 = vunpack.c.h.b16 %v1201
    %v2469 = vunpack.c.l.b16 %v1202
    %v2470 = vunpack.c.h.b16 %v1202
    %v2471 = vunpack.c.l.b16 %v1203
    %v2472 = vunpack.c.h.b16 %v1203
    %v2473 = vunpack.c.l.b16 %v1204
    %v2474 = vunpack.c.h.b16 %v1204
    %v2475 = vunpack.c.l.b16 %v1205
    %v2476 = vunpack.c.h.b16 %v1205
    %v2477 = vunpack.c.l.b16 %v1206
    %v2478 = vunpack.c.h.b16 %v1206
    %v2479 = vunpack.c.l.b16 %v1207
    %v2480 = vunpack.c.h.b16 %v1207
    %v2481 = vunpack.c.l.b16 %v1208
    %v2482 = vunpack.c.h.b16 %v1208
    %v2483 = vunpack.c.l.b16 %v1209
    %v2484 = vunpack.c.h.b16 %v1209
    %v2485 = vunpack.c.l.b16 %v1210
    %v2486 = vunpack.c.h.b16 %v1210
    %v2487 = vunpack.c.l.b16 %v1211
    %v2488 = vunpack.c.h.b16 %v1211
    %v2489 = vunpack.c.l.b16 %v1212
    %v2490 = vunpack.c.h.b16 %v1212
    %v2491 = vunpack.c.l.b16 %v1213
    %v2492 = vunpack.c.h.b16 %v1213
    %v2493 = vunpack.c.l.b16 %v1214
    %v2494 = vunpack.c.h.b16 %v1214
    %v2495 = vunpack.c.l.b16 %v1215
    %v2496 = vunpack.c.h.b16 %v1215
    %v2497 = vunpack.c.l.b16 %v1216
    %v2498 = vunpack.c.h.b16 %v1216
    %v2499 = vunpack.c.l.b16 %v1217
    %v2500 = vunpack.c.h.b16 %v1217
    %v2501 = vunpack.c.l.b16 %v1218
    %v2502 = vunpack.c.h.b16 %v1218
    %v2503 = vunpack.c.l.b16 %v1219
    %v2504 = vunpack.c.h.b16 %v1219
    %v2505 = vunpack.c.l.b16 %v1220
    %v2506 = vunpack.c.h.b16 %v1220
    %v2507 = vunpack.c.l.b16 %v1221
    %v2508 = vunpack.c.h.b16 %v1221
    %v2509 = vunpack.c.l.b16 %v1222
    %v2510 = vunpack.c.h.b16 %v1222
    %v2511 = vunpack.c.l.b16 %v1223
    %v2512 = vunpack.c.h.b16 %v1223
    %v2513 = vunpack.c.l.b16 %v1224
    %v2514 = vunpack.c.h.b16 %v1224
    %v2515 = vunpack.c.l.b16 %v1225
    %v2516 = vunpack.c.h.b16 %v1225
    %v2517 = vunpack.c.l.b16 %v1226
    %v2518 = vunpack.c.h.b16 %v1226
    %v2519 = vunpack.c.l.b16 %v1227
    %v2520 = vunpack.c.h.b16 %v1227
    %v2521 = vunpack.c.l.b16 %v1228
    %v2522 = vunpack.c.h.b16 %v1228
    %v2523 = vunpack.c.l.b16 %v1229
    %v2524 = vunpack.c.h.b16 %v1229
    %v2525 = vunpack.c.l.b16 %v1230
    %v2526 = vunpack.c.h.b16 %v1230
    %v2527 = vunpack.c.l.b16 %v1231
    %v2528 = vunpack.c.h.b16 %v1231
    %v2529 = vunpack.c.l.b16 %v1232
    %v2530 = vunpack.c.h.b16 %v1232
    %v2531 = vunpack.c.l.b16 %v1233
    %v2532 = vunpack.c.h.b16 %v1233
    %v2533 = vunpack.c.l.b16 %v1234
    %v2534 = vunpack.c.h.b16 %v1234
    %v2535 = vunpack.c.l.b16 %v1235
    %v2536 = vunpack.c.h.b16 %v1235
    %v2537 = vunpack.c.l.b16 %v1236
    %v2538 = vunpack.c.h.b16 %v1236
    %v2539 = vunpack.c.l.b16 %v1237
    %v2540 = vunpack.c.h.b16 %v1237
    %v2541 = vunpack.c.l.b16 %v1238
    %v2542 = vunpack.c.h.b16 %v1238
    %v2543 = vunpack.c.l.b16 %v1239
    %v2544 = vunpack.c.h.b16 %v1239
    %v2545 = vunpack.c.l.b16 %v1240
    %v2546 = vunpack.c.h.b16 %v1240
    %v2547 = vunpack.c.l.b16 %v1241
    %v2548 = vunpack.c.h.b16 %v1241
    %v2549 = vunpack.c.l.b16 %v1242
    %v2550 = vunpack.c.h.b16 %v1242
    %v2551 = vunpack.c.l.b16 %v1243
    %v2552 = vunpack.c.h.b16 %v1243
    %v2553 = vunpack.c.l.b16 %v1244
    %v2554 = vunpack.c.h.b16 %v1244
    %v2555 = vunpack.c.l.b16 %v1245
    %v2556 = vunpack.c.h.b16 %v1245
    %v2557 = vunpack.c.l.b16 %v1246
    %v2558 = vunpack.c.h.b16 %v1246
    %v2559 = vunpack.c.l.b16 %v1247
    %v2560 = vunpack.c.h.b16 %v1247
    %v2561 = vunpack.c.l.b16 %v1248
    %v2562 = vunpack.c.h.b16 %v1248
    %v2563 = vunpack.c.l.b16 %v1249
    %v2564 = vunpack.c.h.b16 %v1249
    %v2565 = vunpack.c.l.b16 %v1250
    %v2566 = vunpack.c.h.b16 %v1250
    %v2567 = vunpack.c.l.b16 %v1251
    %v2568 = vunpack.c.h.b16 %v1251
    %v2569 = vunpack.c.l.b16 %v1252
    %v2570 = vunpack.c.h.b16 %v1252
    %v2571 = vunpack.c.l.b16 %v1253
    %v2572 = vunpack.c.h.b16 %v1253
    %v2573 = vunpack.c.l.b16 %v1254
    %v2574 = vunpack.c.h.b16 %v1254
    %v2575 = vunpack.c.l.b16 %v1255
    %v2576 = vunpack.c.h.b16 %v1255
    %v2577 = vunpack.c.l.b16 %v1256
    %v2578 = vunpack.c.h.b16 %v1256
    %v2579 = vunpack.c.l.b16 %v1257
    %v2580 = vunpack.c.h.b16 %v1257
    %v2581 = vunpack.c.l.b16 %v1258
    %v2582 = vunpack.c.h.b16 %v1258
    %v2583 = vunpack.c.l.b16 %v1259
    %v2584 = vunpack.c.h.b16 %v1259
    %v2585 = vunpack.c.l.b16 %v1260
    %v2586 = vunpack.c.h.b16 %v1260
    %v2587 = vunpack.c.l.b16 %v1261
    %v2588 = vunpack.c.h.b16 %v1261
    %v2589 = vunpack.c.l.b16 %v1262
    %v2590 = vunpack.c.h.b16 %v1262
    %v2591 = vunpack.c.l.b16 %v1263
    %v2592 = vunpack.c.h.b16 %v1263
    %v2593 = vunpack.c.l.b16 %v1264
    %v2594 = vunpack.c.h.b16 %v1264
    %v2595 = vunpack.c.l.b16 %v1265
    %v2596 = vunpack.c.h.b16 %v1265
    %v2597 = vunpack.c.l.b16 %v1266
    %v2598 = vunpack.c.h.b16 %v1266
    %v2599 = vunpack.c.l.b16 %v1267
    %v2600 = vunpack.c.h.b16 %v1267
    %v2601 = vunpack.c.l.b16 %v1268
    %v2602 = vunpack.c.h.b16 %v1268
    %v2603 = vunpack.c.l.b16 %v1269
    %v2604 = vunpack.c.h.b16 %v1269
    %v2605 = vunpack.c.l.b16 %v1270
    %v2606 = vunpack.c.h.b16 %v1270
    %v2607 = vunpack.c.l.b16 %v1271
    %v2608 = vunpack.c.h.b16 %v1271
    %v2609 = vunpack.c.l.b16 %v1272
    %v2610 = vunpack.c.h.b16 %v1272
    %v2611 = vunpack.c.l.b16 %v1273
    %v2612 = vunpack.c.h.b16 %v1273
    %v2613 = vunpack.c.l.b16 %v1274
    %v2614 = vunpack.c.h.b16 %v1274
    %v2615 = vunpack.c.l.b16 %v1275
    %v2616 = vunpack.c.h.b16 %v1275
    %v2617 = vunpack.c.l.b16 %v1276
    %v2618 = vunpack.c.h.b16 %v1276
    %v2619 = vunpack.c.l.b16 %v1277
    %v2620 = vunpack.c.h.b16 %v1277
    %v2621 = vunpack.c.l.b16 %v1278
    %v2622 = vunpack.c.h.b16 %v1278
    %v2623 = vunpack.c.l.b16 %v1279
    %v2624 = vunpack.c.h.b16 %v1279
    %v2625 = vunpack.c.l.b16 %v1280
    %v2626 = vunpack.c.h.b16 %v1280
    %v2627 = vunpack.c.l.b16 %v1281
    %v2628 = vunpack.c.h.b16 %v1281
    %v2629 = vunpack.c.l.b16 %v1282
    %v2630 = vunpack.c.h.b16 %v1282
    %v2631 = vunpack.c.l.b16 %v1283
    %v2632 = vunpack.c.h.b16 %v1283
    %v2633 = vunpack.c.l.b16 %v1284
    %v2634 = vunpack.c.h.b16 %v1284
    %v2635 = vunpack.c.l.b16 %v1285
    %v2636 = vunpack.c.h.b16 %v1285
    %v2637 = vunpack.c.l.b16 %v1286
    %v2638 = vunpack.c.h.b16 %v1286
    %v2639 = vunpack.c.l.b16 %v1287
    %v2640 = vunpack.c.h.b16 %v1287
    %v2641 = vunpack.c.l.b16 %v1288
    %v2642 = vunpack.c.h.b16 %v1288
    %v2643 = vunpack.c.l.b16 %v1289
    %v2644 = vunpack.c.h.b16 %v1289
    %v2645 = vunpack.c.l.b16 %v1290
    %v2646 = vunpack.c.h.b16 %v1290
    %v2647 = vunpack.c.l.b16 %v1291
    %v2648 = vunpack.c.h.b16 %v1291
    %v2649 = vunpack.c.l.b16 %v1292
    %v2650 = vunpack.c.h.b16 %v1292
    %v2651 = vunpack.c.l.b16 %v1293
    %v2652 = vunpack.c.h.b16 %v1293
    %v2653 = vunpack.c.l.b16 %v1294
    %v2654 = vunpack.c.h.b16 %v1294
    %v2655 = vunpack.c.l.b16 %v1295
    %v2656 = vunpack.c.h.b16 %v1295
    %v2657 = vunpack.c.l.b16 %v1296
    %v2658 = vunpack.c.h.b16 %v1296
    %v2659 = vunpack.c.l.b16 %v1297
    %v2660 = vunpack.c.h.b16 %v1297
    %v2661 = vunpack.c.l.b16 %v1298
    %v2662 = vunpack.c.h.b16 %v1298
    %v2663 = vunpack.c.l.b16 %v1299
    %v2664 = vunpack.c.h.b16 %v1299
    %v2665 = vunpack.c.l.b16 %v1300
    %v2666 = vunpack.c.h.b16 %v1300
    %v2667 = vunpack.c.l.b16 %v1301
    %v2668 = vunpack.c.h.b16 %v1301
    %v2669 = vunpack.c.l.b16 %v1302
    %v2670 = vunpack.c.h.b16 %v1302
    %v2671 = vunpack.c.l.b16 %v1303
    %v2672 = vunpack.c.h.b16 %v1303
    %v2673 = vunpack.c.l.b16 %v1304
    %v2674 = vunpack.c.h.b16 %v1304
    %v2675 = vunpack.c.l.b16 %v1305
    %v2676 = vunpack.c.h.b16 %v1305
    %v2677 = vunpack.c.l.b16 %v1306
    %v2678 = vunpack.c.h.b16 %v1306
    %v2679 = vunpack.c.l.b16 %v1307
    %v2680 = vunpack.c.h.b16 %v1307
    %v2681 = vunpack.c.l.b16 %v1308
    %v2682 = vunpack.c.h.b16 %v1308
    %v2683 = vunpack.c.l.b16 %v1309
    %v2684 = vunpack.c.h.b16 %v1309
    %v2685 = vunpack.c.l.b16 %v1310
    %v2686 = vunpack.c.h.b16 %v1310
    %v2687 = vunpack.c.l.b16 %v1311
    %v2688 = vunpack.c.h.b16 %v1311
    %v2689 = vunpack.c.l.b16 %v1312
    %v2690 = vunpack.c.h.b16 %v1312
    %v2691 = vunpack.c.l.b16 %v1313
    %v2692 = vunpack.c.h.b16 %v1313
    %v2693 = vunpack.c.l.b16 %v1314
    %v2694 = vunpack.c.h.b16 %v1314
    %v2695 = vunpack.c.l.b16 %v1315
    %v2696 = vunpack.c.h.b16 %v1315
    %v2697 = vunpack.c.l.b16 %v1316
    %v2698 = vunpack.c.h.b16 %v1316
    %v2699 = vunpack.c.l.b16 %v1317
    %v2700 = vunpack.c.h.b16 %v1317
    %v2701 = vunpack.c.l.b16 %v1318
    %v2702 = vunpack.c.h.b16 %v1318
    %v2703 = vunpack.c.l.b16 %v1319
    %v2704 = vunpack.c.h.b16 %v1319
    %v2705 = vunpack.c.l.b16 %v1320
    %v2706 = vunpack.c.h.b16 %v1320
    %v2707 = vunpack.c.l.b16 %v1321
    %v2708 = vunpack.c.h.b16 %v1321
    %v2709 = vunpack.c.l.b16 %v1322
    %v2710 = vunpack.c.h.b16 %v1322
    %v2711 = vunpack.c.l.b16 %v1323
    %v2712 = vunpack.c.h.b16 %v1323
    %v2713 = vunpack.c.l.b16 %v1324
    %v2714 = vunpack.c.h.b16 %v1324
    %v2715 = vunpack.c.l.b16 %v1325
    %v2716 = vunpack.c.h.b16 %v1325
    %v2717 = vunpack.c.l.b16 %v1326
    %v2718 = vunpack.c.h.b16 %v1326
    %v2719 = vunpack.c.l.b16 %v1327
    %v2720 = vunpack.c.h.b16 %v1327
    %v2721 = vunpack.c.l.b16 %v1328
    %v2722 = vunpack.c.h.b16 %v1328
    %v2723 = vunpack.c.l.b16 %v1329
    %v2724 = vunpack.c.h.b16 %v1329
    %v2725 = vunpack.c.l.b16 %v1330
    %v2726 = vunpack.c.h.b16 %v1330
    %v2727 = vunpack.c.l.b16 %v1331
    %v2728 = vunpack.c.h.b16 %v1331
    %v2729 = vunpack.c.l.b16 %v1332
    %v2730 = vunpack.c.h.b16 %v1332
    %v2731 = vunpack.c.l.b16 %v1333
    %v2732 = vunpack.c.h.b16 %v1333
    %v2733 = vunpack.c.l.b16 %v1334
    %v2734 = vunpack.c.h.b16 %v1334
    %v2735 = vunpack.c.l.b16 %v1335
    %v2736 = vunpack.c.h.b16 %v1335
    %v2737 = vunpack.c.l.b16 %v1336
    %v2738 = vunpack.c.h.b16 %v1336
    %v2739 = vunpack.c.l.b16 %v1337
    %v2740 = vunpack.c.h.b16 %v1337
    %v2741 = vunpack.c.l.b16 %v1338
    %v2742 = vunpack.c.h.b16 %v1338
    %v2743 = vunpack.c.l.b16 %v1339
    %v2744 = vunpack.c.h.b16 %v1339
    %v2745 = vunpack.c.l.b16 %v1340
    %v2746 = vunpack.c.h.b16 %v1340
    %v2747 = vunpack.c.l.b16 %v1341
    %v2748 = vunpack.c.h.b16 %v1341
    %v2749 = vunpack.c.l.b16 %v1342
    %v2750 = vunpack.c.h.b16 %v1342
    %v2751 = vunpack.c.l.b16 %v1343
    %v2752 = vunpack.c.h.b16 %v1343
    %v2753 = vunpack.c.l.b16 %v1344
    %v2754 = vunpack.c.h.b16 %v1344
    %v2755 = vunpack.c.l.b16 %v1345
    %v2756 = vunpack.c.h.b16 %v1345
    %v2757 = vunpack.c.l.b16 %v1346
    %v2758 = vunpack.c.h.b16 %v1346
    %v2759 = vunpack.c.l.b16 %v1347
    %v2760 = vunpack.c.h.b16 %v1347
    %v2761 = vunpack.c.l.b16 %v1348
    %v2762 = vunpack.c.h.b16 %v1348
    %v2763 = vunpack.c.l.b16 %v1349
    %v2764 = vunpack.c.h.b16 %v1349
    %v2765 = vunpack.c.l.b16 %v1350
    %v2766 = vunpack.c.h.b16 %v1350
    %v2767 = vunpack.c.l.b16 %v1351
    %v2768 = vunpack.c.h.b16 %v1351
    %v2769 = vunpack.c.l.b16 %v1352
    %v2770 = vunpack.c.h.b16 %v1352
    %v2771 = vunpack.c.l.b16 %v1353
    %v2772 = vunpack.c.h.b16 %v1353
    %v2773 = vunpack.c.l.b16 %v1354
    %v2774 = vunpack.c.h.b16 %v1354
    %v2775 = vunpack.c.l.b16 %v1355
    %v2776 = vunpack.c.h.b16 %v1355
    %v2777 = vunpack.c.l.b16 %v1356
    %v2778 = vunpack.c.h.b16 %v1356
    %v2779 = vunpack.c.l.b16 %v1357
    %v2780 = vunpack.c.h.b16 %v1357
    %v2781 = vunpack.c.l.b16 %v1358
    %v2782 = vunpack.c.h.b16 %v1358
    %v2783 = vunpack.c.l.b16 %v1359
    %v2784 = vunpack.c.h.b16 %v1359
    %v2785 = vunpack.c.l.b16 %v1360
    %v2786 = vunpack.c.h.b16 %v1360
    %v2787 = vunpack.c.l.b16 %v1361
    %v2788 = vunpack.c.h.b16 %v1361
    %v2789 = vunpack.c.l.b16 %v1362
    %v2790 = vunpack.c.h.b16 %v1362
    %v2791 = vunpack.c.l.b16 %v1363
    %v2792 = vunpack.c.h.b16 %v1363
    %v2793 = vunpack.c.l.b16 %v1364
    %v2794 = vunpack.c.h.b16 %v1364
    %v2795 = vunpack.c.l.b16 %v1365
    %v2796 = vunpack.c.h.b16 %v1365
    %v2797 = vunpack.c.l.b16 %v1366
    %v2798 = vunpack.c.h.b16 %v1366
    %v2799 = vunpack.c.l.b16 %v1367
    %v2800 = vunpack.c.h.b16 %v1367
    %v2801 = vunpack.c.l.b16 %v1368
    %v2802 = vunpack.c.h.b16 %v1368
    %v2803 = vunpack.c.l.b16 %v1369
    %v2804 = vunpack.c.h.b16 %v1369
    %v2805 = vunpack.c.l.b16 %v1370
    %v2806 = vunpack.c.h.b16 %v1370
    %v2807 = vunpack.c.l.b16 %v1371
    %v2808 = vunpack.c.h.b16 %v1371
    %v2809 = vunpack.c.l.b16 %v1372
    %v2810 = vunpack.c.h.b16 %v1372
    %v2811 = vunpack.c.l.b16 %v1373
    %v2812 = vunpack.c.h.b16 %v1373
    %v2813 = vunpack.c.l.b16 %v1374
    %v2814 = vunpack.c.h.b16 %v1374
    %v2815 = vunpack.c.l.b16 %v1375
    %v2816 = vunpack.c.h.b16 %v1375
    %v2817 = vunpack.c.l.b16 %v1376
    %v2818 = vunpack.c.h.b16 %v1376
    %v2819 = vunpack.c.l.b16 %v1377
    %v2820 = vunpack.c.h.b16 %v1377
    %v2821 = vunpack.c.l.b16 %v1378
    %v2822 = vunpack.c.h.b16 %v1378
    %v2823 = vunpack.c.l.b16 %v1379
    %v2824 = vunpack.c.h.b16 %v1379
    %v2825 = vunpack.c.l.b16 %v1380
    %v2826 = vunpack.c.h.b16 %v1380
    %v2827 = vunpack.c.l.b16 %v1381
    %v2828 = vunpack.c.h.b16 %v1381
    %v2829 = vunpack.c.l.b16 %v1382
    %v2830 = vunpack.c.h.b16 %v1382
    %v2831 = vunpack.c.l.b16 %v1383
    %v2832 = vunpack.c.h.b16 %v1383
    %v2833 = vunpack.c.l.b16 %v1384
    %v2834 = vunpack.c.h.b16 %v1384
    %v2835 = vunpack.c.l.b16 %v1385
    %v2836 = vunpack.c.h.b16 %v1385
    %v2837 = vunpack.c.l.b16 %v1386
    %v2838 = vunpack.c.h.b16 %v1386
    %v2839 = vunpack.c.l.b16 %v1387
    %v2840 = vunpack.c.h.b16 %v1387
    %v2841 = vunpack.c.l.b16 %v1388
    %v2842 = vunpack.c.h.b16 %v1388
    %v2843 = vunpack.c.l.b16 %v1389
    %v2844 = vunpack.c.h.b16 %v1389
    %v2845 = vunpack.c.l.b16 %v1390
    %v2846 = vunpack.c.h.b16 %v1390
    %v2847 = vunpack.c.l.b16 %v1391
    %v2848 = vunpack.c.h.b16 %v1391
    %v2849 = vunpack.c.l.b16 %v1392
    %v2850 = vunpack.c.h.b16 %v1392
    %v2851 = vunpack.c.l.b16 %v1393
    %v2852 = vunpack.c.h.b16 %v1393
    %v2853 = vunpack.c.l.b16 %v1394
    %v2854 = vunpack.c.h.b16 %v1394
    %v2855 = vunpack.c.l.b16 %v1395
    %v2856 = vunpack.c.h.b16 %v1395
    %v2857 = vunpack.c.l.b16 %v1396
    %v2858 = vunpack.c.h.b16 %v1396
    %v2859 = vunpack.c.l.b16 %v1397
    %v2860 = vunpack.c.h.b16 %v1397
    %v2861 = vunpack.c.l.b16 %v1398
    %v2862 = vunpack.c.h.b16 %v1398
    %v2863 = vunpack.c.l.b16 %v1399
    %v2864 = vunpack.c.h.b16 %v1399
    %v2865 = vunpack.c.l.b16 %v1400
    %v2866 = vunpack.c.h.b16 %v1400
    %v2867 = vunpack.c.l.b16 %v1401
    %v2868 = vunpack.c.h.b16 %v1401
    %v2869 = vunpack.c.l.b16 %v1402
    %v2870 = vunpack.c.h.b16 %v1402
    %v2871 = vunpack.c.l.b16 %v1403
    %v2872 = vunpack.c.h.b16 %v1403
    %v2873 = vunpack.c.l.b16 %v1404
    %v2874 = vunpack.c.h.b16 %v1404
    %v2875 = vunpack.c.l.b16 %v1405
    %v2876 = vunpack.c.h.b16 %v1405
    %v2877 = vunpack.c.l.b16 %v1406
    %v2878 = vunpack.c.h.b16 %v1406
    %v2879 = vunpack.c.l.b16 %v1407
    %v2880 = vunpack.c.h.b16 %v1407
    %v2881 = vunpack.c.l.b16 %v1408
    %v2882 = vunpack.c.h.b16 %v1408
    %v2883 = vunpack.c.l.b16 %v1409
    %v2884 = vunpack.c.h.b16 %v1409
    %v2885 = vunpack.c.l.b16 %v1410
    %v2886 = vunpack.c.h.b16 %v1410
    %v2887 = vunpack.c.l.b16 %v1411
    %v2888 = vunpack.c.h.b16 %v1411
    %v2889 = vunpack.c.l.b16 %v1412
    %v2890 = vunpack.c.h.b16 %v1412
    %v2891 = vunpack.c.l.b16 %v1413
    %v2892 = vunpack.c.h.b16 %v1413
    %v2893 = vunpack.c.l.b16 %v1414
    %v2894 = vunpack.c.h.b16 %v1414
    %v2895 = vunpack.c.l.b16 %v1415
    %v2896 = vunpack.c.h.b16 %v1415
    %v2897 = vunpack.c.l.b16 %v1416
    %v2898 = vunpack.c.h.b16 %v1416
    %v2899 = vunpack.c.l.b16 %v1417
    %v2900 = vunpack.c.h.b16 %v1417
    %v2901 = vunpack.c.l.b16 %v1418
    %v2902 = vunpack.c.h.b16 %v1418
    %v2903 = vunpack.c.l.b16 %v1419
    %v2904 = vunpack.c.h.b16 %v1419
    %v2905 = vunpack.c.l.b16 %v1420
    %v2906 = vunpack.c.h.b16 %v1420
    %v2907 = vunpack.c.l.b16 %v1421
    %v2908 = vunpack.c.h.b16 %v1421
    %v2909 = vunpack.c.l.b16 %v1422
    %v2910 = vunpack.c.h.b16 %v1422
    %v2911 = vunpack.c.l.b16 %v1423
    %v2912 = vunpack.c.h.b16 %v1423
    %v2913 = vunpack.c.l.b16 %v1424
    %v2914 = vunpack.c.h.b16 %v1424
    %v2915 = vunpack.c.l.b16 %v1425
    %v2916 = vunpack.c.h.b16 %v1425
    %v2917 = vunpack.c.l.b16 %v1426
    %v2918 = vunpack.c.h.b16 %v1426
    %v2919 = vunpack.c.l.b16 %v1427
    %v2920 = vunpack.c.h.b16 %v1427
    %v2921 = vunpack.c.l.b16 %v1428
    %v2922 = vunpack.c.h.b16 %v1428
    %v2923 = vunpack.c.l.b16 %v1429
    %v2924 = vunpack.c.h.b16 %v1429
    %v2925 = vunpack.c.l.b16 %v1430
    %v2926 = vunpack.c.h.b16 %v1430
    %v2927 = vunpack.c.l.b16 %v1431
    %v2928 = vunpack.c.h.b16 %v1431
    %v2929 = vunpack.c.l.b16 %v1432
    %v2930 = vunpack.c.h.b16 %v1432
    %v2931 = vunpack.c.l.b16 %v1433
    %v2932 = vunpack.c.h.b16 %v1433
    %v2933 = vunpack.c.l.b16 %v1434
    %v2934 = vunpack.c.h.b16 %v1434
    %v2935 = vunpack.c.l.b16 %v1435
    %v2936 = vunpack.c.h.b16 %v1435
    %v2937 = vunpack.c.l.b16 %v1436
    %v2938 = vunpack.c.h.b16 %v1436
    %v2939 = vunpack.c.l.b16 %v1437
    %v2940 = vunpack.c.h.b16 %v1437
    %v2941 = vunpack.c.l.b16 %v1438
    %v2942 = vunpack.c.h.b16 %v1438
    %v2943 = vunpack.c.l.b16 %v1439
    %v2944 = vunpack.c.h.b16 %v1439
    %v2945 = vunpack.c.l.b16 %v1440
    %v2946 = vunpack.c.h.b16 %v1440
    %v2947 = vunpack.c.l.b16 %v1441
    %v2948 = vunpack.c.h.b16 %v1441
    %v2949 = vunpack.c.l.b16 %v1442
    %v2950 = vunpack.c.h.b16 %v1442
    %v2951 = vunpack.c.l.b16 %v1443
    %v2952 = vunpack.c.h.b16 %v1443
    %v2953 = vunpack.c.l.b16 %v1444
    %v2954 = vunpack.c.h.b16 %v1444
    %v2955 = vunpack.c.l.b16 %v1445
    %v2956 = vunpack.c.h.b16 %v1445
    %v2957 = vunpack.c.l.b16 %v1446
    %v2958 = vunpack.c.h.b16 %v1446
    %v2959 = vunpack.c.l.b16 %v1447
    %v2960 = vunpack.c.h.b16 %v1447
    %v2961 = vunpack.c.l.b16 %v1448
    %v2962 = vunpack.c.h.b16 %v1448
    %v2963 = vunpack.c.l.b16 %v1449
    %v2964 = vunpack.c.h.b16 %v1449
    %v2965 = vunpack.c.l.b16 %v1450
    %v2966 = vunpack.c.h.b16 %v1450
    %v2967 = vunpack.c.l.b16 %v1451
    %v2968 = vunpack.c.h.b16 %v1451
    %v2969 = vunpack.c.l.b16 %v1452
    %v2970 = vunpack.c.h.b16 %v1452
    %v2971 = vunpack.c.l.b16 %v1453
    %v2972 = vunpack.c.h.b16 %v1453
    %v2973 = vunpack.c.l.b16 %v1454
    %v2974 = vunpack.c.h.b16 %v1454
    %v2975 = vunpack.c.l.b16 %v1455
    %v2976 = vunpack.c.h.b16 %v1455
    %v2977 = vunpack.c.l.b16 %v1456
    %v2978 = vunpack.c.h.b16 %v1456
    %v2979 = vunpack.c.l.b16 %v1457
    %v2980 = vunpack.c.h.b16 %v1457
    %v2981 = vunpack.c.l.b16 %v1458
    %v2982 = vunpack.c.h.b16 %v1458
    %v2983 = vunpack.c.l.b16 %v1459
    %v2984 = vunpack.c.h.b16 %v1459
    %v2985 = vunpack.c.l.b16 %v1460
    %v2986 = vunpack.c.h.b16 %v1460
    %v2987 = vunpack.c.l.b16 %v1461
    %v2988 = vunpack.c.h.b16 %v1461
    %v2989 = vunpack.c.l.b16 %v1462
    %v2990 = vunpack.c.h.b16 %v1462
    %v2991 = vunpack.c.l.b16 %v1463
    %v2992 = vunpack.c.h.b16 %v1463
    %v2993 = vunpack.c.l.b16 %v1464
    %v2994 = vunpack.c.h.b16 %v1464
    %v2995 = vunpack.c.l.b16 %v1465
    %v2996 = vunpack.c.h.b16 %v1465
    %v2997 = vunpack.c.l.b16 %v1466
    %v2998 = vunpack.c.h.b16 %v1466
    %v2999 = vunpack.c.l.b16 %v1467
    %v3000 = vunpack.c.h.b16 %v1467
    %v3001 = vunpack.c.l.b16 %v1468
    %v3002 = vunpack.c.h.b16 %v1468
    %v3003 = vunpack.c.l.b16 %v1469
    %v3004 = vunpack.c.h.b16 %v1469
    %v3005 = vunpack.c.l.b16 %v1470
    %v3006 = vunpack.c.h.b16 %v1470
    %v3007 = vpack.c.b16 %v1991, %v1983
    %v3008 = vpack.c.b16 %v1992, %v1984
    %v3009 = vpack.c.b16 %v1993, %v1985
    %v3010 = vpack.c.b16 %v1994, %v1986
    %v3011 = vpack.c.b16 %v1995, %v1987
    %v3012 = vpack.c.b16 %v1996, %v1988
    %v3013 = vpack.c.b16 %v1997, %v1989
    %v3014 = vpack.c.b16 %v1998, %v1990
    %v3015 = vpack.c.b16 %v2007, %v1999
    %v3016 = vpack.c.b16 %v2008, %v2000
    %v3017 = vpack.c.b16 %v2009, %v2001
    %v3018 = vpack.c.b16 %v2010, %v2002
    %v3019 = vpack.c.b16 %v2011, %v2003
    %v3020 = vpack.c.b16 %v2012, %v2004
    %v3021 = vpack.c.b16 %v2013, %v2005
    %v3022 = vpack.c.b16 %v2014, %v2006
    %v3023 = vpack.c.b16 %v2023, %v2015
    %v3024 = vpack.c.b16 %v2024, %v2016
    %v3025 = vpack.c.b16 %v2025, %v2017
    %v3026 = vpack.c.b16 %v2026, %v2018
    %v3027 = vpack.c.b16 %v2027, %v2019
    %v3028 = vpack.c.b16 %v2028, %v2020
    %v3029 = vpack.c.b16 %v2029, %v2021
    %v3030 = vpack.c.b16 %v2030, %v2022
    %v3031 = vpack.c.b16 %v2039, %v2031
    %v3032 = vpack.c.b16 %v2040, %v2032
    %v3033 = vpack.c.b16 %v2041, %v2033
    %v3034 = vpack.c.b16 %v2042, %v2034
    %v3035 = vpack.c.b16 %v2043, %v2035
    %v3036 = vpack.c.b16 %v2044, %v2036
    %v3037 = vpack.c.b16 %v2045, %v2037
    %v3038 = vpack.c.b16 %v2046, %v2038
    %v3039 = vpack.c.b16 %v2055, %v2047
    %v3040 = vpack.c.b16 %v2056, %v2048
    %v3041 = vpack.c.b16 %v2057, %v2049
    %v3042 = vpack.c.b16 %v2058, %v2050
    %v3043 = vpack.c.b16 %v2059, %v2051
    %v3044 = vpack.c.b16 %v2060, %v2052
    %v3045 = vpack.c.b16 %v2061, %v2053
    %v3046 = vpack.c.b16 %v2062, %v2054
    %v3047 = vpack.c.b16 %v2071, %v2063
    %v3048 = vpack.c.b16 %v2072, %v2064
    %v3049 = vpack.c.b16 %v2073, %v2065
    %v3050 = vpack.c.b16 %v2074, %v2066
    %v3051 = vpack.c.b16 %v2075, %v2067
    %v3052 = vpack.c.b16 %v2076, %v2068
    %v3053 = vpack.c.b16 %v2077, %v2069
    %v3054 = vpack.c.b16 %v2078, %v2070
    %v3055 = vpack.c.b16 %v2087, %v2079
    %v3056 = vpack.c.b16 %v2088, %v2080
    %v3057 = vpack.c.b16 %v2089, %v2081
    %v3058 = vpack.c.b16 %v2090, %v2082
    %v3059 = vpack.c.b16 %v2091, %v2083
    %v3060 = vpack.c.b16 %v2092, %v2084
    %v3061 = vpack.c.b16 %v2093, %v2085
    %v3062 = vpack.c.b16 %v2094, %v2086
    %v3063 = vpack.c.b16 %v2103, %v2095
    %v3064 = vpack.c.b16 %v2104, %v2096
    %v3065 = vpack.c.b16 %v2105, %v2097
    %v3066 = vpack.c.b16 %v2106, %v2098
    %v3067 = vpack.c.b16 %v2107, %v2099
    %v3068 = vpack.c.b16 %v2108, %v2100
    %v3069 = vpack.c.b16 %v2109, %v2101
    %v3070 = vpack.c.b16 %v2110, %v2102
    %v3071 = vpack.c.b16 %v2119, %v2111
    %v3072 = vpack.c.b16 %v2120, %v2112
    %v3073 = vpack.c.b16 %v2121, %v2113
    %v3074 = vpack.c.b16 %v2122, %v2114
    %v3075 = vpack.c.b16 %v2123, %v2115
    %v3076 = vpack.c.b16 %v2124, %v2116
    %v3077 = vpack.c.b16 %v2125, %v2117
    %v3078 = vpack.c.b16 %v2126, %v2118
    %v3079 = vpack.c.b16 %v2135, %v2127
    %v3080 = vpack.c.b16 %v2136, %v2128
    %v3081 = vpack.c.b16 %v2137, %v2129
    %v3082 = vpack.c.b16 %v2138, %v2130
    %v3083 = vpack.c.b16 %v2139, %v2131
    %v3084 = vpack.c.b16 %v2140, %v2132
    %v3085 = vpack.c.b16 %v2141, %v2133
    %v3086 = vpack.c.b16 %v2142, %v2134
    %v3087 = vpack.c.b16 %v2151, %v2143
    %v3088 = vpack.c.b16 %v2152, %v2144
    %v3089 = vpack.c.b16 %v2153, %v2145
    %v3090 = vpack.c.b16 %v2154, %v2146
    %v3091 = vpack.c.b16 %v2155, %v2147
    %v3092 = vpack.c.b16 %v2156, %v2148
    %v3093 = vpack.c.b16 %v2157, %v2149
    %v3094 = vpack.c.b16 %v2158, %v2150
    %v3095 = vpack.c.b16 %v2167, %v2159
    %v3096 = vpack.c.b16 %v2168, %v2160
    %v3097 = vpack.c.b16 %v2169, %v2161
    %v3098 = vpack.c.b16 %v2170, %v2162
    %v3099 = vpack.c.b16 %v2171, %v2163
    %v3100 = vpack.c.b16 %v2172, %v2164
    %v3101 = vpack.c.b16 %v2173, %v2165
    %v3102 = vpack.c.b16 %v2174, %v2166
    %v3103 = vpack.c.b16 %v2183, %v2175
    %v3104 = vpack.c.b16 %v2184, %v2176
    %v3105 = vpack.c.b16 %v2185, %v2177
    %v3106 = vpack.c.b16 %v2186, %v2178
    %v3107 = vpack.c.b16 %v2187, %v2179
    %v3108 = vpack.c.b16 %v2188, %v2180
    %v3109 = vpack.c.b16 %v2189, %v2181
    %v3110 = vpack.c.b16 %v2190, %v2182
    %v3111 = vpack.c.b16 %v2199, %v2191
    %v3112 = vpack.c.b16 %v2200, %v2192
    %v3113 = vpack.c.b16 %v2201, %v2193
    %v3114 = vpack.c.b16 %v2202, %v2194
    %v3115 = vpack.c.b16 %v2203, %v2195
    %v3116 = vpack.c.b16 %v2204, %v2196
    %v3117 = vpack.c.b16 %v2205, %v2197
    %v3118 = vpack.c.b16 %v2206, %v2198
    %v3119 = vpack.c.b16 %v2215, %v2207
    %v3120 = vpack.c.b16 %v2216, %v2208
    %v3121 = vpack.c.b16 %v2217, %v2209
    %v3122 = vpack.c.b16 %v2218, %v2210
    %v3123 = vpack.c.b16 %v2219, %v2211
    %v3124 = vpack.c.b16 %v2220, %v2212
    %v3125 = vpack.c.b16 %v2221, %v2213
    %v3126 = vpack.c.b16 %v2222, %v2214
    %v3127 = vpack.c.b16 %v2231, %v2223
    %v3128 = vpack.c.b16 %v2232, %v2224
    %v3129 = vpack.c.b16 %v2233, %v2225
    %v3130 = vpack.c.b16 %v2234, %v2226
    %v3131 = vpack.c.b16 %v2235, %v2227
    %v3132 = vpack.c.b16 %v2236, %v2228
    %v3133 = vpack.c.b16 %v2237, %v2229
    %v3134 = vpack.c.b16 %v2238, %v2230
    %v3135 = vpack.c.b16 %v2247, %v2239
    %v3136 = vpack.c.b16 %v2248, %v2240
    %v3137 = vpack.c.b16 %v2249, %v2241
    %v3138 = vpack.c.b16 %v2250, %v2242
    %v3139 = vpack.c.b16 %v2251, %v2243
    %v3140 = vpack.c.b16 %v2252, %v2244
    %v3141 = vpack.c.b16 %v2253, %v2245
    %v3142 = vpack.c.b16 %v2254, %v2246
    %v3143 = vpack.c.b16 %v2263, %v2255
    %v3144 = vpack.c.b16 %v2264, %v2256
    %v3145 = vpack.c.b16 %v2265, %v2257
    %v3146 = vpack.c.b16 %v2266, %v2258
    %v3147 = vpack.c.b16 %v2267, %v2259
    %v3148 = vpack.c.b16 %v2268, %v2260
    %v3149 = vpack.c.b16 %v2269, %v2261
    %v3150 = vpack.c.b16 %v2270, %v2262
    %v3151 = vpack.c.b16 %v2279, %v2271
    %v3152 = vpack.c.b16 %v2280, %v2272
    %v3153 = vpack.c.b16 %v2281, %v2273
    %v3154 = vpack.c.b16 %v2282, %v2274
    %v3155 = vpack.c.b16 %v2283, %v2275
    %v3156 = vpack.c.b16 %v2284, %v2276
    %v3157 = vpack.c.b16 %v2285, %v2277
    %v3158 = vpack.c.b16 %v2286, %v2278
    %v3159 = vpack.c.b16 %v2295, %v2287
    %v3160 = vpack.c.b16 %v2296, %v2288
    %v3161 = vpack.c.b16 %v2297, %v2289
    %v3162 = vpack.c.b16 %v2298, %v2290
    %v3163 = vpack.c.b16 %v2299, %v2291
    %v3164 = vpack.c.b16 %v2300, %v2292
    %v3165 = vpack.c.b16 %v2301, %v2293
    %v3166 = vpack.c.b16 %v2302, %v2294
    %v3167 = vpack.c.b16 %v2311, %v2303
    %v3168 = vpack.c.b16 %v2312, %v2304
    %v3169 = vpack.c.b16 %v2313, %v2305
    %v3170 = vpack.c.b16 %v2314, %v2306
    %v3171 = vpack.c.b16 %v2315, %v2307
    %v3172 = vpack.c.b16 %v2316, %v2308
    %v3173 = vpack.c.b16 %v2317, %v2309
    %v3174 = vpack.c.b16 %v2318, %v2310
    %v3175 = vpack.c.b16 %v2327, %v2319
    %v3176 = vpack.c.b16 %v2328, %v2320
    %v3177 = vpack.c.b16 %v2329, %v2321
    %v3178 = vpack.c.b16 %v2330, %v2322
    %v3179 = vpack.c.b16 %v2331, %v2323
    %v3180 = vpack.c.b16 %v2332, %v2324
    %v3181 = vpack.c.b16 %v2333, %v2325
    %v3182 = vpack.c.b16 %v2334, %v2326
    %v3183 = vpack.c.b16 %v2343, %v2335
    %v3184 = vpack.c.b16 %v2344, %v2336
    %v3185 = vpack.c.b16 %v2345, %v2337
    %v3186 = vpack.c.b16 %v2346, %v2338
    %v3187 = vpack.c.b16 %v2347, %v2339
    %v3188 = vpack.c.b16 %v2348, %v2340
    %v3189 = vpack.c.b16 %v2349, %v2341
    %v3190 = vpack.c.b16 %v2350, %v2342
    %v3191 = vpack.c.b16 %v2359, %v2351
    %v3192 = vpack.c.b16 %v2360, %v2352
    %v3193 = vpack.c.b16 %v2361, %v2353
    %v3194 = vpack.c.b16 %v2362, %v2354
    %v3195 = vpack.c.b16 %v2363, %v2355
    %v3196 = vpack.c.b16 %v2364, %v2356
    %v3197 = vpack.c.b16 %v2365, %v2357
    %v3198 = vpack.c.b16 %v2366, %v2358
    %v3199 = vpack.c.b16 %v2375, %v2367
    %v3200 = vpack.c.b16 %v2376, %v2368
    %v3201 = vpack.c.b16 %v2377, %v2369
    %v3202 = vpack.c.b16 %v2378, %v2370
    %v3203 = vpack.c.b16 %v2379, %v2371
    %v3204 = vpack.c.b16 %v2380, %v2372
    %v3205 = vpack.c.b16 %v2381, %v2373
    %v3206 = vpack.c.b16 %v2382, %v2374
    %v3207 = vpack.c.b16 %v2391, %v2383
    %v3208 = vpack.c.b16 %v2392, %v2384
    %v3209 = vpack.c.b16 %v2393, %v2385
    %v3210 = vpack.c.b16 %v2394, %v2386
    %v3211 = vpack.c.b16 %v2395, %v2387
    %v3212 = vpack.c.b16 %v2396, %v2388
    %v3213 = vpack.c.b16 %v2397, %v2389
    %v3214 = vpack.c.b16 %v2398, %v2390
    %v3215 = vpack.c.b16 %v2407, %v2399
    %v3216 = vpack.c.b16 %v2408, %v2400
    %v3217 = vpack.c.b16 %v2409, %v2401
    %v3218 = vpack.c.b16 %v2410, %v2402
    %v3219 = vpack.c.b16 %v2411, %v2403
    %v3220 = vpack.c.b16 %v2412, %v2404
    %v3221 = vpack.c.b16 %v2413, %v2405
    %v3222 = vpack.c.b16 %v2414, %v2406
    %v3223 = vpack.c.b16 %v2423, %v2415
    %v3224 = vpack.c.b16 %v2424, %v2416
    %v3225 = vpack.c.b16 %v2425, %v2417
    %v3226 = vpack.c.b16 %v2426, %v2418
    %v3227 = vpack.c.b16 %v2427, %v2419
    %v3228 = vpack.c.b16 %v2428, %v2420
    %v3229 = vpack.c.b16 %v2429, %v2421
    %v3230 = vpack.c.b16 %v2430, %v2422
    %v3231 = vpack.c.b16 %v2439, %v2431
    %v3232 = vpack.c.b16 %v2440, %v2432
    %v3233 = vpack.c.b16 %v2441, %v2433
    %v3234 = vpack.c.b16 %v2442, %v2434
    %v3235 = vpack.c.b16 %v2443, %v2435
    %v3236 = vpack.c.b16 %v2444, %v2436
    %v3237 = vpack.c.b16 %v2445, %v2437
    %v3238 = vpack.c.b16 %v2446, %v2438
    %v3239 = vpack.c.b16 %v2455, %v2447
    %v3240 = vpack.c.b16 %v2456, %v2448
    %v3241 = vpack.c.b16 %v2457, %v2449
    %v3242 = vpack.c.b16 %v2458, %v2450
    %v3243 = vpack.c.b16 %v2459, %v2451
    %v3244 = vpack.c.b16 %v2460, %v2452
    %v3245 = vpack.c.b16 %v2461, %v2453
    %v3246 = vpack.c.b16 %v2462, %v2454
    %v3247 = vpack.c.b16 %v2471, %v2463
    %v3248 = vpack.c.b16 %v2472, %v2464
    %v3249 = vpack.c.b16 %v2473, %v2465
    %v3250 = vpack.c.b16 %v2474, %v2466
    %v3251 = vpack.c.b16 %v2475, %v2467
    %v3252 = vpack.c.b16 %v2476, %v2468
    %v3253 = vpack.c.b16 %v2477, %v2469
    %v3254 = vpack.c.b16 %v2478, %v2470
    %v3255 = vpack.c.b16 %v2487, %v2479
    %v3256 = vpack.c.b16 %v2488, %v2480
    %v3257 = vpack.c.b16 %v2489, %v2481
    %v3258 = vpack.c.b16 %v2490, %v2482
    %v3259 = vpack.c.b16 %v2491, %v2483
    %v3260 = vpack.c.b16 %v2492, %v2484
    %v3261 = vpack.c.b16 %v2493, %v2485
    %v3262 = vpack.c.b16 %v2494, %v2486
    %v3263 = vpack.c.b16 %v2503, %v2495
    %v3264 = vpack.c.b16 %v2504, %v2496
    %v3265 = vpack.c.b16 %v2505, %v2497
    %v3266 = vpack.c.b16 %v2506, %v2498
    %v3267 = vpack.c.b16 %v2507, %v2499
    %v3268 = vpack.c.b16 %v2508, %v2500
    %v3269 = vpack.c.b16 %v2509, %v2501
    %v3270 = vpack.c.b16 %v2510, %v2502
    %v3271 = vpack.c.b16 %v2519, %v2511
    %v3272 = vpack.c.b16 %v2520, %v2512
    %v3273 = vpack.c.b16 %v2521, %v2513
    %v3274 = vpack.c.b16 %v2522, %v2514
    %v3275 = vpack.c.b16 %v2523, %v2515
    %v3276 = vpack.c.b16 %v2524, %v2516
    %v3277 = vpack.c.b16 %v2525, %v2517
    %v3278 = vpack.c.b16 %v2526, %v2518
    %v3279 = vpack.c.b16 %v2535, %v2527
    %v3280 = vpack.c.b16 %v2536, %v2528
    %v3281 = vpack.c.b16 %v2537, %v2529
    %v3282 = vpack.c.b16 %v2538, %v2530
    %v3283 = vpack.c.b16 %v2539, %v2531
    %v3284 = vpack.c.b16 %v2540, %v2532
    %v3285 = vpack.c.b16 %v2541, %v2533
    %v3286 = vpack.c.b16 %v2542, %v2534
    %v3287 = vpack.c.b16 %v2551, %v2543
    %v3288 = vpack.c.b16 %v2552, %v2544
    %v3289 = vpack.c.b16 %v2553, %v2545
    %v3290 = vpack.c.b16 %v2554, %v2546
    %v3291 = vpack.c.b16 %v2555, %v2547
    %v3292 = vpack.c.b16 %v2556, %v2548
    %v3293 = vpack.c.b16 %v2557, %v2549
    %v3294 = vpack.c.b16 %v2558, %v2550
    %v3295 = vpack.c.b16 %v2567, %v2559
    %v3296 = vpack.c.b16 %v2568, %v2560
    %v3297 = vpack.c.b16 %v2569, %v2561
    %v3298 = vpack.c.b16 %v2570, %v2562
    %v3299 = vpack.c.b16 %v2571, %v2563
    %v3300 = vpack.c.b16 %v2572, %v2564
    %v3301 = vpack.c.b16 %v2573, %v2565
    %v3302 = vpack.c.b16 %v2574, %v2566
    %v3303 = vpack.c.b16 %v2583, %v2575
    %v3304 = vpack.c.b16 %v2584, %v2576
    %v3305 = vpack.c.b16 %v2585, %v2577
    %v3306 = vpack.c.b16 %v2586, %v2578
    %v3307 = vpack.c.b16 %v2587, %v2579
    %v3308 = vpack.c.b16 %v2588, %v2580
    %v3309 = vpack.c.b16 %v2589, %v2581
    %v3310 = vpack.c.b16 %v2590, %v2582
    %v3311 = vpack.c.b16 %v2599, %v2591
    %v3312 = vpack.c.b16 %v2600, %v2592
    %v3313 = vpack.c.b16 %v2601, %v2593
    %v3314 = vpack.c.b16 %v2602, %v2594
    %v3315 = vpack.c.b16 %v2603, %v2595
    %v3316 = vpack.c.b16 %v2604, %v2596
    %v3317 = vpack.c.b16 %v2605, %v2597
    %v3318 = vpack.c.b16 %v2606, %v2598
    %v3319 = vpack.c.b16 %v2615, %v2607
    %v3320 = vpack.c.b16 %v2616, %v2608
    %v3321 = vpack.c.b16 %v2617, %v2609
    %v3322 = vpack.c.b16 %v2618, %v2610
    %v3323 = vpack.c.b16 %v2619, %v2611
    %v3324 = vpack.c.b16 %v2620, %v2612
    %v3325 = vpack.c.b16 %v2621, %v2613
    %v3326 = vpack.c.b16 %v2622, %v2614
    %v3327 = vpack.c.b16 %v2631, %v2623
    %v3328 = vpack.c.b16 %v2632, %v2624
    %v3329 = vpack.c.b16 %v2633, %v2625
    %v3330 = vpack.c.b16 %v2634, %v2626
    %v3331 = vpack.c.b16 %v2635, %v2627
    %v3332 = vpack.c.b16 %v2636, %v2628
    %v3333 = vpack.c.b16 %v2637, %v2629
    %v3334 = vpack.c.b16 %v2638, %v2630
    %v3335 = vpack.c.b16 %v2647, %v2639
    %v3336 = vpack.c.b16 %v2648, %v2640
    %v3337 = vpack.c.b16 %v2649, %v2641
    %v3338 = vpack.c.b16 %v2650, %v2642
    %v3339 = vpack.c.b16 %v2651, %v2643
    %v3340 = vpack.c.b16 %v2652, %v2644
    %v3341 = vpack.c.b16 %v2653, %v2645
    %v3342 = vpack.c.b16 %v2654, %v2646
    %v3343 = vpack.c.b16 %v2663, %v2655
    %v3344 = vpack.c.b16 %v2664, %v2656
    %v3345 = vpack.c.b16 %v2665, %v2657
    %v3346 = vpack.c.b16 %v2666, %v2658
    %v3347 = vpack.c.b16 %v2667, %v2659
    %v3348 = vpack.c.b16 %v2668, %v2660
    %v3349 = vpack.c.b16 %v2669, %v2661
    %v3350 = vpack.c.b16 %v2670, %v2662
    %v3351 = vpack.c.b16 %v2679, %v2671
    %v3352 = vpack.c.b16 %v2680, %v2672
    %v3353 = vpack.c.b16 %v2681, %v2673
    %v3354 = vpack.c.b16 %v2682, %v2674
    %v3355 = vpack.c.b16 %v2683, %v2675
    %v3356 = vpack.c.b16 %v2684, %v2676
    %v3357 = vpack.c.b16 %v2685, %v2677
    %v3358 = vpack.c.b16 %v2686, %v2678
    %v3359 = vpack.c.b16 %v2695, %v2687
    %v3360 = vpack.c.b16 %v2696, %v2688
    %v3361 = vpack.c.b16 %v2697, %v2689
    %v3362 = vpack.c.b16 %v2698, %v2690
    %v3363 = vpack.c.b16 %v2699, %v2691
    %v3364 = vpack.c.b16 %v2700, %v2692
    %v3365 = vpack.c.b16 %v2701, %v2693
    %v3366 = vpack.c.b16 %v2702, %v2694
    %v3367 = vpack.c.b16 %v2711, %v2703
    %v3368 = vpack.c.b16 %v2712, %v2704
    %v3369 = vpack.c.b16 %v2713, %v2705
    %v3370 = vpack.c.b16 %v2714, %v2706
    %v3371 = vpack.c.b16 %v2715, %v2707
    %v3372 = vpack.c.b16 %v2716, %v2708
    %v3373 = vpack.c.b16 %v2717, %v2709
    %v3374 = vpack.c.b16 %v2718, %v2710
    %v3375 = vpack.c.b16 %v2727, %v2719
    %v3376 = vpack.c.b16 %v2728, %v2720
    %v3377 = vpack.c.b16 %v2729, %v2721
    %v3378 = vpack.c.b16 %v2730, %v2722
    %v3379 = vpack.c.b16 %v2731, %v2723
    %v3380 = vpack.c.b16 %v2732, %v2724
    %v3381 = vpack.c.b16 %v2733, %v2725
    %v3382 = vpack.c.b16 %v2734, %v2726
    %v3383 = vpack.c.b16 %v2743, %v2735
    %v3384 = vpack.c.b16 %v2744, %v2736
    %v3385 = vpack.c.b16 %v2745, %v2737
    %v3386 = vpack.c.b16 %v2746, %v2738
    %v3387 = vpack.c.b16 %v2747, %v2739
    %v3388 = vpack.c.b16 %v2748, %v2740
    %v3389 = vpack.c.b16 %v2749, %v2741
    %v3390 = vpack.c.b16 %v2750, %v2742
    %v3391 = vpack.c.b16 %v2759, %v2751
    %v3392 = vpack.c.b16 %v2760, %v2752
    %v3393 = vpack.c.b16 %v2761, %v2753
    %v3394 = vpack.c.b16 %v2762, %v2754
    %v3395 = vpack.c.b16 %v2763, %v2755
    %v3396 = vpack.c.b16 %v2764, %v2756
    %v3397 = vpack.c.b16 %v2765, %v2757
    %v3398 = vpack.c.b16 %v2766, %v2758
    %v3399 = vpack.c.b16 %v2775, %v2767
    %v3400 = vpack.c.b16 %v2776, %v2768
    %v3401 = vpack.c.b16 %v2777, %v2769
    %v3402 = vpack.c.b16 %v2778, %v2770
    %v3403 = vpack.c.b16 %v2779, %v2771
    %v3404 = vpack.c.b16 %v2780, %v2772
    %v3405 = vpack.c.b16 %v2781, %v2773
    %v3406 = vpack.c.b16 %v2782, %v2774
    %v3407 = vpack.c.b16 %v2791, %v2783
    %v3408 = vpack.c.b16 %v2792, %v2784
    %v3409 = vpack.c.b16 %v2793, %v2785
    %v3410 = vpack.c.b16 %v2794, %v2786
    %v3411 = vpack.c.b16 %v2795, %v2787
    %v3412 = vpack.c.b16 %v2796, %v2788
    %v3413 = vpack.c.b16 %v2797, %v2789
    %v3414 = vpack.c.b16 %v2798, %v2790
    %v3415 = vpack.c.b16 %v2807, %v2799
    %v3416 = vpack.c.b16 %v2808, %v2800
    %v3417 = vpack.c.b16 %v2809, %v2801
    %v3418 = vpack.c.b16 %v2810, %v2802
    %v3419 = vpack.c.b16 %v2811, %v2803
    %v3420 = vpack.c.b16 %v2812, %v2804
    %v3421 = vpack.c.b16 %v2813, %v2805
    %v3422 = vpack.c.b16 %v2814, %v2806
    %v3423 = vpack.c.b16 %v2823, %v2815
    %v3424 = vpack.c.b16 %v2824, %v2816
    %v3425 = vpack.c.b16 %v2825, %v2817
    %v3426 = vpack.c.b16 %v2826, %v2818
    %v3427 = vpack.c.b16 %v2827, %v2819
    %v3428 = vpack.c.b16 %v2828, %v2820
    %v3429 = vpack.c.b16 %v2829, %v2821
    %v3430 = vpack.c.b16 %v2830, %v2822
    %v3431 = vpack.c.b16 %v2839, %v2831
    %v3432 = vpack.c.b16 %v2840, %v2832
    %v3433 = vpack.c.b16 %v2841, %v2833
    %v3434 = vpack.c.b16 %v2842, %v2834
    %v3435 = vpack.c.b16 %v2843, %v2835
    %v3436 = vpack.c.b16 %v2844, %v2836
    %v3437 = vpack.c.b16 %v2845, %v2837
    %v3438 = vpack.c.b16 %v2846, %v2838
    %v3439 = vpack.c.b16 %v2855, %v2847
    %v3440 = vpack.c.b16 %v2856, %v2848
    %v3441 = vpack.c.b16 %v2857, %v2849
    %v3442 = vpack.c.b16 %v2858, %v2850
    %v3443 = vpack.c.b16 %v2859, %v2851
    %v3444 = vpack.c.b16 %v2860, %v2852
    %v3445 = vpack.c.b16 %v2861, %v2853
    %v3446 = vpack.c.b16 %v2862, %v2854
    %v3447 = vpack.c.b16 %v2871, %v2863
    %v3448 = vpack.c.b16 %v2872, %v2864
    %v3449 = vpack.c.b16 %v2873, %v2865
    %v3450 = vpack.c.b16 %v2874, %v2866
    %v3451 = vpack.c.b16 %v2875, %v2867
    %v3452 = vpack.c.b16 %v2876, %v2868
    %v3453 = vpack.c.b16 %v2877, %v2869
    %v3454 = vpack.c.b16 %v2878, %v2870
    %v3455 = vpack.c.b16 %v2887, %v2879
    %v3456 = vpack.c.b16 %v2888, %v2880
    %v3457 = vpack.c.b16 %v2889, %v2881
    %v3458 = vpack.c.b16 %v2890, %v2882
    %v3459 = vpack.c.b16 %v2891, %v2883
    %v3460 = vpack.c.b16 %v2892, %v2884
    %v3461 = vpack.c.b16 %v2893, %v2885
    %v3462 = vpack.c.b16 %v2894, %v2886
    %v3463 = vpack.c.b16 %v2903, %v2895
    %v3464 = vpack.c.b16 %v2904, %v2896
    %v3465 = vpack.c.b16 %v2905, %v2897
    %v3466 = vpack.c.b16 %v2906, %v2898
    %v3467 = vpack.c.b16 %v2907, %v2899
    %v3468 = vpack.c.b16 %v2908, %v2900
    %v3469 = vpack.c.b16 %v2909, %v2901
    %v3470 = vpack.c.b16 %v2910, %v2902
    %v3471 = vpack.c.b16 %v2919, %v2911
    %v3472 = vpack.c.b16 %v2920, %v2912
    %v3473 = vpack.c.b16 %v2921, %v2913
    %v3474 = vpack.c.b16 %v2922, %v2914
    %v3475 = vpack.c.b16 %v2923, %v2915
    %v3476 = vpack.c.b16 %v2924, %v2916
    %v3477 = vpack.c.b16 %v2925, %v2917
    %v3478 = vpack.c.b16 %v2926, %v2918
    %v3479 = vpack.c.b16 %v2935, %v2927
    %v3480 = vpack.c.b16 %v2936, %v2928
    %v3481 = vpack.c.b16 %v2937, %v2929
    %v3482 = vpack.c.b16 %v2938, %v2930
    %v3483 = vpack.c.b16 %v2939, %v2931
    %v3484 = vpack.c.b16 %v2940, %v2932
    %v3485 = vpack.c.b16 %v2941, %v2933
    %v3486 = vpack.c.b16 %v2942, %v2934
    %v3487 = vpack.c.b16 %v2951, %v2943
    %v3488 = vpack.c.b16 %v2952, %v2944
    %v3489 = vpack.c.b16 %v2953, %v2945
    %v3490 = vpack.c.b16 %v2954, %v2946
    %v3491 = vpack.c.b16 %v2955, %v2947
    %v3492 = vpack.c.b16 %v2956, %v2948
    %v3493 = vpack.c.b16 %v2957, %v2949
    %v3494 = vpack.c.b16 %v2958, %v2950
    %v3495 = vpack.c.b16 %v2967, %v2959
    %v3496 = vpack.c.b16 %v2968, %v2960
    %v3497 = vpack.c.b16 %v2969, %v2961
    %v3498 = vpack.c.b16 %v2970, %v2962
    %v3499 = vpack.c.b16 %v2971, %v2963
    %v3500 = vpack.c.b16 %v2972, %v2964
    %v3501 = vpack.c.b16 %v2973, %v2965
    %v3502 = vpack.c.b16 %v2974, %v2966
    %v3503 = vpack.c.b16 %v2983, %v2975
    %v3504 = vpack.c.b16 %v2984, %v2976
    %v3505 = vpack.c.b16 %v2985, %v2977
    %v3506 = vpack.c.b16 %v2986, %v2978
    %v3507 = vpack.c.b16 %v2987, %v2979
    %v3508 = vpack.c.b16 %v2988, %v2980
    %v3509 = vpack.c.b16 %v2989, %v2981
    %v3510 = vpack.c.b16 %v2990, %v2982
    %v3511 = vpack.c.b16 %v2999, %v2991
    %v3512 = vpack.c.b16 %v3000, %v2992
    %v3513 = vpack.c.b16 %v3001, %v2993
    %v3514 = vpack.c.b16 %v3002, %v2994
    %v3515 = vpack.c.b16 %v3003, %v2995
    %v3516 = vpack.c.b16 %v3004, %v2996
    %v3517 = vpack.c.b16 %v3005, %v2997
    %v3518 = vpack.c.b16 %v3006, %v2998
    %4031 = vmatpush.bf16.msra.mxu0 %v3063
    %4032 = vmatpush.bf16.msra.mxu0 %v3055
    %4033 = vmatpush.bf16.msra.mxu0 %v3047
    %4034 = vmatpush.bf16.msra.mxu0 %v3039
    %4035 = vmatpush.bf16.msra.mxu0 %v3031
    %4036 = vmatpush.bf16.msra.mxu0 %v3023
    %4037 = vmatpush.bf16.msra.mxu0 %v3015
    %4038 = vmatpush.bf16.msra.mxu0 %v3007
    %4039 = vmatmul.bf16.gmra.mxu0 %v951
    %v4040 = vpop.f32.mrf.mxu0
    %v4041 = vadd.f32 0.0, %v4040
    %v4042 = vpop.f32.mrf.mxu0
    %v4043 = vadd.f32 0.0, %v4042
    %4044 = vdwg.mxu0
    %4045 = vmatpush.bf16.msra.mxu0 %v3127
    %4046 = vmatpush.bf16.msra.mxu0 %v3119
    %4047 = vmatpush.bf16.msra.mxu0 %v3111
    %4048 = vmatpush.bf16.msra.mxu0 %v3103
    %4049 = vmatpush.bf16.msra.mxu0 %v3095
    %4050 = vmatpush.bf16.msra.mxu0 %v3087
    %4051 = vmatpush.bf16.msra.mxu0 %v3079
    %4052 = vmatpush.bf16.msra.mxu0 %v3071
    %4053 = vmatmul.bf16.gmra.mxu0 %v952
    %v4054 = vpop.f32.mrf.mxu0
    %v4055 = vadd.f32 %v4041, %v4054
    %v4056 = vpop.f32.mrf.mxu0
    %v4057 = vadd.f32 %v4043, %v4056
    %4058 = vdwg.mxu0
    %4059 = vmatpush.bf16.msra.mxu0 %v3191
    %4060 = vmatpush.bf16.msra.mxu0 %v3183
    %4061 = vmatpush.bf16.msra.mxu0 %v3175
    %4062 = vmatpush.bf16.msra.mxu0 %v3167
    %4063 = vmatpush.bf16.msra.mxu0 %v3159
    %4064 = vmatpush.bf16.msra.mxu0 %v3151
    %4065 = vmatpush.bf16.msra.mxu0 %v3143
    %4066 = vmatpush.bf16.msra.mxu0 %v3135
    %4067 = vmatmul.bf16.gmra.mxu0 %v953
    %v4068 = vpop.f32.mrf.mxu0
    %v4069 = vadd.f32 %v4055, %v4068
    %v4070 = vpop.f32.mrf.mxu0
    %v4071 = vadd.f32 %v4057, %v4070
    %4072 = vdwg.mxu0
    %4073 = vmatpush.bf16.msra.mxu0 %v3255
    %4074 = vmatpush.bf16.msra.mxu0 %v3247
    %4075 = vmatpush.bf16.msra.mxu0 %v3239
    %4076 = vmatpush.bf16.msra.mxu0 %v3231
    %4077 = vmatpush.bf16.msra.mxu0 %v3223
    %4078 = vmatpush.bf16.msra.mxu0 %v3215
    %4079 = vmatpush.bf16.msra.mxu0 %v3207
    %4080 = vmatpush.bf16.msra.mxu0 %v3199
    %4081 = vmatmul.bf16.gmra.mxu0 %v954
    %v4082 = vpop.f32.mrf.mxu0
    %v4083 = vadd.f32 %v4069, %v4082
    %v4084 = vpop.f32.mrf.mxu0
    %v4085 = vadd.f32 %v4071, %v4084
    %4086 = vdwg.mxu0
    %4087 = vmatpush.bf16.msra.mxu0 %v3319
    %4088 = vmatpush.bf16.msra.mxu0 %v3311
    %4089 = vmatpush.bf16.msra.mxu0 %v3303
    %4090 = vmatpush.bf16.msra.mxu0 %v3295
    %4091 = vmatpush.bf16.msra.mxu0 %v3287
    %4092 = vmatpush.bf16.msra.mxu0 %v3279
    %4093 = vmatpush.bf16.msra.mxu0 %v3271
    %4094 = vmatpush.bf16.msra.mxu0 %v3263
    %4095 = vmatmul.bf16.gmra.mxu0 %v955
    %v4096 = vpop.f32.mrf.mxu0
    %v4097 = vadd.f32 %v4083, %v4096
    %v4098 = vpop.f32.mrf.mxu0
    %v4099 = vadd.f32 %v4085, %v4098
    %4100 = vdwg.mxu0
    %4101 = vmatpush.bf16.msra.mxu0 %v3383
    %4102 = vmatpush.bf16.msra.mxu0 %v3375
    %4103 = vmatpush.bf16.msra.mxu0 %v3367
    %4104 = vmatpush.bf16.msra.mxu0 %v3359
    %4105 = vmatpush.bf16.msra.mxu0 %v3351
    %4106 = vmatpush.bf16.msra.mxu0 %v3343
    %4107 = vmatpush.bf16.msra.mxu0 %v3335
    %4108 = vmatpush.bf16.msra.mxu0 %v3327
    %4109 = vmatmul.bf16.gmra.mxu0 %v956
    %v4110 = vpop.f32.mrf.mxu0
    %v4111 = vadd.f32 %v4097, %v4110
    %v4112 = vpop.f32.mrf.mxu0
    %v4113 = vadd.f32 %v4099, %v4112
    %4114 = vdwg.mxu0
    %4115 = vmatpush.bf16.msra.mxu0 %v3447
    %4116 = vmatpush.bf16.msra.mxu0 %v3439
    %4117 = vmatpush.bf16.msra.mxu0 %v3431
    %4118 = vmatpush.bf16.msra.mxu0 %v3423
    %4119 = vmatpush.bf16.msra.mxu0 %v3415
    %4120 = vmatpush.bf16.msra.mxu0 %v3407
    %4121 = vmatpush.bf16.msra.mxu0 %v3399
    %4122 = vmatpush.bf16.msra.mxu0 %v3391
    %4123 = vmatmul.bf16.gmra.mxu0 %v957
    %v4124 = vpop.f32.mrf.mxu0
    %v4125 = vadd.f32 %v4111, %v4124
    %v4126 = vpop.f32.mrf.mxu0
    %v4127 = vadd.f32 %v4113, %v4126
    %4128 = vdwg.mxu0
    %4129 = vmatpush.bf16.msra.mxu0 %v3511
    %4130 = vmatpush.bf16.msra.mxu0 %v3503
    %4131 = vmatpush.bf16.msra.mxu0 %v3495
    %4132 = vmatpush.bf16.msra.mxu0 %v3487
    %4133 = vmatpush.bf16.msra.mxu0 %v3479
    %4134 = vmatpush.bf16.msra.mxu0 %v3471
    %4135 = vmatpush.bf16.msra.mxu0 %v3463
    %4136 = vmatpush.bf16.msra.mxu0 %v3455
    %4137 = vmatmul.bf16.gmra.mxu0 %v958
    %v4138 = vpop.f32.mrf.mxu0
    %v4139 = vadd.f32 %v4125, %v4138
    %v4140 = vpop.f32.mrf.mxu0
    %v4141 = vadd.f32 %v4127, %v4140
    %4142 = vdwg.mxu0
    %4143 = vmatpush.bf16.msra.mxu0 %v3064
    %4144 = vmatpush.bf16.msra.mxu0 %v3056
    %4145 = vmatpush.bf16.msra.mxu0 %v3048
    %4146 = vmatpush.bf16.msra.mxu0 %v3040
    %4147 = vmatpush.bf16.msra.mxu0 %v3032
    %4148 = vmatpush.bf16.msra.mxu0 %v3024
    %4149 = vmatpush.bf16.msra.mxu0 %v3016
    %4150 = vmatpush.bf16.msra.mxu0 %v3008
    %4151 = vmatmul.bf16.gmra.mxu0 %v951
    %v4152 = vpop.f32.mrf.mxu0
    %v4153 = vadd.f32 0.0, %v4152
    %v4154 = vpop.f32.mrf.mxu0
    %v4155 = vadd.f32 0.0, %v4154
    %4156 = vdwg.mxu0
    %4157 = vmatpush.bf16.msra.mxu0 %v3128
    %4158 = vmatpush.bf16.msra.mxu0 %v3120
    %4159 = vmatpush.bf16.msra.mxu0 %v3112
    %4160 = vmatpush.bf16.msra.mxu0 %v3104
    %4161 = vmatpush.bf16.msra.mxu0 %v3096
    %4162 = vmatpush.bf16.msra.mxu0 %v3088
    %4163 = vmatpush.bf16.msra.mxu0 %v3080
    %4164 = vmatpush.bf16.msra.mxu0 %v3072
    %4165 = vmatmul.bf16.gmra.mxu0 %v952
    %v4166 = vpop.f32.mrf.mxu0
    %v4167 = vadd.f32 %v4153, %v4166
    %v4168 = vpop.f32.mrf.mxu0
    %v4169 = vadd.f32 %v4155, %v4168
    %4170 = vdwg.mxu0
    %4171 = vmatpush.bf16.msra.mxu0 %v3192
    %4172 = vmatpush.bf16.msra.mxu0 %v3184
    %4173 = vmatpush.bf16.msra.mxu0 %v3176
    %4174 = vmatpush.bf16.msra.mxu0 %v3168
    %4175 = vmatpush.bf16.msra.mxu0 %v3160
    %4176 = vmatpush.bf16.msra.mxu0 %v3152
    %4177 = vmatpush.bf16.msra.mxu0 %v3144
    %4178 = vmatpush.bf16.msra.mxu0 %v3136
    %4179 = vmatmul.bf16.gmra.mxu0 %v953
    %v4180 = vpop.f32.mrf.mxu0
    %v4181 = vadd.f32 %v4167, %v4180
    %v4182 = vpop.f32.mrf.mxu0
    %v4183 = vadd.f32 %v4169, %v4182
    %4184 = vdwg.mxu0
    %4185 = vmatpush.bf16.msra.mxu0 %v3256
    %4186 = vmatpush.bf16.msra.mxu0 %v3248
    %4187 = vmatpush.bf16.msra.mxu0 %v3240
    %4188 = vmatpush.bf16.msra.mxu0 %v3232
    %4189 = vmatpush.bf16.msra.mxu0 %v3224
    %4190 = vmatpush.bf16.msra.mxu0 %v3216
    %4191 = vmatpush.bf16.msra.mxu0 %v3208
    %4192 = vmatpush.bf16.msra.mxu0 %v3200
    %4193 = vmatmul.bf16.gmra.mxu0 %v954
    %v4194 = vpop.f32.mrf.mxu0
    %v4195 = vadd.f32 %v4181, %v4194
    %v4196 = vpop.f32.mrf.mxu0
    %v4197 = vadd.f32 %v4183, %v4196
    %4198 = vdwg.mxu0
    %4199 = vmatpush.bf16.msra.mxu0 %v3320
    %4200 = vmatpush.bf16.msra.mxu0 %v3312
    %4201 = vmatpush.bf16.msra.mxu0 %v3304
    %4202 = vmatpush.bf16.msra.mxu0 %v3296
    %4203 = vmatpush.bf16.msra.mxu0 %v3288
    %4204 = vmatpush.bf16.msra.mxu0 %v3280
    %4205 = vmatpush.bf16.msra.mxu0 %v3272
    %4206 = vmatpush.bf16.msra.mxu0 %v3264
    %4207 = vmatmul.bf16.gmra.mxu0 %v955
    %v4208 = vpop.f32.mrf.mxu0
    %v4209 = vadd.f32 %v4195, %v4208
    %v4210 = vpop.f32.mrf.mxu0
    %v4211 = vadd.f32 %v4197, %v4210
    %4212 = vdwg.mxu0
    %4213 = vmatpush.bf16.msra.mxu0 %v3384
    %4214 = vmatpush.bf16.msra.mxu0 %v3376
    %4215 = vmatpush.bf16.msra.mxu0 %v3368
    %4216 = vmatpush.bf16.msra.mxu0 %v3360
    %4217 = vmatpush.bf16.msra.mxu0 %v3352
    %4218 = vmatpush.bf16.msra.mxu0 %v3344
    %4219 = vmatpush.bf16.msra.mxu0 %v3336
    %4220 = vmatpush.bf16.msra.mxu0 %v3328
    %4221 = vmatmul.bf16.gmra.mxu0 %v956
    %v4222 = vpop.f32.mrf.mxu0
    %v4223 = vadd.f32 %v4209, %v4222
    %v4224 = vpop.f32.mrf.mxu0
    %v4225 = vadd.f32 %v4211, %v4224
    %4226 = vdwg.mxu0
    %4227 = vmatpush.bf16.msra.mxu0 %v3448
    %4228 = vmatpush.bf16.msra.mxu0 %v3440
    %4229 = vmatpush.bf16.msra.mxu0 %v3432
    %4230 = vmatpush.bf16.msra.mxu0 %v3424
    %4231 = vmatpush.bf16.msra.mxu0 %v3416
    %4232 = vmatpush.bf16.msra.mxu0 %v3408
    %4233 = vmatpush.bf16.msra.mxu0 %v3400
    %4234 = vmatpush.bf16.msra.mxu0 %v3392
    %4235 = vmatmul.bf16.gmra.mxu0 %v957
    %v4236 = vpop.f32.mrf.mxu0
    %v4237 = vadd.f32 %v4223, %v4236
    %v4238 = vpop.f32.mrf.mxu0
    %v4239 = vadd.f32 %v4225, %v4238
    %4240 = vdwg.mxu0
    %4241 = vmatpush.bf16.msra.mxu0 %v3512
    %4242 = vmatpush.bf16.msra.mxu0 %v3504
    %4243 = vmatpush.bf16.msra.mxu0 %v3496
    %4244 = vmatpush.bf16.msra.mxu0 %v3488
    %4245 = vmatpush.bf16.msra.mxu0 %v3480
    %4246 = vmatpush.bf16.msra.mxu0 %v3472
    %4247 = vmatpush.bf16.msra.mxu0 %v3464
    %4248 = vmatpush.bf16.msra.mxu0 %v3456
    %4249 = vmatmul.bf16.gmra.mxu0 %v958
    %v4250 = vpop.f32.mrf.mxu0
    %v4251 = vadd.f32 %v4237, %v4250
    %v4252 = vpop.f32.mrf.mxu0
    %v4253 = vadd.f32 %v4239, %v4252
    %4254 = vdwg.mxu0
    %4255 = vmatpush.bf16.msra.mxu0 %v3065
    %4256 = vmatpush.bf16.msra.mxu0 %v3057
    %4257 = vmatpush.bf16.msra.mxu0 %v3049
    %4258 = vmatpush.bf16.msra.mxu0 %v3041
    %4259 = vmatpush.bf16.msra.mxu0 %v3033
    %4260 = vmatpush.bf16.msra.mxu0 %v3025
    %4261 = vmatpush.bf16.msra.mxu0 %v3017
    %4262 = vmatpush.bf16.msra.mxu0 %v3009
    %4263 = vmatmul.bf16.gmra.mxu0 %v951
    %v4264 = vpop.f32.mrf.mxu0
    %v4265 = vadd.f32 0.0, %v4264
    %v4266 = vpop.f32.mrf.mxu0
    %v4267 = vadd.f32 0.0, %v4266
    %4268 = vdwg.mxu0
    %4269 = vmatpush.bf16.msra.mxu0 %v3129
    %4270 = vmatpush.bf16.msra.mxu0 %v3121
    %4271 = vmatpush.bf16.msra.mxu0 %v3113
    %4272 = vmatpush.bf16.msra.mxu0 %v3105
    %4273 = vmatpush.bf16.msra.mxu0 %v3097
    %4274 = vmatpush.bf16.msra.mxu0 %v3089
    %4275 = vmatpush.bf16.msra.mxu0 %v3081
    %4276 = vmatpush.bf16.msra.mxu0 %v3073
    %4277 = vmatmul.bf16.gmra.mxu0 %v952
    %v4278 = vpop.f32.mrf.mxu0
    %v4279 = vadd.f32 %v4265, %v4278
    %v4280 = vpop.f32.mrf.mxu0
    %v4281 = vadd.f32 %v4267, %v4280
    %4282 = vdwg.mxu0
    %4283 = vmatpush.bf16.msra.mxu0 %v3193
    %4284 = vmatpush.bf16.msra.mxu0 %v3185
    %4285 = vmatpush.bf16.msra.mxu0 %v3177
    %4286 = vmatpush.bf16.msra.mxu0 %v3169
    %4287 = vmatpush.bf16.msra.mxu0 %v3161
    %4288 = vmatpush.bf16.msra.mxu0 %v3153
    %4289 = vmatpush.bf16.msra.mxu0 %v3145
    %4290 = vmatpush.bf16.msra.mxu0 %v3137
    %4291 = vmatmul.bf16.gmra.mxu0 %v953
    %v4292 = vpop.f32.mrf.mxu0
    %v4293 = vadd.f32 %v4279, %v4292
    %v4294 = vpop.f32.mrf.mxu0
    %v4295 = vadd.f32 %v4281, %v4294
    %4296 = vdwg.mxu0
    %4297 = vmatpush.bf16.msra.mxu0 %v3257
    %4298 = vmatpush.bf16.msra.mxu0 %v3249
    %4299 = vmatpush.bf16.msra.mxu0 %v3241
    %4300 = vmatpush.bf16.msra.mxu0 %v3233
    %4301 = vmatpush.bf16.msra.mxu0 %v3225
    %4302 = vmatpush.bf16.msra.mxu0 %v3217
    %4303 = vmatpush.bf16.msra.mxu0 %v3209
    %4304 = vmatpush.bf16.msra.mxu0 %v3201
    %4305 = vmatmul.bf16.gmra.mxu0 %v954
    %v4306 = vpop.f32.mrf.mxu0
    %v4307 = vadd.f32 %v4293, %v4306
    %v4308 = vpop.f32.mrf.mxu0
    %v4309 = vadd.f32 %v4295, %v4308
    %4310 = vdwg.mxu0
    %4311 = vmatpush.bf16.msra.mxu0 %v3321
    %4312 = vmatpush.bf16.msra.mxu0 %v3313
    %4313 = vmatpush.bf16.msra.mxu0 %v3305
    %4314 = vmatpush.bf16.msra.mxu0 %v3297
    %4315 = vmatpush.bf16.msra.mxu0 %v3289
    %4316 = vmatpush.bf16.msra.mxu0 %v3281
    %4317 = vmatpush.bf16.msra.mxu0 %v3273
    %4318 = vmatpush.bf16.msra.mxu0 %v3265
    %4319 = vmatmul.bf16.gmra.mxu0 %v955
    %v4320 = vpop.f32.mrf.mxu0
    %v4321 = vadd.f32 %v4307, %v4320
    %v4322 = vpop.f32.mrf.mxu0
    %v4323 = vadd.f32 %v4309, %v4322
    %4324 = vdwg.mxu0
    %4325 = vmatpush.bf16.msra.mxu0 %v3385
    %4326 = vmatpush.bf16.msra.mxu0 %v3377
    %4327 = vmatpush.bf16.msra.mxu0 %v3369
    %4328 = vmatpush.bf16.msra.mxu0 %v3361
    %4329 = vmatpush.bf16.msra.mxu0 %v3353
    %4330 = vmatpush.bf16.msra.mxu0 %v3345
    %4331 = vmatpush.bf16.msra.mxu0 %v3337
    %4332 = vmatpush.bf16.msra.mxu0 %v3329
    %4333 = vmatmul.bf16.gmra.mxu0 %v956
    %v4334 = vpop.f32.mrf.mxu0
    %v4335 = vadd.f32 %v4321, %v4334
    %v4336 = vpop.f32.mrf.mxu0
    %v4337 = vadd.f32 %v4323, %v4336
    %4338 = vdwg.mxu0
    %4339 = vmatpush.bf16.msra.mxu0 %v3449
    %4340 = vmatpush.bf16.msra.mxu0 %v3441
    %4341 = vmatpush.bf16.msra.mxu0 %v3433
    %4342 = vmatpush.bf16.msra.mxu0 %v3425
    %4343 = vmatpush.bf16.msra.mxu0 %v3417
    %4344 = vmatpush.bf16.msra.mxu0 %v3409
    %4345 = vmatpush.bf16.msra.mxu0 %v3401
    %4346 = vmatpush.bf16.msra.mxu0 %v3393
    %4347 = vmatmul.bf16.gmra.mxu0 %v957
    %v4348 = vpop.f32.mrf.mxu0
    %v4349 = vadd.f32 %v4335, %v4348
    %v4350 = vpop.f32.mrf.mxu0
    %v4351 = vadd.f32 %v4337, %v4350
    %4352 = vdwg.mxu0
    %4353 = vmatpush.bf16.msra.mxu0 %v3513
    %4354 = vmatpush.bf16.msra.mxu0 %v3505
    %4355 = vmatpush.bf16.msra.mxu0 %v3497
    %4356 = vmatpush.bf16.msra.mxu0 %v3489
    %4357 = vmatpush.bf16.msra.mxu0 %v3481
    %4358 = vmatpush.bf16.msra.mxu0 %v3473
    %4359 = vmatpush.bf16.msra.mxu0 %v3465
    %4360 = vmatpush.bf16.msra.mxu0 %v3457
    %4361 = vmatmul.bf16.gmra.mxu0 %v958
    %v4362 = vpop.f32.mrf.mxu0
    %v4363 = vadd.f32 %v4349, %v4362
    %v4364 = vpop.f32.mrf.mxu0
    %v4365 = vadd.f32 %v4351, %v4364
    %4366 = vdwg.mxu0
    %4367 = vmatpush.bf16.msra.mxu0 %v3066
    %4368 = vmatpush.bf16.msra.mxu0 %v3058
    %4369 = vmatpush.bf16.msra.mxu0 %v3050
    %4370 = vmatpush.bf16.msra.mxu0 %v3042
    %4371 = vmatpush.bf16.msra.mxu0 %v3034
    %4372 = vmatpush.bf16.msra.mxu0 %v3026
    %4373 = vmatpush.bf16.msra.mxu0 %v3018
    %4374 = vmatpush.bf16.msra.mxu0 %v3010
    %4375 = vmatmul.bf16.gmra.mxu0 %v951
    %v4376 = vpop.f32.mrf.mxu0
    %v4377 = vadd.f32 0.0, %v4376
    %v4378 = vpop.f32.mrf.mxu0
    %v4379 = vadd.f32 0.0, %v4378
    %4380 = vdwg.mxu0
    %4381 = vmatpush.bf16.msra.mxu0 %v3130
    %4382 = vmatpush.bf16.msra.mxu0 %v3122
    %4383 = vmatpush.bf16.msra.mxu0 %v3114
    %4384 = vmatpush.bf16.msra.mxu0 %v3106
    %4385 = vmatpush.bf16.msra.mxu0 %v3098
    %4386 = vmatpush.bf16.msra.mxu0 %v3090
    %4387 = vmatpush.bf16.msra.mxu0 %v3082
    %4388 = vmatpush.bf16.msra.mxu0 %v3074
    %4389 = vmatmul.bf16.gmra.mxu0 %v952
    %v4390 = vpop.f32.mrf.mxu0
    %v4391 = vadd.f32 %v4377, %v4390
    %v4392 = vpop.f32.mrf.mxu0
    %v4393 = vadd.f32 %v4379, %v4392
    %4394 = vdwg.mxu0
    %4395 = vmatpush.bf16.msra.mxu0 %v3194
    %4396 = vmatpush.bf16.msra.mxu0 %v3186
    %4397 = vmatpush.bf16.msra.mxu0 %v3178
    %4398 = vmatpush.bf16.msra.mxu0 %v3170
    %4399 = vmatpush.bf16.msra.mxu0 %v3162
    %4400 = vmatpush.bf16.msra.mxu0 %v3154
    %4401 = vmatpush.bf16.msra.mxu0 %v3146
    %4402 = vmatpush.bf16.msra.mxu0 %v3138
    %4403 = vmatmul.bf16.gmra.mxu0 %v953
    %v4404 = vpop.f32.mrf.mxu0
    %v4405 = vadd.f32 %v4391, %v4404
    %v4406 = vpop.f32.mrf.mxu0
    %v4407 = vadd.f32 %v4393, %v4406
    %4408 = vdwg.mxu0
    %4409 = vmatpush.bf16.msra.mxu0 %v3258
    %4410 = vmatpush.bf16.msra.mxu0 %v3250
    %4411 = vmatpush.bf16.msra.mxu0 %v3242
    %4412 = vmatpush.bf16.msra.mxu0 %v3234
    %4413 = vmatpush.bf16.msra.mxu0 %v3226
    %4414 = vmatpush.bf16.msra.mxu0 %v3218
    %4415 = vmatpush.bf16.msra.mxu0 %v3210
    %4416 = vmatpush.bf16.msra.mxu0 %v3202
    %4417 = vmatmul.bf16.gmra.mxu0 %v954
    %v4418 = vpop.f32.mrf.mxu0
    %v4419 = vadd.f32 %v4405, %v4418
    %v4420 = vpop.f32.mrf.mxu0
    %v4421 = vadd.f32 %v4407, %v4420
    %4422 = vdwg.mxu0
    %4423 = vmatpush.bf16.msra.mxu0 %v3322
    %4424 = vmatpush.bf16.msra.mxu0 %v3314
    %4425 = vmatpush.bf16.msra.mxu0 %v3306
    %4426 = vmatpush.bf16.msra.mxu0 %v3298
    %4427 = vmatpush.bf16.msra.mxu0 %v3290
    %4428 = vmatpush.bf16.msra.mxu0 %v3282
    %4429 = vmatpush.bf16.msra.mxu0 %v3274
    %4430 = vmatpush.bf16.msra.mxu0 %v3266
    %4431 = vmatmul.bf16.gmra.mxu0 %v955
    %v4432 = vpop.f32.mrf.mxu0
    %v4433 = vadd.f32 %v4419, %v4432
    %v4434 = vpop.f32.mrf.mxu0
    %v4435 = vadd.f32 %v4421, %v4434
    %4436 = vdwg.mxu0
    %4437 = vmatpush.bf16.msra.mxu0 %v3386
    %4438 = vmatpush.bf16.msra.mxu0 %v3378
    %4439 = vmatpush.bf16.msra.mxu0 %v3370
    %4440 = vmatpush.bf16.msra.mxu0 %v3362
    %4441 = vmatpush.bf16.msra.mxu0 %v3354
    %4442 = vmatpush.bf16.msra.mxu0 %v3346
    %4443 = vmatpush.bf16.msra.mxu0 %v3338
    %4444 = vmatpush.bf16.msra.mxu0 %v3330
    %4445 = vmatmul.bf16.gmra.mxu0 %v956
    %v4446 = vpop.f32.mrf.mxu0
    %v4447 = vadd.f32 %v4433, %v4446
    %v4448 = vpop.f32.mrf.mxu0
    %v4449 = vadd.f32 %v4435, %v4448
    %4450 = vdwg.mxu0
    %4451 = vmatpush.bf16.msra.mxu0 %v3450
    %4452 = vmatpush.bf16.msra.mxu0 %v3442
    %4453 = vmatpush.bf16.msra.mxu0 %v3434
    %4454 = vmatpush.bf16.msra.mxu0 %v3426
    %4455 = vmatpush.bf16.msra.mxu0 %v3418
    %4456 = vmatpush.bf16.msra.mxu0 %v3410
    %4457 = vmatpush.bf16.msra.mxu0 %v3402
    %4458 = vmatpush.bf16.msra.mxu0 %v3394
    %4459 = vmatmul.bf16.gmra.mxu0 %v957
    %v4460 = vpop.f32.mrf.mxu0
    %v4461 = vadd.f32 %v4447, %v4460
    %v4462 = vpop.f32.mrf.mxu0
    %v4463 = vadd.f32 %v4449, %v4462
    %4464 = vdwg.mxu0
    %4465 = vmatpush.bf16.msra.mxu0 %v3514
    %4466 = vmatpush.bf16.msra.mxu0 %v3506
    %4467 = vmatpush.bf16.msra.mxu0 %v3498
    %4468 = vmatpush.bf16.msra.mxu0 %v3490
    %4469 = vmatpush.bf16.msra.mxu0 %v3482
    %4470 = vmatpush.bf16.msra.mxu0 %v3474
    %4471 = vmatpush.bf16.msra.mxu0 %v3466
    %4472 = vmatpush.bf16.msra.mxu0 %v3458
    %4473 = vmatmul.bf16.gmra.mxu0 %v958
    %v4474 = vpop.f32.mrf.mxu0
    %v4475 = vadd.f32 %v4461, %v4474
    %v4476 = vpop.f32.mrf.mxu0
    %v4477 = vadd.f32 %v4463, %v4476
    %4478 = vdwg.mxu0
    %4479 = vmatpush.bf16.msra.mxu0 %v3067
    %4480 = vmatpush.bf16.msra.mxu0 %v3059
    %4481 = vmatpush.bf16.msra.mxu0 %v3051
    %4482 = vmatpush.bf16.msra.mxu0 %v3043
    %4483 = vmatpush.bf16.msra.mxu0 %v3035
    %4484 = vmatpush.bf16.msra.mxu0 %v3027
    %4485 = vmatpush.bf16.msra.mxu0 %v3019
    %4486 = vmatpush.bf16.msra.mxu0 %v3011
    %4487 = vmatmul.bf16.gmra.mxu0 %v951
    %v4488 = vpop.f32.mrf.mxu0
    %v4489 = vadd.f32 0.0, %v4488
    %v4490 = vpop.f32.mrf.mxu0
    %v4491 = vadd.f32 0.0, %v4490
    %4492 = vdwg.mxu0
    %4493 = vmatpush.bf16.msra.mxu0 %v3131
    %4494 = vmatpush.bf16.msra.mxu0 %v3123
    %4495 = vmatpush.bf16.msra.mxu0 %v3115
    %4496 = vmatpush.bf16.msra.mxu0 %v3107
    %4497 = vmatpush.bf16.msra.mxu0 %v3099
    %4498 = vmatpush.bf16.msra.mxu0 %v3091
    %4499 = vmatpush.bf16.msra.mxu0 %v3083
    %4500 = vmatpush.bf16.msra.mxu0 %v3075
    %4501 = vmatmul.bf16.gmra.mxu0 %v952
    %v4502 = vpop.f32.mrf.mxu0
    %v4503 = vadd.f32 %v4489, %v4502
    %v4504 = vpop.f32.mrf.mxu0
    %v4505 = vadd.f32 %v4491, %v4504
    %4506 = vdwg.mxu0
    %4507 = vmatpush.bf16.msra.mxu0 %v3195
    %4508 = vmatpush.bf16.msra.mxu0 %v3187
    %4509 = vmatpush.bf16.msra.mxu0 %v3179
    %4510 = vmatpush.bf16.msra.mxu0 %v3171
    %4511 = vmatpush.bf16.msra.mxu0 %v3163
    %4512 = vmatpush.bf16.msra.mxu0 %v3155
    %4513 = vmatpush.bf16.msra.mxu0 %v3147
    %4514 = vmatpush.bf16.msra.mxu0 %v3139
    %4515 = vmatmul.bf16.gmra.mxu0 %v953
    %v4516 = vpop.f32.mrf.mxu0
    %v4517 = vadd.f32 %v4503, %v4516
    %v4518 = vpop.f32.mrf.mxu0
    %v4519 = vadd.f32 %v4505, %v4518
    %4520 = vdwg.mxu0
    %4521 = vmatpush.bf16.msra.mxu0 %v3259
    %4522 = vmatpush.bf16.msra.mxu0 %v3251
    %4523 = vmatpush.bf16.msra.mxu0 %v3243
    %4524 = vmatpush.bf16.msra.mxu0 %v3235
    %4525 = vmatpush.bf16.msra.mxu0 %v3227
    %4526 = vmatpush.bf16.msra.mxu0 %v3219
    %4527 = vmatpush.bf16.msra.mxu0 %v3211
    %4528 = vmatpush.bf16.msra.mxu0 %v3203
    %4529 = vmatmul.bf16.gmra.mxu0 %v954
    %v4530 = vpop.f32.mrf.mxu0
    %v4531 = vadd.f32 %v4517, %v4530
    %v4532 = vpop.f32.mrf.mxu0
    %v4533 = vadd.f32 %v4519, %v4532
    %4534 = vdwg.mxu0
    %4535 = vmatpush.bf16.msra.mxu0 %v3323
    %4536 = vmatpush.bf16.msra.mxu0 %v3315
    %4537 = vmatpush.bf16.msra.mxu0 %v3307
    %4538 = vmatpush.bf16.msra.mxu0 %v3299
    %4539 = vmatpush.bf16.msra.mxu0 %v3291
    %4540 = vmatpush.bf16.msra.mxu0 %v3283
    %4541 = vmatpush.bf16.msra.mxu0 %v3275
    %4542 = vmatpush.bf16.msra.mxu0 %v3267
    %4543 = vmatmul.bf16.gmra.mxu0 %v955
    %v4544 = vpop.f32.mrf.mxu0
    %v4545 = vadd.f32 %v4531, %v4544
    %v4546 = vpop.f32.mrf.mxu0
    %v4547 = vadd.f32 %v4533, %v4546
    %4548 = vdwg.mxu0
    %4549 = vmatpush.bf16.msra.mxu0 %v3387
    %4550 = vmatpush.bf16.msra.mxu0 %v3379
    %4551 = vmatpush.bf16.msra.mxu0 %v3371
    %4552 = vmatpush.bf16.msra.mxu0 %v3363
    %4553 = vmatpush.bf16.msra.mxu0 %v3355
    %4554 = vmatpush.bf16.msra.mxu0 %v3347
    %4555 = vmatpush.bf16.msra.mxu0 %v3339
    %4556 = vmatpush.bf16.msra.mxu0 %v3331
    %4557 = vmatmul.bf16.gmra.mxu0 %v956
    %v4558 = vpop.f32.mrf.mxu0
    %v4559 = vadd.f32 %v4545, %v4558
    %v4560 = vpop.f32.mrf.mxu0
    %v4561 = vadd.f32 %v4547, %v4560
    %4562 = vdwg.mxu0
    %4563 = vmatpush.bf16.msra.mxu0 %v3451
    %4564 = vmatpush.bf16.msra.mxu0 %v3443
    %4565 = vmatpush.bf16.msra.mxu0 %v3435
    %4566 = vmatpush.bf16.msra.mxu0 %v3427
    %4567 = vmatpush.bf16.msra.mxu0 %v3419
    %4568 = vmatpush.bf16.msra.mxu0 %v3411
    %4569 = vmatpush.bf16.msra.mxu0 %v3403
    %4570 = vmatpush.bf16.msra.mxu0 %v3395
    %4571 = vmatmul.bf16.gmra.mxu0 %v957
    %v4572 = vpop.f32.mrf.mxu0
    %v4573 = vadd.f32 %v4559, %v4572
    %v4574 = vpop.f32.mrf.mxu0
    %v4575 = vadd.f32 %v4561, %v4574
    %4576 = vdwg.mxu0
    %4577 = vmatpush.bf16.msra.mxu0 %v3515
    %4578 = vmatpush.bf16.msra.mxu0 %v3507
    %4579 = vmatpush.bf16.msra.mxu0 %v3499
    %4580 = vmatpush.bf16.msra.mxu0 %v3491
    %4581 = vmatpush.bf16.msra.mxu0 %v3483
    %4582 = vmatpush.bf16.msra.mxu0 %v3475
    %4583 = vmatpush.bf16.msra.mxu0 %v3467
    %4584 = vmatpush.bf16.msra.mxu0 %v3459
    %4585 = vmatmul.bf16.gmra.mxu0 %v958
    %v4586 = vpop.f32.mrf.mxu0
    %v4587 = vadd.f32 %v4573, %v4586
    %v4588 = vpop.f32.mrf.mxu0
    %v4589 = vadd.f32 %v4575, %v4588
    %4590 = vdwg.mxu0
    %4591 = vmatpush.bf16.msra.mxu0 %v3068
    %4592 = vmatpush.bf16.msra.mxu0 %v3060
    %4593 = vmatpush.bf16.msra.mxu0 %v3052
    %4594 = vmatpush.bf16.msra.mxu0 %v3044
    %4595 = vmatpush.bf16.msra.mxu0 %v3036
    %4596 = vmatpush.bf16.msra.mxu0 %v3028
    %4597 = vmatpush.bf16.msra.mxu0 %v3020
    %4598 = vmatpush.bf16.msra.mxu0 %v3012
    %4599 = vmatmul.bf16.gmra.mxu0 %v951
    %v4600 = vpop.f32.mrf.mxu0
    %v4601 = vadd.f32 0.0, %v4600
    %v4602 = vpop.f32.mrf.mxu0
    %v4603 = vadd.f32 0.0, %v4602
    %4604 = vdwg.mxu0
    %4605 = vmatpush.bf16.msra.mxu0 %v3132
    %4606 = vmatpush.bf16.msra.mxu0 %v3124
    %4607 = vmatpush.bf16.msra.mxu0 %v3116
    %4608 = vmatpush.bf16.msra.mxu0 %v3108
    %4609 = vmatpush.bf16.msra.mxu0 %v3100
    %4610 = vmatpush.bf16.msra.mxu0 %v3092
    %4611 = vmatpush.bf16.msra.mxu0 %v3084
    %4612 = vmatpush.bf16.msra.mxu0 %v3076
    %4613 = vmatmul.bf16.gmra.mxu0 %v952
    %v4614 = vpop.f32.mrf.mxu0
    %v4615 = vadd.f32 %v4601, %v4614
    %v4616 = vpop.f32.mrf.mxu0
    %v4617 = vadd.f32 %v4603, %v4616
    %4618 = vdwg.mxu0
    %4619 = vmatpush.bf16.msra.mxu0 %v3196
    %4620 = vmatpush.bf16.msra.mxu0 %v3188
    %4621 = vmatpush.bf16.msra.mxu0 %v3180
    %4622 = vmatpush.bf16.msra.mxu0 %v3172
    %4623 = vmatpush.bf16.msra.mxu0 %v3164
    %4624 = vmatpush.bf16.msra.mxu0 %v3156
    %4625 = vmatpush.bf16.msra.mxu0 %v3148
    %4626 = vmatpush.bf16.msra.mxu0 %v3140
    %4627 = vmatmul.bf16.gmra.mxu0 %v953
    %v4628 = vpop.f32.mrf.mxu0
    %v4629 = vadd.f32 %v4615, %v4628
    %v4630 = vpop.f32.mrf.mxu0
    %v4631 = vadd.f32 %v4617, %v4630
    %4632 = vdwg.mxu0
    %4633 = vmatpush.bf16.msra.mxu0 %v3260
    %4634 = vmatpush.bf16.msra.mxu0 %v3252
    %4635 = vmatpush.bf16.msra.mxu0 %v3244
    %4636 = vmatpush.bf16.msra.mxu0 %v3236
    %4637 = vmatpush.bf16.msra.mxu0 %v3228
    %4638 = vmatpush.bf16.msra.mxu0 %v3220
    %4639 = vmatpush.bf16.msra.mxu0 %v3212
    %4640 = vmatpush.bf16.msra.mxu0 %v3204
    %4641 = vmatmul.bf16.gmra.mxu0 %v954
    %v4642 = vpop.f32.mrf.mxu0
    %v4643 = vadd.f32 %v4629, %v4642
    %v4644 = vpop.f32.mrf.mxu0
    %v4645 = vadd.f32 %v4631, %v4644
    %4646 = vdwg.mxu0
    %4647 = vmatpush.bf16.msra.mxu0 %v3324
    %4648 = vmatpush.bf16.msra.mxu0 %v3316
    %4649 = vmatpush.bf16.msra.mxu0 %v3308
    %4650 = vmatpush.bf16.msra.mxu0 %v3300
    %4651 = vmatpush.bf16.msra.mxu0 %v3292
    %4652 = vmatpush.bf16.msra.mxu0 %v3284
    %4653 = vmatpush.bf16.msra.mxu0 %v3276
    %4654 = vmatpush.bf16.msra.mxu0 %v3268
    %4655 = vmatmul.bf16.gmra.mxu0 %v955
    %v4656 = vpop.f32.mrf.mxu0
    %v4657 = vadd.f32 %v4643, %v4656
    %v4658 = vpop.f32.mrf.mxu0
    %v4659 = vadd.f32 %v4645, %v4658
    %4660 = vdwg.mxu0
    %4661 = vmatpush.bf16.msra.mxu0 %v3388
    %4662 = vmatpush.bf16.msra.mxu0 %v3380
    %4663 = vmatpush.bf16.msra.mxu0 %v3372
    %4664 = vmatpush.bf16.msra.mxu0 %v3364
    %4665 = vmatpush.bf16.msra.mxu0 %v3356
    %4666 = vmatpush.bf16.msra.mxu0 %v3348
    %4667 = vmatpush.bf16.msra.mxu0 %v3340
    %4668 = vmatpush.bf16.msra.mxu0 %v3332
    %4669 = vmatmul.bf16.gmra.mxu0 %v956
    %v4670 = vpop.f32.mrf.mxu0
    %v4671 = vadd.f32 %v4657, %v4670
    %v4672 = vpop.f32.mrf.mxu0
    %v4673 = vadd.f32 %v4659, %v4672
    %4674 = vdwg.mxu0
    %4675 = vmatpush.bf16.msra.mxu0 %v3452
    %4676 = vmatpush.bf16.msra.mxu0 %v3444
    %4677 = vmatpush.bf16.msra.mxu0 %v3436
    %4678 = vmatpush.bf16.msra.mxu0 %v3428
    %4679 = vmatpush.bf16.msra.mxu0 %v3420
    %4680 = vmatpush.bf16.msra.mxu0 %v3412
    %4681 = vmatpush.bf16.msra.mxu0 %v3404
    %4682 = vmatpush.bf16.msra.mxu0 %v3396
    %4683 = vmatmul.bf16.gmra.mxu0 %v957
    %v4684 = vpop.f32.mrf.mxu0
    %v4685 = vadd.f32 %v4671, %v4684
    %v4686 = vpop.f32.mrf.mxu0
    %v4687 = vadd.f32 %v4673, %v4686
    %4688 = vdwg.mxu0
    %4689 = vmatpush.bf16.msra.mxu0 %v3516
    %4690 = vmatpush.bf16.msra.mxu0 %v3508
    %4691 = vmatpush.bf16.msra.mxu0 %v3500
    %4692 = vmatpush.bf16.msra.mxu0 %v3492
    %4693 = vmatpush.bf16.msra.mxu0 %v3484
    %4694 = vmatpush.bf16.msra.mxu0 %v3476
    %4695 = vmatpush.bf16.msra.mxu0 %v3468
    %4696 = vmatpush.bf16.msra.mxu0 %v3460
    %4697 = vmatmul.bf16.gmra.mxu0 %v958
    %v4698 = vpop.f32.mrf.mxu0
    %v4699 = vadd.f32 %v4685, %v4698
    %v4700 = vpop.f32.mrf.mxu0
    %v4701 = vadd.f32 %v4687, %v4700
    %4702 = vdwg.mxu0
    %4703 = vmatpush.bf16.msra.mxu0 %v3069
    %4704 = vmatpush.bf16.msra.mxu0 %v3061
    %4705 = vmatpush.bf16.msra.mxu0 %v3053
    %4706 = vmatpush.bf16.msra.mxu0 %v3045
    %4707 = vmatpush.bf16.msra.mxu0 %v3037
    %4708 = vmatpush.bf16.msra.mxu0 %v3029
    %4709 = vmatpush.bf16.msra.mxu0 %v3021
    %4710 = vmatpush.bf16.msra.mxu0 %v3013
    %4711 = vmatmul.bf16.gmra.mxu0 %v951
    %v4712 = vpop.f32.mrf.mxu0
    %v4713 = vadd.f32 0.0, %v4712
    %v4714 = vpop.f32.mrf.mxu0
    %v4715 = vadd.f32 0.0, %v4714
    %4716 = vdwg.mxu0
    %4717 = vmatpush.bf16.msra.mxu0 %v3133
    %4718 = vmatpush.bf16.msra.mxu0 %v3125
    %4719 = vmatpush.bf16.msra.mxu0 %v3117
    %4720 = vmatpush.bf16.msra.mxu0 %v3109
    %4721 = vmatpush.bf16.msra.mxu0 %v3101
    %4722 = vmatpush.bf16.msra.mxu0 %v3093
    %4723 = vmatpush.bf16.msra.mxu0 %v3085
    %4724 = vmatpush.bf16.msra.mxu0 %v3077
    %4725 = vmatmul.bf16.gmra.mxu0 %v952
    %v4726 = vpop.f32.mrf.mxu0
    %v4727 = vadd.f32 %v4713, %v4726
    %v4728 = vpop.f32.mrf.mxu0
    %v4729 = vadd.f32 %v4715, %v4728
    %4730 = vdwg.mxu0
    %4731 = vmatpush.bf16.msra.mxu0 %v3197
    %4732 = vmatpush.bf16.msra.mxu0 %v3189
    %4733 = vmatpush.bf16.msra.mxu0 %v3181
    %4734 = vmatpush.bf16.msra.mxu0 %v3173
    %4735 = vmatpush.bf16.msra.mxu0 %v3165
    %4736 = vmatpush.bf16.msra.mxu0 %v3157
    %4737 = vmatpush.bf16.msra.mxu0 %v3149
    %4738 = vmatpush.bf16.msra.mxu0 %v3141
    %4739 = vmatmul.bf16.gmra.mxu0 %v953
    %v4740 = vpop.f32.mrf.mxu0
    %v4741 = vadd.f32 %v4727, %v4740
    %v4742 = vpop.f32.mrf.mxu0
    %v4743 = vadd.f32 %v4729, %v4742
    %4744 = vdwg.mxu0
    %4745 = vmatpush.bf16.msra.mxu0 %v3261
    %4746 = vmatpush.bf16.msra.mxu0 %v3253
    %4747 = vmatpush.bf16.msra.mxu0 %v3245
    %4748 = vmatpush.bf16.msra.mxu0 %v3237
    %4749 = vmatpush.bf16.msra.mxu0 %v3229
    %4750 = vmatpush.bf16.msra.mxu0 %v3221
    %4751 = vmatpush.bf16.msra.mxu0 %v3213
    %4752 = vmatpush.bf16.msra.mxu0 %v3205
    %4753 = vmatmul.bf16.gmra.mxu0 %v954
    %v4754 = vpop.f32.mrf.mxu0
    %v4755 = vadd.f32 %v4741, %v4754
    %v4756 = vpop.f32.mrf.mxu0
    %v4757 = vadd.f32 %v4743, %v4756
    %4758 = vdwg.mxu0
    %4759 = vmatpush.bf16.msra.mxu0 %v3325
    %4760 = vmatpush.bf16.msra.mxu0 %v3317
    %4761 = vmatpush.bf16.msra.mxu0 %v3309
    %4762 = vmatpush.bf16.msra.mxu0 %v3301
    %4763 = vmatpush.bf16.msra.mxu0 %v3293
    %4764 = vmatpush.bf16.msra.mxu0 %v3285
    %4765 = vmatpush.bf16.msra.mxu0 %v3277
    %4766 = vmatpush.bf16.msra.mxu0 %v3269
    %4767 = vmatmul.bf16.gmra.mxu0 %v955
    %v4768 = vpop.f32.mrf.mxu0
    %v4769 = vadd.f32 %v4755, %v4768
    %v4770 = vpop.f32.mrf.mxu0
    %v4771 = vadd.f32 %v4757, %v4770
    %4772 = vdwg.mxu0
    %4773 = vmatpush.bf16.msra.mxu0 %v3389
    %4774 = vmatpush.bf16.msra.mxu0 %v3381
    %4775 = vmatpush.bf16.msra.mxu0 %v3373
    %4776 = vmatpush.bf16.msra.mxu0 %v3365
    %4777 = vmatpush.bf16.msra.mxu0 %v3357
    %4778 = vmatpush.bf16.msra.mxu0 %v3349
    %4779 = vmatpush.bf16.msra.mxu0 %v3341
    %4780 = vmatpush.bf16.msra.mxu0 %v3333
    %4781 = vmatmul.bf16.gmra.mxu0 %v956
    %v4782 = vpop.f32.mrf.mxu0
    %v4783 = vadd.f32 %v4769, %v4782
    %v4784 = vpop.f32.mrf.mxu0
    %v4785 = vadd.f32 %v4771, %v4784
    %4786 = vdwg.mxu0
    %4787 = vmatpush.bf16.msra.mxu0 %v3453
    %4788 = vmatpush.bf16.msra.mxu0 %v3445
    %4789 = vmatpush.bf16.msra.mxu0 %v3437
    %4790 = vmatpush.bf16.msra.mxu0 %v3429
    %4791 = vmatpush.bf16.msra.mxu0 %v3421
    %4792 = vmatpush.bf16.msra.mxu0 %v3413
    %4793 = vmatpush.bf16.msra.mxu0 %v3405
    %4794 = vmatpush.bf16.msra.mxu0 %v3397
    %4795 = vmatmul.bf16.gmra.mxu0 %v957
    %v4796 = vpop.f32.mrf.mxu0
    %v4797 = vadd.f32 %v4783, %v4796
    %v4798 = vpop.f32.mrf.mxu0
    %v4799 = vadd.f32 %v4785, %v4798
    %4800 = vdwg.mxu0
    %4801 = vmatpush.bf16.msra.mxu0 %v3517
    %4802 = vmatpush.bf16.msra.mxu0 %v3509
    %4803 = vmatpush.bf16.msra.mxu0 %v3501
    %4804 = vmatpush.bf16.msra.mxu0 %v3493
    %4805 = vmatpush.bf16.msra.mxu0 %v3485
    %4806 = vmatpush.bf16.msra.mxu0 %v3477
    %4807 = vmatpush.bf16.msra.mxu0 %v3469
    %4808 = vmatpush.bf16.msra.mxu0 %v3461
    %4809 = vmatmul.bf16.gmra.mxu0 %v958
    %v4810 = vpop.f32.mrf.mxu0
    %v4811 = vadd.f32 %v4797, %v4810
    %v4812 = vpop.f32.mrf.mxu0
    %v4813 = vadd.f32 %v4799, %v4812
    %4814 = vdwg.mxu0
    %4815 = vmatpush.bf16.msra.mxu0 %v3070
    %4816 = vmatpush.bf16.msra.mxu0 %v3062
    %4817 = vmatpush.bf16.msra.mxu0 %v3054
    %4818 = vmatpush.bf16.msra.mxu0 %v3046
    %4819 = vmatpush.bf16.msra.mxu0 %v3038
    %4820 = vmatpush.bf16.msra.mxu0 %v3030
    %4821 = vmatpush.bf16.msra.mxu0 %v3022
    %4822 = vmatpush.bf16.msra.mxu0 %v3014
    %4823 = vmatmul.bf16.gmra.mxu0 %v951
    %v4824 = vpop.f32.mrf.mxu0
    %v4825 = vadd.f32 0.0, %v4824
    %v4826 = vpop.f32.mrf.mxu0
    %v4827 = vadd.f32 0.0, %v4826
    %4828 = vdwg.mxu0
    %4829 = vmatpush.bf16.msra.mxu0 %v3134
    %4830 = vmatpush.bf16.msra.mxu0 %v3126
    %4831 = vmatpush.bf16.msra.mxu0 %v3118
    %4832 = vmatpush.bf16.msra.mxu0 %v3110
    %4833 = vmatpush.bf16.msra.mxu0 %v3102
    %4834 = vmatpush.bf16.msra.mxu0 %v3094
    %4835 = vmatpush.bf16.msra.mxu0 %v3086
    %4836 = vmatpush.bf16.msra.mxu0 %v3078
    %4837 = vmatmul.bf16.gmra.mxu0 %v952
    %v4838 = vpop.f32.mrf.mxu0
    %v4839 = vadd.f32 %v4825, %v4838
    %v4840 = vpop.f32.mrf.mxu0
    %v4841 = vadd.f32 %v4827, %v4840
    %4842 = vdwg.mxu0
    %4843 = vmatpush.bf16.msra.mxu0 %v3198
    %4844 = vmatpush.bf16.msra.mxu0 %v3190
    %4845 = vmatpush.bf16.msra.mxu0 %v3182
    %4846 = vmatpush.bf16.msra.mxu0 %v3174
    %4847 = vmatpush.bf16.msra.mxu0 %v3166
    %4848 = vmatpush.bf16.msra.mxu0 %v3158
    %4849 = vmatpush.bf16.msra.mxu0 %v3150
    %4850 = vmatpush.bf16.msra.mxu0 %v3142
    %4851 = vmatmul.bf16.gmra.mxu0 %v953
    %v4852 = vpop.f32.mrf.mxu0
    %v4853 = vadd.f32 %v4839, %v4852
    %v4854 = vpop.f32.mrf.mxu0
    %v4855 = vadd.f32 %v4841, %v4854
    %4856 = vdwg.mxu0
    %4857 = vmatpush.bf16.msra.mxu0 %v3262
    %4858 = vmatpush.bf16.msra.mxu0 %v3254
    %4859 = vmatpush.bf16.msra.mxu0 %v3246
    %4860 = vmatpush.bf16.msra.mxu0 %v3238
    %4861 = vmatpush.bf16.msra.mxu0 %v3230
    %4862 = vmatpush.bf16.msra.mxu0 %v3222
    %4863 = vmatpush.bf16.msra.mxu0 %v3214
    %4864 = vmatpush.bf16.msra.mxu0 %v3206
    %4865 = vmatmul.bf16.gmra.mxu0 %v954
    %v4866 = vpop.f32.mrf.mxu0
    %v4867 = vadd.f32 %v4853, %v4866
    %v4868 = vpop.f32.mrf.mxu0
    %v4869 = vadd.f32 %v4855, %v4868
    %4870 = vdwg.mxu0
    %4871 = vmatpush.bf16.msra.mxu0 %v3326
    %4872 = vmatpush.bf16.msra.mxu0 %v3318
    %4873 = vmatpush.bf16.msra.mxu0 %v3310
    %4874 = vmatpush.bf16.msra.mxu0 %v3302
    %4875 = vmatpush.bf16.msra.mxu0 %v3294
    %4876 = vmatpush.bf16.msra.mxu0 %v3286
    %4877 = vmatpush.bf16.msra.mxu0 %v3278
    %4878 = vmatpush.bf16.msra.mxu0 %v3270
    %4879 = vmatmul.bf16.gmra.mxu0 %v955
    %v4880 = vpop.f32.mrf.mxu0
    %v4881 = vadd.f32 %v4867, %v4880
    %v4882 = vpop.f32.mrf.mxu0
    %v4883 = vadd.f32 %v4869, %v4882
    %4884 = vdwg.mxu0
    %4885 = vmatpush.bf16.msra.mxu0 %v3390
    %4886 = vmatpush.bf16.msra.mxu0 %v3382
    %4887 = vmatpush.bf16.msra.mxu0 %v3374
    %4888 = vmatpush.bf16.msra.mxu0 %v3366
    %4889 = vmatpush.bf16.msra.mxu0 %v3358
    %4890 = vmatpush.bf16.msra.mxu0 %v3350
    %4891 = vmatpush.bf16.msra.mxu0 %v3342
    %4892 = vmatpush.bf16.msra.mxu0 %v3334
    %4893 = vmatmul.bf16.gmra.mxu0 %v956
    %v4894 = vpop.f32.mrf.mxu0
    %v4895 = vadd.f32 %v4881, %v4894
    %v4896 = vpop.f32.mrf.mxu0
    %v4897 = vadd.f32 %v4883, %v4896
    %4898 = vdwg.mxu0
    %4899 = vmatpush.bf16.msra.mxu0 %v3454
    %4900 = vmatpush.bf16.msra.mxu0 %v3446
    %4901 = vmatpush.bf16.msra.mxu0 %v3438
    %4902 = vmatpush.bf16.msra.mxu0 %v3430
    %4903 = vmatpush.bf16.msra.mxu0 %v3422
    %4904 = vmatpush.bf16.msra.mxu0 %v3414
    %4905 = vmatpush.bf16.msra.mxu0 %v3406
    %4906 = vmatpush.bf16.msra.mxu0 %v3398
    %4907 = vmatmul.bf16.gmra.mxu0 %v957
    %v4908 = vpop.f32.mrf.mxu0
    %v4909 = vadd.f32 %v4895, %v4908
    %v4910 = vpop.f32.mrf.mxu0
    %v4911 = vadd.f32 %v4897, %v4910
    %4912 = vdwg.mxu0
    %4913 = vmatpush.bf16.msra.mxu0 %v3518
    %4914 = vmatpush.bf16.msra.mxu0 %v3510
    %4915 = vmatpush.bf16.msra.mxu0 %v3502
    %4916 = vmatpush.bf16.msra.mxu0 %v3494
    %4917 = vmatpush.bf16.msra.mxu0 %v3486
    %4918 = vmatpush.bf16.msra.mxu0 %v3478
    %4919 = vmatpush.bf16.msra.mxu0 %v3470
    %4920 = vmatpush.bf16.msra.mxu0 %v3462
    %4921 = vmatmul.bf16.gmra.mxu0 %v958
    %v4922 = vpop.f32.mrf.mxu0
    %v4923 = vadd.f32 %v4909, %v4922
    %v4924 = vpop.f32.mrf.mxu0
    %v4925 = vadd.f32 %v4911, %v4924
    %4926 = vdwg.mxu0
    %v4927 = vld [vmem:[#allocation13] sm:$0xff]
    %v4929 = vperm.slane %v4927, 0
    %v4930 = vperm.slane %v4927, 1
    %v4931 = vperm.slane %v4927, 2
    %v4932 = vperm.slane %v4927, 3
    %v4933 = vperm.slane %v4927, 4
    %v4934 = vperm.slane %v4927, 5
    %v4935 = vperm.slane %v4927, 6
    %v4936 = vperm.slane %v4927, 7
    %v4945 = vmul.f32 %v4139, %v4929
    %v4946 = vmul.f32 %v4251, %v4930
    %v4947 = vmul.f32 %v4363, %v4931
    %v4948 = vmul.f32 %v4475, %v4932
    %v4949 = vmul.f32 %v4587, %v4933
    %v4950 = vmul.f32 %v4699, %v4934
    %v4951 = vmul.f32 %v4811, %v4935
    %v4952 = vmul.f32 %v4923, %v4936
    %v4953 = vmul.f32 %v4141, %v4929
    %v4954 = vmul.f32 %v4253, %v4930
    %v4955 = vmul.f32 %v4365, %v4931
    %v4956 = vmul.f32 %v4477, %v4932
    %v4957 = vmul.f32 %v4589, %v4933
    %v4958 = vmul.f32 %v4701, %v4934
    %v4959 = vmul.f32 %v4813, %v4935
    %v4960 = vmul.f32 %v4925, %v4936
    %v4961 = vld [vmem:[#allocation14] sm:$0xff]
    %v4963 = vperm.slane %v4961, 0
    %v4964 = vperm.slane %v4961, 1
    %v4965 = vperm.slane %v4961, 2
    %v4966 = vperm.slane %v4961, 3
    %v4967 = vperm.slane %v4961, 4
    %v4968 = vperm.slane %v4961, 5
    %v4969 = vperm.slane %v4961, 6
    %v4970 = vperm.slane %v4961, 7
    %v4979 = vadd.f32 %v4945, %v4963
    %v4980 = vadd.f32 %v4946, %v4964
    %v4981 = vadd.f32 %v4947, %v4965
    %v4982 = vadd.f32 %v4948, %v4966
    %v4983 = vadd.f32 %v4949, %v4967
    %v4984 = vadd.f32 %v4950, %v4968
    %v4985 = vadd.f32 %v4951, %v4969
    %v4986 = vadd.f32 %v4952, %v4970
    %v4987 = vadd.f32 %v4953, %v4963
    %v4988 = vadd.f32 %v4954, %v4964
    %v4989 = vadd.f32 %v4955, %v4965
    %v4990 = vadd.f32 %v4956, %v4966
    %v4991 = vadd.f32 %v4957, %v4967
    %v4992 = vadd.f32 %v4958, %v4968
    %v4993 = vadd.f32 %v4959, %v4969
    %v4994 = vadd.f32 %v4960, %v4970
    %vm4995 = vcmp.gt.f32.partialorder %v4979, 0.0
    %vm4996 = vcmp.gt.f32.partialorder %v4980, 0.0
    %vm4997 = vcmp.gt.f32.partialorder %v4981, 0.0
    %vm4998 = vcmp.gt.f32.partialorder %v4982, 0.0
    %vm4999 = vcmp.gt.f32.partialorder %v4983, 0.0
    %vm5000 = vcmp.gt.f32.partialorder %v4984, 0.0
    %vm5001 = vcmp.gt.f32.partialorder %v4985, 0.0
    %vm5002 = vcmp.gt.f32.partialorder %v4986, 0.0
    %vm5003 = vcmp.gt.f32.partialorder %v4987, 0.0
    %vm5004 = vcmp.gt.f32.partialorder %v4988, 0.0
    %vm5005 = vcmp.gt.f32.partialorder %v4989, 0.0
    %vm5006 = vcmp.gt.f32.partialorder %v4990, 0.0
    %vm5007 = vcmp.gt.f32.partialorder %v4991, 0.0
    %vm5008 = vcmp.gt.f32.partialorder %v4992, 0.0
    %vm5009 = vcmp.gt.f32.partialorder %v4993, 0.0
    %vm5010 = vcmp.gt.f32.partialorder %v4994, 0.0
    %v5011 = vmul.f32 %v4979, 1.442695
    %v5012 = vpow.pop %v5011
    %v5013 = vmul.f32 %v4980, 1.442695
    %v5014 = vpow.pop %v5013
    %v5015 = vmul.f32 %v4981, 1.442695
    %v5016 = vpow.pop %v5015
    %v5017 = vmul.f32 %v4982, 1.442695
    %v5018 = vpow.pop %v5017
    %v5019 = vmul.f32 %v4983, 1.442695
    %v5020 = vpow.pop %v5019
    %v5021 = vmul.f32 %v4984, 1.442695
    %v5022 = vpow.pop %v5021
    %v5023 = vmul.f32 %v4985, 1.442695
    %v5024 = vpow.pop %v5023
    %v5025 = vmul.f32 %v4986, 1.442695
    %v5026 = vpow.pop %v5025
    %v5027 = vmul.f32 %v4987, 1.442695
    %v5028 = vpow.pop %v5027
    %v5029 = vmul.f32 %v4988, 1.442695
    %v5030 = vpow.pop %v5029
    %v5031 = vmul.f32 %v4989, 1.442695
    %v5032 = vpow.pop %v5031
    %v5033 = vmul.f32 %v4990, 1.442695
    %v5034 = vpow.pop %v5033
    %v5035 = vmul.f32 %v4991, 1.442695
    %v5036 = vpow.pop %v5035
    %v5037 = vmul.f32 %v4992, 1.442695
    %v5038 = vpow.pop %v5037
    %v5039 = vmul.f32 %v4993, 1.442695
    %v5040 = vpow.pop %v5039
    %v5041 = vmul.f32 %v4994, 1.442695
    %v5042 = vpow.pop %v5041
    %v5043 = vsub.f32 %v5012, 1.0
    %v5044 = vsub.f32 %v5014, 1.0
    %v5045 = vsub.f32 %v5016, 1.0
    %v5046 = vsub.f32 %v5018, 1.0
    %v5047 = vsub.f32 %v5020, 1.0
    %v5048 = vsub.f32 %v5022, 1.0
    %v5049 = vsub.f32 %v5024, 1.0
    %v5050 = vsub.f32 %v5026, 1.0
    %v5051 = vsub.f32 %v5028, 1.0
    %v5052 = vsub.f32 %v5030, 1.0
    %v5053 = vsub.f32 %v5032, 1.0
    %v5054 = vsub.f32 %v5034, 1.0
    %v5055 = vsub.f32 %v5036, 1.0
    %v5056 = vsub.f32 %v5038, 1.0
    %v5057 = vsub.f32 %v5040, 1.0
    %v5058 = vsub.f32 %v5042, 1.0
    %v5059 = vsel %vm4995, %v4979, %v5043
    %v5060 = vsel %vm4996, %v4980, %v5044
    %v5061 = vsel %vm4997, %v4981, %v5045
    %v5062 = vsel %vm4998, %v4982, %v5046
    %v5063 = vsel %vm4999, %v4983, %v5047
    %v5064 = vsel %vm5000, %v4984, %v5048
    %v5065 = vsel %vm5001, %v4985, %v5049
    %v5066 = vsel %vm5002, %v4986, %v5050
    %v5067 = vsel %vm5003, %v4987, %v5051
    %v5068 = vsel %vm5004, %v4988, %v5052
    %v5069 = vsel %vm5005, %v4989, %v5053
    %v5070 = vsel %vm5006, %v4990, %v5054
    %v5071 = vsel %vm5007, %v4991, %v5055
    %v5072 = vsel %vm5008, %v4992, %v5056
    %v5073 = vsel %vm5009, %v4993, %v5057
    %v5074 = vsel %vm5010, %v4994, %v5058
    %v5075 = vpack.c.bf16 %v5067, %v5059
    %v5076 = vpack.c.bf16 %v5068, %v5060
    %v5077 = vpack.c.bf16 %v5069, %v5061
    %v5078 = vpack.c.bf16 %v5070, %v5062
    %v5079 = vpack.c.bf16 %v5071, %v5063
    %v5080 = vpack.c.bf16 %v5072, %v5064
    %v5081 = vpack.c.bf16 %v5073, %v5065
    %v5082 = vpack.c.bf16 %v5074, %v5066
    %v5083 = vld [vmem:[%s13] sm:$0xf]
    %v5084 = vld [vmem:[%s13 + $0x4] sm:$0xf]
    %v5085 = vld [vmem:[%s13 + $0x8] sm:$0xf]
    %v5086 = vld [vmem:[%s13 + $0xc] sm:$0xf]
    %v5087 = vld [vmem:[%s13 + $0x10] sm:$0xf]
    %v5088 = vld [vmem:[%s13 + $0x14] sm:$0xf]
    %v5089 = vld [vmem:[%s13 + $0x18] sm:$0xf]
    %v5090 = vld [vmem:[%s13 + $0x1c] sm:$0xf]
    %v5091 = vld [vmem:[%s13 + $0x20] sm:$0xf]
    %v5092 = vld [vmem:[%s13 + $0x24] sm:$0xf]
    %v5093 = vld [vmem:[%s13 + $0x28] sm:$0xf]
    %v5094 = vld [vmem:[%s13 + $0x2c] sm:$0xf]
    %v5095 = vld [vmem:[%s13 + $0x30] sm:$0xf]
    %v5096 = vld [vmem:[%s13 + $0x34] sm:$0xf]
    %v5097 = vld [vmem:[%s13 + $0x38] sm:$0xf]
    %v5098 = vld [vmem:[%s13 + $0x3c] sm:$0xf]
    %v5099 = vld [vmem:[%s13 + $0x40] sm:$0xf]
    %v5100 = vld [vmem:[%s13 + $0x44] sm:$0xf]
    %v5101 = vld [vmem:[%s13 + $0x48] sm:$0xf]
    %v5102 = vld [vmem:[%s13 + $0x4c] sm:$0xf]
    %v5103 = vld [vmem:[%s13 + $0x50] sm:$0xf]
    %v5104 = vld [vmem:[%s13 + $0x54] sm:$0xf]
    %v5105 = vld [vmem:[%s13 + $0x58] sm:$0xf]
    %v5106 = vld [vmem:[%s13 + $0x5c] sm:$0xf]
    %v5107 = vld [vmem:[%s13 + $0x60] sm:$0xf]
    %v5108 = vld [vmem:[%s13 + $0x64] sm:$0xf]
    %v5109 = vld [vmem:[%s13 + $0x68] sm:$0xf]
    %v5110 = vld [vmem:[%s13 + $0x6c] sm:$0xf]
    %v5111 = vld [vmem:[%s13 + $0x70] sm:$0xf]
    %v5112 = vld [vmem:[%s13 + $0x74] sm:$0xf]
    %v5113 = vld [vmem:[%s13 + $0x78] sm:$0xf]
    %v5114 = vld [vmem:[%s13 + $0x7c] sm:$0xf]
    %v5115 = vld [vmem:[%s13 + $0x80] sm:$0xf]
    %v5116 = vld [vmem:[%s13 + $0x84] sm:$0xf]
    %v5117 = vld [vmem:[%s13 + $0x88] sm:$0xf]
    %v5118 = vld [vmem:[%s13 + $0x8c] sm:$0xf]
    %v5119 = vld [vmem:[%s13 + $0x90] sm:$0xf]
    %v5120 = vld [vmem:[%s13 + $0x94] sm:$0xf]
    %v5121 = vld [vmem:[%s13 + $0x98] sm:$0xf]
    %v5122 = vld [vmem:[%s13 + $0x9c] sm:$0xf]
    %v5123 = vld [vmem:[%s13 + $0xa0] sm:$0xf]
    %v5124 = vld [vmem:[%s13 + $0xa4] sm:$0xf]
    %v5125 = vld [vmem:[%s13 + $0xa8] sm:$0xf]
    %v5126 = vld [vmem:[%s13 + $0xac] sm:$0xf]
    %v5127 = vld [vmem:[%s13 + $0xb0] sm:$0xf]
    %v5128 = vld [vmem:[%s13 + $0xb4] sm:$0xf]
    %v5129 = vld [vmem:[%s13 + $0xb8] sm:$0xf]
    %v5130 = vld [vmem:[%s13 + $0xbc] sm:$0xf]
    %v5131 = vld [vmem:[%s13 + $0xc0] sm:$0xf]
    %v5132 = vld [vmem:[%s13 + $0xc4] sm:$0xf]
    %v5133 = vld [vmem:[%s13 + $0xc8] sm:$0xf]
    %v5134 = vld [vmem:[%s13 + $0xcc] sm:$0xf]
    %v5135 = vld [vmem:[%s13 + $0xd0] sm:$0xf]
    %v5136 = vld [vmem:[%s13 + $0xd4] sm:$0xf]
    %v5137 = vld [vmem:[%s13 + $0xd8] sm:$0xf]
    %v5138 = vld [vmem:[%s13 + $0xdc] sm:$0xf]
    %v5139 = vld [vmem:[%s13 + $0xe0] sm:$0xf]
    %v5140 = vld [vmem:[%s13 + $0xe4] sm:$0xf]
    %v5141 = vld [vmem:[%s13 + $0xe8] sm:$0xf]
    %v5142 = vld [vmem:[%s13 + $0xec] sm:$0xf]
    %v5143 = vld [vmem:[%s13 + $0xf0] sm:$0xf]
    %v5144 = vld [vmem:[%s13 + $0xf4] sm:$0xf]
    %v5145 = vld [vmem:[%s13 + $0xf8] sm:$0xf]
    %v5146 = vld [vmem:[%s13 + $0xfc] sm:$0xf]
    %v5147 = vld [vmem:[%s13 + $0x100] sm:$0xf]
    %v5148 = vld [vmem:[%s13 + $0x104] sm:$0xf]
    %v5149 = vld [vmem:[%s13 + $0x108] sm:$0xf]
    %v5150 = vld [vmem:[%s13 + $0x10c] sm:$0xf]
    %v5151 = vld [vmem:[%s13 + $0x110] sm:$0xf]
    %v5152 = vld [vmem:[%s13 + $0x114] sm:$0xf]
    %v5153 = vld [vmem:[%s13 + $0x118] sm:$0xf]
    %v5154 = vld [vmem:[%s13 + $0x11c] sm:$0xf]
    %v5155 = vld [vmem:[%s13 + $0x120] sm:$0xf]
    %v5156 = vld [vmem:[%s13 + $0x124] sm:$0xf]
    %v5157 = vld [vmem:[%s13 + $0x128] sm:$0xf]
    %v5158 = vld [vmem:[%s13 + $0x12c] sm:$0xf]
    %v5159 = vld [vmem:[%s13 + $0x130] sm:$0xf]
    %v5160 = vld [vmem:[%s13 + $0x134] sm:$0xf]
    %v5161 = vld [vmem:[%s13 + $0x138] sm:$0xf]
    %v5162 = vld [vmem:[%s13 + $0x13c] sm:$0xf]
    %v5163 = vld [vmem:[%s13 + $0x140] sm:$0xf]
    %v5164 = vld [vmem:[%s13 + $0x144] sm:$0xf]
    %v5165 = vld [vmem:[%s13 + $0x148] sm:$0xf]
    %v5166 = vld [vmem:[%s13 + $0x14c] sm:$0xf]
    %v5167 = vld [vmem:[%s13 + $0x150] sm:$0xf]
    %v5168 = vld [vmem:[%s13 + $0x154] sm:$0xf]
    %v5169 = vld [vmem:[%s13 + $0x158] sm:$0xf]
    %v5170 = vld [vmem:[%s13 + $0x15c] sm:$0xf]
    %v5171 = vld [vmem:[%s13 + $0x160] sm:$0xf]
    %v5172 = vld [vmem:[%s13 + $0x164] sm:$0xf]
    %v5173 = vld [vmem:[%s13 + $0x168] sm:$0xf]
    %v5174 = vld [vmem:[%s13 + $0x16c] sm:$0xf]
    %v5175 = vld [vmem:[%s13 + $0x170] sm:$0xf]
    %v5176 = vld [vmem:[%s13 + $0x174] sm:$0xf]
    %v5177 = vld [vmem:[%s13 + $0x178] sm:$0xf]
    %v5178 = vld [vmem:[%s13 + $0x17c] sm:$0xf]
    %v5179 = vld [vmem:[%s13 + $0x180] sm:$0xf]
    %v5180 = vld [vmem:[%s13 + $0x184] sm:$0xf]
    %v5181 = vld [vmem:[%s13 + $0x188] sm:$0xf]
    %v5182 = vld [vmem:[%s13 + $0x18c] sm:$0xf]
    %v5183 = vld [vmem:[%s13 + $0x190] sm:$0xf]
    %v5184 = vld [vmem:[%s13 + $0x194] sm:$0xf]
    %v5185 = vld [vmem:[%s13 + $0x198] sm:$0xf]
    %v5186 = vld [vmem:[%s13 + $0x19c] sm:$0xf]
    %v5187 = vld [vmem:[%s13 + $0x1a0] sm:$0xf]
    %v5188 = vld [vmem:[%s13 + $0x1a4] sm:$0xf]
    %v5189 = vld [vmem:[%s13 + $0x1a8] sm:$0xf]
    %v5190 = vld [vmem:[%s13 + $0x1ac] sm:$0xf]
    %v5191 = vld [vmem:[%s13 + $0x1b0] sm:$0xf]
    %v5192 = vld [vmem:[%s13 + $0x1b4] sm:$0xf]
    %v5193 = vld [vmem:[%s13 + $0x1b8] sm:$0xf]
    %v5194 = vld [vmem:[%s13 + $0x1bc] sm:$0xf]
    %v5195 = vld [vmem:[%s13 + $0x1c0] sm:$0xf]
    %v5196 = vld [vmem:[%s13 + $0x1c4] sm:$0xf]
    %v5197 = vld [vmem:[%s13 + $0x1c8] sm:$0xf]
    %v5198 = vld [vmem:[%s13 + $0x1cc] sm:$0xf]
    %v5199 = vld [vmem:[%s13 + $0x1d0] sm:$0xf]
    %v5200 = vld [vmem:[%s13 + $0x1d4] sm:$0xf]
    %v5201 = vld [vmem:[%s13 + $0x1d8] sm:$0xf]
    %v5202 = vld [vmem:[%s13 + $0x1dc] sm:$0xf]
    %v5203 = vld [vmem:[%s13 + $0x1e0] sm:$0xf]
    %v5204 = vld [vmem:[%s13 + $0x1e4] sm:$0xf]
    %v5205 = vld [vmem:[%s13 + $0x1e8] sm:$0xf]
    %v5206 = vld [vmem:[%s13 + $0x1ec] sm:$0xf]
    %v5207 = vld [vmem:[%s13 + $0x1f0] sm:$0xf]
    %v5208 = vld [vmem:[%s13 + $0x1f4] sm:$0xf]
    %v5209 = vld [vmem:[%s13 + $0x1f8] sm:$0xf]
    %v5210 = vld [vmem:[%s13 + $0x1fc] sm:$0xf]
    %v5339 = vunpack.c.l.b16 %v5083
    %v5340 = vunpack.c.l.b16 %v5084
    %v5341 = vunpack.c.l.b16 %v5085
    %v5342 = vunpack.c.l.b16 %v5086
    %v5343 = vunpack.c.l.b16 %v5087
    %v5344 = vunpack.c.l.b16 %v5088
    %v5345 = vunpack.c.l.b16 %v5089
    %v5346 = vunpack.c.l.b16 %v5090
    %v5347 = vunpack.c.l.b16 %v5091
    %v5348 = vunpack.c.l.b16 %v5092
    %v5349 = vunpack.c.l.b16 %v5093
    %v5350 = vunpack.c.l.b16 %v5094
    %v5351 = vunpack.c.l.b16 %v5095
    %v5352 = vunpack.c.l.b16 %v5096
    %v5353 = vunpack.c.l.b16 %v5097
    %v5354 = vunpack.c.l.b16 %v5098
    %v5355 = vunpack.c.l.b16 %v5099
    %v5356 = vunpack.c.l.b16 %v5100
    %v5357 = vunpack.c.l.b16 %v5101
    %v5358 = vunpack.c.l.b16 %v5102
    %v5359 = vunpack.c.l.b16 %v5103
    %v5360 = vunpack.c.l.b16 %v5104
    %v5361 = vunpack.c.l.b16 %v5105
    %v5362 = vunpack.c.l.b16 %v5106
    %v5363 = vunpack.c.l.b16 %v5107
    %v5364 = vunpack.c.l.b16 %v5108
    %v5365 = vunpack.c.l.b16 %v5109
    %v5366 = vunpack.c.l.b16 %v5110
    %v5367 = vunpack.c.l.b16 %v5111
    %v5368 = vunpack.c.l.b16 %v5112
    %v5369 = vunpack.c.l.b16 %v5113
    %v5370 = vunpack.c.l.b16 %v5114
    %v5371 = vunpack.c.l.b16 %v5115
    %v5372 = vunpack.c.l.b16 %v5116
    %v5373 = vunpack.c.l.b16 %v5117
    %v5374 = vunpack.c.l.b16 %v5118
    %v5375 = vunpack.c.l.b16 %v5119
    %v5376 = vunpack.c.l.b16 %v5120
    %v5377 = vunpack.c.l.b16 %v5121
    %v5378 = vunpack.c.l.b16 %v5122
    %v5379 = vunpack.c.l.b16 %v5123
    %v5380 = vunpack.c.l.b16 %v5124
    %v5381 = vunpack.c.l.b16 %v5125
    %v5382 = vunpack.c.l.b16 %v5126
    %v5383 = vunpack.c.l.b16 %v5127
    %v5384 = vunpack.c.l.b16 %v5128
    %v5385 = vunpack.c.l.b16 %v5129
    %v5386 = vunpack.c.l.b16 %v5130
    %v5387 = vunpack.c.l.b16 %v5131
    %v5388 = vunpack.c.l.b16 %v5132
    %v5389 = vunpack.c.l.b16 %v5133
    %v5390 = vunpack.c.l.b16 %v5134
    %v5391 = vunpack.c.l.b16 %v5135
    %v5392 = vunpack.c.l.b16 %v5136
    %v5393 = vunpack.c.l.b16 %v5137
    %v5394 = vunpack.c.l.b16 %v5138
    %v5395 = vunpack.c.l.b16 %v5139
    %v5396 = vunpack.c.l.b16 %v5140
    %v5397 = vunpack.c.l.b16 %v5141
    %v5398 = vunpack.c.l.b16 %v5142
    %v5399 = vunpack.c.l.b16 %v5143
    %v5400 = vunpack.c.l.b16 %v5144
    %v5401 = vunpack.c.l.b16 %v5145
    %v5402 = vunpack.c.l.b16 %v5146
    %v5403 = vunpack.c.l.b16 %v5147
    %v5404 = vunpack.c.l.b16 %v5148
    %v5405 = vunpack.c.l.b16 %v5149
    %v5406 = vunpack.c.l.b16 %v5150
    %v5407 = vunpack.c.l.b16 %v5151
    %v5408 = vunpack.c.l.b16 %v5152
    %v5409 = vunpack.c.l.b16 %v5153
    %v5410 = vunpack.c.l.b16 %v5154
    %v5411 = vunpack.c.l.b16 %v5155
    %v5412 = vunpack.c.l.b16 %v5156
    %v5413 = vunpack.c.l.b16 %v5157
    %v5414 = vunpack.c.l.b16 %v5158
    %v5415 = vunpack.c.l.b16 %v5159
    %v5416 = vunpack.c.l.b16 %v5160
    %v5417 = vunpack.c.l.b16 %v5161
    %v5418 = vunpack.c.l.b16 %v5162
    %v5419 = vunpack.c.l.b16 %v5163
    %v5420 = vunpack.c.l.b16 %v5164
    %v5421 = vunpack.c.l.b16 %v5165
    %v5422 = vunpack.c.l.b16 %v5166
    %v5423 = vunpack.c.l.b16 %v5167
    %v5424 = vunpack.c.l.b16 %v5168
    %v5425 = vunpack.c.l.b16 %v5169
    %v5426 = vunpack.c.l.b16 %v5170
    %v5427 = vunpack.c.l.b16 %v5171
    %v5428 = vunpack.c.l.b16 %v5172
    %v5429 = vunpack.c.l.b16 %v5173
    %v5430 = vunpack.c.l.b16 %v5174
    %v5431 = vunpack.c.l.b16 %v5175
    %v5432 = vunpack.c.l.b16 %v5176
    %v5433 = vunpack.c.l.b16 %v5177
    %v5434 = vunpack.c.l.b16 %v5178
    %v5435 = vunpack.c.l.b16 %v5179
    %v5436 = vunpack.c.l.b16 %v5180
    %v5437 = vunpack.c.l.b16 %v5181
    %v5438 = vunpack.c.l.b16 %v5182
    %v5439 = vunpack.c.l.b16 %v5183
    %v5440 = vunpack.c.l.b16 %v5184
    %v5441 = vunpack.c.l.b16 %v5185
    %v5442 = vunpack.c.l.b16 %v5186
    %v5443 = vunpack.c.l.b16 %v5187
    %v5444 = vunpack.c.l.b16 %v5188
    %v5445 = vunpack.c.l.b16 %v5189
    %v5446 = vunpack.c.l.b16 %v5190
    %v5447 = vunpack.c.l.b16 %v5191
    %v5448 = vunpack.c.l.b16 %v5192
    %v5449 = vunpack.c.l.b16 %v5193
    %v5450 = vunpack.c.l.b16 %v5194
    %v5451 = vunpack.c.l.b16 %v5195
    %v5452 = vunpack.c.l.b16 %v5196
    %v5453 = vunpack.c.l.b16 %v5197
    %v5454 = vunpack.c.l.b16 %v5198
    %v5455 = vunpack.c.l.b16 %v5199
    %v5456 = vunpack.c.l.b16 %v5200
    %v5457 = vunpack.c.l.b16 %v5201
    %v5458 = vunpack.c.l.b16 %v5202
    %v5459 = vunpack.c.l.b16 %v5203
    %v5460 = vunpack.c.l.b16 %v5204
    %v5461 = vunpack.c.l.b16 %v5205
    %v5462 = vunpack.c.l.b16 %v5206
    %v5463 = vunpack.c.l.b16 %v5207
    %v5464 = vunpack.c.l.b16 %v5208
    %v5465 = vunpack.c.l.b16 %v5209
    %v5466 = vunpack.c.l.b16 %v5210
    %v5467 = vpack.c.b16 %v5340, %v5339
    %v5468 = vpack.c.b16 %v5342, %v5341
    %v5469 = vpack.c.b16 %v5344, %v5343
    %v5470 = vpack.c.b16 %v5346, %v5345
    %v5471 = vpack.c.b16 %v5348, %v5347
    %v5472 = vpack.c.b16 %v5350, %v5349
    %v5473 = vpack.c.b16 %v5352, %v5351
    %v5474 = vpack.c.b16 %v5354, %v5353
    %v5475 = vpack.c.b16 %v5356, %v5355
    %v5476 = vpack.c.b16 %v5358, %v5357
    %v5477 = vpack.c.b16 %v5360, %v5359
    %v5478 = vpack.c.b16 %v5362, %v5361
    %v5479 = vpack.c.b16 %v5364, %v5363
    %v5480 = vpack.c.b16 %v5366, %v5365
    %v5481 = vpack.c.b16 %v5368, %v5367
    %v5482 = vpack.c.b16 %v5370, %v5369
    %v5483 = vpack.c.b16 %v5372, %v5371
    %v5484 = vpack.c.b16 %v5374, %v5373
    %v5485 = vpack.c.b16 %v5376, %v5375
    %v5486 = vpack.c.b16 %v5378, %v5377
    %v5487 = vpack.c.b16 %v5380, %v5379
    %v5488 = vpack.c.b16 %v5382, %v5381
    %v5489 = vpack.c.b16 %v5384, %v5383
    %v5490 = vpack.c.b16 %v5386, %v5385
    %v5491 = vpack.c.b16 %v5388, %v5387
    %v5492 = vpack.c.b16 %v5390, %v5389
    %v5493 = vpack.c.b16 %v5392, %v5391
    %v5494 = vpack.c.b16 %v5394, %v5393
    %v5495 = vpack.c.b16 %v5396, %v5395
    %v5496 = vpack.c.b16 %v5398, %v5397
    %v5497 = vpack.c.b16 %v5400, %v5399
    %v5498 = vpack.c.b16 %v5402, %v5401
    %v5499 = vpack.c.b16 %v5404, %v5403
    %v5500 = vpack.c.b16 %v5406, %v5405
    %v5501 = vpack.c.b16 %v5408, %v5407
    %v5502 = vpack.c.b16 %v5410, %v5409
    %v5503 = vpack.c.b16 %v5412, %v5411
    %v5504 = vpack.c.b16 %v5414, %v5413
    %v5505 = vpack.c.b16 %v5416, %v5415
    %v5506 = vpack.c.b16 %v5418, %v5417
    %v5507 = vpack.c.b16 %v5420, %v5419
    %v5508 = vpack.c.b16 %v5422, %v5421
    %v5509 = vpack.c.b16 %v5424, %v5423
    %v5510 = vpack.c.b16 %v5426, %v5425
    %v5511 = vpack.c.b16 %v5428, %v5427
    %v5512 = vpack.c.b16 %v5430, %v5429
    %v5513 = vpack.c.b16 %v5432, %v5431
    %v5514 = vpack.c.b16 %v5434, %v5433
    %v5515 = vpack.c.b16 %v5436, %v5435
    %v5516 = vpack.c.b16 %v5438, %v5437
    %v5517 = vpack.c.b16 %v5440, %v5439
    %v5518 = vpack.c.b16 %v5442, %v5441
    %v5519 = vpack.c.b16 %v5444, %v5443
    %v5520 = vpack.c.b16 %v5446, %v5445
    %v5521 = vpack.c.b16 %v5448, %v5447
    %v5522 = vpack.c.b16 %v5450, %v5449
    %v5523 = vpack.c.b16 %v5452, %v5451
    %v5524 = vpack.c.b16 %v5454, %v5453
    %v5525 = vpack.c.b16 %v5456, %v5455
    %v5526 = vpack.c.b16 %v5458, %v5457
    %v5527 = vpack.c.b16 %v5460, %v5459
    %v5528 = vpack.c.b16 %v5462, %v5461
    %v5529 = vpack.c.b16 %v5464, %v5463
    %v5530 = vpack.c.b16 %v5466, %v5465
    %5595 = vmatpush.bf16.msra.mxu0 %v5474
    %5596 = vmatpush.bf16.msra.mxu0 %v5473
    %5597 = vmatpush.bf16.msra.mxu0 %v5472
    %5598 = vmatpush.bf16.msra.mxu0 %v5471
    %5599 = vmatpush.bf16.msra.mxu0 %v5470
    %5600 = vmatpush.bf16.msra.mxu0 %v5469
    %5601 = vmatpush.bf16.msra.mxu0 %v5468
    %5602 = vmatpush.bf16.msra.mxu0 %v5467
    %5603 = vmatmul.bf16.gmra.mxu0 %v5075
    %v5604 = vpop.f32.mrf.mxu0
    %v5605 = vadd.f32 0.0, %v5604
    %v5606 = vpop.f32.mrf.mxu0
    %v5607 = vadd.f32 0.0, %v5606
    %5608 = vdwg.mxu0
    %5609 = vmatpush.bf16.msra.mxu0 %v5482
    %5610 = vmatpush.bf16.msra.mxu0 %v5481
    %5611 = vmatpush.bf16.msra.mxu0 %v5480
    %5612 = vmatpush.bf16.msra.mxu0 %v5479
    %5613 = vmatpush.bf16.msra.mxu0 %v5478
    %5614 = vmatpush.bf16.msra.mxu0 %v5477
    %5615 = vmatpush.bf16.msra.mxu0 %v5476
    %5616 = vmatpush.bf16.msra.mxu0 %v5475
    %5617 = vmatmul.bf16.gmra.mxu0 %v5076
    %v5618 = vpop.f32.mrf.mxu0
    %v5619 = vadd.f32 %v5605, %v5618
    %v5620 = vpop.f32.mrf.mxu0
    %v5621 = vadd.f32 %v5607, %v5620
    %5622 = vdwg.mxu0
    %5623 = vmatpush.bf16.msra.mxu0 %v5490
    %5624 = vmatpush.bf16.msra.mxu0 %v5489
    %5625 = vmatpush.bf16.msra.mxu0 %v5488
    %5626 = vmatpush.bf16.msra.mxu0 %v5487
    %5627 = vmatpush.bf16.msra.mxu0 %v5486
    %5628 = vmatpush.bf16.msra.mxu0 %v5485
    %5629 = vmatpush.bf16.msra.mxu0 %v5484
    %5630 = vmatpush.bf16.msra.mxu0 %v5483
    %5631 = vmatmul.bf16.gmra.mxu0 %v5077
    %v5632 = vpop.f32.mrf.mxu0
    %v5633 = vadd.f32 %v5619, %v5632
    %v5634 = vpop.f32.mrf.mxu0
    %v5635 = vadd.f32 %v5621, %v5634
    %5636 = vdwg.mxu0
    %5637 = vmatpush.bf16.msra.mxu0 %v5498
    %5638 = vmatpush.bf16.msra.mxu0 %v5497
    %5639 = vmatpush.bf16.msra.mxu0 %v5496
    %5640 = vmatpush.bf16.msra.mxu0 %v5495
    %5641 = vmatpush.bf16.msra.mxu0 %v5494
    %5642 = vmatpush.bf16.msra.mxu0 %v5493
    %5643 = vmatpush.bf16.msra.mxu0 %v5492
    %5644 = vmatpush.bf16.msra.mxu0 %v5491
    %5645 = vmatmul.bf16.gmra.mxu0 %v5078
    %v5646 = vpop.f32.mrf.mxu0
    %v5647 = vadd.f32 %v5633, %v5646
    %v5648 = vpop.f32.mrf.mxu0
    %v5649 = vadd.f32 %v5635, %v5648
    %5650 = vdwg.mxu0
    %5651 = vmatpush.bf16.msra.mxu0 %v5506
    %5652 = vmatpush.bf16.msra.mxu0 %v5505
    %5653 = vmatpush.bf16.msra.mxu0 %v5504
    %5654 = vmatpush.bf16.msra.mxu0 %v5503
    %5655 = vmatpush.bf16.msra.mxu0 %v5502
    %5656 = vmatpush.bf16.msra.mxu0 %v5501
    %5657 = vmatpush.bf16.msra.mxu0 %v5500
    %5658 = vmatpush.bf16.msra.mxu0 %v5499
    %5659 = vmatmul.bf16.gmra.mxu0 %v5079
    %v5660 = vpop.f32.mrf.mxu0
    %v5661 = vadd.f32 %v5647, %v5660
    %v5662 = vpop.f32.mrf.mxu0
    %v5663 = vadd.f32 %v5649, %v5662
    %5664 = vdwg.mxu0
    %5665 = vmatpush.bf16.msra.mxu0 %v5514
    %5666 = vmatpush.bf16.msra.mxu0 %v5513
    %5667 = vmatpush.bf16.msra.mxu0 %v5512
    %5668 = vmatpush.bf16.msra.mxu0 %v5511
    %5669 = vmatpush.bf16.msra.mxu0 %v5510
    %5670 = vmatpush.bf16.msra.mxu0 %v5509
    %5671 = vmatpush.bf16.msra.mxu0 %v5508
    %5672 = vmatpush.bf16.msra.mxu0 %v5507
    %5673 = vmatmul.bf16.gmra.mxu0 %v5080
    %v5674 = vpop.f32.mrf.mxu0
    %v5675 = vadd.f32 %v5661, %v5674
    %v5676 = vpop.f32.mrf.mxu0
    %v5677 = vadd.f32 %v5663, %v5676
    %5678 = vdwg.mxu0
    %5679 = vmatpush.bf16.msra.mxu0 %v5522
    %5680 = vmatpush.bf16.msra.mxu0 %v5521
    %5681 = vmatpush.bf16.msra.mxu0 %v5520
    %5682 = vmatpush.bf16.msra.mxu0 %v5519
    %5683 = vmatpush.bf16.msra.mxu0 %v5518
    %5684 = vmatpush.bf16.msra.mxu0 %v5517
    %5685 = vmatpush.bf16.msra.mxu0 %v5516
    %5686 = vmatpush.bf16.msra.mxu0 %v5515
    %5687 = vmatmul.bf16.gmra.mxu0 %v5081
    %v5688 = vpop.f32.mrf.mxu0
    %v5689 = vadd.f32 %v5675, %v5688
    %v5690 = vpop.f32.mrf.mxu0
    %v5691 = vadd.f32 %v5677, %v5690
    %5692 = vdwg.mxu0
    %5693 = vmatpush.bf16.msra.mxu0 %v5530
    %5694 = vmatpush.bf16.msra.mxu0 %v5529
    %5695 = vmatpush.bf16.msra.mxu0 %v5528
    %5696 = vmatpush.bf16.msra.mxu0 %v5527
    %5697 = vmatpush.bf16.msra.mxu0 %v5526
    %5698 = vmatpush.bf16.msra.mxu0 %v5525
    %5699 = vmatpush.bf16.msra.mxu0 %v5524
    %5700 = vmatpush.bf16.msra.mxu0 %v5523
    %5701 = vmatmul.bf16.gmra.mxu0 %v5082
    %v5702 = vpop.f32.mrf.mxu0
    %v5703 = vadd.f32 %v5689, %v5702
    %v5704 = vpop.f32.mrf.mxu0
    %v5705 = vadd.f32 %v5691, %v5704
    %5706 = vdwg.mxu0
    %v5707 = vld [vmem:[#allocation19] sm:$0xff]
    %v5708 = vld [vmem:[#allocation19 + $0x8] sm:$0xff]
    %v5709 = vld [vmem:[#allocation19 + $0x10] sm:$0xff]
    %v5710 = vld [vmem:[#allocation19 + $0x18] sm:$0xff]
    %v5711 = vld [vmem:[#allocation19 + $0x20] sm:$0xff]
    %v5712 = vld [vmem:[#allocation19 + $0x28] sm:$0xff]
    %v5713 = vld [vmem:[#allocation19 + $0x30] sm:$0xff]
    %v5714 = vld [vmem:[#allocation19 + $0x38] sm:$0xff]
    %v5715 = vld [vmem:[#allocation19 + $0x40] sm:$0xff]
    %v5716 = vld [vmem:[#allocation19 + $0x48] sm:$0xff]
    %v5717 = vld [vmem:[#allocation19 + $0x50] sm:$0xff]
    %v5718 = vld [vmem:[#allocation19 + $0x58] sm:$0xff]
    %vm5719 = vcmask 130048
    %v5721 = vsel %vm5719, %v945, 0
    %v5724 = vsel %vm5719, %v946, 0
    %5726 = vmatpush.msra.mxu0 0.0
    %5727 = vmatpush.msra.mxu0 0.0
    %5728 = vmatpush.msra.mxu0 0.0
    %5729 = vmatpush.msra.mxu0 0.0
    %5730 = vmatpush.msra.mxu0 0.0
    %5731 = vmatpush.msra.mxu0 0.0
    %5732 = vmatpush.msra.mxu0 0.0
    %5733 = vmatpush.msra.mxu0 0.0
    %5734 = vmatpush.msra.mxu0 0.0
    %5735 = vmatpush.msra.mxu0 0.0
    %5736 = vmatpush.msra.mxu0 0.0
    %5737 = vmatpush.msra.mxu0 0.0
    %5738 = vmatpush.msra.mxu0 0.0
    %5739 = vmatpush.msra.mxu0 0.0
    %5740 = vmatpush.msra.mxu0 %v5716
    %5741 = vmatpush.msra.mxu0 %v5713
    %5742 = vmatmul.f32.gmra.mxu0 %v5721
    %v5743 = vpop.f32.mrf.mxu0
    %v5744 = vadd.f32 0.0, %v5743
    %5745 = vmatmul.f32.gmra.mxu0 %v5724
    %v5746 = vpop.f32.mrf.mxu0
    %v5747 = vadd.f32 0.0, %v5746
    %5748 = vdwg.mxu0
    %5749 = vmatpush.msra.mxu0 0.0
    %5750 = vmatpush.msra.mxu0 0.0
    %5751 = vmatpush.msra.mxu0 0.0
    %5752 = vmatpush.msra.mxu0 0.0
    %5753 = vmatpush.msra.mxu0 0.0
    %5754 = vmatpush.msra.mxu0 0.0
    %5755 = vmatpush.msra.mxu0 0.0
    %5756 = vmatpush.msra.mxu0 0.0
    %5757 = vmatpush.msra.mxu0 0.0
    %5758 = vmatpush.msra.mxu0 0.0
    %5759 = vmatpush.msra.mxu0 0.0
    %5760 = vmatpush.msra.mxu0 0.0
    %5761 = vmatpush.msra.mxu0 0.0
    %5762 = vmatpush.msra.mxu0 0.0
    %5763 = vmatpush.msra.mxu0 %v5717
    %5764 = vmatpush.msra.mxu0 %v5714
    %5765 = vmatmul.f32.gmra.mxu0 %v5721
    %v5766 = vpop.f32.mrf.mxu0
    %v5767 = vadd.f32 0.0, %v5766
    %5768 = vmatmul.f32.gmra.mxu0 %v5724
    %v5769 = vpop.f32.mrf.mxu0
    %v5770 = vadd.f32 0.0, %v5769
    %5771 = vdwg.mxu0
    %5772 = vmatpush.msra.mxu0 0.0
    %5773 = vmatpush.msra.mxu0 0.0
    %5774 = vmatpush.msra.mxu0 0.0
    %5775 = vmatpush.msra.mxu0 0.0
    %5776 = vmatpush.msra.mxu0 0.0
    %5777 = vmatpush.msra.mxu0 0.0
    %5778 = vmatpush.msra.mxu0 0.0
    %5779 = vmatpush.msra.mxu0 0.0
    %5780 = vmatpush.msra.mxu0 0.0
    %5781 = vmatpush.msra.mxu0 0.0
    %5782 = vmatpush.msra.mxu0 0.0
    %5783 = vmatpush.msra.mxu0 0.0
    %5784 = vmatpush.msra.mxu0 0.0
    %5785 = vmatpush.msra.mxu0 0.0
    %5786 = vmatpush.msra.mxu0 %v5718
    %5787 = vmatpush.msra.mxu0 %v5715
    %5788 = vmatmul.f32.gmra.mxu0 %v5721
    %v5789 = vpop.f32.mrf.mxu0
    %v5790 = vadd.f32 0.0, %v5789
    %5791 = vmatmul.f32.gmra.mxu0 %v5724
    %v5792 = vpop.f32.mrf.mxu0
    %v5793 = vadd.f32 0.0, %v5792
    %5794 = vdwg.mxu0
    %v5796 = vsel %vm5719, %v5703, 0
    %v5799 = vsel %vm5719, %v5705, 0
    %5801 = vmatpush.msra.mxu0 0.0
    %5802 = vmatpush.msra.mxu0 0.0
    %5803 = vmatpush.msra.mxu0 0.0
    %5804 = vmatpush.msra.mxu0 0.0
    %5805 = vmatpush.msra.mxu0 0.0
    %5806 = vmatpush.msra.mxu0 0.0
    %5807 = vmatpush.msra.mxu0 0.0
    %5808 = vmatpush.msra.mxu0 0.0
    %5809 = vmatpush.msra.mxu0 0.0
    %5810 = vmatpush.msra.mxu0 0.0
    %5811 = vmatpush.msra.mxu0 0.0
    %5812 = vmatpush.msra.mxu0 0.0
    %5813 = vmatpush.msra.mxu0 0.0
    %5814 = vmatpush.msra.mxu0 0.0
    %5815 = vmatpush.msra.mxu0 %v5710
    %5816 = vmatpush.msra.mxu0 %v5707
    %5817 = vmatmul.f32.gmra.mxu0 %v5796
    %v5818 = vpop.f32.mrf.mxu0
    %v5819 = vadd.f32 %v5744, %v5818
    %5820 = vmatmul.f32.gmra.mxu0 %v5799
    %v5821 = vpop.f32.mrf.mxu0
    %v5822 = vadd.f32 %v5747, %v5821
    %5823 = vdwg.mxu0
    %5824 = vmatpush.msra.mxu0 0.0
    %5825 = vmatpush.msra.mxu0 0.0
    %5826 = vmatpush.msra.mxu0 0.0
    %5827 = vmatpush.msra.mxu0 0.0
    %5828 = vmatpush.msra.mxu0 0.0
    %5829 = vmatpush.msra.mxu0 0.0
    %5830 = vmatpush.msra.mxu0 0.0
    %5831 = vmatpush.msra.mxu0 0.0
    %5832 = vmatpush.msra.mxu0 0.0
    %5833 = vmatpush.msra.mxu0 0.0
    %5834 = vmatpush.msra.mxu0 0.0
    %5835 = vmatpush.msra.mxu0 0.0
    %5836 = vmatpush.msra.mxu0 0.0
    %5837 = vmatpush.msra.mxu0 0.0
    %5838 = vmatpush.msra.mxu0 %v5711
    %5839 = vmatpush.msra.mxu0 %v5708
    %5840 = vmatmul.f32.gmra.mxu0 %v5796
    %v5841 = vpop.f32.mrf.mxu0
    %v5842 = vadd.f32 %v5767, %v5841
    %5843 = vmatmul.f32.gmra.mxu0 %v5799
    %v5844 = vpop.f32.mrf.mxu0
    %v5845 = vadd.f32 %v5770, %v5844
    %5846 = vdwg.mxu0
    %5847 = vmatpush.msra.mxu0 0.0
    %5848 = vmatpush.msra.mxu0 0.0
    %5849 = vmatpush.msra.mxu0 0.0
    %5850 = vmatpush.msra.mxu0 0.0
    %5851 = vmatpush.msra.mxu0 0.0
    %5852 = vmatpush.msra.mxu0 0.0
    %5853 = vmatpush.msra.mxu0 0.0
    %5854 = vmatpush.msra.mxu0 0.0
    %5855 = vmatpush.msra.mxu0 0.0
    %5856 = vmatpush.msra.mxu0 0.0
    %5857 = vmatpush.msra.mxu0 0.0
    %5858 = vmatpush.msra.mxu0 0.0
    %5859 = vmatpush.msra.mxu0 0.0
    %5860 = vmatpush.msra.mxu0 0.0
    %5861 = vmatpush.msra.mxu0 %v5712
    %5862 = vmatpush.msra.mxu0 %v5709
    %5863 = vmatmul.f32.gmra.mxu0 %v5796
    %v5864 = vpop.f32.mrf.mxu0
    %v5865 = vadd.f32 %v5790, %v5864
    %5866 = vmatmul.f32.gmra.mxu0 %v5799
    %v5867 = vpop.f32.mrf.mxu0
    %v5868 = vadd.f32 %v5793, %v5867
    %5869 = vdwg.mxu0
    %v5870 = vld [vmem:[#allocation20] sm:$0x1]
    %v5872 = vperm.slane %v5870, 0
    %v5874 = vadd.f32 %v5865, %v5872
    %v5875 = vadd.f32 %v5868, %v5872
    %v5876 = vld [vmem:[#allocation4] sm:$0x1]
    %v5878 = vperm.slane %v5876, 0
    %5879 = vrot.lane.b32.xlu0 %v5878, 64
    %v5880 = vpop.permute.xlu0 %5879
    %v5882 = vadd.f32 %v5865, %v5880
    %v5883 = vadd.f32 %v5868, %v5880
    %v5884 = vsub.f32 0.0, %v5882
    %v5885 = vsub.f32 0.0, %v5883
    %v5886 = vmul.f32 %v5884, 1.442695
    %v5887 = vpow.pop %v5886
    %v5888 = vmul.f32 %v5885, 1.442695
    %v5889 = vpow.pop %v5888
    %v5890 = vadd.f32 %v5887, 1.0
    %v5891 = vadd.f32 %v5889, 1.0
    %v5892 = vrcp.pop %v5890
    %v5893 = vmul.f32 %v5890, %v5892
    %v5894 = vsub.f32 1.0, %v5893
    %v5895 = vmul.f32 %v5892, %v5894
    %v5896 = vadd.f32 %v5892, %v5895
    %vm5897 = vweird.f32 %v5890
    %vm5898 = vweird.f32 %v5892
    %vm5899 = vmor %vm5897, %vm5898
    %v5900 = vsel %vm5899, %v5892, %v5896
    %v5901 = vand.u32 2147483647, %v5890
    %vm5902 = vcmp.eq.f32.partialorder %v5901, 8.507059e+37
    %v5903 = vand.u32 %v5890, 2147483648
    %v5904 = vor.u32 1.1754944e-38, %v5903
    %v5905 = vsel %vm5902, %v5904, %v5900
    %v5906 = vmul.f32 1.0, %v5905
    %v5907 = vrcp.pop %v5891
    %v5908 = vmul.f32 %v5891, %v5907
    %v5909 = vsub.f32 1.0, %v5908
    %v5910 = vmul.f32 %v5907, %v5909
    %v5911 = vadd.f32 %v5907, %v5910
    %vm5912 = vweird.f32 %v5891
    %vm5913 = vweird.f32 %v5907
    %vm5914 = vmor %vm5912, %vm5913
    %v5915 = vsel %vm5914, %v5907, %v5911
    %v5916 = vand.u32 2147483647, %v5891
    %vm5917 = vcmp.eq.f32.partialorder %v5916, 8.507059e+37
    %v5918 = vand.u32 %v5891, 2147483648
    %v5919 = vor.u32 1.1754944e-38, %v5918
    %v5920 = vsel %vm5917, %v5919, %v5915
    %v5921 = vmul.f32 1.0, %v5920
    %v5922 = vld [vmem:[#allocation17] sm:$0xff]
    %v5923 = vld [vmem:[#allocation17 + $0x8] sm:$0xff]
    %5926 = vrot.lane.b32.xlu0 %v5906, 64
    %v5927 = vpop.permute.xlu0 %5926
    %5928 = vrot.lane.b32.xlu0 %v5921, 64
    %v5929 = vpop.permute.xlu0 %5928
    %5932 = vxpose.xlu0.b32.start [1/16] %v5927, 128
    %5933 = vxpose.xlu0.b32.cont [2/16] %v5929, 128
    %5934 = vxpose.xlu0.b32.cont [3/16] 0.0, 128
    %5935 = vxpose.xlu0.b32.cont [4/16] 0.0, 128
    %5936 = vxpose.xlu0.b32.cont [5/16] 0.0, 128
    %5937 = vxpose.xlu0.b32.cont [6/16] 0.0, 128
    %5938 = vxpose.xlu0.b32.cont [7/16] 0.0, 128
    %5939 = vxpose.xlu0.b32.cont [8/16] 0.0, 128
    %5940 = vxpose.xlu0.b32.cont [9/16] 0.0, 128
    %5941 = vxpose.xlu0.b32.cont [10/16] 0.0, 128
    %5942 = vxpose.xlu0.b32.cont [11/16] 0.0, 128
    %5943 = vxpose.xlu0.b32.cont [12/16] 0.0, 128
    %5944 = vxpose.xlu0.b32.cont [13/16] 0.0, 128
    %5945 = vxpose.xlu0.b32.cont [14/16] 0.0, 128
    %5946 = vxpose.xlu0.b32.cont [15/16] 0.0, 128
    %5947 = vxpose.xlu0.b32.end [16/16] 0.0, 128
    %v5948 = vpop.trf.xlu0
    %v5949 = vpop.trf.xlu0
    %v5950 = vpop.trf.xlu0
    %v5951 = vpop.trf.xlu0
    %v5952 = vpop.trf.xlu0
    %v5953 = vpop.trf.xlu0
    %v5954 = vpop.trf.xlu0
    %v5955 = vpop.trf.xlu0
    %v5956 = vpop.trf.xlu0
    %v5957 = vpop.trf.xlu0
    %v5958 = vpop.trf.xlu0
    %v5959 = vpop.trf.xlu0
    %v5960 = vpop.trf.xlu0
    %v5961 = vpop.trf.xlu0
    %v5962 = vpop.trf.xlu0
    %v5963 = vpop.trf.xlu0
    %5964 = vset.pattern.permute.xlu0 64
    %5965 = vperm.xlu0 %5964, %v5906
    %v5966 = vpop.permute.xlu0 %5965
    %5968 = vset.pattern.permute.xlu0 64
    %5969 = vperm.xlu0 %5968, %v5921
    %v5970 = vpop.permute.xlu0 %5969
    %v5972 = vperm.slane %v5948, 0
    %v5973 = vmul.f32 %v5966, %v5972
    %v5974 = vmul.f32 %v5970, %v5972
    %v5975 = vmul.f32 %v5922, %v5973
    %v5976 = vmul.f32 %v5923, %v5974
    %v5977 = vld [vmem:[%s29] sm:$0xff]
    %v5978 = vld [vmem:[%s29 + $0x8] sm:$0xff]
    %v5979 = vld [vmem:[%s29 + $0x10] sm:$0xff]
    %v5980 = vld [vmem:[%s29 + $0x18] sm:$0xff]
    %v5981 = vld [vmem:[%s29 + $0x20] sm:$0xff]
    %v5982 = vld [vmem:[%s29 + $0x28] sm:$0xff]
    %v5983 = vld [vmem:[%s29 + $0x30] sm:$0xff]
    %v5984 = vld [vmem:[%s29 + $0x38] sm:$0xff]
    %v5985 = vld [vmem:[%s29 + $0x40] sm:$0xff]
    %v5986 = vld [vmem:[%s29 + $0x48] sm:$0xff]
    %v5987 = vld [vmem:[%s29 + $0x50] sm:$0xff]
    %v5988 = vld [vmem:[%s29 + $0x58] sm:$0xff]
    %v5989 = vld [vmem:[%s29 + $0x60] sm:$0xff]
    %v5990 = vld [vmem:[%s29 + $0x68] sm:$0xff]
    %v5991 = vld [vmem:[%s29 + $0x70] sm:$0xff]
    %v5992 = vld [vmem:[%s29 + $0x78] sm:$0xff]
    %v5993 = vld [vmem:[%s29 + $0x80] sm:$0xff]
    %v5994 = vld [vmem:[%s29 + $0x88] sm:$0xff]
    %v5995 = vld [vmem:[%s29 + $0x90] sm:$0xff]
    %v5996 = vld [vmem:[%s29 + $0x98] sm:$0xff]
    %v5997 = vld [vmem:[%s29 + $0xa0] sm:$0xff]
    %v5998 = vld [vmem:[%s29 + $0xa8] sm:$0xff]
    %v5999 = vld [vmem:[%s29 + $0xb0] sm:$0xff]
    %v6000 = vld [vmem:[%s29 + $0xb8] sm:$0xff]
    %v6001 = vld [vmem:[%s29 + $0xc0] sm:$0xff]
    %v6002 = vld [vmem:[%s29 + $0xc8] sm:$0xff]
    %v6003 = vld [vmem:[%s29 + $0xd0] sm:$0xff]
    %v6004 = vld [vmem:[%s29 + $0xd8] sm:$0xff]
    %v6005 = vld [vmem:[%s29 + $0xe0] sm:$0xff]
    %v6006 = vld [vmem:[%s29 + $0xe8] sm:$0xff]
    %v6007 = vld [vmem:[%s29 + $0xf0] sm:$0xff]
    %v6008 = vld [vmem:[%s29 + $0xf8] sm:$0xff]
    %6009 = vmatpush.msra.mxu0 %v5992
    %6010 = vmatpush.msra.mxu0 %v5991
    %6011 = vmatpush.msra.mxu0 %v5990
    %6012 = vmatpush.msra.mxu0 %v5989
    %6013 = vmatpush.msra.mxu0 %v5988
    %6014 = vmatpush.msra.mxu0 %v5987
    %6015 = vmatpush.msra.mxu0 %v5986
    %6016 = vmatpush.msra.mxu0 %v5985
    %6017 = vmatpush.msra.mxu0 %v5984
    %6018 = vmatpush.msra.mxu0 %v5983
    %6019 = vmatpush.msra.mxu0 %v5982
    %6020 = vmatpush.msra.mxu0 %v5981
    %6021 = vmatpush.msra.mxu0 %v5980
    %6022 = vmatpush.msra.mxu0 %v5979
    %6023 = vmatpush.msra.mxu0 %v5978
    %6024 = vmatpush.msra.mxu0 %v5977
    %6025 = vmatmul.f32.gmra.mxu0 %v5819
    %v6026 = vpop.f32.mrf.mxu0
    %v6027 = vadd.f32 0.0, %v6026
    %6028 = vmatmul.f32.gmra.mxu0 %v5822
    %v6029 = vpop.f32.mrf.mxu0
    %v6030 = vadd.f32 0.0, %v6029
    %6031 = vdwg.mxu0
    %6032 = vmatpush.msra.mxu0 %v6008
    %6033 = vmatpush.msra.mxu0 %v6007
    %6034 = vmatpush.msra.mxu0 %v6006
    %6035 = vmatpush.msra.mxu0 %v6005
    %6036 = vmatpush.msra.mxu0 %v6004
    %6037 = vmatpush.msra.mxu0 %v6003
    %6038 = vmatpush.msra.mxu0 %v6002
    %6039 = vmatpush.msra.mxu0 %v6001
    %6040 = vmatpush.msra.mxu0 %v6000
    %6041 = vmatpush.msra.mxu0 %v5999
    %6042 = vmatpush.msra.mxu0 %v5998
    %6043 = vmatpush.msra.mxu0 %v5997
    %6044 = vmatpush.msra.mxu0 %v5996
    %6045 = vmatpush.msra.mxu0 %v5995
    %6046 = vmatpush.msra.mxu0 %v5994
    %6047 = vmatpush.msra.mxu0 %v5993
    %6048 = vmatmul.f32.gmra.mxu0 %v5842
    %v6049 = vpop.f32.mrf.mxu0
    %v6050 = vadd.f32 %v6027, %v6049
    %6051 = vmatmul.f32.gmra.mxu0 %v5845
    %v6052 = vpop.f32.mrf.mxu0
    %v6053 = vadd.f32 %v6030, %v6052
    %6054 = vdwg.mxu0
    %6055 = vxpose.xlu0.b32.start [1/16] %v6050, 128
    %6056 = vxpose.xlu0.b32.cont [2/16] %v6053, 128
    %6057 = vxpose.xlu0.b32.cont [3/16] 0.0, 128
    %6058 = vxpose.xlu0.b32.cont [4/16] 0.0, 128
    %6059 = vxpose.xlu0.b32.cont [5/16] 0.0, 128
    %6060 = vxpose.xlu0.b32.cont [6/16] 0.0, 128
    %6061 = vxpose.xlu0.b32.cont [7/16] 0.0, 128
    %6062 = vxpose.xlu0.b32.cont [8/16] 0.0, 128
    %6063 = vxpose.xlu0.b32.cont [9/16] 0.0, 128
    %6064 = vxpose.xlu0.b32.cont [10/16] 0.0, 128
    %6065 = vxpose.xlu0.b32.cont [11/16] 0.0, 128
    %6066 = vxpose.xlu0.b32.cont [12/16] 0.0, 128
    %6067 = vxpose.xlu0.b32.cont [13/16] 0.0, 128
    %6068 = vxpose.xlu0.b32.cont [14/16] 0.0, 128
    %6069 = vxpose.xlu0.b32.cont [15/16] 0.0, 128
    %6070 = vxpose.xlu0.b32.end [16/16] 0.0, 128
    %v6071 = vpop.trf.xlu0
    %v6072 = vpop.trf.xlu0
    %v6073 = vpop.trf.xlu0
    %v6074 = vpop.trf.xlu0
    %v6075 = vpop.trf.xlu0
    %v6076 = vpop.trf.xlu0
    %v6077 = vpop.trf.xlu0
    %v6078 = vpop.trf.xlu0
    %v6079 = vpop.trf.xlu0
    %v6080 = vpop.trf.xlu0
    %v6081 = vpop.trf.xlu0
    %v6082 = vpop.trf.xlu0
    %v6083 = vpop.trf.xlu0
    %v6084 = vpop.trf.xlu0
    %v6085 = vpop.trf.xlu0
    %v6086 = vpop.trf.xlu0
    %6088 = vset.pattern.permute.xlu0 4
    %6089 = vperm.xlu0 %6088, %v6050
    %v6090 = vpop.permute.xlu0 %6089
    %6093 = vset.pattern.permute.xlu0 4
    %6094 = vperm.xlu0 %6093, %v6053
    %v6095 = vpop.permute.xlu0 %6094
    %v6097 = vperm.slane %v6071, 0
    %v6098 = vadd.f32 %v6090, %v6097
    %v6099 = vadd.f32 %v6095, %v6097
    %vm6100 = vcmp.gt.f32.partialorder %v6098, 0.0
    %vm6101 = vcmp.gt.f32.partialorder %v6099, 0.0
    %v6102 = vmul.f32 %v6098, 0.2
    %v6103 = vmul.f32 %v6099, 0.2
    %v6104 = vsel %vm6100, %v6098, %v6102
    %v6105 = vsel %vm6101, %v6099, %v6103
    %vm6106 = vcmp.gt.f32.partialorder %v5922, 0.0
    %vm6107 = vcmp.gt.f32.partialorder %v5923, 0.0
    %v6108 = vsel %vm6106, %v6104, -1e+30
    %v6109 = vsel %vm6107, %v6105, -1e+30
    %v6110 = vsel %vm5719, %v6108, -inf
    %6111 = vmax.xlane.f32.xlu0 %v6110
    %v6112 = vpop.xlane.xlu0 %6111
    %v6113 = vsel %vm5719, %v6109, -inf
    %6114 = vmax.xlane.f32.xlu0 %v6113
    %v6115 = vpop.xlane.xlu0 %6114
    %v6116 = vsub.f32 %v6108, %v6112
    %v6117 = vsub.f32 %v6109, %v6115
    %v6118 = vmul.f32 %v6116, 1.442695
    %v6119 = vpow.pop %v6118
    %v6120 = vmul.f32 %v6117, 1.442695
    %v6121 = vpow.pop %v6120
    %v6122 = vmul.f32 %v6119, %v5975
    %v6123 = vmul.f32 %v6121, %v5976
    %v6124 = vsel %vm5719, %v6122, 0.0
    %6125 = vadd.xlane.f32.xlu0 %v6124
    %v6126 = vpop.xlane.xlu0 %6125
    %v6127 = vsel %vm5719, %v6123, 0.0
    %6128 = vadd.xlane.f32.xlu0 %v6127
    %v6129 = vpop.xlane.xlu0 %6128
    %v6130 = vadd.f32 %v6126, 1e-16
    %v6131 = vadd.f32 %v6129, 1e-16
    %v6132 = vrcp.pop %v6130
    %v6133 = vrcp.pop %v6131
    %v6134 = vmul.f32 %v6122, %v6132
    %v6135 = vmul.f32 %v6123, %v6133
    %6136 = vset.pattern.permute.xlu0 5
    %6137 = vperm.xlu0 %6136, %v6050
    %v6138 = vpop.permute.xlu0 %6137
    %6140 = vset.pattern.permute.xlu0 5
    %6141 = vperm.xlu0 %6140, %v6053
    %v6142 = vpop.permute.xlu0 %6141
    %v6144 = vperm.slane %v6071, 1
    %v6145 = vadd.f32 %v6138, %v6144
    %v6146 = vadd.f32 %v6142, %v6144
    %vm6147 = vcmp.gt.f32.partialorder %v6145, 0.0
    %vm6148 = vcmp.gt.f32.partialorder %v6146, 0.0
    %v6149 = vmul.f32 %v6145, 0.2
    %v6150 = vmul.f32 %v6146, 0.2
    %v6151 = vsel %vm6147, %v6145, %v6149
    %v6152 = vsel %vm6148, %v6146, %v6150
    %v6153 = vsel %vm6106, %v6151, -1e+30
    %v6154 = vsel %vm6107, %v6152, -1e+30
    %v6155 = vsel %vm5719, %v6153, -inf
    %6156 = vmax.xlane.f32.xlu0 %v6155
    %v6157 = vpop.xlane.xlu0 %6156
    %v6158 = vsel %vm5719, %v6154, -inf
    %6159 = vmax.xlane.f32.xlu0 %v6158
    %v6160 = vpop.xlane.xlu0 %6159
    %v6161 = vsub.f32 %v6153, %v6157
    %v6162 = vsub.f32 %v6154, %v6160
    %v6163 = vmul.f32 %v6161, 1.442695
    %v6164 = vpow.pop %v6163
    %v6165 = vmul.f32 %v6162, 1.442695
    %v6166 = vpow.pop %v6165
    %v6167 = vmul.f32 %v6164, %v5975
    %v6168 = vmul.f32 %v6166, %v5976
    %v6169 = vsel %vm5719, %v6167, 0.0
    %6170 = vadd.xlane.f32.xlu0 %v6169
    %v6171 = vpop.xlane.xlu0 %6170
    %v6172 = vsel %vm5719, %v6168, 0.0
    %6173 = vadd.xlane.f32.xlu0 %v6172
    %v6174 = vpop.xlane.xlu0 %6173
    %v6175 = vadd.f32 %v6171, 1e-16
    %v6176 = vadd.f32 %v6174, 1e-16
    %v6177 = vrcp.pop %v6175
    %v6178 = vrcp.pop %v6176
    %v6179 = vmul.f32 %v6167, %v6177
    %v6180 = vmul.f32 %v6168, %v6178
    %6183 = vrot.lane.b32.xlu0 %v5819, 64
    %v6184 = vpop.permute.xlu0 %6183
    %6185 = vrot.lane.b32.xlu0 %v5822, 64
    %v6186 = vpop.permute.xlu0 %6185
    %v6190 = vsel %vm5719, %v6179, 0
    %v6193 = vsel %vm5719, %v6180, 0
    %6195 = vmatpush.msra.mxu0 0.0
    %6196 = vmatpush.msra.mxu0 0.0
    %6197 = vmatpush.msra.mxu0 0.0
    %6198 = vmatpush.msra.mxu0 0.0
    %6199 = vmatpush.msra.mxu0 0.0
    %6200 = vmatpush.msra.mxu0 0.0
    %6201 = vmatpush.msra.mxu0 0.0
    %6202 = vmatpush.msra.mxu0 0.0
    %6203 = vmatpush.msra.mxu0 0.0
    %6204 = vmatpush.msra.mxu0 0.0
    %6205 = vmatpush.msra.mxu0 0.0
    %6206 = vmatpush.msra.mxu0 0.0
    %6207 = vmatpush.msra.mxu0 0.0
    %6208 = vmatpush.msra.mxu0 0.0
    %6209 = vmatpush.msra.mxu0 %v6186
    %6210 = vmatpush.msra.mxu0 %v6184
    %6211 = vmatmul.f32.gmra.mxu0 %v6190
    %v6212 = vpop.f32.mrf.mxu0
    %v6213 = vadd.f32 0.0, %v6212
    %6214 = vmatmul.f32.gmra.mxu0 %v6193
    %v6215 = vpop.f32.mrf.mxu0
    %v6216 = vadd.f32 0.0, %v6215
    %6217 = vdwg.mxu0
    %v6219 = vsel %vm5719, %v6134, 0
    %v6222 = vsel %vm5719, %v6135, 0
    %6224 = vmatpush.msra.mxu0 0.0
    %6225 = vmatpush.msra.mxu0 0.0
    %6226 = vmatpush.msra.mxu0 0.0
    %6227 = vmatpush.msra.mxu0 0.0
    %6228 = vmatpush.msra.mxu0 0.0
    %6229 = vmatpush.msra.mxu0 0.0
    %6230 = vmatpush.msra.mxu0 0.0
    %6231 = vmatpush.msra.mxu0 0.0
    %6232 = vmatpush.msra.mxu0 0.0
    %6233 = vmatpush.msra.mxu0 0.0
    %6234 = vmatpush.msra.mxu0 0.0
    %6235 = vmatpush.msra.mxu0 0.0
    %6236 = vmatpush.msra.mxu0 0.0
    %6237 = vmatpush.msra.mxu0 0.0
    %6238 = vmatpush.msra.mxu0 %v5822
    %6239 = vmatpush.msra.mxu0 %v5819
    %6240 = vmatmul.f32.gmra.mxu0 %v6219
    %v6241 = vpop.f32.mrf.mxu0
    %v6242 = vadd.f32 %v6213, %v6241
    %6243 = vmatmul.f32.gmra.mxu0 %v6222
    %v6244 = vpop.f32.mrf.mxu0
    %v6245 = vadd.f32 %v6216, %v6244
    %6246 = vdwg.mxu0
    %6247 = vset.pattern.permute.xlu0 6
    %6248 = vperm.xlu0 %6247, %v6050
    %v6249 = vpop.permute.xlu0 %6248
    %6251 = vset.pattern.permute.xlu0 6
    %6252 = vperm.xlu0 %6251, %v6053
    %v6253 = vpop.permute.xlu0 %6252
    %v6255 = vperm.slane %v6071, 2
    %v6256 = vadd.f32 %v6249, %v6255
    %v6257 = vadd.f32 %v6253, %v6255
    %vm6258 = vcmp.gt.f32.partialorder %v6256, 0.0
    %vm6259 = vcmp.gt.f32.partialorder %v6257, 0.0
    %v6260 = vmul.f32 %v6256, 0.2
    %v6261 = vmul.f32 %v6257, 0.2
    %v6262 = vsel %vm6258, %v6256, %v6260
    %v6263 = vsel %vm6259, %v6257, %v6261
    %v6264 = vsel %vm6106, %v6262, -1e+30
    %v6265 = vsel %vm6107, %v6263, -1e+30
    %v6266 = vsel %vm5719, %v6264, -inf
    %6267 = vmax.xlane.f32.xlu0 %v6266
    %v6268 = vpop.xlane.xlu0 %6267
    %v6269 = vsel %vm5719, %v6265, -inf
    %6270 = vmax.xlane.f32.xlu0 %v6269
    %v6271 = vpop.xlane.xlu0 %6270
    %v6272 = vsub.f32 %v6264, %v6268
    %v6273 = vsub.f32 %v6265, %v6271
    %v6274 = vmul.f32 %v6272, 1.442695
    %v6275 = vpow.pop %v6274
    %v6276 = vmul.f32 %v6273, 1.442695
    %v6277 = vpow.pop %v6276
    %v6278 = vmul.f32 %v6275, %v5975
    %v6279 = vmul.f32 %v6277, %v5976
    %v6280 = vsel %vm5719, %v6278, 0.0
    %6281 = vadd.xlane.f32.xlu0 %v6280
    %v6282 = vpop.xlane.xlu0 %6281
    %v6283 = vsel %vm5719, %v6279, 0.0
    %6284 = vadd.xlane.f32.xlu0 %v6283
    %v6285 = vpop.xlane.xlu0 %6284
    %v6286 = vadd.f32 %v6282, 1e-16
    %v6287 = vadd.f32 %v6285, 1e-16
    %v6288 = vrcp.pop %v6286
    %v6289 = vrcp.pop %v6287
    %v6290 = vmul.f32 %v6278, %v6288
    %v6291 = vmul.f32 %v6279, %v6289
    %v6293 = vsel %vm5719, %v6290, 0
    %v6296 = vsel %vm5719, %v6291, 0
    %6298 = vmatpush.msra.mxu0 0.0
    %6299 = vmatpush.msra.mxu0 0.0
    %6300 = vmatpush.msra.mxu0 0.0
    %6301 = vmatpush.msra.mxu0 0.0
    %6302 = vmatpush.msra.mxu0 0.0
    %6303 = vmatpush.msra.mxu0 0.0
    %6304 = vmatpush.msra.mxu0 0.0
    %6305 = vmatpush.msra.mxu0 0.0
    %6306 = vmatpush.msra.mxu0 0.0
    %6307 = vmatpush.msra.mxu0 0.0
    %6308 = vmatpush.msra.mxu0 0.0
    %6309 = vmatpush.msra.mxu0 0.0
    %6310 = vmatpush.msra.mxu0 0.0
    %6311 = vmatpush.msra.mxu0 0.0
    %6312 = vmatpush.msra.mxu0 %v5845
    %6313 = vmatpush.msra.mxu0 %v5842
    %6314 = vmatmul.f32.gmra.mxu0 %v6293
    %v6315 = vpop.f32.mrf.mxu0
    %v6316 = vadd.f32 0.0, %v6315
    %6317 = vmatmul.f32.gmra.mxu0 %v6296
    %v6318 = vpop.f32.mrf.mxu0
    %v6319 = vadd.f32 0.0, %v6318
    %6320 = vdwg.mxu0
    %v6321 = vadd.f32 %v6242, %v6316
    %v6322 = vadd.f32 %v6245, %v6319
    %6323 = vset.pattern.permute.xlu0 7
    %6324 = vperm.xlu0 %6323, %v6050
    %v6325 = vpop.permute.xlu0 %6324
    %6327 = vset.pattern.permute.xlu0 7
    %6328 = vperm.xlu0 %6327, %v6053
    %v6329 = vpop.permute.xlu0 %6328
    %v6331 = vperm.slane %v6071, 3
    %v6332 = vadd.f32 %v6325, %v6331
    %v6333 = vadd.f32 %v6329, %v6331
    %vm6334 = vcmp.gt.f32.partialorder %v6332, 0.0
    %vm6335 = vcmp.gt.f32.partialorder %v6333, 0.0
    %v6336 = vmul.f32 %v6332, 0.2
    %v6337 = vmul.f32 %v6333, 0.2
    %v6338 = vsel %vm6334, %v6332, %v6336
    %v6339 = vsel %vm6335, %v6333, %v6337
    %v6340 = vsel %vm6106, %v6338, -1e+30
    %v6341 = vsel %vm6107, %v6339, -1e+30
    %v6342 = vsel %vm5719, %v6340, -inf
    %6343 = vmax.xlane.f32.xlu0 %v6342
    %v6344 = vpop.xlane.xlu0 %6343
    %v6345 = vsel %vm5719, %v6341, -inf
    %6346 = vmax.xlane.f32.xlu0 %v6345
    %v6347 = vpop.xlane.xlu0 %6346
    %v6348 = vsub.f32 %v6340, %v6344
    %v6349 = vsub.f32 %v6341, %v6347
    %v6350 = vmul.f32 %v6348, 1.442695
    %v6351 = vpow.pop %v6350
    %v6352 = vmul.f32 %v6349, 1.442695
    %v6353 = vpow.pop %v6352
    %v6354 = vmul.f32 %v6351, %v5975
    %v6355 = vmul.f32 %v6353, %v5976
    %v6356 = vsel %vm5719, %v6354, 0.0
    %6357 = vadd.xlane.f32.xlu0 %v6356
    %v6358 = vpop.xlane.xlu0 %6357
    %v6359 = vsel %vm5719, %v6355, 0.0
    %6360 = vadd.xlane.f32.xlu0 %v6359
    %v6361 = vpop.xlane.xlu0 %6360
    %v6362 = vadd.f32 %v6358, 1e-16
    %v6363 = vadd.f32 %v6361, 1e-16
    %v6364 = vrcp.pop %v6362
    %v6365 = vrcp.pop %v6363
    %v6366 = vmul.f32 %v6354, %v6364
    %v6367 = vmul.f32 %v6355, %v6365
    %6370 = vrot.lane.b32.xlu0 %v5842, 64
    %v6371 = vpop.permute.xlu0 %6370
    %6372 = vrot.lane.b32.xlu0 %v5845, 64
    %v6373 = vpop.permute.xlu0 %6372
    %v6377 = vsel %vm5719, %v6366, 0
    %v6380 = vsel %vm5719, %v6367, 0
    %6382 = vmatpush.msra.mxu0 0.0
    %6383 = vmatpush.msra.mxu0 0.0
    %6384 = vmatpush.msra.mxu0 0.0
    %6385 = vmatpush.msra.mxu0 0.0
    %6386 = vmatpush.msra.mxu0 0.0
    %6387 = vmatpush.msra.mxu0 0.0
    %6388 = vmatpush.msra.mxu0 0.0
    %6389 = vmatpush.msra.mxu0 0.0
    %6390 = vmatpush.msra.mxu0 0.0
    %6391 = vmatpush.msra.mxu0 0.0
    %6392 = vmatpush.msra.mxu0 0.0
    %6393 = vmatpush.msra.mxu0 0.0
    %6394 = vmatpush.msra.mxu0 0.0
    %6395 = vmatpush.msra.mxu0 0.0
    %6396 = vmatpush.msra.mxu0 %v6373
    %6397 = vmatpush.msra.mxu0 %v6371
    %6398 = vmatmul.f32.gmra.mxu0 %v6377
    %v6399 = vpop.f32.mrf.mxu0
    %v6400 = vadd.f32 0.0, %v6399
    %6401 = vmatmul.f32.gmra.mxu0 %v6380
    %v6402 = vpop.f32.mrf.mxu0
    %v6403 = vadd.f32 0.0, %v6402
    %6404 = vdwg.mxu0
    %v6405 = vadd.f32 %v6321, %v6400
    %v6406 = vadd.f32 %v6322, %v6403
    %v6407 = vmul.f32 %v6405, 0.25
    %v6408 = vmul.f32 %v6406, 0.25
    %v6409 = vld [vmem:[#allocation22] sm:$0x1]
    %v6411 = vperm.slane %v6409, 0
    %v6413 = vadd.f32 %v6407, %v6411
    %v6414 = vadd.f32 %v6408, %v6411
    %v6415 = vld [vmem:[#allocation23] sm:$0x1]
    %v6417 = vperm.slane %v6415, 0
    %v6419 = vmul.f32 %v6413, %v6417
    %v6420 = vmul.f32 %v6414, %v6417
    %v6421 = vld [vmem:[#allocation25] sm:$0x1]
    %v6423 = vperm.slane %v6421, 0
    %v6425 = vadd.f32 %v6419, %v6423
    %v6426 = vadd.f32 %v6420, %v6423
    %vm6427 = vcmp.gt.f32.partialorder %v6425, 0.0
    %vm6428 = vcmp.gt.f32.partialorder %v6426, 0.0
    %v6429 = vmul.f32 %v6425, 1.442695
    %v6430 = vpow.pop %v6429
    %v6431 = vmul.f32 %v6426, 1.442695
    %v6432 = vpow.pop %v6431
    %v6433 = vsub.f32 %v6430, 1.0
    %v6434 = vsub.f32 %v6432, 1.0
    %v6435 = vsel %vm6427, %v6425, %v6433
    %v6436 = vsel %vm6428, %v6426, %v6434
    %v6437 = vadd.f32 %v6435, %v5874
    %v6438 = vadd.f32 %v6436, %v5875
    %v6439 = vld [vmem:[#allocation26] sm:$0xff]
    %v6440 = vld [vmem:[#allocation26 + $0x8] sm:$0xff]
    %v6441 = vld [vmem:[#allocation26 + $0x10] sm:$0xff]
    %v6442 = vld [vmem:[#allocation26 + $0x18] sm:$0xff]
    %v6443 = vld [vmem:[#allocation26 + $0x20] sm:$0xff]
    %v6444 = vld [vmem:[#allocation26 + $0x28] sm:$0xff]
    %v6445 = vld [vmem:[#allocation26 + $0x30] sm:$0xff]
    %v6446 = vld [vmem:[#allocation26 + $0x38] sm:$0xff]
    %v6447 = vld [vmem:[#allocation26 + $0x40] sm:$0xff]
    %v6448 = vld [vmem:[#allocation26 + $0x48] sm:$0xff]
    %v6449 = vld [vmem:[#allocation26 + $0x50] sm:$0xff]
    %v6450 = vld [vmem:[#allocation26 + $0x58] sm:$0xff]
    %v6451 = vld [vmem:[#allocation26 + $0x60] sm:$0xff]
    %v6452 = vld [vmem:[#allocation26 + $0x68] sm:$0xff]
    %v6453 = vld [vmem:[#allocation26 + $0x70] sm:$0xff]
    %v6454 = vld [vmem:[#allocation26 + $0x78] sm:$0xff]
    %v6456 = vsel %vm628, %v6437, 0
    %v6459 = vsel %vm628, %v6438, 0
    %6461 = vmatpush.msra.mxu0 0.0
    %6462 = vmatpush.msra.mxu0 0.0
    %6463 = vmatpush.msra.mxu0 0.0
    %6464 = vmatpush.msra.mxu0 0.0
    %6465 = vmatpush.msra.mxu0 0.0
    %6466 = vmatpush.msra.mxu0 0.0
    %6467 = vmatpush.msra.mxu0 0.0
    %6468 = vmatpush.msra.mxu0 0.0
    %6469 = vmatpush.msra.mxu0 %v6453
    %6470 = vmatpush.msra.mxu0 %v6451
    %6471 = vmatpush.msra.mxu0 %v6449
    %6472 = vmatpush.msra.mxu0 %v6447
    %6473 = vmatpush.msra.mxu0 %v6445
    %6474 = vmatpush.msra.mxu0 %v6443
    %6475 = vmatpush.msra.mxu0 %v6441
    %6476 = vmatpush.msra.mxu0 %v6439
    %6477 = vmatmul.f32.gmra.mxu0 %v6456
    %v6478 = vpop.f32.mrf.mxu0
    %v6479 = vadd.f32 0.0, %v6478
    %6480 = vmatmul.f32.gmra.mxu0 %v6459
    %v6481 = vpop.f32.mrf.mxu0
    %v6482 = vadd.f32 0.0, %v6481
    %6483 = vdwg.mxu0
    %6484 = vmatpush.msra.mxu0 0.0
    %6485 = vmatpush.msra.mxu0 0.0
    %6486 = vmatpush.msra.mxu0 0.0
    %6487 = vmatpush.msra.mxu0 0.0
    %6488 = vmatpush.msra.mxu0 0.0
    %6489 = vmatpush.msra.mxu0 0.0
    %6490 = vmatpush.msra.mxu0 0.0
    %6491 = vmatpush.msra.mxu0 0.0
    %6492 = vmatpush.msra.mxu0 %v6454
    %6493 = vmatpush.msra.mxu0 %v6452
    %6494 = vmatpush.msra.mxu0 %v6450
    %6495 = vmatpush.msra.mxu0 %v6448
    %6496 = vmatpush.msra.mxu0 %v6446
    %6497 = vmatpush.msra.mxu0 %v6444
    %6498 = vmatpush.msra.mxu0 %v6442
    %6499 = vmatpush.msra.mxu0 %v6440
    %6500 = vmatmul.f32.gmra.mxu0 %v6456
    %v6501 = vpop.f32.mrf.mxu0
    %v6502 = vadd.f32 0.0, %v6501
    %6503 = vmatmul.f32.gmra.mxu0 %v6459
    %v6504 = vpop.f32.mrf.mxu0
    %v6505 = vadd.f32 0.0, %v6504
    %6506 = vdwg.mxu0
    %v6507 = vld [vmem:[%s39] sm:$0xff]
    %v6508 = vld [vmem:[%s39 + $0x8] sm:$0xff]
    %v6509 = vld [vmem:[%s39 + $0x10] sm:$0xff]
    %v6510 = vld [vmem:[%s39 + $0x18] sm:$0xff]
    %v6511 = vld [vmem:[%s39 + $0x20] sm:$0xff]
    %v6512 = vld [vmem:[%s39 + $0x28] sm:$0xff]
    %v6513 = vld [vmem:[%s39 + $0x30] sm:$0xff]
    %v6514 = vld [vmem:[%s39 + $0x38] sm:$0xff]
    %v6515 = vld [vmem:[%s39 + $0x40] sm:$0xff]
    %v6516 = vld [vmem:[%s39 + $0x48] sm:$0xff]
    %v6517 = vld [vmem:[%s39 + $0x50] sm:$0xff]
    %v6518 = vld [vmem:[%s39 + $0x58] sm:$0xff]
    %v6519 = vld [vmem:[%s39 + $0x60] sm:$0xff]
    %v6520 = vld [vmem:[%s39 + $0x68] sm:$0xff]
    %v6521 = vld [vmem:[%s39 + $0x70] sm:$0xff]
    %v6522 = vld [vmem:[%s39 + $0x78] sm:$0xff]
    %v6523 = vld [vmem:[%s39 + $0x80] sm:$0xff]
    %v6524 = vld [vmem:[%s39 + $0x88] sm:$0xff]
    %v6525 = vld [vmem:[%s39 + $0x90] sm:$0xff]
    %v6526 = vld [vmem:[%s39 + $0x98] sm:$0xff]
    %v6527 = vld [vmem:[%s39 + $0xa0] sm:$0xff]
    %v6528 = vld [vmem:[%s39 + $0xa8] sm:$0xff]
    %v6529 = vld [vmem:[%s39 + $0xb0] sm:$0xff]
    %v6530 = vld [vmem:[%s39 + $0xb8] sm:$0xff]
    %v6531 = vld [vmem:[%s39 + $0xc0] sm:$0xff]
    %v6532 = vld [vmem:[%s39 + $0xc8] sm:$0xff]
    %v6533 = vld [vmem:[%s39 + $0xd0] sm:$0xff]
    %v6534 = vld [vmem:[%s39 + $0xd8] sm:$0xff]
    %v6535 = vld [vmem:[%s39 + $0xe0] sm:$0xff]
    %v6536 = vld [vmem:[%s39 + $0xe8] sm:$0xff]
    %v6537 = vld [vmem:[%s39 + $0xf0] sm:$0xff]
    %v6538 = vld [vmem:[%s39 + $0xf8] sm:$0xff]
    %6539 = vmatpush.msra.mxu0 %v6522
    %6540 = vmatpush.msra.mxu0 %v6521
    %6541 = vmatpush.msra.mxu0 %v6520
    %6542 = vmatpush.msra.mxu0 %v6519
    %6543 = vmatpush.msra.mxu0 %v6518
    %6544 = vmatpush.msra.mxu0 %v6517
    %6545 = vmatpush.msra.mxu0 %v6516
    %6546 = vmatpush.msra.mxu0 %v6515
    %6547 = vmatpush.msra.mxu0 %v6514
    %6548 = vmatpush.msra.mxu0 %v6513
    %6549 = vmatpush.msra.mxu0 %v6512
    %6550 = vmatpush.msra.mxu0 %v6511
    %6551 = vmatpush.msra.mxu0 %v6510
    %6552 = vmatpush.msra.mxu0 %v6509
    %6553 = vmatpush.msra.mxu0 %v6508
    %6554 = vmatpush.msra.mxu0 %v6507
    %6555 = vmatmul.f32.gmra.mxu0 %v6479
    %v6556 = vpop.f32.mrf.mxu0
    %v6557 = vadd.f32 0.0, %v6556
    %6558 = vmatmul.f32.gmra.mxu0 %v6482
    %v6559 = vpop.f32.mrf.mxu0
    %v6560 = vadd.f32 0.0, %v6559
    %6561 = vdwg.mxu0
    %6562 = vmatpush.msra.mxu0 %v6538
    %6563 = vmatpush.msra.mxu0 %v6537
    %6564 = vmatpush.msra.mxu0 %v6536
    %6565 = vmatpush.msra.mxu0 %v6535
    %6566 = vmatpush.msra.mxu0 %v6534
    %6567 = vmatpush.msra.mxu0 %v6533
    %6568 = vmatpush.msra.mxu0 %v6532
    %6569 = vmatpush.msra.mxu0 %v6531
    %6570 = vmatpush.msra.mxu0 %v6530
    %6571 = vmatpush.msra.mxu0 %v6529
    %6572 = vmatpush.msra.mxu0 %v6528
    %6573 = vmatpush.msra.mxu0 %v6527
    %6574 = vmatpush.msra.mxu0 %v6526
    %6575 = vmatpush.msra.mxu0 %v6525
    %6576 = vmatpush.msra.mxu0 %v6524
    %6577 = vmatpush.msra.mxu0 %v6523
    %6578 = vmatmul.f32.gmra.mxu0 %v6502
    %v6579 = vpop.f32.mrf.mxu0
    %v6580 = vadd.f32 %v6557, %v6579
    %6581 = vmatmul.f32.gmra.mxu0 %v6505
    %v6582 = vpop.f32.mrf.mxu0
    %v6583 = vadd.f32 %v6560, %v6582
    %6584 = vdwg.mxu0
    %6585 = vxpose.xlu0.b32.start [1/16] %v6580, 128
    %6586 = vxpose.xlu0.b32.cont [2/16] %v6583, 128
    %6587 = vxpose.xlu0.b32.cont [3/16] 0.0, 128
    %6588 = vxpose.xlu0.b32.cont [4/16] 0.0, 128
    %6589 = vxpose.xlu0.b32.cont [5/16] 0.0, 128
    %6590 = vxpose.xlu0.b32.cont [6/16] 0.0, 128
    %6591 = vxpose.xlu0.b32.cont [7/16] 0.0, 128
    %6592 = vxpose.xlu0.b32.cont [8/16] 0.0, 128
    %6593 = vxpose.xlu0.b32.cont [9/16] 0.0, 128
    %6594 = vxpose.xlu0.b32.cont [10/16] 0.0, 128
    %6595 = vxpose.xlu0.b32.cont [11/16] 0.0, 128
    %6596 = vxpose.xlu0.b32.cont [12/16] 0.0, 128
    %6597 = vxpose.xlu0.b32.cont [13/16] 0.0, 128
    %6598 = vxpose.xlu0.b32.cont [14/16] 0.0, 128
    %6599 = vxpose.xlu0.b32.cont [15/16] 0.0, 128
    %6600 = vxpose.xlu0.b32.end [16/16] 0.0, 128
    %v6601 = vpop.trf.xlu0
    %v6602 = vpop.trf.xlu0
    %v6603 = vpop.trf.xlu0
    %v6604 = vpop.trf.xlu0
    %v6605 = vpop.trf.xlu0
    %v6606 = vpop.trf.xlu0
    %v6607 = vpop.trf.xlu0
    %v6608 = vpop.trf.xlu0
    %v6609 = vpop.trf.xlu0
    %v6610 = vpop.trf.xlu0
    %v6611 = vpop.trf.xlu0
    %v6612 = vpop.trf.xlu0
    %v6613 = vpop.trf.xlu0
    %v6614 = vpop.trf.xlu0
    %v6615 = vpop.trf.xlu0
    %v6616 = vpop.trf.xlu0
    %6618 = vset.pattern.permute.xlu0 4
    %6619 = vperm.xlu0 %6618, %v6580
    %v6620 = vpop.permute.xlu0 %6619
    %6623 = vset.pattern.permute.xlu0 4
    %6624 = vperm.xlu0 %6623, %v6583
    %v6625 = vpop.permute.xlu0 %6624
    %v6627 = vperm.slane %v6601, 0
    %v6628 = vadd.f32 %v6620, %v6627
    %v6629 = vadd.f32 %v6625, %v6627
    %vm6630 = vcmp.gt.f32.partialorder %v6628, 0.0
    %vm6631 = vcmp.gt.f32.partialorder %v6629, 0.0
    %v6632 = vmul.f32 %v6628, 0.2
    %v6633 = vmul.f32 %v6629, 0.2
    %v6634 = vsel %vm6630, %v6628, %v6632
    %v6635 = vsel %vm6631, %v6629, %v6633
    %v6636 = vsel %vm6106, %v6634, -1e+30
    %v6637 = vsel %vm6107, %v6635, -1e+30
    %v6638 = vsel %vm5719, %v6636, -inf
    %6639 = vmax.xlane.f32.xlu0 %v6638
    %v6640 = vpop.xlane.xlu0 %6639
    %v6641 = vsel %vm5719, %v6637, -inf
    %6642 = vmax.xlane.f32.xlu0 %v6641
    %v6643 = vpop.xlane.xlu0 %6642
    %v6644 = vsub.f32 %v6636, %v6640
    %v6645 = vsub.f32 %v6637, %v6643
    %v6646 = vmul.f32 %v6644, 1.442695
    %v6647 = vpow.pop %v6646
    %v6648 = vmul.f32 %v6645, 1.442695
    %v6649 = vpow.pop %v6648
    %v6650 = vmul.f32 %v6647, %v5975
    %v6651 = vmul.f32 %v6649, %v5976
    %v6652 = vsel %vm5719, %v6650, 0.0
    %6653 = vadd.xlane.f32.xlu0 %v6652
    %v6654 = vpop.xlane.xlu0 %6653
    %v6655 = vsel %vm5719, %v6651, 0.0
    %6656 = vadd.xlane.f32.xlu0 %v6655
    %v6657 = vpop.xlane.xlu0 %6656
    %v6658 = vadd.f32 %v6654, 1e-16
    %v6659 = vadd.f32 %v6657, 1e-16
    %v6660 = vrcp.pop %v6658
    %v6661 = vrcp.pop %v6659
    %v6662 = vmul.f32 %v6650, %v6660
    %v6663 = vmul.f32 %v6651, %v6661
    %6664 = vset.pattern.permute.xlu0 5
    %6665 = vperm.xlu0 %6664, %v6580
    %v6666 = vpop.permute.xlu0 %6665
    %6668 = vset.pattern.permute.xlu0 5
    %6669 = vperm.xlu0 %6668, %v6583
    %v6670 = vpop.permute.xlu0 %6669
    %v6672 = vperm.slane %v6601, 1
    %v6673 = vadd.f32 %v6666, %v6672
    %v6674 = vadd.f32 %v6670, %v6672
    %vm6675 = vcmp.gt.f32.partialorder %v6673, 0.0
    %vm6676 = vcmp.gt.f32.partialorder %v6674, 0.0
    %v6677 = vmul.f32 %v6673, 0.2
    %v6678 = vmul.f32 %v6674, 0.2
    %v6679 = vsel %vm6675, %v6673, %v6677
    %v6680 = vsel %vm6676, %v6674, %v6678
    %v6681 = vsel %vm6106, %v6679, -1e+30
    %v6682 = vsel %vm6107, %v6680, -1e+30
    %v6683 = vsel %vm5719, %v6681, -inf
    %6684 = vmax.xlane.f32.xlu0 %v6683
    %v6685 = vpop.xlane.xlu0 %6684
    %v6686 = vsel %vm5719, %v6682, -inf
    %6687 = vmax.xlane.f32.xlu0 %v6686
    %v6688 = vpop.xlane.xlu0 %6687
    %v6689 = vsub.f32 %v6681, %v6685
    %v6690 = vsub.f32 %v6682, %v6688
    %v6691 = vmul.f32 %v6689, 1.442695
    %v6692 = vpow.pop %v6691
    %v6693 = vmul.f32 %v6690, 1.442695
    %v6694 = vpow.pop %v6693
    %v6695 = vmul.f32 %v6692, %v5975
    %v6696 = vmul.f32 %v6694, %v5976
    %v6697 = vsel %vm5719, %v6695, 0.0
    %6698 = vadd.xlane.f32.xlu0 %v6697
    %v6699 = vpop.xlane.xlu0 %6698
    %v6700 = vsel %vm5719, %v6696, 0.0
    %6701 = vadd.xlane.f32.xlu0 %v6700
    %v6702 = vpop.xlane.xlu0 %6701
    %v6703 = vadd.f32 %v6699, 1e-16
    %v6704 = vadd.f32 %v6702, 1e-16
    %v6705 = vrcp.pop %v6703
    %v6706 = vrcp.pop %v6704
    %v6707 = vmul.f32 %v6695, %v6705
    %v6708 = vmul.f32 %v6696, %v6706
    %6711 = vrot.lane.b32.xlu0 %v6479, 64
    %v6712 = vpop.permute.xlu0 %6711
    %6713 = vrot.lane.b32.xlu0 %v6482, 64
    %v6714 = vpop.permute.xlu0 %6713
    %v6718 = vsel %vm5719, %v6707, 0
    %v6721 = vsel %vm5719, %v6708, 0
    %6723 = vmatpush.msra.mxu0 0.0
    %6724 = vmatpush.msra.mxu0 0.0
    %6725 = vmatpush.msra.mxu0 0.0
    %6726 = vmatpush.msra.mxu0 0.0
    %6727 = vmatpush.msra.mxu0 0.0
    %6728 = vmatpush.msra.mxu0 0.0
    %6729 = vmatpush.msra.mxu0 0.0
    %6730 = vmatpush.msra.mxu0 0.0
    %6731 = vmatpush.msra.mxu0 0.0
    %6732 = vmatpush.msra.mxu0 0.0
    %6733 = vmatpush.msra.mxu0 0.0
    %6734 = vmatpush.msra.mxu0 0.0
    %6735 = vmatpush.msra.mxu0 0.0
    %6736 = vmatpush.msra.mxu0 0.0
    %6737 = vmatpush.msra.mxu0 %v6714
    %6738 = vmatpush.msra.mxu0 %v6712
    %6739 = vmatmul.f32.gmra.mxu0 %v6718
    %v6740 = vpop.f32.mrf.mxu0
    %v6741 = vadd.f32 0.0, %v6740
    %6742 = vmatmul.f32.gmra.mxu0 %v6721
    %v6743 = vpop.f32.mrf.mxu0
    %v6744 = vadd.f32 0.0, %v6743
    %6745 = vdwg.mxu0
    %v6747 = vsel %vm5719, %v6662, 0
    %v6750 = vsel %vm5719, %v6663, 0
    %6752 = vmatpush.msra.mxu0 0.0
    %6753 = vmatpush.msra.mxu0 0.0
    %6754 = vmatpush.msra.mxu0 0.0
    %6755 = vmatpush.msra.mxu0 0.0
    %6756 = vmatpush.msra.mxu0 0.0
    %6757 = vmatpush.msra.mxu0 0.0
    %6758 = vmatpush.msra.mxu0 0.0
    %6759 = vmatpush.msra.mxu0 0.0
    %6760 = vmatpush.msra.mxu0 0.0
    %6761 = vmatpush.msra.mxu0 0.0
    %6762 = vmatpush.msra.mxu0 0.0
    %6763 = vmatpush.msra.mxu0 0.0
    %6764 = vmatpush.msra.mxu0 0.0
    %6765 = vmatpush.msra.mxu0 0.0
    %6766 = vmatpush.msra.mxu0 %v6482
    %6767 = vmatpush.msra.mxu0 %v6479
    %6768 = vmatmul.f32.gmra.mxu0 %v6747
    %v6769 = vpop.f32.mrf.mxu0
    %v6770 = vadd.f32 %v6741, %v6769
    %6771 = vmatmul.f32.gmra.mxu0 %v6750
    %v6772 = vpop.f32.mrf.mxu0
    %v6773 = vadd.f32 %v6744, %v6772
    %6774 = vdwg.mxu0
    %6775 = vset.pattern.permute.xlu0 6
    %6776 = vperm.xlu0 %6775, %v6580
    %v6777 = vpop.permute.xlu0 %6776
    %6779 = vset.pattern.permute.xlu0 6
    %6780 = vperm.xlu0 %6779, %v6583
    %v6781 = vpop.permute.xlu0 %6780
    %v6783 = vperm.slane %v6601, 2
    %v6784 = vadd.f32 %v6777, %v6783
    %v6785 = vadd.f32 %v6781, %v6783
    %vm6786 = vcmp.gt.f32.partialorder %v6784, 0.0
    %vm6787 = vcmp.gt.f32.partialorder %v6785, 0.0
    %v6788 = vmul.f32 %v6784, 0.2
    %v6789 = vmul.f32 %v6785, 0.2
    %v6790 = vsel %vm6786, %v6784, %v6788
    %v6791 = vsel %vm6787, %v6785, %v6789
    %v6792 = vsel %vm6106, %v6790, -1e+30
    %v6793 = vsel %vm6107, %v6791, -1e+30
    %v6794 = vsel %vm5719, %v6792, -inf
    %6795 = vmax.xlane.f32.xlu0 %v6794
    %v6796 = vpop.xlane.xlu0 %6795
    %v6797 = vsel %vm5719, %v6793, -inf
    %6798 = vmax.xlane.f32.xlu0 %v6797
    %v6799 = vpop.xlane.xlu0 %6798
    %v6800 = vsub.f32 %v6792, %v6796
    %v6801 = vsub.f32 %v6793, %v6799
    %v6802 = vmul.f32 %v6800, 1.442695
    %v6803 = vpow.pop %v6802
    %v6804 = vmul.f32 %v6801, 1.442695
    %v6805 = vpow.pop %v6804
    %v6806 = vmul.f32 %v6803, %v5975
    %v6807 = vmul.f32 %v6805, %v5976
    %v6808 = vsel %vm5719, %v6806, 0.0
    %6809 = vadd.xlane.f32.xlu0 %v6808
    %v6810 = vpop.xlane.xlu0 %6809
    %v6811 = vsel %vm5719, %v6807, 0.0
    %6812 = vadd.xlane.f32.xlu0 %v6811
    %v6813 = vpop.xlane.xlu0 %6812
    %v6814 = vadd.f32 %v6810, 1e-16
    %v6815 = vadd.f32 %v6813, 1e-16
    %v6816 = vrcp.pop %v6814
    %v6817 = vrcp.pop %v6815
    %v6818 = vmul.f32 %v6806, %v6816
    %v6819 = vmul.f32 %v6807, %v6817
    %v6821 = vsel %vm5719, %v6818, 0
    %v6824 = vsel %vm5719, %v6819, 0
    %6826 = vmatpush.msra.mxu0 0.0
    %6827 = vmatpush.msra.mxu0 0.0
    %6828 = vmatpush.msra.mxu0 0.0
    %6829 = vmatpush.msra.mxu0 0.0
    %6830 = vmatpush.msra.mxu0 0.0
    %6831 = vmatpush.msra.mxu0 0.0
    %6832 = vmatpush.msra.mxu0 0.0
    %6833 = vmatpush.msra.mxu0 0.0
    %6834 = vmatpush.msra.mxu0 0.0
    %6835 = vmatpush.msra.mxu0 0.0
    %6836 = vmatpush.msra.mxu0 0.0
    %6837 = vmatpush.msra.mxu0 0.0
    %6838 = vmatpush.msra.mxu0 0.0
    %6839 = vmatpush.msra.mxu0 0.0
    %6840 = vmatpush.msra.mxu0 %v6505
    %6841 = vmatpush.msra.mxu0 %v6502
    %6842 = vmatmul.f32.gmra.mxu0 %v6821
    %v6843 = vpop.f32.mrf.mxu0
    %v6844 = vadd.f32 0.0, %v6843
    %6845 = vmatmul.f32.gmra.mxu0 %v6824
    %v6846 = vpop.f32.mrf.mxu0
    %v6847 = vadd.f32 0.0, %v6846
    %6848 = vdwg.mxu0
    %v6849 = vadd.f32 %v6770, %v6844
    %v6850 = vadd.f32 %v6773, %v6847
    %6851 = vset.pattern.permute.xlu0 7
    %6852 = vperm.xlu0 %6851, %v6580
    %v6853 = vpop.permute.xlu0 %6852
    %6855 = vset.pattern.permute.xlu0 7
    %6856 = vperm.xlu0 %6855, %v6583
    %v6857 = vpop.permute.xlu0 %6856
    %v6859 = vperm.slane %v6601, 3
    %v6860 = vadd.f32 %v6853, %v6859
    %v6861 = vadd.f32 %v6857, %v6859
    %vm6862 = vcmp.gt.f32.partialorder %v6860, 0.0
    %vm6863 = vcmp.gt.f32.partialorder %v6861, 0.0
    %v6864 = vmul.f32 %v6860, 0.2
    %v6865 = vmul.f32 %v6861, 0.2
    %v6866 = vsel %vm6862, %v6860, %v6864
    %v6867 = vsel %vm6863, %v6861, %v6865
    %v6868 = vsel %vm6106, %v6866, -1e+30
    %v6869 = vsel %vm6107, %v6867, -1e+30
    %v6870 = vsel %vm5719, %v6868, -inf
    %6871 = vmax.xlane.f32.xlu0 %v6870
    %v6872 = vpop.xlane.xlu0 %6871
    %v6873 = vsel %vm5719, %v6869, -inf
    %6874 = vmax.xlane.f32.xlu0 %v6873
    %v6875 = vpop.xlane.xlu0 %6874
    %v6876 = vsub.f32 %v6868, %v6872
    %v6877 = vsub.f32 %v6869, %v6875
    %v6878 = vmul.f32 %v6876, 1.442695
    %v6879 = vpow.pop %v6878
    %v6880 = vmul.f32 %v6877, 1.442695
    %v6881 = vpow.pop %v6880
    %v6882 = vmul.f32 %v6879, %v5975
    %v6883 = vmul.f32 %v6881, %v5976
    %v6884 = vsel %vm5719, %v6882, 0.0
    %6885 = vadd.xlane.f32.xlu0 %v6884
    %v6886 = vpop.xlane.xlu0 %6885
    %v6887 = vsel %vm5719, %v6883, 0.0
    %6888 = vadd.xlane.f32.xlu0 %v6887
    %v6889 = vpop.xlane.xlu0 %6888
    %v6890 = vadd.f32 %v6886, 1e-16
    %v6891 = vadd.f32 %v6889, 1e-16
    %v6892 = vrcp.pop %v6890
    %v6893 = vrcp.pop %v6891
    %v6894 = vmul.f32 %v6882, %v6892
    %v6895 = vmul.f32 %v6883, %v6893
    %6898 = vrot.lane.b32.xlu0 %v6502, 64
    %v6899 = vpop.permute.xlu0 %6898
    %6900 = vrot.lane.b32.xlu0 %v6505, 64
    %v6901 = vpop.permute.xlu0 %6900
    %v6905 = vsel %vm5719, %v6894, 0
    %v6908 = vsel %vm5719, %v6895, 0
    %6910 = vmatpush.msra.mxu0 0.0
    %6911 = vmatpush.msra.mxu0 0.0
    %6912 = vmatpush.msra.mxu0 0.0
    %6913 = vmatpush.msra.mxu0 0.0
    %6914 = vmatpush.msra.mxu0 0.0
    %6915 = vmatpush.msra.mxu0 0.0
    %6916 = vmatpush.msra.mxu0 0.0
    %6917 = vmatpush.msra.mxu0 0.0
    %6918 = vmatpush.msra.mxu0 0.0
    %6919 = vmatpush.msra.mxu0 0.0
    %6920 = vmatpush.msra.mxu0 0.0
    %6921 = vmatpush.msra.mxu0 0.0
    %6922 = vmatpush.msra.mxu0 0.0
    %6923 = vmatpush.msra.mxu0 0.0
    %6924 = vmatpush.msra.mxu0 %v6901
    %6925 = vmatpush.msra.mxu0 %v6899
    %6926 = vmatmul.f32.gmra.mxu0 %v6905
    %v6927 = vpop.f32.mrf.mxu0
    %v6928 = vadd.f32 0.0, %v6927
    %6929 = vmatmul.f32.gmra.mxu0 %v6908
    %v6930 = vpop.f32.mrf.mxu0
    %v6931 = vadd.f32 0.0, %v6930
    %6932 = vdwg.mxu0
    %v6933 = vadd.f32 %v6849, %v6928
    %v6934 = vadd.f32 %v6850, %v6931
    %v6935 = vmul.f32 %v6933, 0.25
    %v6936 = vmul.f32 %v6934, 0.25
    %v6937 = vld [vmem:[#allocation28] sm:$0x1]
    %v6939 = vperm.slane %v6937, 0
    %v6941 = vadd.f32 %v6935, %v6939
    %v6942 = vadd.f32 %v6936, %v6939
    %v6943 = vld [vmem:[#allocation29] sm:$0x1]
    %v6945 = vperm.slane %v6943, 0
    %v6947 = vmul.f32 %v6941, %v6945
    %v6948 = vmul.f32 %v6942, %v6945
    %v6949 = vld [vmem:[#allocation31] sm:$0x1]
    %v6951 = vperm.slane %v6949, 0
    %v6953 = vadd.f32 %v6947, %v6951
    %v6954 = vadd.f32 %v6948, %v6951
    %vm6955 = vcmp.gt.f32.partialorder %v6953, 0.0
    %vm6956 = vcmp.gt.f32.partialorder %v6954, 0.0
    %v6957 = vmul.f32 %v6953, 1.442695
    %v6958 = vpow.pop %v6957
    %v6959 = vmul.f32 %v6954, 1.442695
    %v6960 = vpow.pop %v6959
    %v6961 = vsub.f32 %v6958, 1.0
    %v6962 = vsub.f32 %v6960, 1.0
    %v6963 = vsel %vm6955, %v6953, %v6961
    %v6964 = vsel %vm6956, %v6954, %v6962
    %v6965 = vld [vmem:[#allocation32] sm:$0x3]
    %v6967 = vsel %vm5719, %v6965, 0
    %6969 = vmatpush.msra.mxu0 0.0
    %6970 = vmatpush.msra.mxu0 0.0
    %6971 = vmatpush.msra.mxu0 0.0
    %6972 = vmatpush.msra.mxu0 0.0
    %6973 = vmatpush.msra.mxu0 0.0
    %6974 = vmatpush.msra.mxu0 0.0
    %6975 = vmatpush.msra.mxu0 0.0
    %6976 = vmatpush.msra.mxu0 0.0
    %6977 = vmatpush.msra.mxu0 0.0
    %6978 = vmatpush.msra.mxu0 0.0
    %6979 = vmatpush.msra.mxu0 0.0
    %6980 = vmatpush.msra.mxu0 0.0
    %6981 = vmatpush.msra.mxu0 0.0
    %6982 = vmatpush.msra.mxu0 0.0
    %6983 = vmatpush.msra.mxu0 %v6964
    %6984 = vmatpush.msra.mxu0 %v6963
    %6985 = vmatmul.f32.gmra.mxu0 %v6967
    %v6986 = vpop.f32.mrf.mxu0
    %v6987 = vadd.f32 0.0, %v6986
    %6988 = vdwg.mxu0
    %v6989 = vld [vmem:[#allocation34] sm:$0xff]
    %v6990 = vld [vmem:[#allocation34 + $0x8] sm:$0xff]
    %v6991 = vld [vmem:[#allocation34 + $0x10] sm:$0xff]
    %v6992 = vld [vmem:[#allocation34 + $0x18] sm:$0xff]
    %v6993 = vld [vmem:[#allocation34 + $0x20] sm:$0xff]
    %v6994 = vld [vmem:[#allocation34 + $0x28] sm:$0xff]
    %v6995 = vld [vmem:[#allocation34 + $0x30] sm:$0xff]
    %v6996 = vld [vmem:[#allocation34 + $0x38] sm:$0xff]
    %v6997 = vld [vmem:[#allocation35] sm:$0x1]
    %v6999 = vperm.slane %v6997, 0
    %v7002 = vsel %vm628, %v6987, 0
    %7004 = vmatpush.msra.mxu0 0.0
    %7005 = vmatpush.msra.mxu0 0.0
    %7006 = vmatpush.msra.mxu0 0.0
    %7007 = vmatpush.msra.mxu0 0.0
    %7008 = vmatpush.msra.mxu0 0.0
    %7009 = vmatpush.msra.mxu0 0.0
    %7010 = vmatpush.msra.mxu0 0.0
    %7011 = vmatpush.msra.mxu0 0.0
    %7012 = vmatpush.msra.mxu0 %v6996
    %7013 = vmatpush.msra.mxu0 %v6995
    %7014 = vmatpush.msra.mxu0 %v6994
    %7015 = vmatpush.msra.mxu0 %v6993
    %7016 = vmatpush.msra.mxu0 %v6992
    %7017 = vmatpush.msra.mxu0 %v6991
    %7018 = vmatpush.msra.mxu0 %v6990
    %7019 = vmatpush.msra.mxu0 %v6989
    %7020 = vmatmul.f32.gmra.mxu0 %v7002
    %v7021 = vpop.f32.mrf.mxu0
    %v7022 = vadd.f32 %v6999, %v7021
    %7023 = vdwg.mxu0
    %v7024 = vmul.f32 %v7022, 0.5
    %v7025 = vmul.f32 %v7022, 0.70710677
    %vm7026 = vcmp.ge.f32.partialorder %v7025, 0.0
    %v7027 = vsel %vm7026, 1.0, -1.0
    %v7028 = vand.u32 2147483647, %v7025
    %v7029 = vmul.f32 %v7028, 0.3275911
    %v7030 = vadd.f32 %v7029, 1.0
    %v7031 = vrcp.pop %v7030
    %v7032 = vmul.f32 %v7030, %v7031
    %v7033 = vsub.f32 1.0, %v7032
    %v7034 = vmul.f32 %v7031, %v7033
    %v7035 = vadd.f32 %v7031, %v7034
    %vm7036 = vweird.f32 %v7030
    %vm7037 = vweird.f32 %v7031
    %vm7038 = vmor %vm7036, %vm7037
    %v7039 = vsel %vm7038, %v7031, %v7035
    %v7040 = vand.u32 2147483647, %v7030
    %vm7041 = vcmp.eq.f32.partialorder %v7040, 8.507059e+37
    %v7042 = vand.u32 %v7030, 2147483648
    %v7043 = vor.u32 1.1754944e-38, %v7042
    %v7044 = vsel %vm7041, %v7043, %v7039
    %v7045 = vmul.f32 1.0, %v7044
    %v7046 = vmul.f32 %v7045, 1.0614054
    %v7047 = vadd.f32 %v7046, -1.4531521
    %v7048 = vmul.f32 %v7047, %v7045
    %v7049 = vadd.f32 %v7048, 1.4214138
    %v7050 = vmul.f32 %v7049, %v7045
    %v7051 = vadd.f32 %v7050, -0.28449672
    %v7052 = vmul.f32 %v7051, %v7045
    %v7053 = vadd.f32 %v7052, 0.2548296
    %v7054 = vmul.f32 %v7053, %v7045
    %v7055 = vsub.f32 0.0, %v7028
    %v7056 = vmul.f32 %v7055, %v7028
    %v7057 = vmul.f32 %v7056, 1.442695
    %v7058 = vpow.pop %v7057
    %v7059 = vmul.f32 %v7054, %v7058
    %v7060 = vsub.f32 1.0, %v7059
    %v7061 = vmul.f32 %v7027, %v7060
    %v7062 = vadd.f32 %v7061, 1.0
    %v7063 = vmul.f32 %v7024, %v7062
    %v7064 = vld [vmem:[%s53] sm:$0xff]
    %v7065 = vld [vmem:[%s53 + $0x8] sm:$0xff]
    %v7066 = vld [vmem:[%s53 + $0x10] sm:$0xff]
    %v7067 = vld [vmem:[%s53 + $0x18] sm:$0xff]
    %v7068 = vld [vmem:[%s53 + $0x20] sm:$0xff]
    %v7069 = vld [vmem:[%s53 + $0x28] sm:$0xff]
    %v7070 = vld [vmem:[%s53 + $0x30] sm:$0xff]
    %v7071 = vld [vmem:[%s53 + $0x38] sm:$0xff]
    %v7072 = vld [vmem:[#allocation37] sm:$0x1]
    %v7074 = vperm.slane %v7072, 0
    %v7077 = vsel %vm628, %v7063, 0
    %7079 = vmatpush.msra.mxu0 0.0
    %7080 = vmatpush.msra.mxu0 0.0
    %7081 = vmatpush.msra.mxu0 0.0
    %7082 = vmatpush.msra.mxu0 0.0
    %7083 = vmatpush.msra.mxu0 0.0
    %7084 = vmatpush.msra.mxu0 0.0
    %7085 = vmatpush.msra.mxu0 0.0
    %7086 = vmatpush.msra.mxu0 0.0
    %7087 = vmatpush.msra.mxu0 %v7071
    %7088 = vmatpush.msra.mxu0 %v7070
    %7089 = vmatpush.msra.mxu0 %v7069
    %7090 = vmatpush.msra.mxu0 %v7068
    %7091 = vmatpush.msra.mxu0 %v7067
    %7092 = vmatpush.msra.mxu0 %v7066
    %7093 = vmatpush.msra.mxu0 %v7065
    %7094 = vmatpush.msra.mxu0 %v7064
    %7095 = vmatmul.f32.gmra.mxu0 %v7077
    %v7096 = vpop.f32.mrf.mxu0
    %v7097 = vadd.f32 %v7074, %v7096
    %7098 = vdwg.mxu0
    %vm7099 = vcmask 9216
    %7100 = vst.msk [vmem:[#allocation38] sm:$0x3] %vm7099, %v7097
    // Predicated region
    $region202: #{eegnet_gat_forward.1} parent=1 // pred_check
      _
    $region203: #{eegnet_gat_forward.1} parent=1 // pred_check_branch
      %7102 = sbr.rel (0) target = $region205
    $region204: #{eegnet_gat_forward.1} parent=1 // pred_region
      %7104 = vsyncadd [#allocation7], 0
      %s7106 = sshll.u32 [#allocation38], 4
      %s7107 = int_to_ptr.vmem [resolvable:$true] %s7106
      %s7108 = sshll.u32 %s59, 4
      %s7109 = int_to_ptr.hbm [resolvable:$true] %s7108
      %7111 = dma.vmem_to_hbm [thread:$0]  %s7107, 32, %s7109, [#allocation7]
    $region205: #{eegnet_gat_forward.1} parent=1 // pred_fallthru
      _
    // Predicated region
    $region206: #{eegnet_gat_forward.1} parent=1 // pred_check
      _
    $region207: #{eegnet_gat_forward.1} parent=1 // pred_check_branch
      %7113 = sbr.rel (0) target = $region209
    $region208: #{eegnet_gat_forward.1} parent=1 // pred_region
      %7115 = dma.done [#allocation7], 32
    $region209: #{eegnet_gat_forward.1} parent=1 // pred_fallthru
      _
    %7116 = vsyncpa [#allocation6], 1
    %7117 = vsyncpa [#allocation9], 1
    %7118 = vsyncpa [#allocation12], 1
    %7119 = vsyncpa [#allocation15], 1
    %7120 = vsyncpa [#allocation18], 1
    %7121 = vsyncpa [#allocation21], 1
    %7122 = vsyncpa [#allocation24], 1
    %7123 = vsyncpa [#allocation27], 1
    %7124 = vsyncpa [#allocation30], 1
    %7125 = vsyncpa [#allocation33], 1
    %7126 = vsyncpa [#allocation36], 1
    %7127 = vsyncpa [#allocation7], 1
  %7128 = vsyncmov [#allocation3]
  %s7129 = vpop.sfrf %7128
  %p7130 = scmp.eq.s32.totalorder %s7129, 0
  %p7131 = pneg %p7130
  %7133 = shalt.err (%p7131)

</llo_original>
